<compile_context>
chip_gen: v7x
topology: tpu7x:2x2x1
jax: 0.10.0
libtpu: 0.0.40
codegen_flags: <defaults>
</compile_context>

<pallas_src>
import math

import jax
import jax.numpy as jnp
from jax.experimental import pallas as pl
from jax.experimental.pallas import tpu as pltpu

# ----------------------- small, structure-faithful config -----------------------
B = 2            # batch
T = 8            # time steps
CONV_CH = 16     # p.conv_ch
EMB_DIM = 64     # p.emb_hidden_dim (scaled down from 256)
DF_HID = 64      # p.df_hidden_dim  (scaled down from 256)
DF_NUM_LAYERS = 2
DF_ORDER = 5
DF_OUT_CH = 2 * DF_ORDER                      # 10
NB_DF = 32       # p.nb_df (scaled down from 96)
PR_LIN_GROUPS = 2
FIX_LIN_GROUPS = 8
OUT_DIM = NB_DF * DF_OUT_CH                   # 320
CONV_GROUPS = math.gcd(CONV_CH, DF_OUT_CH)    # 2


# ----------------------- fused Pallas kernel -----------------------
def fused_df_decoder_kernel(emb_ref, c0p_ref, w_in_ref,
                            w_ih_ref, b_ih_ref, w_hh_ref, b_hh_ref,
                            conv_m_ref, conv_shift_ref, w_out_ref,
                            o_ref):
    f32 = jnp.float32

    # ---- df_gru.linear_in (GroupedLinear as block-diag) + ReLU ----
    # Rows are time-major: row = t*B + b.
    seq = jnp.maximum(
        jnp.dot(emb_ref[...], w_in_ref[...], preferred_element_type=f32), 0.0)   # (T*B, H)

    # ---- 2 stacked GRU layers, recurrence unrolled over T, batched over B ----
    for l in range(DF_NUM_LAYERS):
        # Input-projected gates for the whole sequence: one matmul per gate, once per layer
        # (off the recurrent critical path).
        xg = [jnp.dot(seq, w_ih_ref[l, g, :, :], preferred_element_type=f32)
              + b_ih_ref[l, g, :, :] for g in range(3)]                           # (T*B, H) each
        whh = [w_hh_ref[l, g, :, :] for g in range(3)]                            # (H, H) each
        bhh = [b_hh_ref[l, g, :, :] for g in range(3)]                            # (1, H) each

        h = jnp.zeros((B, DF_HID), f32)
        hs = []
        for t in range(T):
            r0 = t * B
            hr = jnp.dot(h, whh[0], preferred_element_type=f32) + bhh[0]          # (B, H)
            hz = jnp.dot(h, whh[1], preferred_element_type=f32) + bhh[1]
            hn = jnp.dot(h, whh[2], preferred_element_type=f32) + bhh[2]
            r = jax.nn.sigmoid(xg[0][r0:r0 + B, :] + hr)
            z = jax.nn.sigmoid(xg[1][r0:r0 + B, :] + hz)
            n = jnp.tanh(xg[2][r0:r0 + B, :] + r * hn)
            h = (1.0 - z) * n + z * h
            hs.append(h)
        seq = jnp.concatenate(hs, axis=0)                                          # (T*B, H)

    # ---- df_out (GroupedLinear as block-diag) + Tanh ----
    y = jnp.tanh(jnp.dot(seq, w_out_ref[...], preferred_element_type=f32))        # (T*B, 320)

    # ---- df_convp: grouped 1x1 conv + folded BN + ReLU, directly in residual layout ----
    conv = jnp.dot(c0p_ref[...], conv_m_ref[...], preferred_element_type=f32)     # (T*B, 320)
    conv = jnp.maximum(conv + conv_shift_ref[...], 0.0)

    o_ref[...] = y + conv


# ----------------------- wrapper -----------------------
def df_decoder_forward(emb, c0, P):
    Bb, Tt, _ = emb.shape
    # Time-major row layout (row = t*B + b) so the in-kernel recurrence is batched over B.
    emb2d = jnp.transpose(emb, (1, 0, 2)).reshape(Tt * Bb, EMB_DIM)
    # NCHW -> channels-last, time-major flatten; columns are (f, c) f-major for the conv matmul.
    c0p = jnp.transpose(c0, (2, 0, 3, 1)).reshape(Tt * Bb, NB_DF * CONV_CH)
    out2d = pl.pallas_call(
        fused_df_decoder_kernel,
        out_shape=jax.ShapeDtypeStruct((Tt * Bb, OUT_DIM), jnp.float32),
    )(emb2d, c0p, P["w_in"], P["w_ih"], P["b_ih"], P["w_hh"], P["b_hh"],
      P["conv_m"], P["conv_shift"], P["w_out"])
    out = out2d.reshape(Tt, Bb, NB_DF, DF_OUT_CH)
    return jnp.transpose(out, (1, 0, 2, 3))


# ----------------------- deterministic parameters -----------------------
def _block_diag(w):
    """(G, ki, ko) -> (G*ki, G*ko) block-diag; same output-column order as per-group concat."""
    G, ki, ko = w.shape
    m = jnp.zeros((G * ki, G * ko), w.dtype)
    for g in range(G):
        m = m.at[g * ki:(g + 1) * ki, g * ko:(g + 1) * ko].set(w[g])
    return m


def make_params(key):
    ks = jax.random.split(key, 12)

    def nrm(k, shape, scale=0.2):
        return scale * jax.random.normal(k, shape, jnp.float32)

    P = {}
    # GroupedLinear (linear_in of the squeezed GRU, no bias) -> block-diag (EMB, H)
    P["w_in"] = _block_diag(nrm(ks[0], (PR_LIN_GROUPS, EMB_DIM // PR_LIN_GROUPS,
                                        DF_HID // PR_LIN_GROUPS)))

    # 2-layer GRU, gate-separated weights (r|z|n), stored pre-transposed: x @ W_ih, h @ W_hh
    P["w_ih"] = nrm(ks[1], (DF_NUM_LAYERS, 3, DF_HID, DF_HID))
    P["b_ih"] = nrm(ks[2], (DF_NUM_LAYERS, 3, 1, DF_HID), 0.05)
    P["w_hh"] = nrm(ks[3], (DF_NUM_LAYERS, 3, DF_HID, DF_HID))
    P["b_hh"] = nrm(ks[4], (DF_NUM_LAYERS, 3, 1, DF_HID), 0.05)

    # Grouped 1x1 conv weight (G, Cin/G, Cout/G) <-> Conv2d(CONV_CH, DF_OUT_CH, 1, groups=G, bias=False)
    w_conv = _block_diag(nrm(ks[5], (CONV_GROUPS, CONV_CH // CONV_GROUPS,
                                     DF_OUT_CH // CONV_GROUPS)))                 # (Cin, Cout)
    # BatchNorm2d(DF_OUT_CH), eval mode, folded into scale/shift
    gamma = 1.0 + 0.1 * jax.random.normal(ks[6], (DF_OUT_CH,), jnp.float32)
    beta = 0.1 * jax.random.normal(ks[7], (DF_OUT_CH,), jnp.float32)
    mean = 0.1 * jax.random.normal(ks[8], (DF_OUT_CH,), jnp.float32)
    var = 1.0 + 0.1 * jnp.abs(jax.random.normal(ks[9], (DF_OUT_CH,), jnp.float32))
    scale = gamma / jnp.sqrt(var + 1e-5)
    shift = beta - mean * scale
    # Bake conv + BN scale into a (F*Cin, F*Cout) block matrix acting on channels-last rows;
    # the shift is tiled across the NB_DF frequency bins.
    P["conv_m"] = jnp.kron(jnp.eye(NB_DF, dtype=jnp.float32), w_conv * scale[None, :])
    P["conv_shift"] = jnp.tile(shift, NB_DF)[None, :]

    # df_out GroupedLinear (no bias) -> block-diag (H, OUT_DIM); column order == group concat order
    P["w_out"] = _block_diag(nrm(ks[10], (FIX_LIN_GROUPS, DF_HID // FIX_LIN_GROUPS,
                                          OUT_DIM // FIX_LIN_GROUPS)))
    return P


# ----------------------- plain-JAX reference (correctness check) -----------------------
def reference_forward(emb, c0, P):
    hp = jax.lax.Precision.HIGHEST
    Bb, Tt, _ = emb.shape
    seq = jnp.maximum(jnp.dot(emb.reshape(Bb * Tt, EMB_DIM), P["w_in"], precision=hp), 0.0)
    for l in range(DF_NUM_LAYERS):
        xg = [jnp.dot(seq, P["w_ih"][l, g], precision=hp) + P["b_ih"][l, g] for g in range(3)]
        rows = []
        for b in range(Bb):
            h = jnp.zeros((1, DF_HID), jnp.float32)
            for t in range(Tt):
                r0 = b * Tt + t
                hr = jnp.dot(h, P["w_hh"][l, 0], precision=hp) + P["b_hh"][l, 0]
                hz = jnp.dot(h, P["w_hh"][l, 1], precision=hp) + P["b_hh"][l, 1]
                hn = jnp.dot(h, P["w_hh"][l, 2], precision=hp) + P["b_hh"][l, 2]
                r = jax.nn.sigmoid(xg[0][r0:r0 + 1] + hr)
                z = jax.nn.sigmoid(xg[1][r0:r0 + 1] + hz)
                n = jnp.tanh(xg[2][r0:r0 + 1] + r * hn)
                h = (1.0 - z) * n + z * h
                rows.append(h)
        seq = jnp.concatenate(rows, axis=0)
    y = jnp.tanh(jnp.dot(seq, P["w_out"], precision=hp))
    c0p = jnp.transpose(c0, (0, 2, 3, 1)).reshape(Bb * Tt, NB_DF * CONV_CH)
    conv = jnp.maximum(jnp.dot(c0p, P["conv_m"], precision=hp) + P["conv_shift"], 0.0)
    return (y + conv).reshape(Bb, Tt, NB_DF, DF_OUT_CH)


if __name__ == "__main__":
    key = jax.random.PRNGKey(0)
    k_emb, k_c0, k_par = jax.random.split(key, 3)

    emb = jax.random.normal(k_emb, (B, T, EMB_DIM), jnp.float32)           # (b, t, emb_dim)
    c0 = jax.random.normal(k_c0, (B, CONV_CH, T, NB_DF), jnp.float32)      # NCHW df pathway feat
    params = make_params(k_par)

    out = jax.jit(df_decoder_forward)(emb, c0, params)
    out = jax.block_until_ready(out)

    assert out.shape == (B, T, NB_DF, DF_OUT_CH), out.shape
    assert bool(jnp.all(jnp.isfinite(out)))

    ref = reference_forward(emb, c0, params)
    err = float(jnp.max(jnp.abs(out - ref)))
    assert err < 2e-2, f"mismatch vs plain-JAX reference: {err}"

    print("KERNEL_OK")
</pallas_src>

<mosaic_0001>
module attributes {stable_mosaic.version = 11 : i64} {
  func.func @fused_df_decoder_kernel(%arg0: memref<16x64xf32, #tpu.memory_space<vmem>>, %arg1: memref<16x512xf32, #tpu.memory_space<vmem>>, %arg2: memref<64x64xf32, #tpu.memory_space<vmem>>, %arg3: memref<2x3x64x64xf32, #tpu.memory_space<vmem>>, %arg4: memref<2x3x1x64xf32, #tpu.memory_space<vmem>>, %arg5: memref<2x3x64x64xf32, #tpu.memory_space<vmem>>, %arg6: memref<2x3x1x64xf32, #tpu.memory_space<vmem>>, %arg7: memref<512x320xf32, #tpu.memory_space<vmem>>, %arg8: memref<1x320xf32, #tpu.memory_space<vmem>>, %arg9: memref<64x320xf32, #tpu.memory_space<vmem>>, %arg10: memref<16x320xf32, #tpu.memory_space<vmem>>) attributes {dimension_semantics = [], scalar_prefetch = 0 : i64, scratch_operands = 0 : i64, tpu.core_type = #tpu.core_type<tc>} {
    %c0 = arith.constant 0 : index
    %c0_0 = arith.constant 0 : index
    %0 = vector.load %arg0[%c0, %c0_0] : memref<16x64xf32, #tpu.memory_space<vmem>>, vector<16x64xf32>
    %c0_1 = arith.constant 0 : index
    %c0_2 = arith.constant 0 : index
    %1 = vector.load %arg2[%c0_1, %c0_2] : memref<64x64xf32, #tpu.memory_space<vmem>>, vector<64x64xf32>
    %cst = arith.constant dense<0.000000e+00> : vector<16x64xf32>
    %2 = tpu.matmul %0, %1, %cst {dimension_numbers = #tpu.dot_dimension_numbers<[1], [0], [0], [1], [0, 0, 1, 1], [], []>} : vector<16x64xf32>, vector<64x64xf32>, vector<16x64xf32> -> vector<16x64xf32>
    %cst_3 = arith.constant 0.000000e+00 : f32
    %3 = vector.broadcast %cst_3 : f32 to vector<16x64xf32>
    %4 = arith.maximumf %2, %3 : vector<16x64xf32>
    %c0_4 = arith.constant 0 : index
    %c0_5 = arith.constant 0 : index
    %c0_6 = arith.constant 0 : index
    %c0_7 = arith.constant 0 : index
    %5 = vector.load %arg3[%c0_4, %c0_5, %c0_6, %c0_7] : memref<2x3x64x64xf32, #tpu.memory_space<vmem>>, vector<1x1x64x64xf32>
    %6 = vector.shape_cast %5 : vector<1x1x64x64xf32> to vector<64x64xf32>
    %cst_8 = arith.constant dense<0.000000e+00> : vector<16x64xf32>
    %7 = tpu.matmul %4, %6, %cst_8 {dimension_numbers = #tpu.dot_dimension_numbers<[1], [0], [0], [1], [0, 0, 1, 1], [], []>} : vector<16x64xf32>, vector<64x64xf32>, vector<16x64xf32> -> vector<16x64xf32>
    %c0_9 = arith.constant 0 : index
    %c0_10 = arith.constant 0 : index
    %c0_11 = arith.constant 0 : index
    %c0_12 = arith.constant 0 : index
    %8 = vector.load %arg4[%c0_9, %c0_10, %c0_11, %c0_12] : memref<2x3x1x64xf32, #tpu.memory_space<vmem>>, vector<1x1x1x64xf32>
    %9 = vector.shape_cast %8 : vector<1x1x1x64xf32> to vector<1x64xf32>
    %10 = vector.broadcast %9 : vector<1x64xf32> to vector<16x64xf32>
    %11 = arith.addf %7, %10 : vector<16x64xf32>
    %c0_13 = arith.constant 0 : index
    %c1 = arith.constant 1 : index
    %c0_14 = arith.constant 0 : index
    %c0_15 = arith.constant 0 : index
    %12 = vector.load %arg3[%c0_13, %c1, %c0_14, %c0_15] : memref<2x3x64x64xf32, #tpu.memory_space<vmem>>, vector<1x1x64x64xf32>
    %13 = vector.shape_cast %12 : vector<1x1x64x64xf32> to vector<64x64xf32>
    %cst_16 = arith.constant dense<0.000000e+00> : vector<16x64xf32>
    %14 = tpu.matmul %4, %13, %cst_16 {dimension_numbers = #tpu.dot_dimension_numbers<[1], [0], [0], [1], [0, 0, 1, 1], [], []>} : vector<16x64xf32>, vector<64x64xf32>, vector<16x64xf32> -> vector<16x64xf32>
    %c0_17 = arith.constant 0 : index
    %c1_18 = arith.constant 1 : index
    %c0_19 = arith.constant 0 : index
    %c0_20 = arith.constant 0 : index
    %15 = vector.load %arg4[%c0_17, %c1_18, %c0_19, %c0_20] : memref<2x3x1x64xf32, #tpu.memory_space<vmem>>, vector<1x1x1x64xf32>
    %16 = vector.shape_cast %15 : vector<1x1x1x64xf32> to vector<1x64xf32>
    %17 = vector.broadcast %16 : vector<1x64xf32> to vector<16x64xf32>
    %18 = arith.addf %14, %17 : vector<16x64xf32>
    %c0_21 = arith.constant 0 : index
    %c2 = arith.constant 2 : index
    %c0_22 = arith.constant 0 : index
    %c0_23 = arith.constant 0 : index
    %19 = vector.load %arg3[%c0_21, %c2, %c0_22, %c0_23] : memref<2x3x64x64xf32, #tpu.memory_space<vmem>>, vector<1x1x64x64xf32>
    %20 = vector.shape_cast %19 : vector<1x1x64x64xf32> to vector<64x64xf32>
    %cst_24 = arith.constant dense<0.000000e+00> : vector<16x64xf32>
    %21 = tpu.matmul %4, %20, %cst_24 {dimension_numbers = #tpu.dot_dimension_numbers<[1], [0], [0], [1], [0, 0, 1, 1], [], []>} : vector<16x64xf32>, vector<64x64xf32>, vector<16x64xf32> -> vector<16x64xf32>
    %c0_25 = arith.constant 0 : index
    %c2_26 = arith.constant 2 : index
    %c0_27 = arith.constant 0 : index
    %c0_28 = arith.constant 0 : index
    %22 = vector.load %arg4[%c0_25, %c2_26, %c0_27, %c0_28] : memref<2x3x1x64xf32, #tpu.memory_space<vmem>>, vector<1x1x1x64xf32>
    %23 = vector.shape_cast %22 : vector<1x1x1x64xf32> to vector<1x64xf32>
    %24 = vector.broadcast %23 : vector<1x64xf32> to vector<16x64xf32>
    %25 = arith.addf %21, %24 : vector<16x64xf32>
    %c0_29 = arith.constant 0 : index
    %c0_30 = arith.constant 0 : index
    %c0_31 = arith.constant 0 : index
    %c0_32 = arith.constant 0 : index
    %26 = vector.load %arg5[%c0_29, %c0_30, %c0_31, %c0_32] : memref<2x3x64x64xf32, #tpu.memory_space<vmem>>, vector<1x1x64x64xf32>
    %27 = vector.shape_cast %26 : vector<1x1x64x64xf32> to vector<64x64xf32>
    %c0_33 = arith.constant 0 : index
    %c1_34 = arith.constant 1 : index
    %c0_35 = arith.constant 0 : index
    %c0_36 = arith.constant 0 : index
    %28 = vector.load %arg5[%c0_33, %c1_34, %c0_35, %c0_36] : memref<2x3x64x64xf32, #tpu.memory_space<vmem>>, vector<1x1x64x64xf32>
    %29 = vector.shape_cast %28 : vector<1x1x64x64xf32> to vector<64x64xf32>
    %c0_37 = arith.constant 0 : index
    %c2_38 = arith.constant 2 : index
    %c0_39 = arith.constant 0 : index
    %c0_40 = arith.constant 0 : index
    %30 = vector.load %arg5[%c0_37, %c2_38, %c0_39, %c0_40] : memref<2x3x64x64xf32, #tpu.memory_space<vmem>>, vector<1x1x64x64xf32>
    %31 = vector.shape_cast %30 : vector<1x1x64x64xf32> to vector<64x64xf32>
    %c0_41 = arith.constant 0 : index
    %c0_42 = arith.constant 0 : index
    %c0_43 = arith.constant 0 : index
    %c0_44 = arith.constant 0 : index
    %32 = vector.load %arg6[%c0_41, %c0_42, %c0_43, %c0_44] : memref<2x3x1x64xf32, #tpu.memory_space<vmem>>, vector<1x1x1x64xf32>
    %33 = vector.shape_cast %32 : vector<1x1x1x64xf32> to vector<1x64xf32>
    %c0_45 = arith.constant 0 : index
    %c1_46 = arith.constant 1 : index
    %c0_47 = arith.constant 0 : index
    %c0_48 = arith.constant 0 : index
    %34 = vector.load %arg6[%c0_45, %c1_46, %c0_47, %c0_48] : memref<2x3x1x64xf32, #tpu.memory_space<vmem>>, vector<1x1x1x64xf32>
    %35 = vector.shape_cast %34 : vector<1x1x1x64xf32> to vector<1x64xf32>
    %c0_49 = arith.constant 0 : index
    %c2_50 = arith.constant 2 : index
    %c0_51 = arith.constant 0 : index
    %c0_52 = arith.constant 0 : index
    %36 = vector.load %arg6[%c0_49, %c2_50, %c0_51, %c0_52] : memref<2x3x1x64xf32, #tpu.memory_space<vmem>>, vector<1x1x1x64xf32>
    %37 = vector.shape_cast %36 : vector<1x1x1x64xf32> to vector<1x64xf32>
    %cst_53 = arith.constant 0.000000e+00 : f32
    %38 = vector.broadcast %cst_53 : f32 to vector<2x64xf32>
    %cst_54 = arith.constant dense<0.000000e+00> : vector<2x64xf32>
    %39 = tpu.matmul %38, %27, %cst_54 {dimension_numbers = #tpu.dot_dimension_numbers<[1], [0], [0], [1], [0, 0, 1, 1], [], []>} : vector<2x64xf32>, vector<64x64xf32>, vector<2x64xf32> -> vector<2x64xf32>
    %40 = vector.broadcast %33 : vector<1x64xf32> to vector<2x64xf32>
    %41 = arith.addf %39, %40 : vector<2x64xf32>
    %cst_55 = arith.constant dense<0.000000e+00> : vector<2x64xf32>
    %42 = tpu.matmul %38, %29, %cst_55 {dimension_numbers = #tpu.dot_dimension_numbers<[1], [0], [0], [1], [0, 0, 1, 1], [], []>} : vector<2x64xf32>, vector<64x64xf32>, vector<2x64xf32> -> vector<2x64xf32>
    %43 = vector.broadcast %35 : vector<1x64xf32> to vector<2x64xf32>
    %44 = arith.addf %42, %43 : vector<2x64xf32>
    %cst_56 = arith.constant dense<0.000000e+00> : vector<2x64xf32>
    %45 = tpu.matmul %38, %31, %cst_56 {dimension_numbers = #tpu.dot_dimension_numbers<[1], [0], [0], [1], [0, 0, 1, 1], [], []>} : vector<2x64xf32>, vector<64x64xf32>, vector<2x64xf32> -> vector<2x64xf32>
    %46 = vector.broadcast %37 : vector<1x64xf32> to vector<2x64xf32>
    %47 = arith.addf %45, %46 : vector<2x64xf32>
    %48 = vector.extract_strided_slice %11 {offsets = [0, 0], sizes = [2, 64], strides = [1, 1]} : vector<16x64xf32> to vector<2x64xf32>
    %49 = arith.addf %48, %41 : vector<2x64xf32>
    %50 = arith.negf %49 : vector<2x64xf32>
    %51 = math.exp %50 : vector<2x64xf32>
    %cst_57 = arith.constant 1.000000e+00 : f32
    %52 = vector.broadcast %cst_57 : f32 to vector<2x64xf32>
    %53 = arith.addf %52, %51 : vector<2x64xf32>
    %54 = arith.divf %52, %53 : vector<2x64xf32>
    %55 = vector.extract_strided_slice %18 {offsets = [0, 0], sizes = [2, 64], strides = [1, 1]} : vector<16x64xf32> to vector<2x64xf32>
    %56 = arith.addf %55, %44 : vector<2x64xf32>
    %57 = arith.negf %56 : vector<2x64xf32>
    %58 = math.exp %57 : vector<2x64xf32>
    %cst_58 = arith.constant 1.000000e+00 : f32
    %59 = vector.broadcast %cst_58 : f32 to vector<2x64xf32>
    %60 = arith.addf %59, %58 : vector<2x64xf32>
    %61 = arith.divf %59, %60 : vector<2x64xf32>
    %62 = vector.extract_strided_slice %25 {offsets = [0, 0], sizes = [2, 64], strides = [1, 1]} : vector<16x64xf32> to vector<2x64xf32>
    %63 = arith.mulf %54, %47 : vector<2x64xf32>
    %64 = arith.addf %62, %63 : vector<2x64xf32>
    %65 = math.tanh %64 : vector<2x64xf32>
    %cst_59 = arith.constant 1.000000e+00 : f32
    %66 = vector.broadcast %cst_59 : f32 to vector<2x64xf32>
    %67 = arith.subf %66, %61 : vector<2x64xf32>
    %68 = arith.mulf %67, %65 : vector<2x64xf32>
    %69 = arith.mulf %61, %38 : vector<2x64xf32>
    %70 = arith.addf %68, %69 : vector<2x64xf32>
    %cst_60 = arith.constant dense<0.000000e+00> : vector<2x64xf32>
    %71 = tpu.matmul %70, %27, %cst_60 {dimension_numbers = #tpu.dot_dimension_numbers<[1], [0], [0], [1], [0, 0, 1, 1], [], []>} : vector<2x64xf32>, vector<64x64xf32>, vector<2x64xf32> -> vector<2x64xf32>
    %72 = vector.broadcast %33 : vector<1x64xf32> to vector<2x64xf32>
    %73 = arith.addf %71, %72 : vector<2x64xf32>
    %cst_61 = arith.constant dense<0.000000e+00> : vector<2x64xf32>
    %74 = tpu.matmul %70, %29, %cst_61 {dimension_numbers = #tpu.dot_dimension_numbers<[1], [0], [0], [1], [0, 0, 1, 1], [], []>} : vector<2x64xf32>, vector<64x64xf32>, vector<2x64xf32> -> vector<2x64xf32>
    %75 = vector.broadcast %35 : vector<1x64xf32> to vector<2x64xf32>
    %76 = arith.addf %74, %75 : vector<2x64xf32>
    %cst_62 = arith.constant dense<0.000000e+00> : vector<2x64xf32>
    %77 = tpu.matmul %70, %31, %cst_62 {dimension_numbers = #tpu.dot_dimension_numbers<[1], [0], [0], [1], [0, 0, 1, 1], [], []>} : vector<2x64xf32>, vector<64x64xf32>, vector<2x64xf32> -> vector<2x64xf32>
    %78 = vector.broadcast %37 : vector<1x64xf32> to vector<2x64xf32>
    %79 = arith.addf %77, %78 : vector<2x64xf32>
    %80 = vector.extract_strided_slice %11 {offsets = [2, 0], sizes = [2, 64], strides = [1, 1]} : vector<16x64xf32> to vector<2x64xf32>
    %81 = arith.addf %80, %73 : vector<2x64xf32>
    %82 = arith.negf %81 : vector<2x64xf32>
    %83 = math.exp %82 : vector<2x64xf32>
    %cst_63 = arith.constant 1.000000e+00 : f32
    %84 = vector.broadcast %cst_63 : f32 to vector<2x64xf32>
    %85 = arith.addf %84, %83 : vector<2x64xf32>
    %86 = arith.divf %84, %85 : vector<2x64xf32>
    %87 = vector.extract_strided_slice %18 {offsets = [2, 0], sizes = [2, 64], strides = [1, 1]} : vector<16x64xf32> to vector<2x64xf32>
    %88 = arith.addf %87, %76 : vector<2x64xf32>
    %89 = arith.negf %88 : vector<2x64xf32>
    %90 = math.exp %89 : vector<2x64xf32>
    %cst_64 = arith.constant 1.000000e+00 : f32
    %91 = vector.broadcast %cst_64 : f32 to vector<2x64xf32>
    %92 = arith.addf %91, %90 : vector<2x64xf32>
    %93 = arith.divf %91, %92 : vector<2x64xf32>
    %94 = vector.extract_strided_slice %25 {offsets = [2, 0], sizes = [2, 64], strides = [1, 1]} : vector<16x64xf32> to vector<2x64xf32>
    %95 = arith.mulf %86, %79 : vector<2x64xf32>
    %96 = arith.addf %94, %95 : vector<2x64xf32>
    %97 = math.tanh %96 : vector<2x64xf32>
    %cst_65 = arith.constant 1.000000e+00 : f32
    %98 = vector.broadcast %cst_65 : f32 to vector<2x64xf32>
    %99 = arith.subf %98, %93 : vector<2x64xf32>
    %100 = arith.mulf %99, %97 : vector<2x64xf32>
    %101 = arith.mulf %93, %70 : vector<2x64xf32>
    %102 = arith.addf %100, %101 : vector<2x64xf32>
    %cst_66 = arith.constant dense<0.000000e+00> : vector<2x64xf32>
    %103 = tpu.matmul %102, %27, %cst_66 {dimension_numbers = #tpu.dot_dimension_numbers<[1], [0], [0], [1], [0, 0, 1, 1], [], []>} : vector<2x64xf32>, vector<64x64xf32>, vector<2x64xf32> -> vector<2x64xf32>
    %104 = vector.broadcast %33 : vector<1x64xf32> to vector<2x64xf32>
    %105 = arith.addf %103, %104 : vector<2x64xf32>
    %cst_67 = arith.constant dense<0.000000e+00> : vector<2x64xf32>
    %106 = tpu.matmul %102, %29, %cst_67 {dimension_numbers = #tpu.dot_dimension_numbers<[1], [0], [0], [1], [0, 0, 1, 1], [], []>} : vector<2x64xf32>, vector<64x64xf32>, vector<2x64xf32> -> vector<2x64xf32>
    %107 = vector.broadcast %35 : vector<1x64xf32> to vector<2x64xf32>
    %108 = arith.addf %106, %107 : vector<2x64xf32>
    %cst_68 = arith.constant dense<0.000000e+00> : vector<2x64xf32>
    %109 = tpu.matmul %102, %31, %cst_68 {dimension_numbers = #tpu.dot_dimension_numbers<[1], [0], [0], [1], [0, 0, 1, 1], [], []>} : vector<2x64xf32>, vector<64x64xf32>, vector<2x64xf32> -> vector<2x64xf32>
    %110 = vector.broadcast %37 : vector<1x64xf32> to vector<2x64xf32>
    %111 = arith.addf %109, %110 : vector<2x64xf32>
    %112 = vector.extract_strided_slice %11 {offsets = [4, 0], sizes = [2, 64], strides = [1, 1]} : vector<16x64xf32> to vector<2x64xf32>
    %113 = arith.addf %112, %105 : vector<2x64xf32>
    %114 = arith.negf %113 : vector<2x64xf32>
    %115 = math.exp %114 : vector<2x64xf32>
    %cst_69 = arith.constant 1.000000e+00 : f32
    %116 = vector.broadcast %cst_69 : f32 to vector<2x64xf32>
    %117 = arith.addf %116, %115 : vector<2x64xf32>
    %118 = arith.divf %116, %117 : vector<2x64xf32>
    %119 = vector.extract_strided_slice %18 {offsets = [4, 0], sizes = [2, 64], strides = [1, 1]} : vector<16x64xf32> to vector<2x64xf32>
    %120 = arith.addf %119, %108 : vector<2x64xf32>
    %121 = arith.negf %120 : vector<2x64xf32>
    %122 = math.exp %121 : vector<2x64xf32>
    %cst_70 = arith.constant 1.000000e+00 : f32
    %123 = vector.broadcast %cst_70 : f32 to vector<2x64xf32>
    %124 = arith.addf %123, %122 : vector<2x64xf32>
    %125 = arith.divf %123, %124 : vector<2x64xf32>
    %126 = vector.extract_strided_slice %25 {offsets = [4, 0], sizes = [2, 64], strides = [1, 1]} : vector<16x64xf32> to vector<2x64xf32>
    %127 = arith.mulf %118, %111 : vector<2x64xf32>
    %128 = arith.addf %126, %127 : vector<2x64xf32>
    %129 = math.tanh %128 : vector<2x64xf32>
    %cst_71 = arith.constant 1.000000e+00 : f32
    %130 = vector.broadcast %cst_71 : f32 to vector<2x64xf32>
    %131 = arith.subf %130, %125 : vector<2x64xf32>
    %132 = arith.mulf %131, %129 : vector<2x64xf32>
    %133 = arith.mulf %125, %102 : vector<2x64xf32>
    %134 = arith.addf %132, %133 : vector<2x64xf32>
    %cst_72 = arith.constant dense<0.000000e+00> : vector<2x64xf32>
    %135 = tpu.matmul %134, %27, %cst_72 {dimension_numbers = #tpu.dot_dimension_numbers<[1], [0], [0], [1], [0, 0, 1, 1], [], []>} : vector<2x64xf32>, vector<64x64xf32>, vector<2x64xf32> -> vector<2x64xf32>
    %136 = vector.broadcast %33 : vector<1x64xf32> to vector<2x64xf32>
    %137 = arith.addf %135, %136 : vector<2x64xf32>
    %cst_73 = arith.constant dense<0.000000e+00> : vector<2x64xf32>
    %138 = tpu.matmul %134, %29, %cst_73 {dimension_numbers = #tpu.dot_dimension_numbers<[1], [0], [0], [1], [0, 0, 1, 1], [], []>} : vector<2x64xf32>, vector<64x64xf32>, vector<2x64xf32> -> vector<2x64xf32>
    %139 = vector.broadcast %35 : vector<1x64xf32> to vector<2x64xf32>
    %140 = arith.addf %138, %139 : vector<2x64xf32>
    %cst_74 = arith.constant dense<0.000000e+00> : vector<2x64xf32>
    %141 = tpu.matmul %134, %31, %cst_74 {dimension_numbers = #tpu.dot_dimension_numbers<[1], [0], [0], [1], [0, 0, 1, 1], [], []>} : vector<2x64xf32>, vector<64x64xf32>, vector<2x64xf32> -> vector<2x64xf32>
    %142 = vector.broadcast %37 : vector<1x64xf32> to vector<2x64xf32>
    %143 = arith.addf %141, %142 : vector<2x64xf32>
    %144 = vector.extract_strided_slice %11 {offsets = [6, 0], sizes = [2, 64], strides = [1, 1]} : vector<16x64xf32> to vector<2x64xf32>
    %145 = arith.addf %144, %137 : vector<2x64xf32>
    %146 = arith.negf %145 : vector<2x64xf32>
    %147 = math.exp %146 : vector<2x64xf32>
    %cst_75 = arith.constant 1.000000e+00 : f32
    %148 = vector.broadcast %cst_75 : f32 to vector<2x64xf32>
    %149 = arith.addf %148, %147 : vector<2x64xf32>
    %150 = arith.divf %148, %149 : vector<2x64xf32>
    %151 = vector.extract_strided_slice %18 {offsets = [6, 0], sizes = [2, 64], strides = [1, 1]} : vector<16x64xf32> to vector<2x64xf32>
    %152 = arith.addf %151, %140 : vector<2x64xf32>
    %153 = arith.negf %152 : vector<2x64xf32>
    %154 = math.exp %153 : vector<2x64xf32>
    %cst_76 = arith.constant 1.000000e+00 : f32
    %155 = vector.broadcast %cst_76 : f32 to vector<2x64xf32>
    %156 = arith.addf %155, %154 : vector<2x64xf32>
    %157 = arith.divf %155, %156 : vector<2x64xf32>
    %158 = vector.extract_strided_slice %25 {offsets = [6, 0], sizes = [2, 64], strides = [1, 1]} : vector<16x64xf32> to vector<2x64xf32>
    %159 = arith.mulf %150, %143 : vector<2x64xf32>
    %160 = arith.addf %158, %159 : vector<2x64xf32>
    %161 = math.tanh %160 : vector<2x64xf32>
    %cst_77 = arith.constant 1.000000e+00 : f32
    %162 = vector.broadcast %cst_77 : f32 to vector<2x64xf32>
    %163 = arith.subf %162, %157 : vector<2x64xf32>
    %164 = arith.mulf %163, %161 : vector<2x64xf32>
    %165 = arith.mulf %157, %134 : vector<2x64xf32>
    %166 = arith.addf %164, %165 : vector<2x64xf32>
    %cst_78 = arith.constant dense<0.000000e+00> : vector<2x64xf32>
    %167 = tpu.matmul %166, %27, %cst_78 {dimension_numbers = #tpu.dot_dimension_numbers<[1], [0], [0], [1], [0, 0, 1, 1], [], []>} : vector<2x64xf32>, vector<64x64xf32>, vector<2x64xf32> -> vector<2x64xf32>
    %168 = vector.broadcast %33 : vector<1x64xf32> to vector<2x64xf32>
    %169 = arith.addf %167, %168 : vector<2x64xf32>
    %cst_79 = arith.constant dense<0.000000e+00> : vector<2x64xf32>
    %170 = tpu.matmul %166, %29, %cst_79 {dimension_numbers = #tpu.dot_dimension_numbers<[1], [0], [0], [1], [0, 0, 1, 1], [], []>} : vector<2x64xf32>, vector<64x64xf32>, vector<2x64xf32> -> vector<2x64xf32>
    %171 = vector.broadcast %35 : vector<1x64xf32> to vector<2x64xf32>
    %172 = arith.addf %170, %171 : vector<2x64xf32>
    %cst_80 = arith.constant dense<0.000000e+00> : vector<2x64xf32>
    %173 = tpu.matmul %166, %31, %cst_80 {dimension_numbers = #tpu.dot_dimension_numbers<[1], [0], [0], [1], [0, 0, 1, 1], [], []>} : vector<2x64xf32>, vector<64x64xf32>, vector<2x64xf32> -> vector<2x64xf32>
    %174 = vector.broadcast %37 : vector<1x64xf32> to vector<2x64xf32>
    %175 = arith.addf %173, %174 : vector<2x64xf32>
    %176 = vector.extract_strided_slice %11 {offsets = [8, 0], sizes = [2, 64], strides = [1, 1]} : vector<16x64xf32> to vector<2x64xf32>
    %177 = arith.addf %176, %169 : vector<2x64xf32>
    %178 = arith.negf %177 : vector<2x64xf32>
    %179 = math.exp %178 : vector<2x64xf32>
    %cst_81 = arith.constant 1.000000e+00 : f32
    %180 = vector.broadcast %cst_81 : f32 to vector<2x64xf32>
    %181 = arith.addf %180, %179 : vector<2x64xf32>
    %182 = arith.divf %180, %181 : vector<2x64xf32>
    %183 = vector.extract_strided_slice %18 {offsets = [8, 0], sizes = [2, 64], strides = [1, 1]} : vector<16x64xf32> to vector<2x64xf32>
    %184 = arith.addf %183, %172 : vector<2x64xf32>
    %185 = arith.negf %184 : vector<2x64xf32>
    %186 = math.exp %185 : vector<2x64xf32>
    %cst_82 = arith.constant 1.000000e+00 : f32
    %187 = vector.broadcast %cst_82 : f32 to vector<2x64xf32>
    %188 = arith.addf %187, %186 : vector<2x64xf32>
    %189 = arith.divf %187, %188 : vector<2x64xf32>
    %190 = vector.extract_strided_slice %25 {offsets = [8, 0], sizes = [2, 64], strides = [1, 1]} : vector<16x64xf32> to vector<2x64xf32>
    %191 = arith.mulf %182, %175 : vector<2x64xf32>
    %192 = arith.addf %190, %191 : vector<2x64xf32>
    %193 = math.tanh %192 : vector<2x64xf32>
    %cst_83 = arith.constant 1.000000e+00 : f32
    %194 = vector.broadcast %cst_83 : f32 to vector<2x64xf32>
    %195 = arith.subf %194, %189 : vector<2x64xf32>
    %196 = arith.mulf %195, %193 : vector<2x64xf32>
    %197 = arith.mulf %189, %166 : vector<2x64xf32>
    %198 = arith.addf %196, %197 : vector<2x64xf32>
    %cst_84 = arith.constant dense<0.000000e+00> : vector<2x64xf32>
    %199 = tpu.matmul %198, %27, %cst_84 {dimension_numbers = #tpu.dot_dimension_numbers<[1], [0], [0], [1], [0, 0, 1, 1], [], []>} : vector<2x64xf32>, vector<64x64xf32>, vector<2x64xf32> -> vector<2x64xf32>
    %200 = vector.broadcast %33 : vector<1x64xf32> to vector<2x64xf32>
    %201 = arith.addf %199, %200 : vector<2x64xf32>
    %cst_85 = arith.constant dense<0.000000e+00> : vector<2x64xf32>
    %202 = tpu.matmul %198, %29, %cst_85 {dimension_numbers = #tpu.dot_dimension_numbers<[1], [0], [0], [1], [0, 0, 1, 1], [], []>} : vector<2x64xf32>, vector<64x64xf32>, vector<2x64xf32> -> vector<2x64xf32>
    %203 = vector.broadcast %35 : vector<1x64xf32> to vector<2x64xf32>
    %204 = arith.addf %202, %203 : vector<2x64xf32>
    %cst_86 = arith.constant dense<0.000000e+00> : vector<2x64xf32>
    %205 = tpu.matmul %198, %31, %cst_86 {dimension_numbers = #tpu.dot_dimension_numbers<[1], [0], [0], [1], [0, 0, 1, 1], [], []>} : vector<2x64xf32>, vector<64x64xf32>, vector<2x64xf32> -> vector<2x64xf32>
    %206 = vector.broadcast %37 : vector<1x64xf32> to vector<2x64xf32>
    %207 = arith.addf %205, %206 : vector<2x64xf32>
    %208 = vector.extract_strided_slice %11 {offsets = [10, 0], sizes = [2, 64], strides = [1, 1]} : vector<16x64xf32> to vector<2x64xf32>
    %209 = arith.addf %208, %201 : vector<2x64xf32>
    %210 = arith.negf %209 : vector<2x64xf32>
    %211 = math.exp %210 : vector<2x64xf32>
    %cst_87 = arith.constant 1.000000e+00 : f32
    %212 = vector.broadcast %cst_87 : f32 to vector<2x64xf32>
    %213 = arith.addf %212, %211 : vector<2x64xf32>
    %214 = arith.divf %212, %213 : vector<2x64xf32>
    %215 = vector.extract_strided_slice %18 {offsets = [10, 0], sizes = [2, 64], strides = [1, 1]} : vector<16x64xf32> to vector<2x64xf32>
    %216 = arith.addf %215, %204 : vector<2x64xf32>
    %217 = arith.negf %216 : vector<2x64xf32>
    %218 = math.exp %217 : vector<2x64xf32>
    %cst_88 = arith.constant 1.000000e+00 : f32
    %219 = vector.broadcast %cst_88 : f32 to vector<2x64xf32>
    %220 = arith.addf %219, %218 : vector<2x64xf32>
    %221 = arith.divf %219, %220 : vector<2x64xf32>
    %222 = vector.extract_strided_slice %25 {offsets = [10, 0], sizes = [2, 64], strides = [1, 1]} : vector<16x64xf32> to vector<2x64xf32>
    %223 = arith.mulf %214, %207 : vector<2x64xf32>
    %224 = arith.addf %222, %223 : vector<2x64xf32>
    %225 = math.tanh %224 : vector<2x64xf32>
    %cst_89 = arith.constant 1.000000e+00 : f32
    %226 = vector.broadcast %cst_89 : f32 to vector<2x64xf32>
    %227 = arith.subf %226, %221 : vector<2x64xf32>
    %228 = arith.mulf %227, %225 : vector<2x64xf32>
    %229 = arith.mulf %221, %198 : vector<2x64xf32>
    %230 = arith.addf %228, %229 : vector<2x64xf32>
    %cst_90 = arith.constant dense<0.000000e+00> : vector<2x64xf32>
    %231 = tpu.matmul %230, %27, %cst_90 {dimension_numbers = #tpu.dot_dimension_numbers<[1], [0], [0], [1], [0, 0, 1, 1], [], []>} : vector<2x64xf32>, vector<64x64xf32>, vector<2x64xf32> -> vector<2x64xf32>
    %232 = vector.broadcast %33 : vector<1x64xf32> to vector<2x64xf32>
    %233 = arith.addf %231, %232 : vector<2x64xf32>
    %cst_91 = arith.constant dense<0.000000e+00> : vector<2x64xf32>
    %234 = tpu.matmul %230, %29, %cst_91 {dimension_numbers = #tpu.dot_dimension_numbers<[1], [0], [0], [1], [0, 0, 1, 1], [], []>} : vector<2x64xf32>, vector<64x64xf32>, vector<2x64xf32> -> vector<2x64xf32>
    %235 = vector.broadcast %35 : vector<1x64xf32> to vector<2x64xf32>
    %236 = arith.addf %234, %235 : vector<2x64xf32>
    %cst_92 = arith.constant dense<0.000000e+00> : vector<2x64xf32>
    %237 = tpu.matmul %230, %31, %cst_92 {dimension_numbers = #tpu.dot_dimension_numbers<[1], [0], [0], [1], [0, 0, 1, 1], [], []>} : vector<2x64xf32>, vector<64x64xf32>, vector<2x64xf32> -> vector<2x64xf32>
    %238 = vector.broadcast %37 : vector<1x64xf32> to vector<2x64xf32>
    %239 = arith.addf %237, %238 : vector<2x64xf32>
    %240 = vector.extract_strided_slice %11 {offsets = [12, 0], sizes = [2, 64], strides = [1, 1]} : vector<16x64xf32> to vector<2x64xf32>
    %241 = arith.addf %240, %233 : vector<2x64xf32>
    %242 = arith.negf %241 : vector<2x64xf32>
    %243 = math.exp %242 : vector<2x64xf32>
    %cst_93 = arith.constant 1.000000e+00 : f32
    %244 = vector.broadcast %cst_93 : f32 to vector<2x64xf32>
    %245 = arith.addf %244, %243 : vector<2x64xf32>
    %246 = arith.divf %244, %245 : vector<2x64xf32>
    %247 = vector.extract_strided_slice %18 {offsets = [12, 0], sizes = [2, 64], strides = [1, 1]} : vector<16x64xf32> to vector<2x64xf32>
    %248 = arith.addf %247, %236 : vector<2x64xf32>
    %249 = arith.negf %248 : vector<2x64xf32>
    %250 = math.exp %249 : vector<2x64xf32>
    %cst_94 = arith.constant 1.000000e+00 : f32
    %251 = vector.broadcast %cst_94 : f32 to vector<2x64xf32>
    %252 = arith.addf %251, %250 : vector<2x64xf32>
    %253 = arith.divf %251, %252 : vector<2x64xf32>
    %254 = vector.extract_strided_slice %25 {offsets = [12, 0], sizes = [2, 64], strides = [1, 1]} : vector<16x64xf32> to vector<2x64xf32>
    %255 = arith.mulf %246, %239 : vector<2x64xf32>
    %256 = arith.addf %254, %255 : vector<2x64xf32>
    %257 = math.tanh %256 : vector<2x64xf32>
    %cst_95 = arith.constant 1.000000e+00 : f32
    %258 = vector.broadcast %cst_95 : f32 to vector<2x64xf32>
    %259 = arith.subf %258, %253 : vector<2x64xf32>
    %260 = arith.mulf %259, %257 : vector<2x64xf32>
    %261 = arith.mulf %253, %230 : vector<2x64xf32>
    %262 = arith.addf %260, %261 : vector<2x64xf32>
    %cst_96 = arith.constant dense<0.000000e+00> : vector<2x64xf32>
    %263 = tpu.matmul %262, %27, %cst_96 {dimension_numbers = #tpu.dot_dimension_numbers<[1], [0], [0], [1], [0, 0, 1, 1], [], []>} : vector<2x64xf32>, vector<64x64xf32>, vector<2x64xf32> -> vector<2x64xf32>
    %264 = vector.broadcast %33 : vector<1x64xf32> to vector<2x64xf32>
    %265 = arith.addf %263, %264 : vector<2x64xf32>
    %cst_97 = arith.constant dense<0.000000e+00> : vector<2x64xf32>
    %266 = tpu.matmul %262, %29, %cst_97 {dimension_numbers = #tpu.dot_dimension_numbers<[1], [0], [0], [1], [0, 0, 1, 1], [], []>} : vector<2x64xf32>, vector<64x64xf32>, vector<2x64xf32> -> vector<2x64xf32>
    %267 = vector.broadcast %35 : vector<1x64xf32> to vector<2x64xf32>
    %268 = arith.addf %266, %267 : vector<2x64xf32>
    %cst_98 = arith.constant dense<0.000000e+00> : vector<2x64xf32>
    %269 = tpu.matmul %262, %31, %cst_98 {dimension_numbers = #tpu.dot_dimension_numbers<[1], [0], [0], [1], [0, 0, 1, 1], [], []>} : vector<2x64xf32>, vector<64x64xf32>, vector<2x64xf32> -> vector<2x64xf32>
    %270 = vector.broadcast %37 : vector<1x64xf32> to vector<2x64xf32>
    %271 = arith.addf %269, %270 : vector<2x64xf32>
    %272 = vector.extract_strided_slice %11 {offsets = [14, 0], sizes = [2, 64], strides = [1, 1]} : vector<16x64xf32> to vector<2x64xf32>
    %273 = arith.addf %272, %265 : vector<2x64xf32>
    %274 = arith.negf %273 : vector<2x64xf32>
    %275 = math.exp %274 : vector<2x64xf32>
    %cst_99 = arith.constant 1.000000e+00 : f32
    %276 = vector.broadcast %cst_99 : f32 to vector<2x64xf32>
    %277 = arith.addf %276, %275 : vector<2x64xf32>
    %278 = arith.divf %276, %277 : vector<2x64xf32>
    %279 = vector.extract_strided_slice %18 {offsets = [14, 0], sizes = [2, 64], strides = [1, 1]} : vector<16x64xf32> to vector<2x64xf32>
    %280 = arith.addf %279, %268 : vector<2x64xf32>
    %281 = arith.negf %280 : vector<2x64xf32>
    %282 = math.exp %281 : vector<2x64xf32>
    %cst_100 = arith.constant 1.000000e+00 : f32
    %283 = vector.broadcast %cst_100 : f32 to vector<2x64xf32>
    %284 = arith.addf %283, %282 : vector<2x64xf32>
    %285 = arith.divf %283, %284 : vector<2x64xf32>
    %286 = vector.extract_strided_slice %25 {offsets = [14, 0], sizes = [2, 64], strides = [1, 1]} : vector<16x64xf32> to vector<2x64xf32>
    %287 = arith.mulf %278, %271 : vector<2x64xf32>
    %288 = arith.addf %286, %287 : vector<2x64xf32>
    %289 = math.tanh %288 : vector<2x64xf32>
    %cst_101 = arith.constant 1.000000e+00 : f32
    %290 = vector.broadcast %cst_101 : f32 to vector<2x64xf32>
    %291 = arith.subf %290, %285 : vector<2x64xf32>
    %292 = arith.mulf %291, %289 : vector<2x64xf32>
    %293 = arith.mulf %285, %262 : vector<2x64xf32>
    %294 = arith.addf %292, %293 : vector<2x64xf32>
    %295 = tpu.concatenate %70, %102, %134, %166, %198, %230, %262, %294 in 0 : vector<2x64xf32>, vector<2x64xf32>, vector<2x64xf32>, vector<2x64xf32>, vector<2x64xf32>, vector<2x64xf32>, vector<2x64xf32>, vector<2x64xf32> -> vector<16x64xf32>
    %c1_102 = arith.constant 1 : index
    %c0_103 = arith.constant 0 : index
    %c0_104 = arith.constant 0 : index
    %c0_105 = arith.constant 0 : index
    %296 = vector.load %arg3[%c1_102, %c0_103, %c0_104, %c0_105] : memref<2x3x64x64xf32, #tpu.memory_space<vmem>>, vector<1x1x64x64xf32>
    %297 = vector.shape_cast %296 : vector<1x1x64x64xf32> to vector<64x64xf32>
    %cst_106 = arith.constant dense<0.000000e+00> : vector<16x64xf32>
    %298 = tpu.matmul %295, %297, %cst_106 {dimension_numbers = #tpu.dot_dimension_numbers<[1], [0], [0], [1], [0, 0, 1, 1], [], []>} : vector<16x64xf32>, vector<64x64xf32>, vector<16x64xf32> -> vector<16x64xf32>
    %c1_107 = arith.constant 1 : index
    %c0_108 = arith.constant 0 : index
    %c0_109 = arith.constant 0 : index
    %c0_110 = arith.constant 0 : index
    %299 = vector.load %arg4[%c1_107, %c0_108, %c0_109, %c0_110] : memref<2x3x1x64xf32, #tpu.memory_space<vmem>>, vector<1x1x1x64xf32>
    %300 = vector.shape_cast %299 : vector<1x1x1x64xf32> to vector<1x64xf32>
    %301 = vector.broadcast %300 : vector<1x64xf32> to vector<16x64xf32>
    %302 = arith.addf %298, %301 : vector<16x64xf32>
    %c1_111 = arith.constant 1 : index
    %c1_112 = arith.constant 1 : index
    %c0_113 = arith.constant 0 : index
    %c0_114 = arith.constant 0 : index
    %303 = vector.load %arg3[%c1_111, %c1_112, %c0_113, %c0_114] : memref<2x3x64x64xf32, #tpu.memory_space<vmem>>, vector<1x1x64x64xf32>
    %304 = vector.shape_cast %303 : vector<1x1x64x64xf32> to vector<64x64xf32>
    %cst_115 = arith.constant dense<0.000000e+00> : vector<16x64xf32>
    %305 = tpu.matmul %295, %304, %cst_115 {dimension_numbers = #tpu.dot_dimension_numbers<[1], [0], [0], [1], [0, 0, 1, 1], [], []>} : vector<16x64xf32>, vector<64x64xf32>, vector<16x64xf32> -> vector<16x64xf32>
    %c1_116 = arith.constant 1 : index
    %c1_117 = arith.constant 1 : index
    %c0_118 = arith.constant 0 : index
    %c0_119 = arith.constant 0 : index
    %306 = vector.load %arg4[%c1_116, %c1_117, %c0_118, %c0_119] : memref<2x3x1x64xf32, #tpu.memory_space<vmem>>, vector<1x1x1x64xf32>
    %307 = vector.shape_cast %306 : vector<1x1x1x64xf32> to vector<1x64xf32>
    %308 = vector.broadcast %307 : vector<1x64xf32> to vector<16x64xf32>
    %309 = arith.addf %305, %308 : vector<16x64xf32>
    %c1_120 = arith.constant 1 : index
    %c2_121 = arith.constant 2 : index
    %c0_122 = arith.constant 0 : index
    %c0_123 = arith.constant 0 : index
    %310 = vector.load %arg3[%c1_120, %c2_121, %c0_122, %c0_123] : memref<2x3x64x64xf32, #tpu.memory_space<vmem>>, vector<1x1x64x64xf32>
    %311 = vector.shape_cast %310 : vector<1x1x64x64xf32> to vector<64x64xf32>
    %cst_124 = arith.constant dense<0.000000e+00> : vector<16x64xf32>
    %312 = tpu.matmul %295, %311, %cst_124 {dimension_numbers = #tpu.dot_dimension_numbers<[1], [0], [0], [1], [0, 0, 1, 1], [], []>} : vector<16x64xf32>, vector<64x64xf32>, vector<16x64xf32> -> vector<16x64xf32>
    %c1_125 = arith.constant 1 : index
    %c2_126 = arith.constant 2 : index
    %c0_127 = arith.constant 0 : index
    %c0_128 = arith.constant 0 : index
    %313 = vector.load %arg4[%c1_125, %c2_126, %c0_127, %c0_128] : memref<2x3x1x64xf32, #tpu.memory_space<vmem>>, vector<1x1x1x64xf32>
    %314 = vector.shape_cast %313 : vector<1x1x1x64xf32> to vector<1x64xf32>
    %315 = vector.broadcast %314 : vector<1x64xf32> to vector<16x64xf32>
    %316 = arith.addf %312, %315 : vector<16x64xf32>
    %c1_129 = arith.constant 1 : index
    %c0_130 = arith.constant 0 : index
    %c0_131 = arith.constant 0 : index
    %c0_132 = arith.constant 0 : index
    %317 = vector.load %arg5[%c1_129, %c0_130, %c0_131, %c0_132] : memref<2x3x64x64xf32, #tpu.memory_space<vmem>>, vector<1x1x64x64xf32>
    %318 = vector.shape_cast %317 : vector<1x1x64x64xf32> to vector<64x64xf32>
    %c1_133 = arith.constant 1 : index
    %c1_134 = arith.constant 1 : index
    %c0_135 = arith.constant 0 : index
    %c0_136 = arith.constant 0 : index
    %319 = vector.load %arg5[%c1_133, %c1_134, %c0_135, %c0_136] : memref<2x3x64x64xf32, #tpu.memory_space<vmem>>, vector<1x1x64x64xf32>
    %320 = vector.shape_cast %319 : vector<1x1x64x64xf32> to vector<64x64xf32>
    %c1_137 = arith.constant 1 : index
    %c2_138 = arith.constant 2 : index
    %c0_139 = arith.constant 0 : index
    %c0_140 = arith.constant 0 : index
    %321 = vector.load %arg5[%c1_137, %c2_138, %c0_139, %c0_140] : memref<2x3x64x64xf32, #tpu.memory_space<vmem>>, vector<1x1x64x64xf32>
    %322 = vector.shape_cast %321 : vector<1x1x64x64xf32> to vector<64x64xf32>
    %c1_141 = arith.constant 1 : index
    %c0_142 = arith.constant 0 : index
    %c0_143 = arith.constant 0 : index
    %c0_144 = arith.constant 0 : index
    %323 = vector.load %arg6[%c1_141, %c0_142, %c0_143, %c0_144] : memref<2x3x1x64xf32, #tpu.memory_space<vmem>>, vector<1x1x1x64xf32>
    %324 = vector.shape_cast %323 : vector<1x1x1x64xf32> to vector<1x64xf32>
    %c1_145 = arith.constant 1 : index
    %c1_146 = arith.constant 1 : index
    %c0_147 = arith.constant 0 : index
    %c0_148 = arith.constant 0 : index
    %325 = vector.load %arg6[%c1_145, %c1_146, %c0_147, %c0_148] : memref<2x3x1x64xf32, #tpu.memory_space<vmem>>, vector<1x1x1x64xf32>
    %326 = vector.shape_cast %325 : vector<1x1x1x64xf32> to vector<1x64xf32>
    %c1_149 = arith.constant 1 : index
    %c2_150 = arith.constant 2 : index
    %c0_151 = arith.constant 0 : index
    %c0_152 = arith.constant 0 : index
    %327 = vector.load %arg6[%c1_149, %c2_150, %c0_151, %c0_152] : memref<2x3x1x64xf32, #tpu.memory_space<vmem>>, vector<1x1x1x64xf32>
    %328 = vector.shape_cast %327 : vector<1x1x1x64xf32> to vector<1x64xf32>
    %cst_153 = arith.constant 0.000000e+00 : f32
    %329 = vector.broadcast %cst_153 : f32 to vector<2x64xf32>
    %cst_154 = arith.constant dense<0.000000e+00> : vector<2x64xf32>
    %330 = tpu.matmul %329, %318, %cst_154 {dimension_numbers = #tpu.dot_dimension_numbers<[1], [0], [0], [1], [0, 0, 1, 1], [], []>} : vector<2x64xf32>, vector<64x64xf32>, vector<2x64xf32> -> vector<2x64xf32>
    %331 = vector.broadcast %324 : vector<1x64xf32> to vector<2x64xf32>
    %332 = arith.addf %330, %331 : vector<2x64xf32>
    %cst_155 = arith.constant dense<0.000000e+00> : vector<2x64xf32>
    %333 = tpu.matmul %329, %320, %cst_155 {dimension_numbers = #tpu.dot_dimension_numbers<[1], [0], [0], [1], [0, 0, 1, 1], [], []>} : vector<2x64xf32>, vector<64x64xf32>, vector<2x64xf32> -> vector<2x64xf32>
    %334 = vector.broadcast %326 : vector<1x64xf32> to vector<2x64xf32>
    %335 = arith.addf %333, %334 : vector<2x64xf32>
    %cst_156 = arith.constant dense<0.000000e+00> : vector<2x64xf32>
    %336 = tpu.matmul %329, %322, %cst_156 {dimension_numbers = #tpu.dot_dimension_numbers<[1], [0], [0], [1], [0, 0, 1, 1], [], []>} : vector<2x64xf32>, vector<64x64xf32>, vector<2x64xf32> -> vector<2x64xf32>
    %337 = vector.broadcast %328 : vector<1x64xf32> to vector<2x64xf32>
    %338 = arith.addf %336, %337 : vector<2x64xf32>
    %339 = vector.extract_strided_slice %302 {offsets = [0, 0], sizes = [2, 64], strides = [1, 1]} : vector<16x64xf32> to vector<2x64xf32>
    %340 = arith.addf %339, %332 : vector<2x64xf32>
    %341 = arith.negf %340 : vector<2x64xf32>
    %342 = math.exp %341 : vector<2x64xf32>
    %cst_157 = arith.constant 1.000000e+00 : f32
    %343 = vector.broadcast %cst_157 : f32 to vector<2x64xf32>
    %344 = arith.addf %343, %342 : vector<2x64xf32>
    %345 = arith.divf %343, %344 : vector<2x64xf32>
    %346 = vector.extract_strided_slice %309 {offsets = [0, 0], sizes = [2, 64], strides = [1, 1]} : vector<16x64xf32> to vector<2x64xf32>
    %347 = arith.addf %346, %335 : vector<2x64xf32>
    %348 = arith.negf %347 : vector<2x64xf32>
    %349 = math.exp %348 : vector<2x64xf32>
    %cst_158 = arith.constant 1.000000e+00 : f32
    %350 = vector.broadcast %cst_158 : f32 to vector<2x64xf32>
    %351 = arith.addf %350, %349 : vector<2x64xf32>
    %352 = arith.divf %350, %351 : vector<2x64xf32>
    %353 = vector.extract_strided_slice %316 {offsets = [0, 0], sizes = [2, 64], strides = [1, 1]} : vector<16x64xf32> to vector<2x64xf32>
    %354 = arith.mulf %345, %338 : vector<2x64xf32>
    %355 = arith.addf %353, %354 : vector<2x64xf32>
    %356 = math.tanh %355 : vector<2x64xf32>
    %cst_159 = arith.constant 1.000000e+00 : f32
    %357 = vector.broadcast %cst_159 : f32 to vector<2x64xf32>
    %358 = arith.subf %357, %352 : vector<2x64xf32>
    %359 = arith.mulf %358, %356 : vector<2x64xf32>
    %360 = arith.mulf %352, %329 : vector<2x64xf32>
    %361 = arith.addf %359, %360 : vector<2x64xf32>
    %cst_160 = arith.constant dense<0.000000e+00> : vector<2x64xf32>
    %362 = tpu.matmul %361, %318, %cst_160 {dimension_numbers = #tpu.dot_dimension_numbers<[1], [0], [0], [1], [0, 0, 1, 1], [], []>} : vector<2x64xf32>, vector<64x64xf32>, vector<2x64xf32> -> vector<2x64xf32>
    %363 = vector.broadcast %324 : vector<1x64xf32> to vector<2x64xf32>
    %364 = arith.addf %362, %363 : vector<2x64xf32>
    %cst_161 = arith.constant dense<0.000000e+00> : vector<2x64xf32>
    %365 = tpu.matmul %361, %320, %cst_161 {dimension_numbers = #tpu.dot_dimension_numbers<[1], [0], [0], [1], [0, 0, 1, 1], [], []>} : vector<2x64xf32>, vector<64x64xf32>, vector<2x64xf32> -> vector<2x64xf32>
    %366 = vector.broadcast %326 : vector<1x64xf32> to vector<2x64xf32>
    %367 = arith.addf %365, %366 : vector<2x64xf32>
    %cst_162 = arith.constant dense<0.000000e+00> : vector<2x64xf32>
    %368 = tpu.matmul %361, %322, %cst_162 {dimension_numbers = #tpu.dot_dimension_numbers<[1], [0], [0], [1], [0, 0, 1, 1], [], []>} : vector<2x64xf32>, vector<64x64xf32>, vector<2x64xf32> -> vector<2x64xf32>
    %369 = vector.broadcast %328 : vector<1x64xf32> to vector<2x64xf32>
    %370 = arith.addf %368, %369 : vector<2x64xf32>
    %371 = vector.extract_strided_slice %302 {offsets = [2, 0], sizes = [2, 64], strides = [1, 1]} : vector<16x64xf32> to vector<2x64xf32>
    %372 = arith.addf %371, %364 : vector<2x64xf32>
    %373 = arith.negf %372 : vector<2x64xf32>
    %374 = math.exp %373 : vector<2x64xf32>
    %cst_163 = arith.constant 1.000000e+00 : f32
    %375 = vector.broadcast %cst_163 : f32 to vector<2x64xf32>
    %376 = arith.addf %375, %374 : vector<2x64xf32>
    %377 = arith.divf %375, %376 : vector<2x64xf32>
    %378 = vector.extract_strided_slice %309 {offsets = [2, 0], sizes = [2, 64], strides = [1, 1]} : vector<16x64xf32> to vector<2x64xf32>
    %379 = arith.addf %378, %367 : vector<2x64xf32>
    %380 = arith.negf %379 : vector<2x64xf32>
    %381 = math.exp %380 : vector<2x64xf32>
    %cst_164 = arith.constant 1.000000e+00 : f32
    %382 = vector.broadcast %cst_164 : f32 to vector<2x64xf32>
    %383 = arith.addf %382, %381 : vector<2x64xf32>
    %384 = arith.divf %382, %383 : vector<2x64xf32>
    %385 = vector.extract_strided_slice %316 {offsets = [2, 0], sizes = [2, 64], strides = [1, 1]} : vector<16x64xf32> to vector<2x64xf32>
    %386 = arith.mulf %377, %370 : vector<2x64xf32>
    %387 = arith.addf %385, %386 : vector<2x64xf32>
    %388 = math.tanh %387 : vector<2x64xf32>
    %cst_165 = arith.constant 1.000000e+00 : f32
    %389 = vector.broadcast %cst_165 : f32 to vector<2x64xf32>
    %390 = arith.subf %389, %384 : vector<2x64xf32>
    %391 = arith.mulf %390, %388 : vector<2x64xf32>
    %392 = arith.mulf %384, %361 : vector<2x64xf32>
    %393 = arith.addf %391, %392 : vector<2x64xf32>
    %cst_166 = arith.constant dense<0.000000e+00> : vector<2x64xf32>
    %394 = tpu.matmul %393, %318, %cst_166 {dimension_numbers = #tpu.dot_dimension_numbers<[1], [0], [0], [1], [0, 0, 1, 1], [], []>} : vector<2x64xf32>, vector<64x64xf32>, vector<2x64xf32> -> vector<2x64xf32>
    %395 = vector.broadcast %324 : vector<1x64xf32> to vector<2x64xf32>
    %396 = arith.addf %394, %395 : vector<2x64xf32>
    %cst_167 = arith.constant dense<0.000000e+00> : vector<2x64xf32>
    %397 = tpu.matmul %393, %320, %cst_167 {dimension_numbers = #tpu.dot_dimension_numbers<[1], [0], [0], [1], [0, 0, 1, 1], [], []>} : vector<2x64xf32>, vector<64x64xf32>, vector<2x64xf32> -> vector<2x64xf32>
    %398 = vector.broadcast %326 : vector<1x64xf32> to vector<2x64xf32>
    %399 = arith.addf %397, %398 : vector<2x64xf32>
    %cst_168 = arith.constant dense<0.000000e+00> : vector<2x64xf32>
    %400 = tpu.matmul %393, %322, %cst_168 {dimension_numbers = #tpu.dot_dimension_numbers<[1], [0], [0], [1], [0, 0, 1, 1], [], []>} : vector<2x64xf32>, vector<64x64xf32>, vector<2x64xf32> -> vector<2x64xf32>
    %401 = vector.broadcast %328 : vector<1x64xf32> to vector<2x64xf32>
    %402 = arith.addf %400, %401 : vector<2x64xf32>
    %403 = vector.extract_strided_slice %302 {offsets = [4, 0], sizes = [2, 64], strides = [1, 1]} : vector<16x64xf32> to vector<2x64xf32>
    %404 = arith.addf %403, %396 : vector<2x64xf32>
    %405 = arith.negf %404 : vector<2x64xf32>
    %406 = math.exp %405 : vector<2x64xf32>
    %cst_169 = arith.constant 1.000000e+00 : f32
    %407 = vector.broadcast %cst_169 : f32 to vector<2x64xf32>
    %408 = arith.addf %407, %406 : vector<2x64xf32>
    %409 = arith.divf %407, %408 : vector<2x64xf32>
    %410 = vector.extract_strided_slice %309 {offsets = [4, 0], sizes = [2, 64], strides = [1, 1]} : vector<16x64xf32> to vector<2x64xf32>
    %411 = arith.addf %410, %399 : vector<2x64xf32>
    %412 = arith.negf %411 : vector<2x64xf32>
    %413 = math.exp %412 : vector<2x64xf32>
    %cst_170 = arith.constant 1.000000e+00 : f32
    %414 = vector.broadcast %cst_170 : f32 to vector<2x64xf32>
    %415 = arith.addf %414, %413 : vector<2x64xf32>
    %416 = arith.divf %414, %415 : vector<2x64xf32>
    %417 = vector.extract_strided_slice %316 {offsets = [4, 0], sizes = [2, 64], strides = [1, 1]} : vector<16x64xf32> to vector<2x64xf32>
    %418 = arith.mulf %409, %402 : vector<2x64xf32>
    %419 = arith.addf %417, %418 : vector<2x64xf32>
    %420 = math.tanh %419 : vector<2x64xf32>
    %cst_171 = arith.constant 1.000000e+00 : f32
    %421 = vector.broadcast %cst_171 : f32 to vector<2x64xf32>
    %422 = arith.subf %421, %416 : vector<2x64xf32>
    %423 = arith.mulf %422, %420 : vector<2x64xf32>
    %424 = arith.mulf %416, %393 : vector<2x64xf32>
    %425 = arith.addf %423, %424 : vector<2x64xf32>
    %cst_172 = arith.constant dense<0.000000e+00> : vector<2x64xf32>
    %426 = tpu.matmul %425, %318, %cst_172 {dimension_numbers = #tpu.dot_dimension_numbers<[1], [0], [0], [1], [0, 0, 1, 1], [], []>} : vector<2x64xf32>, vector<64x64xf32>, vector<2x64xf32> -> vector<2x64xf32>
    %427 = vector.broadcast %324 : vector<1x64xf32> to vector<2x64xf32>
    %428 = arith.addf %426, %427 : vector<2x64xf32>
    %cst_173 = arith.constant dense<0.000000e+00> : vector<2x64xf32>
    %429 = tpu.matmul %425, %320, %cst_173 {dimension_numbers = #tpu.dot_dimension_numbers<[1], [0], [0], [1], [0, 0, 1, 1], [], []>} : vector<2x64xf32>, vector<64x64xf32>, vector<2x64xf32> -> vector<2x64xf32>
    %430 = vector.broadcast %326 : vector<1x64xf32> to vector<2x64xf32>
    %431 = arith.addf %429, %430 : vector<2x64xf32>
    %cst_174 = arith.constant dense<0.000000e+00> : vector<2x64xf32>
    %432 = tpu.matmul %425, %322, %cst_174 {dimension_numbers = #tpu.dot_dimension_numbers<[1], [0], [0], [1], [0, 0, 1, 1], [], []>} : vector<2x64xf32>, vector<64x64xf32>, vector<2x64xf32> -> vector<2x64xf32>
    %433 = vector.broadcast %328 : vector<1x64xf32> to vector<2x64xf32>
    %434 = arith.addf %432, %433 : vector<2x64xf32>
    %435 = vector.extract_strided_slice %302 {offsets = [6, 0], sizes = [2, 64], strides = [1, 1]} : vector<16x64xf32> to vector<2x64xf32>
    %436 = arith.addf %435, %428 : vector<2x64xf32>
    %437 = arith.negf %436 : vector<2x64xf32>
    %438 = math.exp %437 : vector<2x64xf32>
    %cst_175 = arith.constant 1.000000e+00 : f32
    %439 = vector.broadcast %cst_175 : f32 to vector<2x64xf32>
    %440 = arith.addf %439, %438 : vector<2x64xf32>
    %441 = arith.divf %439, %440 : vector<2x64xf32>
    %442 = vector.extract_strided_slice %309 {offsets = [6, 0], sizes = [2, 64], strides = [1, 1]} : vector<16x64xf32> to vector<2x64xf32>
    %443 = arith.addf %442, %431 : vector<2x64xf32>
    %444 = arith.negf %443 : vector<2x64xf32>
    %445 = math.exp %444 : vector<2x64xf32>
    %cst_176 = arith.constant 1.000000e+00 : f32
    %446 = vector.broadcast %cst_176 : f32 to vector<2x64xf32>
    %447 = arith.addf %446, %445 : vector<2x64xf32>
    %448 = arith.divf %446, %447 : vector<2x64xf32>
    %449 = vector.extract_strided_slice %316 {offsets = [6, 0], sizes = [2, 64], strides = [1, 1]} : vector<16x64xf32> to vector<2x64xf32>
    %450 = arith.mulf %441, %434 : vector<2x64xf32>
    %451 = arith.addf %449, %450 : vector<2x64xf32>
    %452 = math.tanh %451 : vector<2x64xf32>
    %cst_177 = arith.constant 1.000000e+00 : f32
    %453 = vector.broadcast %cst_177 : f32 to vector<2x64xf32>
    %454 = arith.subf %453, %448 : vector<2x64xf32>
    %455 = arith.mulf %454, %452 : vector<2x64xf32>
    %456 = arith.mulf %448, %425 : vector<2x64xf32>
    %457 = arith.addf %455, %456 : vector<2x64xf32>
    %cst_178 = arith.constant dense<0.000000e+00> : vector<2x64xf32>
    %458 = tpu.matmul %457, %318, %cst_178 {dimension_numbers = #tpu.dot_dimension_numbers<[1], [0], [0], [1], [0, 0, 1, 1], [], []>} : vector<2x64xf32>, vector<64x64xf32>, vector<2x64xf32> -> vector<2x64xf32>
    %459 = vector.broadcast %324 : vector<1x64xf32> to vector<2x64xf32>
    %460 = arith.addf %458, %459 : vector<2x64xf32>
    %cst_179 = arith.constant dense<0.000000e+00> : vector<2x64xf32>
    %461 = tpu.matmul %457, %320, %cst_179 {dimension_numbers = #tpu.dot_dimension_numbers<[1], [0], [0], [1], [0, 0, 1, 1], [], []>} : vector<2x64xf32>, vector<64x64xf32>, vector<2x64xf32> -> vector<2x64xf32>
    %462 = vector.broadcast %326 : vector<1x64xf32> to vector<2x64xf32>
    %463 = arith.addf %461, %462 : vector<2x64xf32>
    %cst_180 = arith.constant dense<0.000000e+00> : vector<2x64xf32>
    %464 = tpu.matmul %457, %322, %cst_180 {dimension_numbers = #tpu.dot_dimension_numbers<[1], [0], [0], [1], [0, 0, 1, 1], [], []>} : vector<2x64xf32>, vector<64x64xf32>, vector<2x64xf32> -> vector<2x64xf32>
    %465 = vector.broadcast %328 : vector<1x64xf32> to vector<2x64xf32>
    %466 = arith.addf %464, %465 : vector<2x64xf32>
    %467 = vector.extract_strided_slice %302 {offsets = [8, 0], sizes = [2, 64], strides = [1, 1]} : vector<16x64xf32> to vector<2x64xf32>
    %468 = arith.addf %467, %460 : vector<2x64xf32>
    %469 = arith.negf %468 : vector<2x64xf32>
    %470 = math.exp %469 : vector<2x64xf32>
    %cst_181 = arith.constant 1.000000e+00 : f32
    %471 = vector.broadcast %cst_181 : f32 to vector<2x64xf32>
    %472 = arith.addf %471, %470 : vector<2x64xf32>
    %473 = arith.divf %471, %472 : vector<2x64xf32>
    %474 = vector.extract_strided_slice %309 {offsets = [8, 0], sizes = [2, 64], strides = [1, 1]} : vector<16x64xf32> to vector<2x64xf32>
    %475 = arith.addf %474, %463 : vector<2x64xf32>
    %476 = arith.negf %475 : vector<2x64xf32>
    %477 = math.exp %476 : vector<2x64xf32>
    %cst_182 = arith.constant 1.000000e+00 : f32
    %478 = vector.broadcast %cst_182 : f32 to vector<2x64xf32>
    %479 = arith.addf %478, %477 : vector<2x64xf32>
    %480 = arith.divf %478, %479 : vector<2x64xf32>
    %481 = vector.extract_strided_slice %316 {offsets = [8, 0], sizes = [2, 64], strides = [1, 1]} : vector<16x64xf32> to vector<2x64xf32>
    %482 = arith.mulf %473, %466 : vector<2x64xf32>
    %483 = arith.addf %481, %482 : vector<2x64xf32>
    %484 = math.tanh %483 : vector<2x64xf32>
    %cst_183 = arith.constant 1.000000e+00 : f32
    %485 = vector.broadcast %cst_183 : f32 to vector<2x64xf32>
    %486 = arith.subf %485, %480 : vector<2x64xf32>
    %487 = arith.mulf %486, %484 : vector<2x64xf32>
    %488 = arith.mulf %480, %457 : vector<2x64xf32>
    %489 = arith.addf %487, %488 : vector<2x64xf32>
    %cst_184 = arith.constant dense<0.000000e+00> : vector<2x64xf32>
    %490 = tpu.matmul %489, %318, %cst_184 {dimension_numbers = #tpu.dot_dimension_numbers<[1], [0], [0], [1], [0, 0, 1, 1], [], []>} : vector<2x64xf32>, vector<64x64xf32>, vector<2x64xf32> -> vector<2x64xf32>
    %491 = vector.broadcast %324 : vector<1x64xf32> to vector<2x64xf32>
    %492 = arith.addf %490, %491 : vector<2x64xf32>
    %cst_185 = arith.constant dense<0.000000e+00> : vector<2x64xf32>
    %493 = tpu.matmul %489, %320, %cst_185 {dimension_numbers = #tpu.dot_dimension_numbers<[1], [0], [0], [1], [0, 0, 1, 1], [], []>} : vector<2x64xf32>, vector<64x64xf32>, vector<2x64xf32> -> vector<2x64xf32>
    %494 = vector.broadcast %326 : vector<1x64xf32> to vector<2x64xf32>
    %495 = arith.addf %493, %494 : vector<2x64xf32>
    %cst_186 = arith.constant dense<0.000000e+00> : vector<2x64xf32>
    %496 = tpu.matmul %489, %322, %cst_186 {dimension_numbers = #tpu.dot_dimension_numbers<[1], [0], [0], [1], [0, 0, 1, 1], [], []>} : vector<2x64xf32>, vector<64x64xf32>, vector<2x64xf32> -> vector<2x64xf32>
    %497 = vector.broadcast %328 : vector<1x64xf32> to vector<2x64xf32>
    %498 = arith.addf %496, %497 : vector<2x64xf32>
    %499 = vector.extract_strided_slice %302 {offsets = [10, 0], sizes = [2, 64], strides = [1, 1]} : vector<16x64xf32> to vector<2x64xf32>
    %500 = arith.addf %499, %492 : vector<2x64xf32>
    %501 = arith.negf %500 : vector<2x64xf32>
    %502 = math.exp %501 : vector<2x64xf32>
    %cst_187 = arith.constant 1.000000e+00 : f32
    %503 = vector.broadcast %cst_187 : f32 to vector<2x64xf32>
    %504 = arith.addf %503, %502 : vector<2x64xf32>
    %505 = arith.divf %503, %504 : vector<2x64xf32>
    %506 = vector.extract_strided_slice %309 {offsets = [10, 0], sizes = [2, 64], strides = [1, 1]} : vector<16x64xf32> to vector<2x64xf32>
    %507 = arith.addf %506, %495 : vector<2x64xf32>
    %508 = arith.negf %507 : vector<2x64xf32>
    %509 = math.exp %508 : vector<2x64xf32>
    %cst_188 = arith.constant 1.000000e+00 : f32
    %510 = vector.broadcast %cst_188 : f32 to vector<2x64xf32>
    %511 = arith.addf %510, %509 : vector<2x64xf32>
    %512 = arith.divf %510, %511 : vector<2x64xf32>
    %513 = vector.extract_strided_slice %316 {offsets = [10, 0], sizes = [2, 64], strides = [1, 1]} : vector<16x64xf32> to vector<2x64xf32>
    %514 = arith.mulf %505, %498 : vector<2x64xf32>
    %515 = arith.addf %513, %514 : vector<2x64xf32>
    %516 = math.tanh %515 : vector<2x64xf32>
    %cst_189 = arith.constant 1.000000e+00 : f32
    %517 = vector.broadcast %cst_189 : f32 to vector<2x64xf32>
    %518 = arith.subf %517, %512 : vector<2x64xf32>
    %519 = arith.mulf %518, %516 : vector<2x64xf32>
    %520 = arith.mulf %512, %489 : vector<2x64xf32>
    %521 = arith.addf %519, %520 : vector<2x64xf32>
    %cst_190 = arith.constant dense<0.000000e+00> : vector<2x64xf32>
    %522 = tpu.matmul %521, %318, %cst_190 {dimension_numbers = #tpu.dot_dimension_numbers<[1], [0], [0], [1], [0, 0, 1, 1], [], []>} : vector<2x64xf32>, vector<64x64xf32>, vector<2x64xf32> -> vector<2x64xf32>
    %523 = vector.broadcast %324 : vector<1x64xf32> to vector<2x64xf32>
    %524 = arith.addf %522, %523 : vector<2x64xf32>
    %cst_191 = arith.constant dense<0.000000e+00> : vector<2x64xf32>
    %525 = tpu.matmul %521, %320, %cst_191 {dimension_numbers = #tpu.dot_dimension_numbers<[1], [0], [0], [1], [0, 0, 1, 1], [], []>} : vector<2x64xf32>, vector<64x64xf32>, vector<2x64xf32> -> vector<2x64xf32>
    %526 = vector.broadcast %326 : vector<1x64xf32> to vector<2x64xf32>
    %527 = arith.addf %525, %526 : vector<2x64xf32>
    %cst_192 = arith.constant dense<0.000000e+00> : vector<2x64xf32>
    %528 = tpu.matmul %521, %322, %cst_192 {dimension_numbers = #tpu.dot_dimension_numbers<[1], [0], [0], [1], [0, 0, 1, 1], [], []>} : vector<2x64xf32>, vector<64x64xf32>, vector<2x64xf32> -> vector<2x64xf32>
    %529 = vector.broadcast %328 : vector<1x64xf32> to vector<2x64xf32>
    %530 = arith.addf %528, %529 : vector<2x64xf32>
    %531 = vector.extract_strided_slice %302 {offsets = [12, 0], sizes = [2, 64], strides = [1, 1]} : vector<16x64xf32> to vector<2x64xf32>
    %532 = arith.addf %531, %524 : vector<2x64xf32>
    %533 = arith.negf %532 : vector<2x64xf32>
    %534 = math.exp %533 : vector<2x64xf32>
    %cst_193 = arith.constant 1.000000e+00 : f32
    %535 = vector.broadcast %cst_193 : f32 to vector<2x64xf32>
    %536 = arith.addf %535, %534 : vector<2x64xf32>
    %537 = arith.divf %535, %536 : vector<2x64xf32>
    %538 = vector.extract_strided_slice %309 {offsets = [12, 0], sizes = [2, 64], strides = [1, 1]} : vector<16x64xf32> to vector<2x64xf32>
    %539 = arith.addf %538, %527 : vector<2x64xf32>
    %540 = arith.negf %539 : vector<2x64xf32>
    %541 = math.exp %540 : vector<2x64xf32>
    %cst_194 = arith.constant 1.000000e+00 : f32
    %542 = vector.broadcast %cst_194 : f32 to vector<2x64xf32>
    %543 = arith.addf %542, %541 : vector<2x64xf32>
    %544 = arith.divf %542, %543 : vector<2x64xf32>
    %545 = vector.extract_strided_slice %316 {offsets = [12, 0], sizes = [2, 64], strides = [1, 1]} : vector<16x64xf32> to vector<2x64xf32>
    %546 = arith.mulf %537, %530 : vector<2x64xf32>
    %547 = arith.addf %545, %546 : vector<2x64xf32>
    %548 = math.tanh %547 : vector<2x64xf32>
    %cst_195 = arith.constant 1.000000e+00 : f32
    %549 = vector.broadcast %cst_195 : f32 to vector<2x64xf32>
    %550 = arith.subf %549, %544 : vector<2x64xf32>
    %551 = arith.mulf %550, %548 : vector<2x64xf32>
    %552 = arith.mulf %544, %521 : vector<2x64xf32>
    %553 = arith.addf %551, %552 : vector<2x64xf32>
    %cst_196 = arith.constant dense<0.000000e+00> : vector<2x64xf32>
    %554 = tpu.matmul %553, %318, %cst_196 {dimension_numbers = #tpu.dot_dimension_numbers<[1], [0], [0], [1], [0, 0, 1, 1], [], []>} : vector<2x64xf32>, vector<64x64xf32>, vector<2x64xf32> -> vector<2x64xf32>
    %555 = vector.broadcast %324 : vector<1x64xf32> to vector<2x64xf32>
    %556 = arith.addf %554, %555 : vector<2x64xf32>
    %cst_197 = arith.constant dense<0.000000e+00> : vector<2x64xf32>
    %557 = tpu.matmul %553, %320, %cst_197 {dimension_numbers = #tpu.dot_dimension_numbers<[1], [0], [0], [1], [0, 0, 1, 1], [], []>} : vector<2x64xf32>, vector<64x64xf32>, vector<2x64xf32> -> vector<2x64xf32>
    %558 = vector.broadcast %326 : vector<1x64xf32> to vector<2x64xf32>
    %559 = arith.addf %557, %558 : vector<2x64xf32>
    %cst_198 = arith.constant dense<0.000000e+00> : vector<2x64xf32>
    %560 = tpu.matmul %553, %322, %cst_198 {dimension_numbers = #tpu.dot_dimension_numbers<[1], [0], [0], [1], [0, 0, 1, 1], [], []>} : vector<2x64xf32>, vector<64x64xf32>, vector<2x64xf32> -> vector<2x64xf32>
    %561 = vector.broadcast %328 : vector<1x64xf32> to vector<2x64xf32>
    %562 = arith.addf %560, %561 : vector<2x64xf32>
    %563 = vector.extract_strided_slice %302 {offsets = [14, 0], sizes = [2, 64], strides = [1, 1]} : vector<16x64xf32> to vector<2x64xf32>
    %564 = arith.addf %563, %556 : vector<2x64xf32>
    %565 = arith.negf %564 : vector<2x64xf32>
    %566 = math.exp %565 : vector<2x64xf32>
    %cst_199 = arith.constant 1.000000e+00 : f32
    %567 = vector.broadcast %cst_199 : f32 to vector<2x64xf32>
    %568 = arith.addf %567, %566 : vector<2x64xf32>
    %569 = arith.divf %567, %568 : vector<2x64xf32>
    %570 = vector.extract_strided_slice %309 {offsets = [14, 0], sizes = [2, 64], strides = [1, 1]} : vector<16x64xf32> to vector<2x64xf32>
    %571 = arith.addf %570, %559 : vector<2x64xf32>
    %572 = arith.negf %571 : vector<2x64xf32>
    %573 = math.exp %572 : vector<2x64xf32>
    %cst_200 = arith.constant 1.000000e+00 : f32
    %574 = vector.broadcast %cst_200 : f32 to vector<2x64xf32>
    %575 = arith.addf %574, %573 : vector<2x64xf32>
    %576 = arith.divf %574, %575 : vector<2x64xf32>
    %577 = vector.extract_strided_slice %316 {offsets = [14, 0], sizes = [2, 64], strides = [1, 1]} : vector<16x64xf32> to vector<2x64xf32>
    %578 = arith.mulf %569, %562 : vector<2x64xf32>
    %579 = arith.addf %577, %578 : vector<2x64xf32>
    %580 = math.tanh %579 : vector<2x64xf32>
    %cst_201 = arith.constant 1.000000e+00 : f32
    %581 = vector.broadcast %cst_201 : f32 to vector<2x64xf32>
    %582 = arith.subf %581, %576 : vector<2x64xf32>
    %583 = arith.mulf %582, %580 : vector<2x64xf32>
    %584 = arith.mulf %576, %553 : vector<2x64xf32>
    %585 = arith.addf %583, %584 : vector<2x64xf32>
    %586 = tpu.concatenate %361, %393, %425, %457, %489, %521, %553, %585 in 0 : vector<2x64xf32>, vector<2x64xf32>, vector<2x64xf32>, vector<2x64xf32>, vector<2x64xf32>, vector<2x64xf32>, vector<2x64xf32>, vector<2x64xf32> -> vector<16x64xf32>
    %c0_202 = arith.constant 0 : index
    %c0_203 = arith.constant 0 : index
    %587 = vector.load %arg9[%c0_202, %c0_203] : memref<64x320xf32, #tpu.memory_space<vmem>>, vector<64x320xf32>
    %cst_204 = arith.constant dense<0.000000e+00> : vector<16x320xf32>
    %588 = tpu.matmul %586, %587, %cst_204 {dimension_numbers = #tpu.dot_dimension_numbers<[1], [0], [0], [1], [0, 0, 1, 1], [], []>} : vector<16x64xf32>, vector<64x320xf32>, vector<16x320xf32> -> vector<16x320xf32>
    %589 = math.tanh %588 : vector<16x320xf32>
    %c0_205 = arith.constant 0 : index
    %c0_206 = arith.constant 0 : index
    %590 = vector.load %arg1[%c0_205, %c0_206] : memref<16x512xf32, #tpu.memory_space<vmem>>, vector<16x512xf32>
    %c0_207 = arith.constant 0 : index
    %c0_208 = arith.constant 0 : index
    %591 = vector.load %arg7[%c0_207, %c0_208] : memref<512x320xf32, #tpu.memory_space<vmem>>, vector<512x320xf32>
    %cst_209 = arith.constant dense<0.000000e+00> : vector<16x320xf32>
    %592 = tpu.matmul %590, %591, %cst_209 {dimension_numbers = #tpu.dot_dimension_numbers<[1], [0], [0], [1], [0, 0, 1, 1], [], []>} : vector<16x512xf32>, vector<512x320xf32>, vector<16x320xf32> -> vector<16x320xf32>
    %c0_210 = arith.constant 0 : index
    %c0_211 = arith.constant 0 : index
    %593 = vector.load %arg8[%c0_210, %c0_211] : memref<1x320xf32, #tpu.memory_space<vmem>>, vector<1x320xf32>
    %594 = vector.broadcast %593 : vector<1x320xf32> to vector<16x320xf32>
    %595 = arith.addf %592, %594 : vector<16x320xf32>
    %cst_212 = arith.constant 0.000000e+00 : f32
    %596 = vector.broadcast %cst_212 : f32 to vector<16x320xf32>
    %597 = arith.maximumf %595, %596 : vector<16x320xf32>
    %598 = arith.addf %589, %597 : vector<16x320xf32>
    %c0_213 = arith.constant 0 : index
    %c0_214 = arith.constant 0 : index
    %599 = vector.load %arg10[%c0_213, %c0_214] : memref<16x320xf32, #tpu.memory_space<vmem>>, vector<16x320xf32>
    tpu.vector_store %arg10[%c0_213, %c0_214], %598 {strides = array<i32>} : memref<16x320xf32, #tpu.memory_space<vmem>>, vector<16x320xf32>,
    return
  }
}

</mosaic_0001>

<llo_original>
// kernel: df_decoder_forward.1
$region0: #{df_decoder_forward.1}
  #allocation0 [shape = 'u32[]', space=smem, size = 0x4, offset = 0x4, fixed_abs, tag = 'smem constant byte address 0x4 - core index']
  #allocation1 [shape = 'u32[144,128]{1,0:T(1,128)}', space=vmem, size = 0x12000, scoped, tag = 'internal scratch']
  %s0 = inlined_call_operand.vmem [shape: f32[16,64], index: 0, kind: input, shape index: {}]
  %s1 = inlined_call_operand.vmem [shape: f32[16,512], index: 1, kind: input, shape index: {}]
  %s2 = inlined_call_operand.vmem [shape: f32[64,64], index: 2, kind: input, shape index: {}]
  %s3 = inlined_call_operand.vmem [shape: f32[2,3,64,64], index: 3, kind: input, shape index: {}]
  %s4 = inlined_call_operand.vmem [shape: f32[2,3,1,64], index: 4, kind: input, shape index: {}]
  %s5 = inlined_call_operand.vmem [shape: f32[2,3,64,64], index: 5, kind: input, shape index: {}]
  %s6 = inlined_call_operand.vmem [shape: f32[2,3,1,64], index: 6, kind: input, shape index: {}]
  %s7 = inlined_call_operand.vmem [shape: f32[512,320], index: 7, kind: input, shape index: {}]
  %s8 = inlined_call_operand.vmem [shape: f32[1,320], index: 8, kind: input, shape index: {}]
  %s9 = inlined_call_operand.vmem [shape: f32[64,320], index: 9, kind: input, shape index: {}]
  %s10 = inlined_call_operand.vmem [shape: f32[16,320], index: 10, kind: output, shape index: {}]
  %s11 = sld [smem:[#allocation0]]
  $region50: #{df_decoder_forward.1} parent=0
    _
  %s13 = ssub.s32 1, %s11
  %s14 = scalar_select 0, %s13, %s11
  // Predicated region
  $region2: #{df_decoder_forward.1} parent=0 // pred_check
    _
  $region3: #{df_decoder_forward.1} parent=0 // pred_check_branch
    %16 = sbr.rel (0) target = $region5
  $region4: #{df_decoder_forward.1} parent=0 // pred_region
    _
  $region5: #{df_decoder_forward.1} parent=0 // pred_fallthru
    _
  // Predicated region
  $region6: #{df_decoder_forward.1} parent=0 // pred_check
    _
  $region7: #{df_decoder_forward.1} parent=0 // pred_check_branch
    %18 = sbr.rel (0) target = $region9
  $region8: #{df_decoder_forward.1} parent=0 // pred_region
    _
  $region9: #{df_decoder_forward.1} parent=0 // pred_fallthru
    _
  // Predicated region
  $region10: #{df_decoder_forward.1} parent=0 // pred_check
    _
  $region11: #{df_decoder_forward.1} parent=0 // pred_check_branch
    %20 = sbr.rel (0) target = $region13
  $region12: #{df_decoder_forward.1} parent=0 // pred_region
    _
  $region13: #{df_decoder_forward.1} parent=0 // pred_fallthru
    _
  // Predicated region
  $region14: #{df_decoder_forward.1} parent=0 // pred_check
    _
  $region15: #{df_decoder_forward.1} parent=0 // pred_check_branch
    %22 = sbr.rel (0) target = $region17
  $region16: #{df_decoder_forward.1} parent=0 // pred_region
    _
  $region17: #{df_decoder_forward.1} parent=0 // pred_fallthru
    _
  // Predicated region
  $region18: #{df_decoder_forward.1} parent=0 // pred_check
    _
  $region19: #{df_decoder_forward.1} parent=0 // pred_check_branch
    %24 = sbr.rel (0) target = $region21
  $region20: #{df_decoder_forward.1} parent=0 // pred_region
    _
  $region21: #{df_decoder_forward.1} parent=0 // pred_fallthru
    _
  // Predicated region
  $region22: #{df_decoder_forward.1} parent=0 // pred_check
    _
  $region23: #{df_decoder_forward.1} parent=0 // pred_check_branch
    %26 = sbr.rel (0) target = $region25
  $region24: #{df_decoder_forward.1} parent=0 // pred_region
    _
  $region25: #{df_decoder_forward.1} parent=0 // pred_fallthru
    _
  // Predicated region
  $region26: #{df_decoder_forward.1} parent=0 // pred_check
    _
  $region27: #{df_decoder_forward.1} parent=0 // pred_check_branch
    %28 = sbr.rel (0) target = $region29
  $region28: #{df_decoder_forward.1} parent=0 // pred_region
    _
  $region29: #{df_decoder_forward.1} parent=0 // pred_fallthru
    _
  // Predicated region
  $region30: #{df_decoder_forward.1} parent=0 // pred_check
    _
  $region31: #{df_decoder_forward.1} parent=0 // pred_check_branch
    %30 = sbr.rel (0) target = $region33
  $region32: #{df_decoder_forward.1} parent=0 // pred_region
    _
  $region33: #{df_decoder_forward.1} parent=0 // pred_fallthru
    _
  // Predicated region
  $region34: #{df_decoder_forward.1} parent=0 // pred_check
    _
  $region35: #{df_decoder_forward.1} parent=0 // pred_check_branch
    %32 = sbr.rel (0) target = $region37
  $region36: #{df_decoder_forward.1} parent=0 // pred_region
    _
  $region37: #{df_decoder_forward.1} parent=0 // pred_fallthru
    _
  // Predicated region
  $region38: #{df_decoder_forward.1} parent=0 // pred_check
    _
  $region39: #{df_decoder_forward.1} parent=0 // pred_check_branch
    %34 = sbr.rel (0) target = $region41
  $region40: #{df_decoder_forward.1} parent=0 // pred_region
    _
  $region41: #{df_decoder_forward.1} parent=0 // pred_fallthru
    _
  %v35 = vld [vmem:[%s0] sm:$0xff]
  %v36 = vld [vmem:[%s0 + $0x8] sm:$0xff]
  %v37 = vld [vmem:[%s2] sm:$0xff]
  %v38 = vld [vmem:[%s2 + $0x8] sm:$0xff]
  %v39 = vld [vmem:[%s2 + $0x10] sm:$0xff]
  %v40 = vld [vmem:[%s2 + $0x18] sm:$0xff]
  %v41 = vld [vmem:[%s2 + $0x20] sm:$0xff]
  %v42 = vld [vmem:[%s2 + $0x28] sm:$0xff]
  %v43 = vld [vmem:[%s2 + $0x30] sm:$0xff]
  %v44 = vld [vmem:[%s2 + $0x38] sm:$0xff]
  %vm45 = vcmask 523264
  %v47 = vsel %vm45, %v35, 0
  %v50 = vsel %vm45, %v36, 0
  %52 = vmatprep.subr.mxu0 0.0
  %53 = vmatpush1.msra.mxu0 %v37
  %54 = vmatprep.subr.mxu0 0.0
  %55 = vmatpush1.msra.mxu0 %v38
  %56 = vmatprep.subr.mxu0 0.0
  %57 = vmatpush1.msra.mxu0 %v39
  %58 = vmatprep.subr.mxu0 0.0
  %59 = vmatpush1.msra.mxu0 %v40
  %60 = vmatprep.subr.mxu0 0.0
  %61 = vmatpush1.msra.mxu0 %v41
  %62 = vmatprep.subr.mxu0 0.0
  %63 = vmatpush1.msra.mxu0 %v42
  %64 = vmatprep.subr.mxu0 0.0
  %65 = vmatpush1.msra.mxu0 %v43
  %66 = vmatprep.subr.mxu0 0.0
  %67 = vmatpush1.msra.mxu0 %v44
  %68 = vmatprep.subr.mxu0 0.0
  %69 = vmatpush1.msra.mxu0 0.0
  %70 = vmatprep.subr.mxu0 0.0
  %71 = vmatpush1.msra.mxu0 0.0
  %72 = vmatprep.subr.mxu0 0.0
  %73 = vmatpush1.msra.mxu0 0.0
  %74 = vmatprep.subr.mxu0 0.0
  %75 = vmatpush1.msra.mxu0 0.0
  %76 = vmatprep.subr.mxu0 0.0
  %77 = vmatpush1.msra.mxu0 0.0
  %78 = vmatprep.subr.mxu0 0.0
  %79 = vmatpush1.msra.mxu0 0.0
  %80 = vmatprep.subr.mxu0 0.0
  %81 = vmatpush1.msra.mxu0 0.0
  %82 = vmatprep.subr.mxu0 0.0
  %83 = vmatpush1.msra.mxu0 0.0
  %84 = vmatprep.subr.mxu0 0.0
  %85 = vmatpush1.msra.mxu0 0.0
  %86 = vmatprep.subr.mxu0 0.0
  %87 = vmatpush1.msra.mxu0 0.0
  %88 = vmatprep.subr.mxu0 0.0
  %89 = vmatpush1.msra.mxu0 0.0
  %90 = vmatprep.subr.mxu0 0.0
  %91 = vmatpush1.msra.mxu0 0.0
  %92 = vmatprep.subr.mxu0 0.0
  %93 = vmatpush1.msra.mxu0 0.0
  %94 = vmatprep.subr.mxu0 0.0
  %95 = vmatpush1.msra.mxu0 0.0
  %96 = vmatprep.subr.mxu0 0.0
  %97 = vmatpush1.msra.mxu0 0.0
  %98 = vmatprep.subr.mxu0 0.0
  %99 = vmatpush1.msra.mxu0 0.0
  %100 = vmatprep.subr.mxu0 0.0
  %101 = vmatpush1.msra.mxu0 0.0
  %102 = vmatprep.subr.mxu0 0.0
  %103 = vmatpush1.msra.mxu0 0.0
  %104 = vmatprep.subr.mxu0 0.0
  %105 = vmatpush1.msra.mxu0 0.0
  %106 = vmatprep.subr.mxu0 0.0
  %107 = vmatpush1.msra.mxu0 0.0
  %108 = vmatprep.subr.mxu0 0.0
  %109 = vmatpush1.msra.mxu0 0.0
  %110 = vmatprep.subr.mxu0 0.0
  %111 = vmatpush1.msra.mxu0 0.0
  %112 = vmatprep.subr.mxu0 0.0
  %113 = vmatpush1.msra.mxu0 0.0
  %114 = vmatprep.subr.mxu0 0.0
  %115 = vmatpush1.msra.mxu0 0.0
  %116 = vmatprep.mubr.f32.mxu0 0.0
  %117 = vmatmul.mubr.f32.gmra.mrb[0].mxu0 %v47
  %v118 = vpop.f32.mrb[0].mxu0
  %v119 = vadd.f32 0.0, %v118
  %v120 = vpop.f32.mrb[0].mxu0
  %121 = vmatprep.mubr.f32.mxu0 0.0
  %122 = vmatmul.mubr.f32.gmra.mrb[0].mxu0 %v50
  %v123 = vpop.f32.mrb[0].mxu0
  %v124 = vadd.f32 0.0, %v123
  %v125 = vpop.f32.mrb[0].mxu0
  %126 = vdwg.mxu0
  %v127 = vmax.f32 %v119, 0.0
  %v128 = vmax.f32 %v124, 0.0
  %v129 = vld [vmem:[%s3] sm:$0xff]
  %v130 = vld [vmem:[%s3 + $0x8] sm:$0xff]
  %v131 = vld [vmem:[%s3 + $0x10] sm:$0xff]
  %v132 = vld [vmem:[%s3 + $0x18] sm:$0xff]
  %v133 = vld [vmem:[%s3 + $0x20] sm:$0xff]
  %v134 = vld [vmem:[%s3 + $0x28] sm:$0xff]
  %v135 = vld [vmem:[%s3 + $0x30] sm:$0xff]
  %v136 = vld [vmem:[%s3 + $0x38] sm:$0xff]
  %v137 = vld [vmem:[%s4] sm:$0x1]
  %v139 = vlaneseq
  %v140 = vshrl.u32 %v139, 7
  %v141 = vsub.s32 0, %v140
  %v142 = vrot.slane %v137, %v141
  %v145 = vsel %vm45, %v127, 0
  %v148 = vsel %vm45, %v128, 0
  %150 = vmatprep.subr.mxu0 0.0
  %151 = vmatpush1.msra.mxu0 %v129
  %152 = vmatprep.subr.mxu0 0.0
  %153 = vmatpush1.msra.mxu0 %v130
  %154 = vmatprep.subr.mxu0 0.0
  %155 = vmatpush1.msra.mxu0 %v131
  %156 = vmatprep.subr.mxu0 0.0
  %157 = vmatpush1.msra.mxu0 %v132
  %158 = vmatprep.subr.mxu0 0.0
  %159 = vmatpush1.msra.mxu0 %v133
  %160 = vmatprep.subr.mxu0 0.0
  %161 = vmatpush1.msra.mxu0 %v134
  %162 = vmatprep.subr.mxu0 0.0
  %163 = vmatpush1.msra.mxu0 %v135
  %164 = vmatprep.subr.mxu0 0.0
  %165 = vmatpush1.msra.mxu0 %v136
  %166 = vmatprep.subr.mxu0 0.0
  %167 = vmatpush1.msra.mxu0 0.0
  %168 = vmatprep.subr.mxu0 0.0
  %169 = vmatpush1.msra.mxu0 0.0
  %170 = vmatprep.subr.mxu0 0.0
  %171 = vmatpush1.msra.mxu0 0.0
  %172 = vmatprep.subr.mxu0 0.0
  %173 = vmatpush1.msra.mxu0 0.0
  %174 = vmatprep.subr.mxu0 0.0
  %175 = vmatpush1.msra.mxu0 0.0
  %176 = vmatprep.subr.mxu0 0.0
  %177 = vmatpush1.msra.mxu0 0.0
  %178 = vmatprep.subr.mxu0 0.0
  %179 = vmatpush1.msra.mxu0 0.0
  %180 = vmatprep.subr.mxu0 0.0
  %181 = vmatpush1.msra.mxu0 0.0
  %182 = vmatprep.subr.mxu0 0.0
  %183 = vmatpush1.msra.mxu0 0.0
  %184 = vmatprep.subr.mxu0 0.0
  %185 = vmatpush1.msra.mxu0 0.0
  %186 = vmatprep.subr.mxu0 0.0
  %187 = vmatpush1.msra.mxu0 0.0
  %188 = vmatprep.subr.mxu0 0.0
  %189 = vmatpush1.msra.mxu0 0.0
  %190 = vmatprep.subr.mxu0 0.0
  %191 = vmatpush1.msra.mxu0 0.0
  %192 = vmatprep.subr.mxu0 0.0
  %193 = vmatpush1.msra.mxu0 0.0
  %194 = vmatprep.subr.mxu0 0.0
  %195 = vmatpush1.msra.mxu0 0.0
  %196 = vmatprep.subr.mxu0 0.0
  %197 = vmatpush1.msra.mxu0 0.0
  %198 = vmatprep.subr.mxu0 0.0
  %199 = vmatpush1.msra.mxu0 0.0
  %200 = vmatprep.subr.mxu0 0.0
  %201 = vmatpush1.msra.mxu0 0.0
  %202 = vmatprep.subr.mxu0 0.0
  %203 = vmatpush1.msra.mxu0 0.0
  %204 = vmatprep.subr.mxu0 0.0
  %205 = vmatpush1.msra.mxu0 0.0
  %206 = vmatprep.subr.mxu0 0.0
  %207 = vmatpush1.msra.mxu0 0.0
  %208 = vmatprep.subr.mxu0 0.0
  %209 = vmatpush1.msra.mxu0 0.0
  %210 = vmatprep.subr.mxu0 0.0
  %211 = vmatpush1.msra.mxu0 0.0
  %212 = vmatprep.subr.mxu0 0.0
  %213 = vmatpush1.msra.mxu0 0.0
  %214 = vmatprep.mubr.f32.mxu0 0.0
  %215 = vmatmul.mubr.f32.gmra.mrb[0].mxu0 %v145
  %v216 = vpop.f32.mrb[0].mxu0
  %v217 = vadd.f32 %v142, %v216
  %v218 = vpop.f32.mrb[0].mxu0
  %219 = vmatprep.mubr.f32.mxu0 0.0
  %220 = vmatmul.mubr.f32.gmra.mrb[0].mxu0 %v148
  %v221 = vpop.f32.mrb[0].mxu0
  %v222 = vadd.f32 %v142, %v221
  %v223 = vpop.f32.mrb[0].mxu0
  %224 = vdwg.mxu0
  %s225 = scalar_lea.vmem %s3, 64
  %v226 = vld [vmem:[%s225] sm:$0xff]
  %v227 = vld [vmem:[%s225 + $0x8] sm:$0xff]
  %v228 = vld [vmem:[%s225 + $0x10] sm:$0xff]
  %v229 = vld [vmem:[%s225 + $0x18] sm:$0xff]
  %v230 = vld [vmem:[%s225 + $0x20] sm:$0xff]
  %v231 = vld [vmem:[%s225 + $0x28] sm:$0xff]
  %v232 = vld [vmem:[%s225 + $0x30] sm:$0xff]
  %v233 = vld [vmem:[%s225 + $0x38] sm:$0xff]
  %s234 = scalar_lea.vmem %s4, 1
  %v235 = vld [vmem:[%s234] sm:$0x1]
  %v237 = vlaneseq
  %v238 = vshrl.u32 %v237, 7
  %v239 = vsub.s32 0, %v238
  %v240 = vrot.slane %v235, %v239
  %242 = vmatprep.subr.mxu0 0.0
  %243 = vmatpush1.msra.mxu0 %v226
  %244 = vmatprep.subr.mxu0 0.0
  %245 = vmatpush1.msra.mxu0 %v227
  %246 = vmatprep.subr.mxu0 0.0
  %247 = vmatpush1.msra.mxu0 %v228
  %248 = vmatprep.subr.mxu0 0.0
  %249 = vmatpush1.msra.mxu0 %v229
  %250 = vmatprep.subr.mxu0 0.0
  %251 = vmatpush1.msra.mxu0 %v230
  %252 = vmatprep.subr.mxu0 0.0
  %253 = vmatpush1.msra.mxu0 %v231
  %254 = vmatprep.subr.mxu0 0.0
  %255 = vmatpush1.msra.mxu0 %v232
  %256 = vmatprep.subr.mxu0 0.0
  %257 = vmatpush1.msra.mxu0 %v233
  %258 = vmatprep.subr.mxu0 0.0
  %259 = vmatpush1.msra.mxu0 0.0
  %260 = vmatprep.subr.mxu0 0.0
  %261 = vmatpush1.msra.mxu0 0.0
  %262 = vmatprep.subr.mxu0 0.0
  %263 = vmatpush1.msra.mxu0 0.0
  %264 = vmatprep.subr.mxu0 0.0
  %265 = vmatpush1.msra.mxu0 0.0
  %266 = vmatprep.subr.mxu0 0.0
  %267 = vmatpush1.msra.mxu0 0.0
  %268 = vmatprep.subr.mxu0 0.0
  %269 = vmatpush1.msra.mxu0 0.0
  %270 = vmatprep.subr.mxu0 0.0
  %271 = vmatpush1.msra.mxu0 0.0
  %272 = vmatprep.subr.mxu0 0.0
  %273 = vmatpush1.msra.mxu0 0.0
  %274 = vmatprep.subr.mxu0 0.0
  %275 = vmatpush1.msra.mxu0 0.0
  %276 = vmatprep.subr.mxu0 0.0
  %277 = vmatpush1.msra.mxu0 0.0
  %278 = vmatprep.subr.mxu0 0.0
  %279 = vmatpush1.msra.mxu0 0.0
  %280 = vmatprep.subr.mxu0 0.0
  %281 = vmatpush1.msra.mxu0 0.0
  %282 = vmatprep.subr.mxu0 0.0
  %283 = vmatpush1.msra.mxu0 0.0
  %284 = vmatprep.subr.mxu0 0.0
  %285 = vmatpush1.msra.mxu0 0.0
  %286 = vmatprep.subr.mxu0 0.0
  %287 = vmatpush1.msra.mxu0 0.0
  %288 = vmatprep.subr.mxu0 0.0
  %289 = vmatpush1.msra.mxu0 0.0
  %290 = vmatprep.subr.mxu0 0.0
  %291 = vmatpush1.msra.mxu0 0.0
  %292 = vmatprep.subr.mxu0 0.0
  %293 = vmatpush1.msra.mxu0 0.0
  %294 = vmatprep.subr.mxu0 0.0
  %295 = vmatpush1.msra.mxu0 0.0
  %296 = vmatprep.subr.mxu0 0.0
  %297 = vmatpush1.msra.mxu0 0.0
  %298 = vmatprep.subr.mxu0 0.0
  %299 = vmatpush1.msra.mxu0 0.0
  %300 = vmatprep.subr.mxu0 0.0
  %301 = vmatpush1.msra.mxu0 0.0
  %302 = vmatprep.subr.mxu0 0.0
  %303 = vmatpush1.msra.mxu0 0.0
  %304 = vmatprep.subr.mxu0 0.0
  %305 = vmatpush1.msra.mxu0 0.0
  %306 = vmatprep.mubr.f32.mxu0 0.0
  %307 = vmatmul.mubr.f32.gmra.mrb[0].mxu0 %v145
  %v308 = vpop.f32.mrb[0].mxu0
  %v309 = vadd.f32 %v240, %v308
  %v310 = vpop.f32.mrb[0].mxu0
  %311 = vmatprep.mubr.f32.mxu0 0.0
  %312 = vmatmul.mubr.f32.gmra.mrb[0].mxu0 %v148
  %v313 = vpop.f32.mrb[0].mxu0
  %v314 = vadd.f32 %v240, %v313
  %v315 = vpop.f32.mrb[0].mxu0
  %316 = vdwg.mxu0
  %s317 = scalar_lea.vmem %s3, 128
  %v318 = vld [vmem:[%s317] sm:$0xff]
  %v319 = vld [vmem:[%s317 + $0x8] sm:$0xff]
  %v320 = vld [vmem:[%s317 + $0x10] sm:$0xff]
  %v321 = vld [vmem:[%s317 + $0x18] sm:$0xff]
  %v322 = vld [vmem:[%s317 + $0x20] sm:$0xff]
  %v323 = vld [vmem:[%s317 + $0x28] sm:$0xff]
  %v324 = vld [vmem:[%s317 + $0x30] sm:$0xff]
  %v325 = vld [vmem:[%s317 + $0x38] sm:$0xff]
  %s326 = scalar_lea.vmem %s4, 2
  %v327 = vld [vmem:[%s326] sm:$0x1]
  %v329 = vlaneseq
  %v330 = vshrl.u32 %v329, 7
  %v331 = vsub.s32 0, %v330
  %v332 = vrot.slane %v327, %v331
  %334 = vmatprep.subr.mxu0 0.0
  %335 = vmatpush1.msra.mxu0 %v318
  %336 = vmatprep.subr.mxu0 0.0
  %337 = vmatpush1.msra.mxu0 %v319
  %338 = vmatprep.subr.mxu0 0.0
  %339 = vmatpush1.msra.mxu0 %v320
  %340 = vmatprep.subr.mxu0 0.0
  %341 = vmatpush1.msra.mxu0 %v321
  %342 = vmatprep.subr.mxu0 0.0
  %343 = vmatpush1.msra.mxu0 %v322
  %344 = vmatprep.subr.mxu0 0.0
  %345 = vmatpush1.msra.mxu0 %v323
  %346 = vmatprep.subr.mxu0 0.0
  %347 = vmatpush1.msra.mxu0 %v324
  %348 = vmatprep.subr.mxu0 0.0
  %349 = vmatpush1.msra.mxu0 %v325
  %350 = vmatprep.subr.mxu0 0.0
  %351 = vmatpush1.msra.mxu0 0.0
  %352 = vmatprep.subr.mxu0 0.0
  %353 = vmatpush1.msra.mxu0 0.0
  %354 = vmatprep.subr.mxu0 0.0
  %355 = vmatpush1.msra.mxu0 0.0
  %356 = vmatprep.subr.mxu0 0.0
  %357 = vmatpush1.msra.mxu0 0.0
  %358 = vmatprep.subr.mxu0 0.0
  %359 = vmatpush1.msra.mxu0 0.0
  %360 = vmatprep.subr.mxu0 0.0
  %361 = vmatpush1.msra.mxu0 0.0
  %362 = vmatprep.subr.mxu0 0.0
  %363 = vmatpush1.msra.mxu0 0.0
  %364 = vmatprep.subr.mxu0 0.0
  %365 = vmatpush1.msra.mxu0 0.0
  %366 = vmatprep.subr.mxu0 0.0
  %367 = vmatpush1.msra.mxu0 0.0
  %368 = vmatprep.subr.mxu0 0.0
  %369 = vmatpush1.msra.mxu0 0.0
  %370 = vmatprep.subr.mxu0 0.0
  %371 = vmatpush1.msra.mxu0 0.0
  %372 = vmatprep.subr.mxu0 0.0
  %373 = vmatpush1.msra.mxu0 0.0
  %374 = vmatprep.subr.mxu0 0.0
  %375 = vmatpush1.msra.mxu0 0.0
  %376 = vmatprep.subr.mxu0 0.0
  %377 = vmatpush1.msra.mxu0 0.0
  %378 = vmatprep.subr.mxu0 0.0
  %379 = vmatpush1.msra.mxu0 0.0
  %380 = vmatprep.subr.mxu0 0.0
  %381 = vmatpush1.msra.mxu0 0.0
  %382 = vmatprep.subr.mxu0 0.0
  %383 = vmatpush1.msra.mxu0 0.0
  %384 = vmatprep.subr.mxu0 0.0
  %385 = vmatpush1.msra.mxu0 0.0
  %386 = vmatprep.subr.mxu0 0.0
  %387 = vmatpush1.msra.mxu0 0.0
  %388 = vmatprep.subr.mxu0 0.0
  %389 = vmatpush1.msra.mxu0 0.0
  %390 = vmatprep.subr.mxu0 0.0
  %391 = vmatpush1.msra.mxu0 0.0
  %392 = vmatprep.subr.mxu0 0.0
  %393 = vmatpush1.msra.mxu0 0.0
  %394 = vmatprep.subr.mxu0 0.0
  %395 = vmatpush1.msra.mxu0 0.0
  %396 = vmatprep.subr.mxu0 0.0
  %397 = vmatpush1.msra.mxu0 0.0
  %398 = vmatprep.mubr.f32.mxu0 0.0
  %399 = vmatmul.mubr.f32.gmra.mrb[0].mxu0 %v145
  %v400 = vpop.f32.mrb[0].mxu0
  %v401 = vadd.f32 %v332, %v400
  %v402 = vpop.f32.mrb[0].mxu0
  %403 = vmatprep.mubr.f32.mxu0 0.0
  %404 = vmatmul.mubr.f32.gmra.mrb[0].mxu0 %v148
  %v405 = vpop.f32.mrb[0].mxu0
  %v406 = vadd.f32 %v332, %v405
  %v407 = vpop.f32.mrb[0].mxu0
  %408 = vdwg.mxu0
  %v409 = vld [vmem:[%s5] sm:$0xff]
  %v410 = vld [vmem:[%s5 + $0x8] sm:$0xff]
  %v411 = vld [vmem:[%s5 + $0x10] sm:$0xff]
  %v412 = vld [vmem:[%s5 + $0x18] sm:$0xff]
  %v413 = vld [vmem:[%s5 + $0x20] sm:$0xff]
  %v414 = vld [vmem:[%s5 + $0x28] sm:$0xff]
  %v415 = vld [vmem:[%s5 + $0x30] sm:$0xff]
  %v416 = vld [vmem:[%s5 + $0x38] sm:$0xff]
  %s417 = scalar_lea.vmem %s5, 64
  %v418 = vld [vmem:[%s417] sm:$0xff]
  %v419 = vld [vmem:[%s417 + $0x8] sm:$0xff]
  %v420 = vld [vmem:[%s417 + $0x10] sm:$0xff]
  %v421 = vld [vmem:[%s417 + $0x18] sm:$0xff]
  %v422 = vld [vmem:[%s417 + $0x20] sm:$0xff]
  %v423 = vld [vmem:[%s417 + $0x28] sm:$0xff]
  %v424 = vld [vmem:[%s417 + $0x30] sm:$0xff]
  %v425 = vld [vmem:[%s417 + $0x38] sm:$0xff]
  %s426 = scalar_lea.vmem %s5, 128
  %v427 = vld [vmem:[%s426] sm:$0xff]
  %v428 = vld [vmem:[%s426 + $0x8] sm:$0xff]
  %v429 = vld [vmem:[%s426 + $0x10] sm:$0xff]
  %v430 = vld [vmem:[%s426 + $0x18] sm:$0xff]
  %v431 = vld [vmem:[%s426 + $0x20] sm:$0xff]
  %v432 = vld [vmem:[%s426 + $0x28] sm:$0xff]
  %v433 = vld [vmem:[%s426 + $0x30] sm:$0xff]
  %v434 = vld [vmem:[%s426 + $0x38] sm:$0xff]
  %v435 = vld [vmem:[%s6] sm:$0x1]
  %s436 = scalar_lea.vmem %s6, 1
  %v437 = vld [vmem:[%s436] sm:$0x1]
  %s438 = scalar_lea.vmem %s6, 2
  %v439 = vld [vmem:[%s438] sm:$0x1]
  %v441 = vlaneseq
  %v442 = vshrl.u32 %v441, 7
  %v443 = vsub.s32 0, %v442
  %v444 = vrot.slane %v435, %v443
  %v447 = vsel %vm45, 0.0, 0
  %449 = vmatprep.subr.mxu0 0.0
  %450 = vmatpush1.msra.mxu0 %v409
  %451 = vmatprep.subr.mxu0 0.0
  %452 = vmatpush1.msra.mxu0 %v410
  %453 = vmatprep.subr.mxu0 0.0
  %454 = vmatpush1.msra.mxu0 %v411
  %455 = vmatprep.subr.mxu0 0.0
  %456 = vmatpush1.msra.mxu0 %v412
  %457 = vmatprep.subr.mxu0 0.0
  %458 = vmatpush1.msra.mxu0 %v413
  %459 = vmatprep.subr.mxu0 0.0
  %460 = vmatpush1.msra.mxu0 %v414
  %461 = vmatprep.subr.mxu0 0.0
  %462 = vmatpush1.msra.mxu0 %v415
  %463 = vmatprep.subr.mxu0 0.0
  %464 = vmatpush1.msra.mxu0 %v416
  %465 = vmatprep.subr.mxu0 0.0
  %466 = vmatpush1.msra.mxu0 0.0
  %467 = vmatprep.subr.mxu0 0.0
  %468 = vmatpush1.msra.mxu0 0.0
  %469 = vmatprep.subr.mxu0 0.0
  %470 = vmatpush1.msra.mxu0 0.0
  %471 = vmatprep.subr.mxu0 0.0
  %472 = vmatpush1.msra.mxu0 0.0
  %473 = vmatprep.subr.mxu0 0.0
  %474 = vmatpush1.msra.mxu0 0.0
  %475 = vmatprep.subr.mxu0 0.0
  %476 = vmatpush1.msra.mxu0 0.0
  %477 = vmatprep.subr.mxu0 0.0
  %478 = vmatpush1.msra.mxu0 0.0
  %479 = vmatprep.subr.mxu0 0.0
  %480 = vmatpush1.msra.mxu0 0.0
  %481 = vmatprep.subr.mxu0 0.0
  %482 = vmatpush1.msra.mxu0 0.0
  %483 = vmatprep.subr.mxu0 0.0
  %484 = vmatpush1.msra.mxu0 0.0
  %485 = vmatprep.subr.mxu0 0.0
  %486 = vmatpush1.msra.mxu0 0.0
  %487 = vmatprep.subr.mxu0 0.0
  %488 = vmatpush1.msra.mxu0 0.0
  %489 = vmatprep.subr.mxu0 0.0
  %490 = vmatpush1.msra.mxu0 0.0
  %491 = vmatprep.subr.mxu0 0.0
  %492 = vmatpush1.msra.mxu0 0.0
  %493 = vmatprep.subr.mxu0 0.0
  %494 = vmatpush1.msra.mxu0 0.0
  %495 = vmatprep.subr.mxu0 0.0
  %496 = vmatpush1.msra.mxu0 0.0
  %497 = vmatprep.subr.mxu0 0.0
  %498 = vmatpush1.msra.mxu0 0.0
  %499 = vmatprep.subr.mxu0 0.0
  %500 = vmatpush1.msra.mxu0 0.0
  %501 = vmatprep.subr.mxu0 0.0
  %502 = vmatpush1.msra.mxu0 0.0
  %503 = vmatprep.subr.mxu0 0.0
  %504 = vmatpush1.msra.mxu0 0.0
  %505 = vmatprep.subr.mxu0 0.0
  %506 = vmatpush1.msra.mxu0 0.0
  %507 = vmatprep.subr.mxu0 0.0
  %508 = vmatpush1.msra.mxu0 0.0
  %509 = vmatprep.subr.mxu0 0.0
  %510 = vmatpush1.msra.mxu0 0.0
  %511 = vmatprep.subr.mxu0 0.0
  %512 = vmatpush1.msra.mxu0 0.0
  %513 = vmatprep.mubr.f32.mxu0 0.0
  %514 = vmatmul.mubr.f32.gmra.mrb[0].mxu0 %v447
  %v515 = vpop.f32.mrb[0].mxu0
  %v516 = vadd.f32 %v444, %v515
  %v517 = vpop.f32.mrb[0].mxu0
  %518 = vdwg.mxu0
  %v520 = vlaneseq
  %v521 = vshrl.u32 %v520, 7
  %v522 = vsub.s32 0, %v521
  %v523 = vrot.slane %v437, %v522
  %525 = vmatprep.subr.mxu0 0.0
  %526 = vmatpush1.msra.mxu0 %v418
  %527 = vmatprep.subr.mxu0 0.0
  %528 = vmatpush1.msra.mxu0 %v419
  %529 = vmatprep.subr.mxu0 0.0
  %530 = vmatpush1.msra.mxu0 %v420
  %531 = vmatprep.subr.mxu0 0.0
  %532 = vmatpush1.msra.mxu0 %v421
  %533 = vmatprep.subr.mxu0 0.0
  %534 = vmatpush1.msra.mxu0 %v422
  %535 = vmatprep.subr.mxu0 0.0
  %536 = vmatpush1.msra.mxu0 %v423
  %537 = vmatprep.subr.mxu0 0.0
  %538 = vmatpush1.msra.mxu0 %v424
  %539 = vmatprep.subr.mxu0 0.0
  %540 = vmatpush1.msra.mxu0 %v425
  %541 = vmatprep.subr.mxu0 0.0
  %542 = vmatpush1.msra.mxu0 0.0
  %543 = vmatprep.subr.mxu0 0.0
  %544 = vmatpush1.msra.mxu0 0.0
  %545 = vmatprep.subr.mxu0 0.0
  %546 = vmatpush1.msra.mxu0 0.0
  %547 = vmatprep.subr.mxu0 0.0
  %548 = vmatpush1.msra.mxu0 0.0
  %549 = vmatprep.subr.mxu0 0.0
  %550 = vmatpush1.msra.mxu0 0.0
  %551 = vmatprep.subr.mxu0 0.0
  %552 = vmatpush1.msra.mxu0 0.0
  %553 = vmatprep.subr.mxu0 0.0
  %554 = vmatpush1.msra.mxu0 0.0
  %555 = vmatprep.subr.mxu0 0.0
  %556 = vmatpush1.msra.mxu0 0.0
  %557 = vmatprep.subr.mxu0 0.0
  %558 = vmatpush1.msra.mxu0 0.0
  %559 = vmatprep.subr.mxu0 0.0
  %560 = vmatpush1.msra.mxu0 0.0
  %561 = vmatprep.subr.mxu0 0.0
  %562 = vmatpush1.msra.mxu0 0.0
  %563 = vmatprep.subr.mxu0 0.0
  %564 = vmatpush1.msra.mxu0 0.0
  %565 = vmatprep.subr.mxu0 0.0
  %566 = vmatpush1.msra.mxu0 0.0
  %567 = vmatprep.subr.mxu0 0.0
  %568 = vmatpush1.msra.mxu0 0.0
  %569 = vmatprep.subr.mxu0 0.0
  %570 = vmatpush1.msra.mxu0 0.0
  %571 = vmatprep.subr.mxu0 0.0
  %572 = vmatpush1.msra.mxu0 0.0
  %573 = vmatprep.subr.mxu0 0.0
  %574 = vmatpush1.msra.mxu0 0.0
  %575 = vmatprep.subr.mxu0 0.0
  %576 = vmatpush1.msra.mxu0 0.0
  %577 = vmatprep.subr.mxu0 0.0
  %578 = vmatpush1.msra.mxu0 0.0
  %579 = vmatprep.subr.mxu0 0.0
  %580 = vmatpush1.msra.mxu0 0.0
  %581 = vmatprep.subr.mxu0 0.0
  %582 = vmatpush1.msra.mxu0 0.0
  %583 = vmatprep.subr.mxu0 0.0
  %584 = vmatpush1.msra.mxu0 0.0
  %585 = vmatprep.subr.mxu0 0.0
  %586 = vmatpush1.msra.mxu0 0.0
  %587 = vmatprep.subr.mxu0 0.0
  %588 = vmatpush1.msra.mxu0 0.0
  %589 = vmatprep.mubr.f32.mxu0 0.0
  %590 = vmatmul.mubr.f32.gmra.mrb[0].mxu0 %v447
  %v591 = vpop.f32.mrb[0].mxu0
  %v592 = vadd.f32 %v523, %v591
  %v593 = vpop.f32.mrb[0].mxu0
  %594 = vdwg.mxu0
  %v596 = vlaneseq
  %v597 = vshrl.u32 %v596, 7
  %v598 = vsub.s32 0, %v597
  %v599 = vrot.slane %v439, %v598
  %601 = vmatprep.subr.mxu0 0.0
  %602 = vmatpush1.msra.mxu0 %v427
  %603 = vmatprep.subr.mxu0 0.0
  %604 = vmatpush1.msra.mxu0 %v428
  %605 = vmatprep.subr.mxu0 0.0
  %606 = vmatpush1.msra.mxu0 %v429
  %607 = vmatprep.subr.mxu0 0.0
  %608 = vmatpush1.msra.mxu0 %v430
  %609 = vmatprep.subr.mxu0 0.0
  %610 = vmatpush1.msra.mxu0 %v431
  %611 = vmatprep.subr.mxu0 0.0
  %612 = vmatpush1.msra.mxu0 %v432
  %613 = vmatprep.subr.mxu0 0.0
  %614 = vmatpush1.msra.mxu0 %v433
  %615 = vmatprep.subr.mxu0 0.0
  %616 = vmatpush1.msra.mxu0 %v434
  %617 = vmatprep.subr.mxu0 0.0
  %618 = vmatpush1.msra.mxu0 0.0
  %619 = vmatprep.subr.mxu0 0.0
  %620 = vmatpush1.msra.mxu0 0.0
  %621 = vmatprep.subr.mxu0 0.0
  %622 = vmatpush1.msra.mxu0 0.0
  %623 = vmatprep.subr.mxu0 0.0
  %624 = vmatpush1.msra.mxu0 0.0
  %625 = vmatprep.subr.mxu0 0.0
  %626 = vmatpush1.msra.mxu0 0.0
  %627 = vmatprep.subr.mxu0 0.0
  %628 = vmatpush1.msra.mxu0 0.0
  %629 = vmatprep.subr.mxu0 0.0
  %630 = vmatpush1.msra.mxu0 0.0
  %631 = vmatprep.subr.mxu0 0.0
  %632 = vmatpush1.msra.mxu0 0.0
  %633 = vmatprep.subr.mxu0 0.0
  %634 = vmatpush1.msra.mxu0 0.0
  %635 = vmatprep.subr.mxu0 0.0
  %636 = vmatpush1.msra.mxu0 0.0
  %637 = vmatprep.subr.mxu0 0.0
  %638 = vmatpush1.msra.mxu0 0.0
  %639 = vmatprep.subr.mxu0 0.0
  %640 = vmatpush1.msra.mxu0 0.0
  %641 = vmatprep.subr.mxu0 0.0
  %642 = vmatpush1.msra.mxu0 0.0
  %643 = vmatprep.subr.mxu0 0.0
  %644 = vmatpush1.msra.mxu0 0.0
  %645 = vmatprep.subr.mxu0 0.0
  %646 = vmatpush1.msra.mxu0 0.0
  %647 = vmatprep.subr.mxu0 0.0
  %648 = vmatpush1.msra.mxu0 0.0
  %649 = vmatprep.subr.mxu0 0.0
  %650 = vmatpush1.msra.mxu0 0.0
  %651 = vmatprep.subr.mxu0 0.0
  %652 = vmatpush1.msra.mxu0 0.0
  %653 = vmatprep.subr.mxu0 0.0
  %654 = vmatpush1.msra.mxu0 0.0
  %655 = vmatprep.subr.mxu0 0.0
  %656 = vmatpush1.msra.mxu0 0.0
  %657 = vmatprep.subr.mxu0 0.0
  %658 = vmatpush1.msra.mxu0 0.0
  %659 = vmatprep.subr.mxu0 0.0
  %660 = vmatpush1.msra.mxu0 0.0
  %661 = vmatprep.subr.mxu0 0.0
  %662 = vmatpush1.msra.mxu0 0.0
  %663 = vmatprep.subr.mxu0 0.0
  %664 = vmatpush1.msra.mxu0 0.0
  %665 = vmatprep.mubr.f32.mxu0 0.0
  %666 = vmatmul.mubr.f32.gmra.mrb[0].mxu0 %v447
  %v667 = vpop.f32.mrb[0].mxu0
  %v668 = vadd.f32 %v599, %v667
  %v669 = vpop.f32.mrb[0].mxu0
  %670 = vdwg.mxu0
  %v671 = vadd.f32 %v217, %v516
  %v672 = vxor.u32 %v671, 2147483648
  %v673 = vmul.f32 %v672, 1.442695
  %v674 = vpow.pop %v673
  %v675 = vadd.f32 %v674, 1.0
  %v676 = vrcp.pop %v675
  %v677 = vmul.f32 1.0, %v676
  %v678 = vadd.f32 %v309, %v592
  %v679 = vxor.u32 %v678, 2147483648
  %v680 = vmul.f32 %v679, 1.442695
  %v681 = vpow.pop %v680
  %v682 = vadd.f32 %v681, 1.0
  %v683 = vrcp.pop %v682
  %v684 = vmul.f32 1.0, %v683
  %v685 = vmul.f32 %v677, %v668
  %v686 = vadd.f32 %v401, %v685
  %v687 = vtanh.pop %v686
  %v688 = vsub.f32 1.0, %v684
  %v689 = vmul.f32 %v688, %v687
  %v690 = vmul.f32 %v684, 0.0
  %v691 = vadd.f32 %v689, %v690
  %v693 = vsel %vm45, %v691, 0
  %695 = vmatprep.subr.mxu0 0.0
  %696 = vmatpush1.msra.mxu0 %v409
  %697 = vmatprep.subr.mxu0 0.0
  %698 = vmatpush1.msra.mxu0 %v410
  %699 = vmatprep.subr.mxu0 0.0
  %700 = vmatpush1.msra.mxu0 %v411
  %701 = vmatprep.subr.mxu0 0.0
  %702 = vmatpush1.msra.mxu0 %v412
  %703 = vmatprep.subr.mxu0 0.0
  %704 = vmatpush1.msra.mxu0 %v413
  %705 = vmatprep.subr.mxu0 0.0
  %706 = vmatpush1.msra.mxu0 %v414
  %707 = vmatprep.subr.mxu0 0.0
  %708 = vmatpush1.msra.mxu0 %v415
  %709 = vmatprep.subr.mxu0 0.0
  %710 = vmatpush1.msra.mxu0 %v416
  %711 = vmatprep.subr.mxu0 0.0
  %712 = vmatpush1.msra.mxu0 0.0
  %713 = vmatprep.subr.mxu0 0.0
  %714 = vmatpush1.msra.mxu0 0.0
  %715 = vmatprep.subr.mxu0 0.0
  %716 = vmatpush1.msra.mxu0 0.0
  %717 = vmatprep.subr.mxu0 0.0
  %718 = vmatpush1.msra.mxu0 0.0
  %719 = vmatprep.subr.mxu0 0.0
  %720 = vmatpush1.msra.mxu0 0.0
  %721 = vmatprep.subr.mxu0 0.0
  %722 = vmatpush1.msra.mxu0 0.0
  %723 = vmatprep.subr.mxu0 0.0
  %724 = vmatpush1.msra.mxu0 0.0
  %725 = vmatprep.subr.mxu0 0.0
  %726 = vmatpush1.msra.mxu0 0.0
  %727 = vmatprep.subr.mxu0 0.0
  %728 = vmatpush1.msra.mxu0 0.0
  %729 = vmatprep.subr.mxu0 0.0
  %730 = vmatpush1.msra.mxu0 0.0
  %731 = vmatprep.subr.mxu0 0.0
  %732 = vmatpush1.msra.mxu0 0.0
  %733 = vmatprep.subr.mxu0 0.0
  %734 = vmatpush1.msra.mxu0 0.0
  %735 = vmatprep.subr.mxu0 0.0
  %736 = vmatpush1.msra.mxu0 0.0
  %737 = vmatprep.subr.mxu0 0.0
  %738 = vmatpush1.msra.mxu0 0.0
  %739 = vmatprep.subr.mxu0 0.0
  %740 = vmatpush1.msra.mxu0 0.0
  %741 = vmatprep.subr.mxu0 0.0
  %742 = vmatpush1.msra.mxu0 0.0
  %743 = vmatprep.subr.mxu0 0.0
  %744 = vmatpush1.msra.mxu0 0.0
  %745 = vmatprep.subr.mxu0 0.0
  %746 = vmatpush1.msra.mxu0 0.0
  %747 = vmatprep.subr.mxu0 0.0
  %748 = vmatpush1.msra.mxu0 0.0
  %749 = vmatprep.subr.mxu0 0.0
  %750 = vmatpush1.msra.mxu0 0.0
  %751 = vmatprep.subr.mxu0 0.0
  %752 = vmatpush1.msra.mxu0 0.0
  %753 = vmatprep.subr.mxu0 0.0
  %754 = vmatpush1.msra.mxu0 0.0
  %755 = vmatprep.subr.mxu0 0.0
  %756 = vmatpush1.msra.mxu0 0.0
  %757 = vmatprep.subr.mxu0 0.0
  %758 = vmatpush1.msra.mxu0 0.0
  %759 = vmatprep.mubr.f32.mxu0 0.0
  %760 = vmatmul.mubr.f32.gmra.mrb[0].mxu0 %v693
  %v761 = vpop.f32.mrb[0].mxu0
  %v762 = vadd.f32 %v444, %v761
  %v763 = vpop.f32.mrb[0].mxu0
  %764 = vdwg.mxu0
  %765 = vmatprep.subr.mxu0 0.0
  %766 = vmatpush1.msra.mxu0 %v418
  %767 = vmatprep.subr.mxu0 0.0
  %768 = vmatpush1.msra.mxu0 %v419
  %769 = vmatprep.subr.mxu0 0.0
  %770 = vmatpush1.msra.mxu0 %v420
  %771 = vmatprep.subr.mxu0 0.0
  %772 = vmatpush1.msra.mxu0 %v421
  %773 = vmatprep.subr.mxu0 0.0
  %774 = vmatpush1.msra.mxu0 %v422
  %775 = vmatprep.subr.mxu0 0.0
  %776 = vmatpush1.msra.mxu0 %v423
  %777 = vmatprep.subr.mxu0 0.0
  %778 = vmatpush1.msra.mxu0 %v424
  %779 = vmatprep.subr.mxu0 0.0
  %780 = vmatpush1.msra.mxu0 %v425
  %781 = vmatprep.subr.mxu0 0.0
  %782 = vmatpush1.msra.mxu0 0.0
  %783 = vmatprep.subr.mxu0 0.0
  %784 = vmatpush1.msra.mxu0 0.0
  %785 = vmatprep.subr.mxu0 0.0
  %786 = vmatpush1.msra.mxu0 0.0
  %787 = vmatprep.subr.mxu0 0.0
  %788 = vmatpush1.msra.mxu0 0.0
  %789 = vmatprep.subr.mxu0 0.0
  %790 = vmatpush1.msra.mxu0 0.0
  %791 = vmatprep.subr.mxu0 0.0
  %792 = vmatpush1.msra.mxu0 0.0
  %793 = vmatprep.subr.mxu0 0.0
  %794 = vmatpush1.msra.mxu0 0.0
  %795 = vmatprep.subr.mxu0 0.0
  %796 = vmatpush1.msra.mxu0 0.0
  %797 = vmatprep.subr.mxu0 0.0
  %798 = vmatpush1.msra.mxu0 0.0
  %799 = vmatprep.subr.mxu0 0.0
  %800 = vmatpush1.msra.mxu0 0.0
  %801 = vmatprep.subr.mxu0 0.0
  %802 = vmatpush1.msra.mxu0 0.0
  %803 = vmatprep.subr.mxu0 0.0
  %804 = vmatpush1.msra.mxu0 0.0
  %805 = vmatprep.subr.mxu0 0.0
  %806 = vmatpush1.msra.mxu0 0.0
  %807 = vmatprep.subr.mxu0 0.0
  %808 = vmatpush1.msra.mxu0 0.0
  %809 = vmatprep.subr.mxu0 0.0
  %810 = vmatpush1.msra.mxu0 0.0
  %811 = vmatprep.subr.mxu0 0.0
  %812 = vmatpush1.msra.mxu0 0.0
  %813 = vmatprep.subr.mxu0 0.0
  %814 = vmatpush1.msra.mxu0 0.0
  %815 = vmatprep.subr.mxu0 0.0
  %816 = vmatpush1.msra.mxu0 0.0
  %817 = vmatprep.subr.mxu0 0.0
  %818 = vmatpush1.msra.mxu0 0.0
  %819 = vmatprep.subr.mxu0 0.0
  %820 = vmatpush1.msra.mxu0 0.0
  %821 = vmatprep.subr.mxu0 0.0
  %822 = vmatpush1.msra.mxu0 0.0
  %823 = vmatprep.subr.mxu0 0.0
  %824 = vmatpush1.msra.mxu0 0.0
  %825 = vmatprep.subr.mxu0 0.0
  %826 = vmatpush1.msra.mxu0 0.0
  %827 = vmatprep.subr.mxu0 0.0
  %828 = vmatpush1.msra.mxu0 0.0
  %829 = vmatprep.mubr.f32.mxu0 0.0
  %830 = vmatmul.mubr.f32.gmra.mrb[0].mxu0 %v693
  %v831 = vpop.f32.mrb[0].mxu0
  %v832 = vadd.f32 %v523, %v831
  %v833 = vpop.f32.mrb[0].mxu0
  %834 = vdwg.mxu0
  %835 = vmatprep.subr.mxu0 0.0
  %836 = vmatpush1.msra.mxu0 %v427
  %837 = vmatprep.subr.mxu0 0.0
  %838 = vmatpush1.msra.mxu0 %v428
  %839 = vmatprep.subr.mxu0 0.0
  %840 = vmatpush1.msra.mxu0 %v429
  %841 = vmatprep.subr.mxu0 0.0
  %842 = vmatpush1.msra.mxu0 %v430
  %843 = vmatprep.subr.mxu0 0.0
  %844 = vmatpush1.msra.mxu0 %v431
  %845 = vmatprep.subr.mxu0 0.0
  %846 = vmatpush1.msra.mxu0 %v432
  %847 = vmatprep.subr.mxu0 0.0
  %848 = vmatpush1.msra.mxu0 %v433
  %849 = vmatprep.subr.mxu0 0.0
  %850 = vmatpush1.msra.mxu0 %v434
  %851 = vmatprep.subr.mxu0 0.0
  %852 = vmatpush1.msra.mxu0 0.0
  %853 = vmatprep.subr.mxu0 0.0
  %854 = vmatpush1.msra.mxu0 0.0
  %855 = vmatprep.subr.mxu0 0.0
  %856 = vmatpush1.msra.mxu0 0.0
  %857 = vmatprep.subr.mxu0 0.0
  %858 = vmatpush1.msra.mxu0 0.0
  %859 = vmatprep.subr.mxu0 0.0
  %860 = vmatpush1.msra.mxu0 0.0
  %861 = vmatprep.subr.mxu0 0.0
  %862 = vmatpush1.msra.mxu0 0.0
  %863 = vmatprep.subr.mxu0 0.0
  %864 = vmatpush1.msra.mxu0 0.0
  %865 = vmatprep.subr.mxu0 0.0
  %866 = vmatpush1.msra.mxu0 0.0
  %867 = vmatprep.subr.mxu0 0.0
  %868 = vmatpush1.msra.mxu0 0.0
  %869 = vmatprep.subr.mxu0 0.0
  %870 = vmatpush1.msra.mxu0 0.0
  %871 = vmatprep.subr.mxu0 0.0
  %872 = vmatpush1.msra.mxu0 0.0
  %873 = vmatprep.subr.mxu0 0.0
  %874 = vmatpush1.msra.mxu0 0.0
  %875 = vmatprep.subr.mxu0 0.0
  %876 = vmatpush1.msra.mxu0 0.0
  %877 = vmatprep.subr.mxu0 0.0
  %878 = vmatpush1.msra.mxu0 0.0
  %879 = vmatprep.subr.mxu0 0.0
  %880 = vmatpush1.msra.mxu0 0.0
  %881 = vmatprep.subr.mxu0 0.0
  %882 = vmatpush1.msra.mxu0 0.0
  %883 = vmatprep.subr.mxu0 0.0
  %884 = vmatpush1.msra.mxu0 0.0
  %885 = vmatprep.subr.mxu0 0.0
  %886 = vmatpush1.msra.mxu0 0.0
  %887 = vmatprep.subr.mxu0 0.0
  %888 = vmatpush1.msra.mxu0 0.0
  %889 = vmatprep.subr.mxu0 0.0
  %890 = vmatpush1.msra.mxu0 0.0
  %891 = vmatprep.subr.mxu0 0.0
  %892 = vmatpush1.msra.mxu0 0.0
  %893 = vmatprep.subr.mxu0 0.0
  %894 = vmatpush1.msra.mxu0 0.0
  %895 = vmatprep.subr.mxu0 0.0
  %896 = vmatpush1.msra.mxu0 0.0
  %897 = vmatprep.subr.mxu0 0.0
  %898 = vmatpush1.msra.mxu0 0.0
  %899 = vmatprep.mubr.f32.mxu0 0.0
  %900 = vmatmul.mubr.f32.gmra.mrb[0].mxu0 %v693
  %v901 = vpop.f32.mrb[0].mxu0
  %v902 = vadd.f32 %v599, %v901
  %v903 = vpop.f32.mrb[0].mxu0
  %904 = vdwg.mxu0
  %v906 = vrot.slane %v762, 6
  %v908 = vadd.f32 %v217, %v906
  %v909 = vxor.u32 %v908, 2147483648
  %v910 = vmul.f32 %v909, 1.442695
  %v911 = vpow.pop %v910
  %v912 = vadd.f32 %v911, 1.0
  %v913 = vrcp.pop %v912
  %v914 = vmul.f32 1.0, %v913
  %v916 = vrot.slane %v832, 6
  %v918 = vadd.f32 %v309, %v916
  %v919 = vxor.u32 %v918, 2147483648
  %v920 = vmul.f32 %v919, 1.442695
  %v921 = vpow.pop %v920
  %v922 = vadd.f32 %v921, 1.0
  %v923 = vrcp.pop %v922
  %v924 = vmul.f32 1.0, %v923
  %v926 = vrot.slane %v902, 6
  %v928 = vmul.f32 %v914, %v926
  %v929 = vadd.f32 %v401, %v928
  %v930 = vtanh.pop %v929
  %v931 = vsub.f32 1.0, %v924
  %v932 = vmul.f32 %v931, %v930
  %v933 = vrot.slane %v691, 6
  %v935 = vmul.f32 %v924, %v933
  %v936 = vadd.f32 %v932, %v935
  %v938 = vrot.slane %v936, 2
  %v939 = vsel %vm45, %v938, 0
  %941 = vmatprep.subr.mxu0 0.0
  %942 = vmatpush1.msra.mxu0 %v409
  %943 = vmatprep.subr.mxu0 0.0
  %944 = vmatpush1.msra.mxu0 %v410
  %945 = vmatprep.subr.mxu0 0.0
  %946 = vmatpush1.msra.mxu0 %v411
  %947 = vmatprep.subr.mxu0 0.0
  %948 = vmatpush1.msra.mxu0 %v412
  %949 = vmatprep.subr.mxu0 0.0
  %950 = vmatpush1.msra.mxu0 %v413
  %951 = vmatprep.subr.mxu0 0.0
  %952 = vmatpush1.msra.mxu0 %v414
  %953 = vmatprep.subr.mxu0 0.0
  %954 = vmatpush1.msra.mxu0 %v415
  %955 = vmatprep.subr.mxu0 0.0
  %956 = vmatpush1.msra.mxu0 %v416
  %957 = vmatprep.subr.mxu0 0.0
  %958 = vmatpush1.msra.mxu0 0.0
  %959 = vmatprep.subr.mxu0 0.0
  %960 = vmatpush1.msra.mxu0 0.0
  %961 = vmatprep.subr.mxu0 0.0
  %962 = vmatpush1.msra.mxu0 0.0
  %963 = vmatprep.subr.mxu0 0.0
  %964 = vmatpush1.msra.mxu0 0.0
  %965 = vmatprep.subr.mxu0 0.0
  %966 = vmatpush1.msra.mxu0 0.0
  %967 = vmatprep.subr.mxu0 0.0
  %968 = vmatpush1.msra.mxu0 0.0
  %969 = vmatprep.subr.mxu0 0.0
  %970 = vmatpush1.msra.mxu0 0.0
  %971 = vmatprep.subr.mxu0 0.0
  %972 = vmatpush1.msra.mxu0 0.0
  %973 = vmatprep.subr.mxu0 0.0
  %974 = vmatpush1.msra.mxu0 0.0
  %975 = vmatprep.subr.mxu0 0.0
  %976 = vmatpush1.msra.mxu0 0.0
  %977 = vmatprep.subr.mxu0 0.0
  %978 = vmatpush1.msra.mxu0 0.0
  %979 = vmatprep.subr.mxu0 0.0
  %980 = vmatpush1.msra.mxu0 0.0
  %981 = vmatprep.subr.mxu0 0.0
  %982 = vmatpush1.msra.mxu0 0.0
  %983 = vmatprep.subr.mxu0 0.0
  %984 = vmatpush1.msra.mxu0 0.0
  %985 = vmatprep.subr.mxu0 0.0
  %986 = vmatpush1.msra.mxu0 0.0
  %987 = vmatprep.subr.mxu0 0.0
  %988 = vmatpush1.msra.mxu0 0.0
  %989 = vmatprep.subr.mxu0 0.0
  %990 = vmatpush1.msra.mxu0 0.0
  %991 = vmatprep.subr.mxu0 0.0
  %992 = vmatpush1.msra.mxu0 0.0
  %993 = vmatprep.subr.mxu0 0.0
  %994 = vmatpush1.msra.mxu0 0.0
  %995 = vmatprep.subr.mxu0 0.0
  %996 = vmatpush1.msra.mxu0 0.0
  %997 = vmatprep.subr.mxu0 0.0
  %998 = vmatpush1.msra.mxu0 0.0
  %999 = vmatprep.subr.mxu0 0.0
  %1000 = vmatpush1.msra.mxu0 0.0
  %1001 = vmatprep.subr.mxu0 0.0
  %1002 = vmatpush1.msra.mxu0 0.0
  %1003 = vmatprep.subr.mxu0 0.0
  %1004 = vmatpush1.msra.mxu0 0.0
  %1005 = vmatprep.mubr.f32.mxu0 0.0
  %1006 = vmatmul.mubr.f32.gmra.mrb[0].mxu0 %v939
  %v1007 = vpop.f32.mrb[0].mxu0
  %v1008 = vadd.f32 %v444, %v1007
  %v1009 = vpop.f32.mrb[0].mxu0
  %1010 = vdwg.mxu0
  %1011 = vmatprep.subr.mxu0 0.0
  %1012 = vmatpush1.msra.mxu0 %v418
  %1013 = vmatprep.subr.mxu0 0.0
  %1014 = vmatpush1.msra.mxu0 %v419
  %1015 = vmatprep.subr.mxu0 0.0
  %1016 = vmatpush1.msra.mxu0 %v420
  %1017 = vmatprep.subr.mxu0 0.0
  %1018 = vmatpush1.msra.mxu0 %v421
  %1019 = vmatprep.subr.mxu0 0.0
  %1020 = vmatpush1.msra.mxu0 %v422
  %1021 = vmatprep.subr.mxu0 0.0
  %1022 = vmatpush1.msra.mxu0 %v423
  %1023 = vmatprep.subr.mxu0 0.0
  %1024 = vmatpush1.msra.mxu0 %v424
  %1025 = vmatprep.subr.mxu0 0.0
  %1026 = vmatpush1.msra.mxu0 %v425
  %1027 = vmatprep.subr.mxu0 0.0
  %1028 = vmatpush1.msra.mxu0 0.0
  %1029 = vmatprep.subr.mxu0 0.0
  %1030 = vmatpush1.msra.mxu0 0.0
  %1031 = vmatprep.subr.mxu0 0.0
  %1032 = vmatpush1.msra.mxu0 0.0
  %1033 = vmatprep.subr.mxu0 0.0
  %1034 = vmatpush1.msra.mxu0 0.0
  %1035 = vmatprep.subr.mxu0 0.0
  %1036 = vmatpush1.msra.mxu0 0.0
  %1037 = vmatprep.subr.mxu0 0.0
  %1038 = vmatpush1.msra.mxu0 0.0
  %1039 = vmatprep.subr.mxu0 0.0
  %1040 = vmatpush1.msra.mxu0 0.0
  %1041 = vmatprep.subr.mxu0 0.0
  %1042 = vmatpush1.msra.mxu0 0.0
  %1043 = vmatprep.subr.mxu0 0.0
  %1044 = vmatpush1.msra.mxu0 0.0
  %1045 = vmatprep.subr.mxu0 0.0
  %1046 = vmatpush1.msra.mxu0 0.0
  %1047 = vmatprep.subr.mxu0 0.0
  %1048 = vmatpush1.msra.mxu0 0.0
  %1049 = vmatprep.subr.mxu0 0.0
  %1050 = vmatpush1.msra.mxu0 0.0
  %1051 = vmatprep.subr.mxu0 0.0
  %1052 = vmatpush1.msra.mxu0 0.0
  %1053 = vmatprep.subr.mxu0 0.0
  %1054 = vmatpush1.msra.mxu0 0.0
  %1055 = vmatprep.subr.mxu0 0.0
  %1056 = vmatpush1.msra.mxu0 0.0
  %1057 = vmatprep.subr.mxu0 0.0
  %1058 = vmatpush1.msra.mxu0 0.0
  %1059 = vmatprep.subr.mxu0 0.0
  %1060 = vmatpush1.msra.mxu0 0.0
  %1061 = vmatprep.subr.mxu0 0.0
  %1062 = vmatpush1.msra.mxu0 0.0
  %1063 = vmatprep.subr.mxu0 0.0
  %1064 = vmatpush1.msra.mxu0 0.0
  %1065 = vmatprep.subr.mxu0 0.0
  %1066 = vmatpush1.msra.mxu0 0.0
  %1067 = vmatprep.subr.mxu0 0.0
  %1068 = vmatpush1.msra.mxu0 0.0
  %1069 = vmatprep.subr.mxu0 0.0
  %1070 = vmatpush1.msra.mxu0 0.0
  %1071 = vmatprep.subr.mxu0 0.0
  %1072 = vmatpush1.msra.mxu0 0.0
  %1073 = vmatprep.subr.mxu0 0.0
  %1074 = vmatpush1.msra.mxu0 0.0
  %1075 = vmatprep.mubr.f32.mxu0 0.0
  %1076 = vmatmul.mubr.f32.gmra.mrb[0].mxu0 %v939
  %v1077 = vpop.f32.mrb[0].mxu0
  %v1078 = vadd.f32 %v523, %v1077
  %v1079 = vpop.f32.mrb[0].mxu0
  %1080 = vdwg.mxu0
  %1081 = vmatprep.subr.mxu0 0.0
  %1082 = vmatpush1.msra.mxu0 %v427
  %1083 = vmatprep.subr.mxu0 0.0
  %1084 = vmatpush1.msra.mxu0 %v428
  %1085 = vmatprep.subr.mxu0 0.0
  %1086 = vmatpush1.msra.mxu0 %v429
  %1087 = vmatprep.subr.mxu0 0.0
  %1088 = vmatpush1.msra.mxu0 %v430
  %1089 = vmatprep.subr.mxu0 0.0
  %1090 = vmatpush1.msra.mxu0 %v431
  %1091 = vmatprep.subr.mxu0 0.0
  %1092 = vmatpush1.msra.mxu0 %v432
  %1093 = vmatprep.subr.mxu0 0.0
  %1094 = vmatpush1.msra.mxu0 %v433
  %1095 = vmatprep.subr.mxu0 0.0
  %1096 = vmatpush1.msra.mxu0 %v434
  %1097 = vmatprep.subr.mxu0 0.0
  %1098 = vmatpush1.msra.mxu0 0.0
  %1099 = vmatprep.subr.mxu0 0.0
  %1100 = vmatpush1.msra.mxu0 0.0
  %1101 = vmatprep.subr.mxu0 0.0
  %1102 = vmatpush1.msra.mxu0 0.0
  %1103 = vmatprep.subr.mxu0 0.0
  %1104 = vmatpush1.msra.mxu0 0.0
  %1105 = vmatprep.subr.mxu0 0.0
  %1106 = vmatpush1.msra.mxu0 0.0
  %1107 = vmatprep.subr.mxu0 0.0
  %1108 = vmatpush1.msra.mxu0 0.0
  %1109 = vmatprep.subr.mxu0 0.0
  %1110 = vmatpush1.msra.mxu0 0.0
  %1111 = vmatprep.subr.mxu0 0.0
  %1112 = vmatpush1.msra.mxu0 0.0
  %1113 = vmatprep.subr.mxu0 0.0
  %1114 = vmatpush1.msra.mxu0 0.0
  %1115 = vmatprep.subr.mxu0 0.0
  %1116 = vmatpush1.msra.mxu0 0.0
  %1117 = vmatprep.subr.mxu0 0.0
  %1118 = vmatpush1.msra.mxu0 0.0
  %1119 = vmatprep.subr.mxu0 0.0
  %1120 = vmatpush1.msra.mxu0 0.0
  %1121 = vmatprep.subr.mxu0 0.0
  %1122 = vmatpush1.msra.mxu0 0.0
  %1123 = vmatprep.subr.mxu0 0.0
  %1124 = vmatpush1.msra.mxu0 0.0
  %1125 = vmatprep.subr.mxu0 0.0
  %1126 = vmatpush1.msra.mxu0 0.0
  %1127 = vmatprep.subr.mxu0 0.0
  %1128 = vmatpush1.msra.mxu0 0.0
  %1129 = vmatprep.subr.mxu0 0.0
  %1130 = vmatpush1.msra.mxu0 0.0
  %1131 = vmatprep.subr.mxu0 0.0
  %1132 = vmatpush1.msra.mxu0 0.0
  %1133 = vmatprep.subr.mxu0 0.0
  %1134 = vmatpush1.msra.mxu0 0.0
  %1135 = vmatprep.subr.mxu0 0.0
  %1136 = vmatpush1.msra.mxu0 0.0
  %1137 = vmatprep.subr.mxu0 0.0
  %1138 = vmatpush1.msra.mxu0 0.0
  %1139 = vmatprep.subr.mxu0 0.0
  %1140 = vmatpush1.msra.mxu0 0.0
  %1141 = vmatprep.subr.mxu0 0.0
  %1142 = vmatpush1.msra.mxu0 0.0
  %1143 = vmatprep.subr.mxu0 0.0
  %1144 = vmatpush1.msra.mxu0 0.0
  %1145 = vmatprep.mubr.f32.mxu0 0.0
  %1146 = vmatmul.mubr.f32.gmra.mrb[0].mxu0 %v939
  %v1147 = vpop.f32.mrb[0].mxu0
  %v1148 = vadd.f32 %v599, %v1147
  %v1149 = vpop.f32.mrb[0].mxu0
  %1150 = vdwg.mxu0
  %v1152 = vrot.slane %v1008, 4
  %v1154 = vadd.f32 %v217, %v1152
  %v1155 = vxor.u32 %v1154, 2147483648
  %v1156 = vmul.f32 %v1155, 1.442695
  %v1157 = vpow.pop %v1156
  %v1158 = vadd.f32 %v1157, 1.0
  %v1159 = vrcp.pop %v1158
  %v1160 = vmul.f32 1.0, %v1159
  %v1162 = vrot.slane %v1078, 4
  %v1164 = vadd.f32 %v309, %v1162
  %v1165 = vxor.u32 %v1164, 2147483648
  %v1166 = vmul.f32 %v1165, 1.442695
  %v1167 = vpow.pop %v1166
  %v1168 = vadd.f32 %v1167, 1.0
  %v1169 = vrcp.pop %v1168
  %v1170 = vmul.f32 1.0, %v1169
  %v1172 = vrot.slane %v1148, 4
  %v1174 = vmul.f32 %v1160, %v1172
  %v1175 = vadd.f32 %v401, %v1174
  %v1176 = vtanh.pop %v1175
  %v1177 = vsub.f32 1.0, %v1170
  %v1178 = vmul.f32 %v1177, %v1176
  %v1179 = vrot.slane %v936, 6
  %v1181 = vmul.f32 %v1170, %v1179
  %v1182 = vadd.f32 %v1178, %v1181
  %v1184 = vrot.slane %v1182, 4
  %v1185 = vsel %vm45, %v1184, 0
  %1187 = vmatprep.subr.mxu0 0.0
  %1188 = vmatpush1.msra.mxu0 %v409
  %1189 = vmatprep.subr.mxu0 0.0
  %1190 = vmatpush1.msra.mxu0 %v410
  %1191 = vmatprep.subr.mxu0 0.0
  %1192 = vmatpush1.msra.mxu0 %v411
  %1193 = vmatprep.subr.mxu0 0.0
  %1194 = vmatpush1.msra.mxu0 %v412
  %1195 = vmatprep.subr.mxu0 0.0
  %1196 = vmatpush1.msra.mxu0 %v413
  %1197 = vmatprep.subr.mxu0 0.0
  %1198 = vmatpush1.msra.mxu0 %v414
  %1199 = vmatprep.subr.mxu0 0.0
  %1200 = vmatpush1.msra.mxu0 %v415
  %1201 = vmatprep.subr.mxu0 0.0
  %1202 = vmatpush1.msra.mxu0 %v416
  %1203 = vmatprep.subr.mxu0 0.0
  %1204 = vmatpush1.msra.mxu0 0.0
  %1205 = vmatprep.subr.mxu0 0.0
  %1206 = vmatpush1.msra.mxu0 0.0
  %1207 = vmatprep.subr.mxu0 0.0
  %1208 = vmatpush1.msra.mxu0 0.0
  %1209 = vmatprep.subr.mxu0 0.0
  %1210 = vmatpush1.msra.mxu0 0.0
  %1211 = vmatprep.subr.mxu0 0.0
  %1212 = vmatpush1.msra.mxu0 0.0
  %1213 = vmatprep.subr.mxu0 0.0
  %1214 = vmatpush1.msra.mxu0 0.0
  %1215 = vmatprep.subr.mxu0 0.0
  %1216 = vmatpush1.msra.mxu0 0.0
  %1217 = vmatprep.subr.mxu0 0.0
  %1218 = vmatpush1.msra.mxu0 0.0
  %1219 = vmatprep.subr.mxu0 0.0
  %1220 = vmatpush1.msra.mxu0 0.0
  %1221 = vmatprep.subr.mxu0 0.0
  %1222 = vmatpush1.msra.mxu0 0.0
  %1223 = vmatprep.subr.mxu0 0.0
  %1224 = vmatpush1.msra.mxu0 0.0
  %1225 = vmatprep.subr.mxu0 0.0
  %1226 = vmatpush1.msra.mxu0 0.0
  %1227 = vmatprep.subr.mxu0 0.0
  %1228 = vmatpush1.msra.mxu0 0.0
  %1229 = vmatprep.subr.mxu0 0.0
  %1230 = vmatpush1.msra.mxu0 0.0
  %1231 = vmatprep.subr.mxu0 0.0
  %1232 = vmatpush1.msra.mxu0 0.0
  %1233 = vmatprep.subr.mxu0 0.0
  %1234 = vmatpush1.msra.mxu0 0.0
  %1235 = vmatprep.subr.mxu0 0.0
  %1236 = vmatpush1.msra.mxu0 0.0
  %1237 = vmatprep.subr.mxu0 0.0
  %1238 = vmatpush1.msra.mxu0 0.0
  %1239 = vmatprep.subr.mxu0 0.0
  %1240 = vmatpush1.msra.mxu0 0.0
  %1241 = vmatprep.subr.mxu0 0.0
  %1242 = vmatpush1.msra.mxu0 0.0
  %1243 = vmatprep.subr.mxu0 0.0
  %1244 = vmatpush1.msra.mxu0 0.0
  %1245 = vmatprep.subr.mxu0 0.0
  %1246 = vmatpush1.msra.mxu0 0.0
  %1247 = vmatprep.subr.mxu0 0.0
  %1248 = vmatpush1.msra.mxu0 0.0
  %1249 = vmatprep.subr.mxu0 0.0
  %1250 = vmatpush1.msra.mxu0 0.0
  %1251 = vmatprep.mubr.f32.mxu0 0.0
  %1252 = vmatmul.mubr.f32.gmra.mrb[0].mxu0 %v1185
  %v1253 = vpop.f32.mrb[0].mxu0
  %v1254 = vadd.f32 %v444, %v1253
  %v1255 = vpop.f32.mrb[0].mxu0
  %1256 = vdwg.mxu0
  %1257 = vmatprep.subr.mxu0 0.0
  %1258 = vmatpush1.msra.mxu0 %v418
  %1259 = vmatprep.subr.mxu0 0.0
  %1260 = vmatpush1.msra.mxu0 %v419
  %1261 = vmatprep.subr.mxu0 0.0
  %1262 = vmatpush1.msra.mxu0 %v420
  %1263 = vmatprep.subr.mxu0 0.0
  %1264 = vmatpush1.msra.mxu0 %v421
  %1265 = vmatprep.subr.mxu0 0.0
  %1266 = vmatpush1.msra.mxu0 %v422
  %1267 = vmatprep.subr.mxu0 0.0
  %1268 = vmatpush1.msra.mxu0 %v423
  %1269 = vmatprep.subr.mxu0 0.0
  %1270 = vmatpush1.msra.mxu0 %v424
  %1271 = vmatprep.subr.mxu0 0.0
  %1272 = vmatpush1.msra.mxu0 %v425
  %1273 = vmatprep.subr.mxu0 0.0
  %1274 = vmatpush1.msra.mxu0 0.0
  %1275 = vmatprep.subr.mxu0 0.0
  %1276 = vmatpush1.msra.mxu0 0.0
  %1277 = vmatprep.subr.mxu0 0.0
  %1278 = vmatpush1.msra.mxu0 0.0
  %1279 = vmatprep.subr.mxu0 0.0
  %1280 = vmatpush1.msra.mxu0 0.0
  %1281 = vmatprep.subr.mxu0 0.0
  %1282 = vmatpush1.msra.mxu0 0.0
  %1283 = vmatprep.subr.mxu0 0.0
  %1284 = vmatpush1.msra.mxu0 0.0
  %1285 = vmatprep.subr.mxu0 0.0
  %1286 = vmatpush1.msra.mxu0 0.0
  %1287 = vmatprep.subr.mxu0 0.0
  %1288 = vmatpush1.msra.mxu0 0.0
  %1289 = vmatprep.subr.mxu0 0.0
  %1290 = vmatpush1.msra.mxu0 0.0
  %1291 = vmatprep.subr.mxu0 0.0
  %1292 = vmatpush1.msra.mxu0 0.0
  %1293 = vmatprep.subr.mxu0 0.0
  %1294 = vmatpush1.msra.mxu0 0.0
  %1295 = vmatprep.subr.mxu0 0.0
  %1296 = vmatpush1.msra.mxu0 0.0
  %1297 = vmatprep.subr.mxu0 0.0
  %1298 = vmatpush1.msra.mxu0 0.0
  %1299 = vmatprep.subr.mxu0 0.0
  %1300 = vmatpush1.msra.mxu0 0.0
  %1301 = vmatprep.subr.mxu0 0.0
  %1302 = vmatpush1.msra.mxu0 0.0
  %1303 = vmatprep.subr.mxu0 0.0
  %1304 = vmatpush1.msra.mxu0 0.0
  %1305 = vmatprep.subr.mxu0 0.0
  %1306 = vmatpush1.msra.mxu0 0.0
  %1307 = vmatprep.subr.mxu0 0.0
  %1308 = vmatpush1.msra.mxu0 0.0
  %1309 = vmatprep.subr.mxu0 0.0
  %1310 = vmatpush1.msra.mxu0 0.0
  %1311 = vmatprep.subr.mxu0 0.0
  %1312 = vmatpush1.msra.mxu0 0.0
  %1313 = vmatprep.subr.mxu0 0.0
  %1314 = vmatpush1.msra.mxu0 0.0
  %1315 = vmatprep.subr.mxu0 0.0
  %1316 = vmatpush1.msra.mxu0 0.0
  %1317 = vmatprep.subr.mxu0 0.0
  %1318 = vmatpush1.msra.mxu0 0.0
  %1319 = vmatprep.subr.mxu0 0.0
  %1320 = vmatpush1.msra.mxu0 0.0
  %1321 = vmatprep.mubr.f32.mxu0 0.0
  %1322 = vmatmul.mubr.f32.gmra.mrb[0].mxu0 %v1185
  %v1323 = vpop.f32.mrb[0].mxu0
  %v1324 = vadd.f32 %v523, %v1323
  %v1325 = vpop.f32.mrb[0].mxu0
  %1326 = vdwg.mxu0
  %1327 = vmatprep.subr.mxu0 0.0
  %1328 = vmatpush1.msra.mxu0 %v427
  %1329 = vmatprep.subr.mxu0 0.0
  %1330 = vmatpush1.msra.mxu0 %v428
  %1331 = vmatprep.subr.mxu0 0.0
  %1332 = vmatpush1.msra.mxu0 %v429
  %1333 = vmatprep.subr.mxu0 0.0
  %1334 = vmatpush1.msra.mxu0 %v430
  %1335 = vmatprep.subr.mxu0 0.0
  %1336 = vmatpush1.msra.mxu0 %v431
  %1337 = vmatprep.subr.mxu0 0.0
  %1338 = vmatpush1.msra.mxu0 %v432
  %1339 = vmatprep.subr.mxu0 0.0
  %1340 = vmatpush1.msra.mxu0 %v433
  %1341 = vmatprep.subr.mxu0 0.0
  %1342 = vmatpush1.msra.mxu0 %v434
  %1343 = vmatprep.subr.mxu0 0.0
  %1344 = vmatpush1.msra.mxu0 0.0
  %1345 = vmatprep.subr.mxu0 0.0
  %1346 = vmatpush1.msra.mxu0 0.0
  %1347 = vmatprep.subr.mxu0 0.0
  %1348 = vmatpush1.msra.mxu0 0.0
  %1349 = vmatprep.subr.mxu0 0.0
  %1350 = vmatpush1.msra.mxu0 0.0
  %1351 = vmatprep.subr.mxu0 0.0
  %1352 = vmatpush1.msra.mxu0 0.0
  %1353 = vmatprep.subr.mxu0 0.0
  %1354 = vmatpush1.msra.mxu0 0.0
  %1355 = vmatprep.subr.mxu0 0.0
  %1356 = vmatpush1.msra.mxu0 0.0
  %1357 = vmatprep.subr.mxu0 0.0
  %1358 = vmatpush1.msra.mxu0 0.0
  %1359 = vmatprep.subr.mxu0 0.0
  %1360 = vmatpush1.msra.mxu0 0.0
  %1361 = vmatprep.subr.mxu0 0.0
  %1362 = vmatpush1.msra.mxu0 0.0
  %1363 = vmatprep.subr.mxu0 0.0
  %1364 = vmatpush1.msra.mxu0 0.0
  %1365 = vmatprep.subr.mxu0 0.0
  %1366 = vmatpush1.msra.mxu0 0.0
  %1367 = vmatprep.subr.mxu0 0.0
  %1368 = vmatpush1.msra.mxu0 0.0
  %1369 = vmatprep.subr.mxu0 0.0
  %1370 = vmatpush1.msra.mxu0 0.0
  %1371 = vmatprep.subr.mxu0 0.0
  %1372 = vmatpush1.msra.mxu0 0.0
  %1373 = vmatprep.subr.mxu0 0.0
  %1374 = vmatpush1.msra.mxu0 0.0
  %1375 = vmatprep.subr.mxu0 0.0
  %1376 = vmatpush1.msra.mxu0 0.0
  %1377 = vmatprep.subr.mxu0 0.0
  %1378 = vmatpush1.msra.mxu0 0.0
  %1379 = vmatprep.subr.mxu0 0.0
  %1380 = vmatpush1.msra.mxu0 0.0
  %1381 = vmatprep.subr.mxu0 0.0
  %1382 = vmatpush1.msra.mxu0 0.0
  %1383 = vmatprep.subr.mxu0 0.0
  %1384 = vmatpush1.msra.mxu0 0.0
  %1385 = vmatprep.subr.mxu0 0.0
  %1386 = vmatpush1.msra.mxu0 0.0
  %1387 = vmatprep.subr.mxu0 0.0
  %1388 = vmatpush1.msra.mxu0 0.0
  %1389 = vmatprep.subr.mxu0 0.0
  %1390 = vmatpush1.msra.mxu0 0.0
  %1391 = vmatprep.mubr.f32.mxu0 0.0
  %1392 = vmatmul.mubr.f32.gmra.mrb[0].mxu0 %v1185
  %v1393 = vpop.f32.mrb[0].mxu0
  %v1394 = vadd.f32 %v599, %v1393
  %v1395 = vpop.f32.mrb[0].mxu0
  %1396 = vdwg.mxu0
  %v1398 = vrot.slane %v1254, 2
  %v1400 = vadd.f32 %v217, %v1398
  %v1401 = vxor.u32 %v1400, 2147483648
  %v1402 = vmul.f32 %v1401, 1.442695
  %v1403 = vpow.pop %v1402
  %v1404 = vadd.f32 %v1403, 1.0
  %v1405 = vrcp.pop %v1404
  %v1406 = vmul.f32 1.0, %v1405
  %v1408 = vrot.slane %v1324, 2
  %v1410 = vadd.f32 %v309, %v1408
  %v1411 = vxor.u32 %v1410, 2147483648
  %v1412 = vmul.f32 %v1411, 1.442695
  %v1413 = vpow.pop %v1412
  %v1414 = vadd.f32 %v1413, 1.0
  %v1415 = vrcp.pop %v1414
  %v1416 = vmul.f32 1.0, %v1415
  %v1418 = vrot.slane %v1394, 2
  %v1420 = vmul.f32 %v1406, %v1418
  %v1421 = vadd.f32 %v401, %v1420
  %v1422 = vtanh.pop %v1421
  %v1423 = vsub.f32 1.0, %v1416
  %v1424 = vmul.f32 %v1423, %v1422
  %v1425 = vrot.slane %v1182, 6
  %v1427 = vmul.f32 %v1416, %v1425
  %v1428 = vadd.f32 %v1424, %v1427
  %v1430 = vrot.slane %v1428, 6
  %v1431 = vsel %vm45, %v1430, 0
  %1433 = vmatprep.subr.mxu0 0.0
  %1434 = vmatpush1.msra.mxu0 %v409
  %1435 = vmatprep.subr.mxu0 0.0
  %1436 = vmatpush1.msra.mxu0 %v410
  %1437 = vmatprep.subr.mxu0 0.0
  %1438 = vmatpush1.msra.mxu0 %v411
  %1439 = vmatprep.subr.mxu0 0.0
  %1440 = vmatpush1.msra.mxu0 %v412
  %1441 = vmatprep.subr.mxu0 0.0
  %1442 = vmatpush1.msra.mxu0 %v413
  %1443 = vmatprep.subr.mxu0 0.0
  %1444 = vmatpush1.msra.mxu0 %v414
  %1445 = vmatprep.subr.mxu0 0.0
  %1446 = vmatpush1.msra.mxu0 %v415
  %1447 = vmatprep.subr.mxu0 0.0
  %1448 = vmatpush1.msra.mxu0 %v416
  %1449 = vmatprep.subr.mxu0 0.0
  %1450 = vmatpush1.msra.mxu0 0.0
  %1451 = vmatprep.subr.mxu0 0.0
  %1452 = vmatpush1.msra.mxu0 0.0
  %1453 = vmatprep.subr.mxu0 0.0
  %1454 = vmatpush1.msra.mxu0 0.0
  %1455 = vmatprep.subr.mxu0 0.0
  %1456 = vmatpush1.msra.mxu0 0.0
  %1457 = vmatprep.subr.mxu0 0.0
  %1458 = vmatpush1.msra.mxu0 0.0
  %1459 = vmatprep.subr.mxu0 0.0
  %1460 = vmatpush1.msra.mxu0 0.0
  %1461 = vmatprep.subr.mxu0 0.0
  %1462 = vmatpush1.msra.mxu0 0.0
  %1463 = vmatprep.subr.mxu0 0.0
  %1464 = vmatpush1.msra.mxu0 0.0
  %1465 = vmatprep.subr.mxu0 0.0
  %1466 = vmatpush1.msra.mxu0 0.0
  %1467 = vmatprep.subr.mxu0 0.0
  %1468 = vmatpush1.msra.mxu0 0.0
  %1469 = vmatprep.subr.mxu0 0.0
  %1470 = vmatpush1.msra.mxu0 0.0
  %1471 = vmatprep.subr.mxu0 0.0
  %1472 = vmatpush1.msra.mxu0 0.0
  %1473 = vmatprep.subr.mxu0 0.0
  %1474 = vmatpush1.msra.mxu0 0.0
  %1475 = vmatprep.subr.mxu0 0.0
  %1476 = vmatpush1.msra.mxu0 0.0
  %1477 = vmatprep.subr.mxu0 0.0
  %1478 = vmatpush1.msra.mxu0 0.0
  %1479 = vmatprep.subr.mxu0 0.0
  %1480 = vmatpush1.msra.mxu0 0.0
  %1481 = vmatprep.subr.mxu0 0.0
  %1482 = vmatpush1.msra.mxu0 0.0
  %1483 = vmatprep.subr.mxu0 0.0
  %1484 = vmatpush1.msra.mxu0 0.0
  %1485 = vmatprep.subr.mxu0 0.0
  %1486 = vmatpush1.msra.mxu0 0.0
  %1487 = vmatprep.subr.mxu0 0.0
  %1488 = vmatpush1.msra.mxu0 0.0
  %1489 = vmatprep.subr.mxu0 0.0
  %1490 = vmatpush1.msra.mxu0 0.0
  %1491 = vmatprep.subr.mxu0 0.0
  %1492 = vmatpush1.msra.mxu0 0.0
  %1493 = vmatprep.subr.mxu0 0.0
  %1494 = vmatpush1.msra.mxu0 0.0
  %1495 = vmatprep.subr.mxu0 0.0
  %1496 = vmatpush1.msra.mxu0 0.0
  %1497 = vmatprep.mubr.f32.mxu0 0.0
  %1498 = vmatmul.mubr.f32.gmra.mrb[0].mxu0 %v1431
  %v1499 = vpop.f32.mrb[0].mxu0
  %v1500 = vadd.f32 %v444, %v1499
  %v1501 = vpop.f32.mrb[0].mxu0
  %1502 = vdwg.mxu0
  %1503 = vmatprep.subr.mxu0 0.0
  %1504 = vmatpush1.msra.mxu0 %v418
  %1505 = vmatprep.subr.mxu0 0.0
  %1506 = vmatpush1.msra.mxu0 %v419
  %1507 = vmatprep.subr.mxu0 0.0
  %1508 = vmatpush1.msra.mxu0 %v420
  %1509 = vmatprep.subr.mxu0 0.0
  %1510 = vmatpush1.msra.mxu0 %v421
  %1511 = vmatprep.subr.mxu0 0.0
  %1512 = vmatpush1.msra.mxu0 %v422
  %1513 = vmatprep.subr.mxu0 0.0
  %1514 = vmatpush1.msra.mxu0 %v423
  %1515 = vmatprep.subr.mxu0 0.0
  %1516 = vmatpush1.msra.mxu0 %v424
  %1517 = vmatprep.subr.mxu0 0.0
  %1518 = vmatpush1.msra.mxu0 %v425
  %1519 = vmatprep.subr.mxu0 0.0
  %1520 = vmatpush1.msra.mxu0 0.0
  %1521 = vmatprep.subr.mxu0 0.0
  %1522 = vmatpush1.msra.mxu0 0.0
  %1523 = vmatprep.subr.mxu0 0.0
  %1524 = vmatpush1.msra.mxu0 0.0
  %1525 = vmatprep.subr.mxu0 0.0
  %1526 = vmatpush1.msra.mxu0 0.0
  %1527 = vmatprep.subr.mxu0 0.0
  %1528 = vmatpush1.msra.mxu0 0.0
  %1529 = vmatprep.subr.mxu0 0.0
  %1530 = vmatpush1.msra.mxu0 0.0
  %1531 = vmatprep.subr.mxu0 0.0
  %1532 = vmatpush1.msra.mxu0 0.0
  %1533 = vmatprep.subr.mxu0 0.0
  %1534 = vmatpush1.msra.mxu0 0.0
  %1535 = vmatprep.subr.mxu0 0.0
  %1536 = vmatpush1.msra.mxu0 0.0
  %1537 = vmatprep.subr.mxu0 0.0
  %1538 = vmatpush1.msra.mxu0 0.0
  %1539 = vmatprep.subr.mxu0 0.0
  %1540 = vmatpush1.msra.mxu0 0.0
  %1541 = vmatprep.subr.mxu0 0.0
  %1542 = vmatpush1.msra.mxu0 0.0
  %1543 = vmatprep.subr.mxu0 0.0
  %1544 = vmatpush1.msra.mxu0 0.0
  %1545 = vmatprep.subr.mxu0 0.0
  %1546 = vmatpush1.msra.mxu0 0.0
  %1547 = vmatprep.subr.mxu0 0.0
  %1548 = vmatpush1.msra.mxu0 0.0
  %1549 = vmatprep.subr.mxu0 0.0
  %1550 = vmatpush1.msra.mxu0 0.0
  %1551 = vmatprep.subr.mxu0 0.0
  %1552 = vmatpush1.msra.mxu0 0.0
  %1553 = vmatprep.subr.mxu0 0.0
  %1554 = vmatpush1.msra.mxu0 0.0
  %1555 = vmatprep.subr.mxu0 0.0
  %1556 = vmatpush1.msra.mxu0 0.0
  %1557 = vmatprep.subr.mxu0 0.0
  %1558 = vmatpush1.msra.mxu0 0.0
  %1559 = vmatprep.subr.mxu0 0.0
  %1560 = vmatpush1.msra.mxu0 0.0
  %1561 = vmatprep.subr.mxu0 0.0
  %1562 = vmatpush1.msra.mxu0 0.0
  %1563 = vmatprep.subr.mxu0 0.0
  %1564 = vmatpush1.msra.mxu0 0.0
  %1565 = vmatprep.subr.mxu0 0.0
  %1566 = vmatpush1.msra.mxu0 0.0
  %1567 = vmatprep.mubr.f32.mxu0 0.0
  %1568 = vmatmul.mubr.f32.gmra.mrb[0].mxu0 %v1431
  %v1569 = vpop.f32.mrb[0].mxu0
  %v1570 = vadd.f32 %v523, %v1569
  %v1571 = vpop.f32.mrb[0].mxu0
  %1572 = vdwg.mxu0
  %1573 = vmatprep.subr.mxu0 0.0
  %1574 = vmatpush1.msra.mxu0 %v427
  %1575 = vmatprep.subr.mxu0 0.0
  %1576 = vmatpush1.msra.mxu0 %v428
  %1577 = vmatprep.subr.mxu0 0.0
  %1578 = vmatpush1.msra.mxu0 %v429
  %1579 = vmatprep.subr.mxu0 0.0
  %1580 = vmatpush1.msra.mxu0 %v430
  %1581 = vmatprep.subr.mxu0 0.0
  %1582 = vmatpush1.msra.mxu0 %v431
  %1583 = vmatprep.subr.mxu0 0.0
  %1584 = vmatpush1.msra.mxu0 %v432
  %1585 = vmatprep.subr.mxu0 0.0
  %1586 = vmatpush1.msra.mxu0 %v433
  %1587 = vmatprep.subr.mxu0 0.0
  %1588 = vmatpush1.msra.mxu0 %v434
  %1589 = vmatprep.subr.mxu0 0.0
  %1590 = vmatpush1.msra.mxu0 0.0
  %1591 = vmatprep.subr.mxu0 0.0
  %1592 = vmatpush1.msra.mxu0 0.0
  %1593 = vmatprep.subr.mxu0 0.0
  %1594 = vmatpush1.msra.mxu0 0.0
  %1595 = vmatprep.subr.mxu0 0.0
  %1596 = vmatpush1.msra.mxu0 0.0
  %1597 = vmatprep.subr.mxu0 0.0
  %1598 = vmatpush1.msra.mxu0 0.0
  %1599 = vmatprep.subr.mxu0 0.0
  %1600 = vmatpush1.msra.mxu0 0.0
  %1601 = vmatprep.subr.mxu0 0.0
  %1602 = vmatpush1.msra.mxu0 0.0
  %1603 = vmatprep.subr.mxu0 0.0
  %1604 = vmatpush1.msra.mxu0 0.0
  %1605 = vmatprep.subr.mxu0 0.0
  %1606 = vmatpush1.msra.mxu0 0.0
  %1607 = vmatprep.subr.mxu0 0.0
  %1608 = vmatpush1.msra.mxu0 0.0
  %1609 = vmatprep.subr.mxu0 0.0
  %1610 = vmatpush1.msra.mxu0 0.0
  %1611 = vmatprep.subr.mxu0 0.0
  %1612 = vmatpush1.msra.mxu0 0.0
  %1613 = vmatprep.subr.mxu0 0.0
  %1614 = vmatpush1.msra.mxu0 0.0
  %1615 = vmatprep.subr.mxu0 0.0
  %1616 = vmatpush1.msra.mxu0 0.0
  %1617 = vmatprep.subr.mxu0 0.0
  %1618 = vmatpush1.msra.mxu0 0.0
  %1619 = vmatprep.subr.mxu0 0.0
  %1620 = vmatpush1.msra.mxu0 0.0
  %1621 = vmatprep.subr.mxu0 0.0
  %1622 = vmatpush1.msra.mxu0 0.0
  %1623 = vmatprep.subr.mxu0 0.0
  %1624 = vmatpush1.msra.mxu0 0.0
  %1625 = vmatprep.subr.mxu0 0.0
  %1626 = vmatpush1.msra.mxu0 0.0
  %1627 = vmatprep.subr.mxu0 0.0
  %1628 = vmatpush1.msra.mxu0 0.0
  %1629 = vmatprep.subr.mxu0 0.0
  %1630 = vmatpush1.msra.mxu0 0.0
  %1631 = vmatprep.subr.mxu0 0.0
  %1632 = vmatpush1.msra.mxu0 0.0
  %1633 = vmatprep.subr.mxu0 0.0
  %1634 = vmatpush1.msra.mxu0 0.0
  %1635 = vmatprep.subr.mxu0 0.0
  %1636 = vmatpush1.msra.mxu0 0.0
  %1637 = vmatprep.mubr.f32.mxu0 0.0
  %1638 = vmatmul.mubr.f32.gmra.mrb[0].mxu0 %v1431
  %v1639 = vpop.f32.mrb[0].mxu0
  %v1640 = vadd.f32 %v599, %v1639
  %v1641 = vpop.f32.mrb[0].mxu0
  %1642 = vdwg.mxu0
  %v1643 = vadd.f32 %v222, %v1500
  %v1644 = vxor.u32 %v1643, 2147483648
  %v1645 = vmul.f32 %v1644, 1.442695
  %v1646 = vpow.pop %v1645
  %v1647 = vadd.f32 %v1646, 1.0
  %v1648 = vrcp.pop %v1647
  %v1649 = vmul.f32 1.0, %v1648
  %v1650 = vadd.f32 %v314, %v1570
  %v1651 = vxor.u32 %v1650, 2147483648
  %v1652 = vmul.f32 %v1651, 1.442695
  %v1653 = vpow.pop %v1652
  %v1654 = vadd.f32 %v1653, 1.0
  %v1655 = vrcp.pop %v1654
  %v1656 = vmul.f32 1.0, %v1655
  %v1657 = vmul.f32 %v1649, %v1640
  %v1658 = vadd.f32 %v406, %v1657
  %v1659 = vtanh.pop %v1658
  %v1660 = vsub.f32 1.0, %v1656
  %v1661 = vmul.f32 %v1660, %v1659
  %v1663 = vmul.f32 %v1656, %v1430
  %v1664 = vadd.f32 %v1661, %v1663
  %v1666 = vsel %vm45, %v1664, 0
  %1668 = vmatprep.subr.mxu0 0.0
  %1669 = vmatpush1.msra.mxu0 %v409
  %1670 = vmatprep.subr.mxu0 0.0
  %1671 = vmatpush1.msra.mxu0 %v410
  %1672 = vmatprep.subr.mxu0 0.0
  %1673 = vmatpush1.msra.mxu0 %v411
  %1674 = vmatprep.subr.mxu0 0.0
  %1675 = vmatpush1.msra.mxu0 %v412
  %1676 = vmatprep.subr.mxu0 0.0
  %1677 = vmatpush1.msra.mxu0 %v413
  %1678 = vmatprep.subr.mxu0 0.0
  %1679 = vmatpush1.msra.mxu0 %v414
  %1680 = vmatprep.subr.mxu0 0.0
  %1681 = vmatpush1.msra.mxu0 %v415
  %1682 = vmatprep.subr.mxu0 0.0
  %1683 = vmatpush1.msra.mxu0 %v416
  %1684 = vmatprep.subr.mxu0 0.0
  %1685 = vmatpush1.msra.mxu0 0.0
  %1686 = vmatprep.subr.mxu0 0.0
  %1687 = vmatpush1.msra.mxu0 0.0
  %1688 = vmatprep.subr.mxu0 0.0
  %1689 = vmatpush1.msra.mxu0 0.0
  %1690 = vmatprep.subr.mxu0 0.0
  %1691 = vmatpush1.msra.mxu0 0.0
  %1692 = vmatprep.subr.mxu0 0.0
  %1693 = vmatpush1.msra.mxu0 0.0
  %1694 = vmatprep.subr.mxu0 0.0
  %1695 = vmatpush1.msra.mxu0 0.0
  %1696 = vmatprep.subr.mxu0 0.0
  %1697 = vmatpush1.msra.mxu0 0.0
  %1698 = vmatprep.subr.mxu0 0.0
  %1699 = vmatpush1.msra.mxu0 0.0
  %1700 = vmatprep.subr.mxu0 0.0
  %1701 = vmatpush1.msra.mxu0 0.0
  %1702 = vmatprep.subr.mxu0 0.0
  %1703 = vmatpush1.msra.mxu0 0.0
  %1704 = vmatprep.subr.mxu0 0.0
  %1705 = vmatpush1.msra.mxu0 0.0
  %1706 = vmatprep.subr.mxu0 0.0
  %1707 = vmatpush1.msra.mxu0 0.0
  %1708 = vmatprep.subr.mxu0 0.0
  %1709 = vmatpush1.msra.mxu0 0.0
  %1710 = vmatprep.subr.mxu0 0.0
  %1711 = vmatpush1.msra.mxu0 0.0
  %1712 = vmatprep.subr.mxu0 0.0
  %1713 = vmatpush1.msra.mxu0 0.0
  %1714 = vmatprep.subr.mxu0 0.0
  %1715 = vmatpush1.msra.mxu0 0.0
  %1716 = vmatprep.subr.mxu0 0.0
  %1717 = vmatpush1.msra.mxu0 0.0
  %1718 = vmatprep.subr.mxu0 0.0
  %1719 = vmatpush1.msra.mxu0 0.0
  %1720 = vmatprep.subr.mxu0 0.0
  %1721 = vmatpush1.msra.mxu0 0.0
  %1722 = vmatprep.subr.mxu0 0.0
  %1723 = vmatpush1.msra.mxu0 0.0
  %1724 = vmatprep.subr.mxu0 0.0
  %1725 = vmatpush1.msra.mxu0 0.0
  %1726 = vmatprep.subr.mxu0 0.0
  %1727 = vmatpush1.msra.mxu0 0.0
  %1728 = vmatprep.subr.mxu0 0.0
  %1729 = vmatpush1.msra.mxu0 0.0
  %1730 = vmatprep.subr.mxu0 0.0
  %1731 = vmatpush1.msra.mxu0 0.0
  %1732 = vmatprep.mubr.f32.mxu0 0.0
  %1733 = vmatmul.mubr.f32.gmra.mrb[0].mxu0 %v1666
  %v1734 = vpop.f32.mrb[0].mxu0
  %v1735 = vadd.f32 %v444, %v1734
  %v1736 = vpop.f32.mrb[0].mxu0
  %1737 = vdwg.mxu0
  %1738 = vmatprep.subr.mxu0 0.0
  %1739 = vmatpush1.msra.mxu0 %v418
  %1740 = vmatprep.subr.mxu0 0.0
  %1741 = vmatpush1.msra.mxu0 %v419
  %1742 = vmatprep.subr.mxu0 0.0
  %1743 = vmatpush1.msra.mxu0 %v420
  %1744 = vmatprep.subr.mxu0 0.0
  %1745 = vmatpush1.msra.mxu0 %v421
  %1746 = vmatprep.subr.mxu0 0.0
  %1747 = vmatpush1.msra.mxu0 %v422
  %1748 = vmatprep.subr.mxu0 0.0
  %1749 = vmatpush1.msra.mxu0 %v423
  %1750 = vmatprep.subr.mxu0 0.0
  %1751 = vmatpush1.msra.mxu0 %v424
  %1752 = vmatprep.subr.mxu0 0.0
  %1753 = vmatpush1.msra.mxu0 %v425
  %1754 = vmatprep.subr.mxu0 0.0
  %1755 = vmatpush1.msra.mxu0 0.0
  %1756 = vmatprep.subr.mxu0 0.0
  %1757 = vmatpush1.msra.mxu0 0.0
  %1758 = vmatprep.subr.mxu0 0.0
  %1759 = vmatpush1.msra.mxu0 0.0
  %1760 = vmatprep.subr.mxu0 0.0
  %1761 = vmatpush1.msra.mxu0 0.0
  %1762 = vmatprep.subr.mxu0 0.0
  %1763 = vmatpush1.msra.mxu0 0.0
  %1764 = vmatprep.subr.mxu0 0.0
  %1765 = vmatpush1.msra.mxu0 0.0
  %1766 = vmatprep.subr.mxu0 0.0
  %1767 = vmatpush1.msra.mxu0 0.0
  %1768 = vmatprep.subr.mxu0 0.0
  %1769 = vmatpush1.msra.mxu0 0.0
  %1770 = vmatprep.subr.mxu0 0.0
  %1771 = vmatpush1.msra.mxu0 0.0
  %1772 = vmatprep.subr.mxu0 0.0
  %1773 = vmatpush1.msra.mxu0 0.0
  %1774 = vmatprep.subr.mxu0 0.0
  %1775 = vmatpush1.msra.mxu0 0.0
  %1776 = vmatprep.subr.mxu0 0.0
  %1777 = vmatpush1.msra.mxu0 0.0
  %1778 = vmatprep.subr.mxu0 0.0
  %1779 = vmatpush1.msra.mxu0 0.0
  %1780 = vmatprep.subr.mxu0 0.0
  %1781 = vmatpush1.msra.mxu0 0.0
  %1782 = vmatprep.subr.mxu0 0.0
  %1783 = vmatpush1.msra.mxu0 0.0
  %1784 = vmatprep.subr.mxu0 0.0
  %1785 = vmatpush1.msra.mxu0 0.0
  %1786 = vmatprep.subr.mxu0 0.0
  %1787 = vmatpush1.msra.mxu0 0.0
  %1788 = vmatprep.subr.mxu0 0.0
  %1789 = vmatpush1.msra.mxu0 0.0
  %1790 = vmatprep.subr.mxu0 0.0
  %1791 = vmatpush1.msra.mxu0 0.0
  %1792 = vmatprep.subr.mxu0 0.0
  %1793 = vmatpush1.msra.mxu0 0.0
  %1794 = vmatprep.subr.mxu0 0.0
  %1795 = vmatpush1.msra.mxu0 0.0
  %1796 = vmatprep.subr.mxu0 0.0
  %1797 = vmatpush1.msra.mxu0 0.0
  %1798 = vmatprep.subr.mxu0 0.0
  %1799 = vmatpush1.msra.mxu0 0.0
  %1800 = vmatprep.subr.mxu0 0.0
  %1801 = vmatpush1.msra.mxu0 0.0
  %1802 = vmatprep.mubr.f32.mxu0 0.0
  %1803 = vmatmul.mubr.f32.gmra.mrb[0].mxu0 %v1666
  %v1804 = vpop.f32.mrb[0].mxu0
  %v1805 = vadd.f32 %v523, %v1804
  %v1806 = vpop.f32.mrb[0].mxu0
  %1807 = vdwg.mxu0
  %1808 = vmatprep.subr.mxu0 0.0
  %1809 = vmatpush1.msra.mxu0 %v427
  %1810 = vmatprep.subr.mxu0 0.0
  %1811 = vmatpush1.msra.mxu0 %v428
  %1812 = vmatprep.subr.mxu0 0.0
  %1813 = vmatpush1.msra.mxu0 %v429
  %1814 = vmatprep.subr.mxu0 0.0
  %1815 = vmatpush1.msra.mxu0 %v430
  %1816 = vmatprep.subr.mxu0 0.0
  %1817 = vmatpush1.msra.mxu0 %v431
  %1818 = vmatprep.subr.mxu0 0.0
  %1819 = vmatpush1.msra.mxu0 %v432
  %1820 = vmatprep.subr.mxu0 0.0
  %1821 = vmatpush1.msra.mxu0 %v433
  %1822 = vmatprep.subr.mxu0 0.0
  %1823 = vmatpush1.msra.mxu0 %v434
  %1824 = vmatprep.subr.mxu0 0.0
  %1825 = vmatpush1.msra.mxu0 0.0
  %1826 = vmatprep.subr.mxu0 0.0
  %1827 = vmatpush1.msra.mxu0 0.0
  %1828 = vmatprep.subr.mxu0 0.0
  %1829 = vmatpush1.msra.mxu0 0.0
  %1830 = vmatprep.subr.mxu0 0.0
  %1831 = vmatpush1.msra.mxu0 0.0
  %1832 = vmatprep.subr.mxu0 0.0
  %1833 = vmatpush1.msra.mxu0 0.0
  %1834 = vmatprep.subr.mxu0 0.0
  %1835 = vmatpush1.msra.mxu0 0.0
  %1836 = vmatprep.subr.mxu0 0.0
  %1837 = vmatpush1.msra.mxu0 0.0
  %1838 = vmatprep.subr.mxu0 0.0
  %1839 = vmatpush1.msra.mxu0 0.0
  %1840 = vmatprep.subr.mxu0 0.0
  %1841 = vmatpush1.msra.mxu0 0.0
  %1842 = vmatprep.subr.mxu0 0.0
  %1843 = vmatpush1.msra.mxu0 0.0
  %1844 = vmatprep.subr.mxu0 0.0
  %1845 = vmatpush1.msra.mxu0 0.0
  %1846 = vmatprep.subr.mxu0 0.0
  %1847 = vmatpush1.msra.mxu0 0.0
  %1848 = vmatprep.subr.mxu0 0.0
  %1849 = vmatpush1.msra.mxu0 0.0
  %1850 = vmatprep.subr.mxu0 0.0
  %1851 = vmatpush1.msra.mxu0 0.0
  %1852 = vmatprep.subr.mxu0 0.0
  %1853 = vmatpush1.msra.mxu0 0.0
  %1854 = vmatprep.subr.mxu0 0.0
  %1855 = vmatpush1.msra.mxu0 0.0
  %1856 = vmatprep.subr.mxu0 0.0
  %1857 = vmatpush1.msra.mxu0 0.0
  %1858 = vmatprep.subr.mxu0 0.0
  %1859 = vmatpush1.msra.mxu0 0.0
  %1860 = vmatprep.subr.mxu0 0.0
  %1861 = vmatpush1.msra.mxu0 0.0
  %1862 = vmatprep.subr.mxu0 0.0
  %1863 = vmatpush1.msra.mxu0 0.0
  %1864 = vmatprep.subr.mxu0 0.0
  %1865 = vmatpush1.msra.mxu0 0.0
  %1866 = vmatprep.subr.mxu0 0.0
  %1867 = vmatpush1.msra.mxu0 0.0
  %1868 = vmatprep.subr.mxu0 0.0
  %1869 = vmatpush1.msra.mxu0 0.0
  %1870 = vmatprep.subr.mxu0 0.0
  %1871 = vmatpush1.msra.mxu0 0.0
  %1872 = vmatprep.mubr.f32.mxu0 0.0
  %1873 = vmatmul.mubr.f32.gmra.mrb[0].mxu0 %v1666
  %v1874 = vpop.f32.mrb[0].mxu0
  %v1875 = vadd.f32 %v599, %v1874
  %v1876 = vpop.f32.mrb[0].mxu0
  %1877 = vdwg.mxu0
  %v1879 = vrot.slane %v1735, 6
  %v1881 = vadd.f32 %v222, %v1879
  %v1882 = vxor.u32 %v1881, 2147483648
  %v1883 = vmul.f32 %v1882, 1.442695
  %v1884 = vpow.pop %v1883
  %v1885 = vadd.f32 %v1884, 1.0
  %v1886 = vrcp.pop %v1885
  %v1887 = vmul.f32 1.0, %v1886
  %v1889 = vrot.slane %v1805, 6
  %v1891 = vadd.f32 %v314, %v1889
  %v1892 = vxor.u32 %v1891, 2147483648
  %v1893 = vmul.f32 %v1892, 1.442695
  %v1894 = vpow.pop %v1893
  %v1895 = vadd.f32 %v1894, 1.0
  %v1896 = vrcp.pop %v1895
  %v1897 = vmul.f32 1.0, %v1896
  %v1899 = vrot.slane %v1875, 6
  %v1901 = vmul.f32 %v1887, %v1899
  %v1902 = vadd.f32 %v406, %v1901
  %v1903 = vtanh.pop %v1902
  %v1904 = vsub.f32 1.0, %v1897
  %v1905 = vmul.f32 %v1904, %v1903
  %v1906 = vrot.slane %v1664, 6
  %v1908 = vmul.f32 %v1897, %v1906
  %v1909 = vadd.f32 %v1905, %v1908
  %v1911 = vrot.slane %v1909, 2
  %v1912 = vsel %vm45, %v1911, 0
  %1914 = vmatprep.subr.mxu0 0.0
  %1915 = vmatpush1.msra.mxu0 %v409
  %1916 = vmatprep.subr.mxu0 0.0
  %1917 = vmatpush1.msra.mxu0 %v410
  %1918 = vmatprep.subr.mxu0 0.0
  %1919 = vmatpush1.msra.mxu0 %v411
  %1920 = vmatprep.subr.mxu0 0.0
  %1921 = vmatpush1.msra.mxu0 %v412
  %1922 = vmatprep.subr.mxu0 0.0
  %1923 = vmatpush1.msra.mxu0 %v413
  %1924 = vmatprep.subr.mxu0 0.0
  %1925 = vmatpush1.msra.mxu0 %v414
  %1926 = vmatprep.subr.mxu0 0.0
  %1927 = vmatpush1.msra.mxu0 %v415
  %1928 = vmatprep.subr.mxu0 0.0
  %1929 = vmatpush1.msra.mxu0 %v416
  %1930 = vmatprep.subr.mxu0 0.0
  %1931 = vmatpush1.msra.mxu0 0.0
  %1932 = vmatprep.subr.mxu0 0.0
  %1933 = vmatpush1.msra.mxu0 0.0
  %1934 = vmatprep.subr.mxu0 0.0
  %1935 = vmatpush1.msra.mxu0 0.0
  %1936 = vmatprep.subr.mxu0 0.0
  %1937 = vmatpush1.msra.mxu0 0.0
  %1938 = vmatprep.subr.mxu0 0.0
  %1939 = vmatpush1.msra.mxu0 0.0
  %1940 = vmatprep.subr.mxu0 0.0
  %1941 = vmatpush1.msra.mxu0 0.0
  %1942 = vmatprep.subr.mxu0 0.0
  %1943 = vmatpush1.msra.mxu0 0.0
  %1944 = vmatprep.subr.mxu0 0.0
  %1945 = vmatpush1.msra.mxu0 0.0
  %1946 = vmatprep.subr.mxu0 0.0
  %1947 = vmatpush1.msra.mxu0 0.0
  %1948 = vmatprep.subr.mxu0 0.0
  %1949 = vmatpush1.msra.mxu0 0.0
  %1950 = vmatprep.subr.mxu0 0.0
  %1951 = vmatpush1.msra.mxu0 0.0
  %1952 = vmatprep.subr.mxu0 0.0
  %1953 = vmatpush1.msra.mxu0 0.0
  %1954 = vmatprep.subr.mxu0 0.0
  %1955 = vmatpush1.msra.mxu0 0.0
  %1956 = vmatprep.subr.mxu0 0.0
  %1957 = vmatpush1.msra.mxu0 0.0
  %1958 = vmatprep.subr.mxu0 0.0
  %1959 = vmatpush1.msra.mxu0 0.0
  %1960 = vmatprep.subr.mxu0 0.0
  %1961 = vmatpush1.msra.mxu0 0.0
  %1962 = vmatprep.subr.mxu0 0.0
  %1963 = vmatpush1.msra.mxu0 0.0
  %1964 = vmatprep.subr.mxu0 0.0
  %1965 = vmatpush1.msra.mxu0 0.0
  %1966 = vmatprep.subr.mxu0 0.0
  %1967 = vmatpush1.msra.mxu0 0.0
  %1968 = vmatprep.subr.mxu0 0.0
  %1969 = vmatpush1.msra.mxu0 0.0
  %1970 = vmatprep.subr.mxu0 0.0
  %1971 = vmatpush1.msra.mxu0 0.0
  %1972 = vmatprep.subr.mxu0 0.0
  %1973 = vmatpush1.msra.mxu0 0.0
  %1974 = vmatprep.subr.mxu0 0.0
  %1975 = vmatpush1.msra.mxu0 0.0
  %1976 = vmatprep.subr.mxu0 0.0
  %1977 = vmatpush1.msra.mxu0 0.0
  %1978 = vmatprep.mubr.f32.mxu0 0.0
  %1979 = vmatmul.mubr.f32.gmra.mrb[0].mxu0 %v1912
  %v1980 = vpop.f32.mrb[0].mxu0
  %v1981 = vadd.f32 %v444, %v1980
  %v1982 = vpop.f32.mrb[0].mxu0
  %1983 = vdwg.mxu0
  %1984 = vmatprep.subr.mxu0 0.0
  %1985 = vmatpush1.msra.mxu0 %v418
  %1986 = vmatprep.subr.mxu0 0.0
  %1987 = vmatpush1.msra.mxu0 %v419
  %1988 = vmatprep.subr.mxu0 0.0
  %1989 = vmatpush1.msra.mxu0 %v420
  %1990 = vmatprep.subr.mxu0 0.0
  %1991 = vmatpush1.msra.mxu0 %v421
  %1992 = vmatprep.subr.mxu0 0.0
  %1993 = vmatpush1.msra.mxu0 %v422
  %1994 = vmatprep.subr.mxu0 0.0
  %1995 = vmatpush1.msra.mxu0 %v423
  %1996 = vmatprep.subr.mxu0 0.0
  %1997 = vmatpush1.msra.mxu0 %v424
  %1998 = vmatprep.subr.mxu0 0.0
  %1999 = vmatpush1.msra.mxu0 %v425
  %2000 = vmatprep.subr.mxu0 0.0
  %2001 = vmatpush1.msra.mxu0 0.0
  %2002 = vmatprep.subr.mxu0 0.0
  %2003 = vmatpush1.msra.mxu0 0.0
  %2004 = vmatprep.subr.mxu0 0.0
  %2005 = vmatpush1.msra.mxu0 0.0
  %2006 = vmatprep.subr.mxu0 0.0
  %2007 = vmatpush1.msra.mxu0 0.0
  %2008 = vmatprep.subr.mxu0 0.0
  %2009 = vmatpush1.msra.mxu0 0.0
  %2010 = vmatprep.subr.mxu0 0.0
  %2011 = vmatpush1.msra.mxu0 0.0
  %2012 = vmatprep.subr.mxu0 0.0
  %2013 = vmatpush1.msra.mxu0 0.0
  %2014 = vmatprep.subr.mxu0 0.0
  %2015 = vmatpush1.msra.mxu0 0.0
  %2016 = vmatprep.subr.mxu0 0.0
  %2017 = vmatpush1.msra.mxu0 0.0
  %2018 = vmatprep.subr.mxu0 0.0
  %2019 = vmatpush1.msra.mxu0 0.0
  %2020 = vmatprep.subr.mxu0 0.0
  %2021 = vmatpush1.msra.mxu0 0.0
  %2022 = vmatprep.subr.mxu0 0.0
  %2023 = vmatpush1.msra.mxu0 0.0
  %2024 = vmatprep.subr.mxu0 0.0
  %2025 = vmatpush1.msra.mxu0 0.0
  %2026 = vmatprep.subr.mxu0 0.0
  %2027 = vmatpush1.msra.mxu0 0.0
  %2028 = vmatprep.subr.mxu0 0.0
  %2029 = vmatpush1.msra.mxu0 0.0
  %2030 = vmatprep.subr.mxu0 0.0
  %2031 = vmatpush1.msra.mxu0 0.0
  %2032 = vmatprep.subr.mxu0 0.0
  %2033 = vmatpush1.msra.mxu0 0.0
  %2034 = vmatprep.subr.mxu0 0.0
  %2035 = vmatpush1.msra.mxu0 0.0
  %2036 = vmatprep.subr.mxu0 0.0
  %2037 = vmatpush1.msra.mxu0 0.0
  %2038 = vmatprep.subr.mxu0 0.0
  %2039 = vmatpush1.msra.mxu0 0.0
  %2040 = vmatprep.subr.mxu0 0.0
  %2041 = vmatpush1.msra.mxu0 0.0
  %2042 = vmatprep.subr.mxu0 0.0
  %2043 = vmatpush1.msra.mxu0 0.0
  %2044 = vmatprep.subr.mxu0 0.0
  %2045 = vmatpush1.msra.mxu0 0.0
  %2046 = vmatprep.subr.mxu0 0.0
  %2047 = vmatpush1.msra.mxu0 0.0
  %2048 = vmatprep.mubr.f32.mxu0 0.0
  %2049 = vmatmul.mubr.f32.gmra.mrb[0].mxu0 %v1912
  %v2050 = vpop.f32.mrb[0].mxu0
  %v2051 = vadd.f32 %v523, %v2050
  %v2052 = vpop.f32.mrb[0].mxu0
  %2053 = vdwg.mxu0
  %2054 = vmatprep.subr.mxu0 0.0
  %2055 = vmatpush1.msra.mxu0 %v427
  %2056 = vmatprep.subr.mxu0 0.0
  %2057 = vmatpush1.msra.mxu0 %v428
  %2058 = vmatprep.subr.mxu0 0.0
  %2059 = vmatpush1.msra.mxu0 %v429
  %2060 = vmatprep.subr.mxu0 0.0
  %2061 = vmatpush1.msra.mxu0 %v430
  %2062 = vmatprep.subr.mxu0 0.0
  %2063 = vmatpush1.msra.mxu0 %v431
  %2064 = vmatprep.subr.mxu0 0.0
  %2065 = vmatpush1.msra.mxu0 %v432
  %2066 = vmatprep.subr.mxu0 0.0
  %2067 = vmatpush1.msra.mxu0 %v433
  %2068 = vmatprep.subr.mxu0 0.0
  %2069 = vmatpush1.msra.mxu0 %v434
  %2070 = vmatprep.subr.mxu0 0.0
  %2071 = vmatpush1.msra.mxu0 0.0
  %2072 = vmatprep.subr.mxu0 0.0
  %2073 = vmatpush1.msra.mxu0 0.0
  %2074 = vmatprep.subr.mxu0 0.0
  %2075 = vmatpush1.msra.mxu0 0.0
  %2076 = vmatprep.subr.mxu0 0.0
  %2077 = vmatpush1.msra.mxu0 0.0
  %2078 = vmatprep.subr.mxu0 0.0
  %2079 = vmatpush1.msra.mxu0 0.0
  %2080 = vmatprep.subr.mxu0 0.0
  %2081 = vmatpush1.msra.mxu0 0.0
  %2082 = vmatprep.subr.mxu0 0.0
  %2083 = vmatpush1.msra.mxu0 0.0
  %2084 = vmatprep.subr.mxu0 0.0
  %2085 = vmatpush1.msra.mxu0 0.0
  %2086 = vmatprep.subr.mxu0 0.0
  %2087 = vmatpush1.msra.mxu0 0.0
  %2088 = vmatprep.subr.mxu0 0.0
  %2089 = vmatpush1.msra.mxu0 0.0
  %2090 = vmatprep.subr.mxu0 0.0
  %2091 = vmatpush1.msra.mxu0 0.0
  %2092 = vmatprep.subr.mxu0 0.0
  %2093 = vmatpush1.msra.mxu0 0.0
  %2094 = vmatprep.subr.mxu0 0.0
  %2095 = vmatpush1.msra.mxu0 0.0
  %2096 = vmatprep.subr.mxu0 0.0
  %2097 = vmatpush1.msra.mxu0 0.0
  %2098 = vmatprep.subr.mxu0 0.0
  %2099 = vmatpush1.msra.mxu0 0.0
  %2100 = vmatprep.subr.mxu0 0.0
  %2101 = vmatpush1.msra.mxu0 0.0
  %2102 = vmatprep.subr.mxu0 0.0
  %2103 = vmatpush1.msra.mxu0 0.0
  %2104 = vmatprep.subr.mxu0 0.0
  %2105 = vmatpush1.msra.mxu0 0.0
  %2106 = vmatprep.subr.mxu0 0.0
  %2107 = vmatpush1.msra.mxu0 0.0
  %2108 = vmatprep.subr.mxu0 0.0
  %2109 = vmatpush1.msra.mxu0 0.0
  %2110 = vmatprep.subr.mxu0 0.0
  %2111 = vmatpush1.msra.mxu0 0.0
  %2112 = vmatprep.subr.mxu0 0.0
  %2113 = vmatpush1.msra.mxu0 0.0
  %2114 = vmatprep.subr.mxu0 0.0
  %2115 = vmatpush1.msra.mxu0 0.0
  %2116 = vmatprep.subr.mxu0 0.0
  %2117 = vmatpush1.msra.mxu0 0.0
  %2118 = vmatprep.mubr.f32.mxu0 0.0
  %2119 = vmatmul.mubr.f32.gmra.mrb[0].mxu0 %v1912
  %v2120 = vpop.f32.mrb[0].mxu0
  %v2121 = vadd.f32 %v599, %v2120
  %v2122 = vpop.f32.mrb[0].mxu0
  %2123 = vdwg.mxu0
  %v2125 = vrot.slane %v1981, 4
  %v2127 = vadd.f32 %v222, %v2125
  %v2128 = vxor.u32 %v2127, 2147483648
  %v2129 = vmul.f32 %v2128, 1.442695
  %v2130 = vpow.pop %v2129
  %v2131 = vadd.f32 %v2130, 1.0
  %v2132 = vrcp.pop %v2131
  %v2133 = vmul.f32 1.0, %v2132
  %v2135 = vrot.slane %v2051, 4
  %v2137 = vadd.f32 %v314, %v2135
  %v2138 = vxor.u32 %v2137, 2147483648
  %v2139 = vmul.f32 %v2138, 1.442695
  %v2140 = vpow.pop %v2139
  %v2141 = vadd.f32 %v2140, 1.0
  %v2142 = vrcp.pop %v2141
  %v2143 = vmul.f32 1.0, %v2142
  %v2145 = vrot.slane %v2121, 4
  %v2147 = vmul.f32 %v2133, %v2145
  %v2148 = vadd.f32 %v406, %v2147
  %v2149 = vtanh.pop %v2148
  %v2150 = vsub.f32 1.0, %v2143
  %v2151 = vmul.f32 %v2150, %v2149
  %v2152 = vrot.slane %v1909, 6
  %v2154 = vmul.f32 %v2143, %v2152
  %v2155 = vadd.f32 %v2151, %v2154
  %v2157 = vrot.slane %v2155, 4
  %v2158 = vsel %vm45, %v2157, 0
  %2160 = vmatprep.subr.mxu0 0.0
  %2161 = vmatpush1.msra.mxu0 %v409
  %2162 = vmatprep.subr.mxu0 0.0
  %2163 = vmatpush1.msra.mxu0 %v410
  %2164 = vmatprep.subr.mxu0 0.0
  %2165 = vmatpush1.msra.mxu0 %v411
  %2166 = vmatprep.subr.mxu0 0.0
  %2167 = vmatpush1.msra.mxu0 %v412
  %2168 = vmatprep.subr.mxu0 0.0
  %2169 = vmatpush1.msra.mxu0 %v413
  %2170 = vmatprep.subr.mxu0 0.0
  %2171 = vmatpush1.msra.mxu0 %v414
  %2172 = vmatprep.subr.mxu0 0.0
  %2173 = vmatpush1.msra.mxu0 %v415
  %2174 = vmatprep.subr.mxu0 0.0
  %2175 = vmatpush1.msra.mxu0 %v416
  %2176 = vmatprep.subr.mxu0 0.0
  %2177 = vmatpush1.msra.mxu0 0.0
  %2178 = vmatprep.subr.mxu0 0.0
  %2179 = vmatpush1.msra.mxu0 0.0
  %2180 = vmatprep.subr.mxu0 0.0
  %2181 = vmatpush1.msra.mxu0 0.0
  %2182 = vmatprep.subr.mxu0 0.0
  %2183 = vmatpush1.msra.mxu0 0.0
  %2184 = vmatprep.subr.mxu0 0.0
  %2185 = vmatpush1.msra.mxu0 0.0
  %2186 = vmatprep.subr.mxu0 0.0
  %2187 = vmatpush1.msra.mxu0 0.0
  %2188 = vmatprep.subr.mxu0 0.0
  %2189 = vmatpush1.msra.mxu0 0.0
  %2190 = vmatprep.subr.mxu0 0.0
  %2191 = vmatpush1.msra.mxu0 0.0
  %2192 = vmatprep.subr.mxu0 0.0
  %2193 = vmatpush1.msra.mxu0 0.0
  %2194 = vmatprep.subr.mxu0 0.0
  %2195 = vmatpush1.msra.mxu0 0.0
  %2196 = vmatprep.subr.mxu0 0.0
  %2197 = vmatpush1.msra.mxu0 0.0
  %2198 = vmatprep.subr.mxu0 0.0
  %2199 = vmatpush1.msra.mxu0 0.0
  %2200 = vmatprep.subr.mxu0 0.0
  %2201 = vmatpush1.msra.mxu0 0.0
  %2202 = vmatprep.subr.mxu0 0.0
  %2203 = vmatpush1.msra.mxu0 0.0
  %2204 = vmatprep.subr.mxu0 0.0
  %2205 = vmatpush1.msra.mxu0 0.0
  %2206 = vmatprep.subr.mxu0 0.0
  %2207 = vmatpush1.msra.mxu0 0.0
  %2208 = vmatprep.subr.mxu0 0.0
  %2209 = vmatpush1.msra.mxu0 0.0
  %2210 = vmatprep.subr.mxu0 0.0
  %2211 = vmatpush1.msra.mxu0 0.0
  %2212 = vmatprep.subr.mxu0 0.0
  %2213 = vmatpush1.msra.mxu0 0.0
  %2214 = vmatprep.subr.mxu0 0.0
  %2215 = vmatpush1.msra.mxu0 0.0
  %2216 = vmatprep.subr.mxu0 0.0
  %2217 = vmatpush1.msra.mxu0 0.0
  %2218 = vmatprep.subr.mxu0 0.0
  %2219 = vmatpush1.msra.mxu0 0.0
  %2220 = vmatprep.subr.mxu0 0.0
  %2221 = vmatpush1.msra.mxu0 0.0
  %2222 = vmatprep.subr.mxu0 0.0
  %2223 = vmatpush1.msra.mxu0 0.0
  %2224 = vmatprep.mubr.f32.mxu0 0.0
  %2225 = vmatmul.mubr.f32.gmra.mrb[0].mxu0 %v2158
  %v2226 = vpop.f32.mrb[0].mxu0
  %v2227 = vadd.f32 %v444, %v2226
  %v2228 = vpop.f32.mrb[0].mxu0
  %2229 = vdwg.mxu0
  %2230 = vmatprep.subr.mxu0 0.0
  %2231 = vmatpush1.msra.mxu0 %v418
  %2232 = vmatprep.subr.mxu0 0.0
  %2233 = vmatpush1.msra.mxu0 %v419
  %2234 = vmatprep.subr.mxu0 0.0
  %2235 = vmatpush1.msra.mxu0 %v420
  %2236 = vmatprep.subr.mxu0 0.0
  %2237 = vmatpush1.msra.mxu0 %v421
  %2238 = vmatprep.subr.mxu0 0.0
  %2239 = vmatpush1.msra.mxu0 %v422
  %2240 = vmatprep.subr.mxu0 0.0
  %2241 = vmatpush1.msra.mxu0 %v423
  %2242 = vmatprep.subr.mxu0 0.0
  %2243 = vmatpush1.msra.mxu0 %v424
  %2244 = vmatprep.subr.mxu0 0.0
  %2245 = vmatpush1.msra.mxu0 %v425
  %2246 = vmatprep.subr.mxu0 0.0
  %2247 = vmatpush1.msra.mxu0 0.0
  %2248 = vmatprep.subr.mxu0 0.0
  %2249 = vmatpush1.msra.mxu0 0.0
  %2250 = vmatprep.subr.mxu0 0.0
  %2251 = vmatpush1.msra.mxu0 0.0
  %2252 = vmatprep.subr.mxu0 0.0
  %2253 = vmatpush1.msra.mxu0 0.0
  %2254 = vmatprep.subr.mxu0 0.0
  %2255 = vmatpush1.msra.mxu0 0.0
  %2256 = vmatprep.subr.mxu0 0.0
  %2257 = vmatpush1.msra.mxu0 0.0
  %2258 = vmatprep.subr.mxu0 0.0
  %2259 = vmatpush1.msra.mxu0 0.0
  %2260 = vmatprep.subr.mxu0 0.0
  %2261 = vmatpush1.msra.mxu0 0.0
  %2262 = vmatprep.subr.mxu0 0.0
  %2263 = vmatpush1.msra.mxu0 0.0
  %2264 = vmatprep.subr.mxu0 0.0
  %2265 = vmatpush1.msra.mxu0 0.0
  %2266 = vmatprep.subr.mxu0 0.0
  %2267 = vmatpush1.msra.mxu0 0.0
  %2268 = vmatprep.subr.mxu0 0.0
  %2269 = vmatpush1.msra.mxu0 0.0
  %2270 = vmatprep.subr.mxu0 0.0
  %2271 = vmatpush1.msra.mxu0 0.0
  %2272 = vmatprep.subr.mxu0 0.0
  %2273 = vmatpush1.msra.mxu0 0.0
  %2274 = vmatprep.subr.mxu0 0.0
  %2275 = vmatpush1.msra.mxu0 0.0
  %2276 = vmatprep.subr.mxu0 0.0
  %2277 = vmatpush1.msra.mxu0 0.0
  %2278 = vmatprep.subr.mxu0 0.0
  %2279 = vmatpush1.msra.mxu0 0.0
  %2280 = vmatprep.subr.mxu0 0.0
  %2281 = vmatpush1.msra.mxu0 0.0
  %2282 = vmatprep.subr.mxu0 0.0
  %2283 = vmatpush1.msra.mxu0 0.0
  %2284 = vmatprep.subr.mxu0 0.0
  %2285 = vmatpush1.msra.mxu0 0.0
  %2286 = vmatprep.subr.mxu0 0.0
  %2287 = vmatpush1.msra.mxu0 0.0
  %2288 = vmatprep.subr.mxu0 0.0
  %2289 = vmatpush1.msra.mxu0 0.0
  %2290 = vmatprep.subr.mxu0 0.0
  %2291 = vmatpush1.msra.mxu0 0.0
  %2292 = vmatprep.subr.mxu0 0.0
  %2293 = vmatpush1.msra.mxu0 0.0
  %2294 = vmatprep.mubr.f32.mxu0 0.0
  %2295 = vmatmul.mubr.f32.gmra.mrb[0].mxu0 %v2158
  %v2296 = vpop.f32.mrb[0].mxu0
  %v2297 = vadd.f32 %v523, %v2296
  %v2298 = vpop.f32.mrb[0].mxu0
  %2299 = vdwg.mxu0
  %2300 = vmatprep.subr.mxu0 0.0
  %2301 = vmatpush1.msra.mxu0 %v427
  %2302 = vmatprep.subr.mxu0 0.0
  %2303 = vmatpush1.msra.mxu0 %v428
  %2304 = vmatprep.subr.mxu0 0.0
  %2305 = vmatpush1.msra.mxu0 %v429
  %2306 = vmatprep.subr.mxu0 0.0
  %2307 = vmatpush1.msra.mxu0 %v430
  %2308 = vmatprep.subr.mxu0 0.0
  %2309 = vmatpush1.msra.mxu0 %v431
  %2310 = vmatprep.subr.mxu0 0.0
  %2311 = vmatpush1.msra.mxu0 %v432
  %2312 = vmatprep.subr.mxu0 0.0
  %2313 = vmatpush1.msra.mxu0 %v433
  %2314 = vmatprep.subr.mxu0 0.0
  %2315 = vmatpush1.msra.mxu0 %v434
  %2316 = vmatprep.subr.mxu0 0.0
  %2317 = vmatpush1.msra.mxu0 0.0
  %2318 = vmatprep.subr.mxu0 0.0
  %2319 = vmatpush1.msra.mxu0 0.0
  %2320 = vmatprep.subr.mxu0 0.0
  %2321 = vmatpush1.msra.mxu0 0.0
  %2322 = vmatprep.subr.mxu0 0.0
  %2323 = vmatpush1.msra.mxu0 0.0
  %2324 = vmatprep.subr.mxu0 0.0
  %2325 = vmatpush1.msra.mxu0 0.0
  %2326 = vmatprep.subr.mxu0 0.0
  %2327 = vmatpush1.msra.mxu0 0.0
  %2328 = vmatprep.subr.mxu0 0.0
  %2329 = vmatpush1.msra.mxu0 0.0
  %2330 = vmatprep.subr.mxu0 0.0
  %2331 = vmatpush1.msra.mxu0 0.0
  %2332 = vmatprep.subr.mxu0 0.0
  %2333 = vmatpush1.msra.mxu0 0.0
  %2334 = vmatprep.subr.mxu0 0.0
  %2335 = vmatpush1.msra.mxu0 0.0
  %2336 = vmatprep.subr.mxu0 0.0
  %2337 = vmatpush1.msra.mxu0 0.0
  %2338 = vmatprep.subr.mxu0 0.0
  %2339 = vmatpush1.msra.mxu0 0.0
  %2340 = vmatprep.subr.mxu0 0.0
  %2341 = vmatpush1.msra.mxu0 0.0
  %2342 = vmatprep.subr.mxu0 0.0
  %2343 = vmatpush1.msra.mxu0 0.0
  %2344 = vmatprep.subr.mxu0 0.0
  %2345 = vmatpush1.msra.mxu0 0.0
  %2346 = vmatprep.subr.mxu0 0.0
  %2347 = vmatpush1.msra.mxu0 0.0
  %2348 = vmatprep.subr.mxu0 0.0
  %2349 = vmatpush1.msra.mxu0 0.0
  %2350 = vmatprep.subr.mxu0 0.0
  %2351 = vmatpush1.msra.mxu0 0.0
  %2352 = vmatprep.subr.mxu0 0.0
  %2353 = vmatpush1.msra.mxu0 0.0
  %2354 = vmatprep.subr.mxu0 0.0
  %2355 = vmatpush1.msra.mxu0 0.0
  %2356 = vmatprep.subr.mxu0 0.0
  %2357 = vmatpush1.msra.mxu0 0.0
  %2358 = vmatprep.subr.mxu0 0.0
  %2359 = vmatpush1.msra.mxu0 0.0
  %2360 = vmatprep.subr.mxu0 0.0
  %2361 = vmatpush1.msra.mxu0 0.0
  %2362 = vmatprep.subr.mxu0 0.0
  %2363 = vmatpush1.msra.mxu0 0.0
  %2364 = vmatprep.mubr.f32.mxu0 0.0
  %2365 = vmatmul.mubr.f32.gmra.mrb[0].mxu0 %v2158
  %v2366 = vpop.f32.mrb[0].mxu0
  %v2367 = vadd.f32 %v599, %v2366
  %v2368 = vpop.f32.mrb[0].mxu0
  %2369 = vdwg.mxu0
  %v2371 = vrot.slane %v2227, 2
  %v2373 = vadd.f32 %v222, %v2371
  %v2374 = vxor.u32 %v2373, 2147483648
  %v2375 = vmul.f32 %v2374, 1.442695
  %v2376 = vpow.pop %v2375
  %v2377 = vadd.f32 %v2376, 1.0
  %v2378 = vrcp.pop %v2377
  %v2379 = vmul.f32 1.0, %v2378
  %v2381 = vrot.slane %v2297, 2
  %v2383 = vadd.f32 %v314, %v2381
  %v2384 = vxor.u32 %v2383, 2147483648
  %v2385 = vmul.f32 %v2384, 1.442695
  %v2386 = vpow.pop %v2385
  %v2387 = vadd.f32 %v2386, 1.0
  %v2388 = vrcp.pop %v2387
  %v2389 = vmul.f32 1.0, %v2388
  %v2391 = vrot.slane %v2367, 2
  %v2393 = vmul.f32 %v2379, %v2391
  %v2394 = vadd.f32 %v406, %v2393
  %v2395 = vtanh.pop %v2394
  %v2396 = vsub.f32 1.0, %v2389
  %v2397 = vmul.f32 %v2396, %v2395
  %v2398 = vrot.slane %v2155, 6
  %v2400 = vmul.f32 %v2389, %v2398
  %v2401 = vadd.f32 %v2397, %v2400
  %vm2402 = vcmask 1041408
  %v2403 = vsel %vm2402, %v691, %v936
  %vm2404 = vcmask 1043456
  %v2405 = vsel %vm2404, %v2403, %v1182
  %vm2406 = vcmask 1045504
  %v2407 = vsel %vm2406, %v2405, %v1428
  %v2408 = vsel %vm2402, %v1664, %v1909
  %v2409 = vsel %vm2404, %v2408, %v2155
  %v2410 = vsel %vm2406, %v2409, %v2401
  %s2411 = scalar_lea.vmem %s3, 192
  %v2412 = vld [vmem:[%s2411] sm:$0xff]
  %v2413 = vld [vmem:[%s2411 + $0x8] sm:$0xff]
  %v2414 = vld [vmem:[%s2411 + $0x10] sm:$0xff]
  %v2415 = vld [vmem:[%s2411 + $0x18] sm:$0xff]
  %v2416 = vld [vmem:[%s2411 + $0x20] sm:$0xff]
  %v2417 = vld [vmem:[%s2411 + $0x28] sm:$0xff]
  %v2418 = vld [vmem:[%s2411 + $0x30] sm:$0xff]
  %v2419 = vld [vmem:[%s2411 + $0x38] sm:$0xff]
  %s2420 = scalar_lea.vmem %s4, 3
  %v2421 = vld [vmem:[%s2420] sm:$0x1]
  %v2423 = vlaneseq
  %v2424 = vshrl.u32 %v2423, 7
  %v2425 = vsub.s32 0, %v2424
  %v2426 = vrot.slane %v2421, %v2425
  %v2429 = vsel %vm45, %v2407, 0
  %v2432 = vsel %vm45, %v2410, 0
  %2434 = vmatprep.subr.mxu0 0.0
  %2435 = vmatpush1.msra.mxu0 %v2412
  %2436 = vmatprep.subr.mxu0 0.0
  %2437 = vmatpush1.msra.mxu0 %v2413
  %2438 = vmatprep.subr.mxu0 0.0
  %2439 = vmatpush1.msra.mxu0 %v2414
  %2440 = vmatprep.subr.mxu0 0.0
  %2441 = vmatpush1.msra.mxu0 %v2415
  %2442 = vmatprep.subr.mxu0 0.0
  %2443 = vmatpush1.msra.mxu0 %v2416
  %2444 = vmatprep.subr.mxu0 0.0
  %2445 = vmatpush1.msra.mxu0 %v2417
  %2446 = vmatprep.subr.mxu0 0.0
  %2447 = vmatpush1.msra.mxu0 %v2418
  %2448 = vmatprep.subr.mxu0 0.0
  %2449 = vmatpush1.msra.mxu0 %v2419
  %2450 = vmatprep.subr.mxu0 0.0
  %2451 = vmatpush1.msra.mxu0 0.0
  %2452 = vmatprep.subr.mxu0 0.0
  %2453 = vmatpush1.msra.mxu0 0.0
  %2454 = vmatprep.subr.mxu0 0.0
  %2455 = vmatpush1.msra.mxu0 0.0
  %2456 = vmatprep.subr.mxu0 0.0
  %2457 = vmatpush1.msra.mxu0 0.0
  %2458 = vmatprep.subr.mxu0 0.0
  %2459 = vmatpush1.msra.mxu0 0.0
  %2460 = vmatprep.subr.mxu0 0.0
  %2461 = vmatpush1.msra.mxu0 0.0
  %2462 = vmatprep.subr.mxu0 0.0
  %2463 = vmatpush1.msra.mxu0 0.0
  %2464 = vmatprep.subr.mxu0 0.0
  %2465 = vmatpush1.msra.mxu0 0.0
  %2466 = vmatprep.subr.mxu0 0.0
  %2467 = vmatpush1.msra.mxu0 0.0
  %2468 = vmatprep.subr.mxu0 0.0
  %2469 = vmatpush1.msra.mxu0 0.0
  %2470 = vmatprep.subr.mxu0 0.0
  %2471 = vmatpush1.msra.mxu0 0.0
  %2472 = vmatprep.subr.mxu0 0.0
  %2473 = vmatpush1.msra.mxu0 0.0
  %2474 = vmatprep.subr.mxu0 0.0
  %2475 = vmatpush1.msra.mxu0 0.0
  %2476 = vmatprep.subr.mxu0 0.0
  %2477 = vmatpush1.msra.mxu0 0.0
  %2478 = vmatprep.subr.mxu0 0.0
  %2479 = vmatpush1.msra.mxu0 0.0
  %2480 = vmatprep.subr.mxu0 0.0
  %2481 = vmatpush1.msra.mxu0 0.0
  %2482 = vmatprep.subr.mxu0 0.0
  %2483 = vmatpush1.msra.mxu0 0.0
  %2484 = vmatprep.subr.mxu0 0.0
  %2485 = vmatpush1.msra.mxu0 0.0
  %2486 = vmatprep.subr.mxu0 0.0
  %2487 = vmatpush1.msra.mxu0 0.0
  %2488 = vmatprep.subr.mxu0 0.0
  %2489 = vmatpush1.msra.mxu0 0.0
  %2490 = vmatprep.subr.mxu0 0.0
  %2491 = vmatpush1.msra.mxu0 0.0
  %2492 = vmatprep.subr.mxu0 0.0
  %2493 = vmatpush1.msra.mxu0 0.0
  %2494 = vmatprep.subr.mxu0 0.0
  %2495 = vmatpush1.msra.mxu0 0.0
  %2496 = vmatprep.subr.mxu0 0.0
  %2497 = vmatpush1.msra.mxu0 0.0
  %2498 = vmatprep.mubr.f32.mxu0 0.0
  %2499 = vmatmul.mubr.f32.gmra.mrb[0].mxu0 %v2429
  %v2500 = vpop.f32.mrb[0].mxu0
  %v2501 = vadd.f32 %v2426, %v2500
  %v2502 = vpop.f32.mrb[0].mxu0
  %2503 = vmatprep.mubr.f32.mxu0 0.0
  %2504 = vmatmul.mubr.f32.gmra.mrb[0].mxu0 %v2432
  %v2505 = vpop.f32.mrb[0].mxu0
  %v2506 = vadd.f32 %v2426, %v2505
  %v2507 = vpop.f32.mrb[0].mxu0
  %2508 = vdwg.mxu0
  %s2509 = scalar_lea.vmem %s3, 256
  %v2510 = vld [vmem:[%s2509] sm:$0xff]
  %v2511 = vld [vmem:[%s2509 + $0x8] sm:$0xff]
  %v2512 = vld [vmem:[%s2509 + $0x10] sm:$0xff]
  %v2513 = vld [vmem:[%s2509 + $0x18] sm:$0xff]
  %v2514 = vld [vmem:[%s2509 + $0x20] sm:$0xff]
  %v2515 = vld [vmem:[%s2509 + $0x28] sm:$0xff]
  %v2516 = vld [vmem:[%s2509 + $0x30] sm:$0xff]
  %v2517 = vld [vmem:[%s2509 + $0x38] sm:$0xff]
  %s2518 = scalar_lea.vmem %s4, 4
  %v2519 = vld [vmem:[%s2518] sm:$0x1]
  %v2521 = vlaneseq
  %v2522 = vshrl.u32 %v2521, 7
  %v2523 = vsub.s32 0, %v2522
  %v2524 = vrot.slane %v2519, %v2523
  %2526 = vmatprep.subr.mxu0 0.0
  %2527 = vmatpush1.msra.mxu0 %v2510
  %2528 = vmatprep.subr.mxu0 0.0
  %2529 = vmatpush1.msra.mxu0 %v2511
  %2530 = vmatprep.subr.mxu0 0.0
  %2531 = vmatpush1.msra.mxu0 %v2512
  %2532 = vmatprep.subr.mxu0 0.0
  %2533 = vmatpush1.msra.mxu0 %v2513
  %2534 = vmatprep.subr.mxu0 0.0
  %2535 = vmatpush1.msra.mxu0 %v2514
  %2536 = vmatprep.subr.mxu0 0.0
  %2537 = vmatpush1.msra.mxu0 %v2515
  %2538 = vmatprep.subr.mxu0 0.0
  %2539 = vmatpush1.msra.mxu0 %v2516
  %2540 = vmatprep.subr.mxu0 0.0
  %2541 = vmatpush1.msra.mxu0 %v2517
  %2542 = vmatprep.subr.mxu0 0.0
  %2543 = vmatpush1.msra.mxu0 0.0
  %2544 = vmatprep.subr.mxu0 0.0
  %2545 = vmatpush1.msra.mxu0 0.0
  %2546 = vmatprep.subr.mxu0 0.0
  %2547 = vmatpush1.msra.mxu0 0.0
  %2548 = vmatprep.subr.mxu0 0.0
  %2549 = vmatpush1.msra.mxu0 0.0
  %2550 = vmatprep.subr.mxu0 0.0
  %2551 = vmatpush1.msra.mxu0 0.0
  %2552 = vmatprep.subr.mxu0 0.0
  %2553 = vmatpush1.msra.mxu0 0.0
  %2554 = vmatprep.subr.mxu0 0.0
  %2555 = vmatpush1.msra.mxu0 0.0
  %2556 = vmatprep.subr.mxu0 0.0
  %2557 = vmatpush1.msra.mxu0 0.0
  %2558 = vmatprep.subr.mxu0 0.0
  %2559 = vmatpush1.msra.mxu0 0.0
  %2560 = vmatprep.subr.mxu0 0.0
  %2561 = vmatpush1.msra.mxu0 0.0
  %2562 = vmatprep.subr.mxu0 0.0
  %2563 = vmatpush1.msra.mxu0 0.0
  %2564 = vmatprep.subr.mxu0 0.0
  %2565 = vmatpush1.msra.mxu0 0.0
  %2566 = vmatprep.subr.mxu0 0.0
  %2567 = vmatpush1.msra.mxu0 0.0
  %2568 = vmatprep.subr.mxu0 0.0
  %2569 = vmatpush1.msra.mxu0 0.0
  %2570 = vmatprep.subr.mxu0 0.0
  %2571 = vmatpush1.msra.mxu0 0.0
  %2572 = vmatprep.subr.mxu0 0.0
  %2573 = vmatpush1.msra.mxu0 0.0
  %2574 = vmatprep.subr.mxu0 0.0
  %2575 = vmatpush1.msra.mxu0 0.0
  %2576 = vmatprep.subr.mxu0 0.0
  %2577 = vmatpush1.msra.mxu0 0.0
  %2578 = vmatprep.subr.mxu0 0.0
  %2579 = vmatpush1.msra.mxu0 0.0
  %2580 = vmatprep.subr.mxu0 0.0
  %2581 = vmatpush1.msra.mxu0 0.0
  %2582 = vmatprep.subr.mxu0 0.0
  %2583 = vmatpush1.msra.mxu0 0.0
  %2584 = vmatprep.subr.mxu0 0.0
  %2585 = vmatpush1.msra.mxu0 0.0
  %2586 = vmatprep.subr.mxu0 0.0
  %2587 = vmatpush1.msra.mxu0 0.0
  %2588 = vmatprep.subr.mxu0 0.0
  %2589 = vmatpush1.msra.mxu0 0.0
  %2590 = vmatprep.mubr.f32.mxu0 0.0
  %2591 = vmatmul.mubr.f32.gmra.mrb[0].mxu0 %v2429
  %v2592 = vpop.f32.mrb[0].mxu0
  %v2593 = vadd.f32 %v2524, %v2592
  %v2594 = vpop.f32.mrb[0].mxu0
  %2595 = vmatprep.mubr.f32.mxu0 0.0
  %2596 = vmatmul.mubr.f32.gmra.mrb[0].mxu0 %v2432
  %v2597 = vpop.f32.mrb[0].mxu0
  %v2598 = vadd.f32 %v2524, %v2597
  %v2599 = vpop.f32.mrb[0].mxu0
  %2600 = vdwg.mxu0
  %s2601 = scalar_lea.vmem %s3, 320
  %v2602 = vld [vmem:[%s2601] sm:$0xff]
  %v2603 = vld [vmem:[%s2601 + $0x8] sm:$0xff]
  %v2604 = vld [vmem:[%s2601 + $0x10] sm:$0xff]
  %v2605 = vld [vmem:[%s2601 + $0x18] sm:$0xff]
  %v2606 = vld [vmem:[%s2601 + $0x20] sm:$0xff]
  %v2607 = vld [vmem:[%s2601 + $0x28] sm:$0xff]
  %v2608 = vld [vmem:[%s2601 + $0x30] sm:$0xff]
  %v2609 = vld [vmem:[%s2601 + $0x38] sm:$0xff]
  %s2610 = scalar_lea.vmem %s4, 5
  %v2611 = vld [vmem:[%s2610] sm:$0x1]
  %v2613 = vlaneseq
  %v2614 = vshrl.u32 %v2613, 7
  %v2615 = vsub.s32 0, %v2614
  %v2616 = vrot.slane %v2611, %v2615
  %2618 = vmatprep.subr.mxu0 0.0
  %2619 = vmatpush1.msra.mxu0 %v2602
  %2620 = vmatprep.subr.mxu0 0.0
  %2621 = vmatpush1.msra.mxu0 %v2603
  %2622 = vmatprep.subr.mxu0 0.0
  %2623 = vmatpush1.msra.mxu0 %v2604
  %2624 = vmatprep.subr.mxu0 0.0
  %2625 = vmatpush1.msra.mxu0 %v2605
  %2626 = vmatprep.subr.mxu0 0.0
  %2627 = vmatpush1.msra.mxu0 %v2606
  %2628 = vmatprep.subr.mxu0 0.0
  %2629 = vmatpush1.msra.mxu0 %v2607
  %2630 = vmatprep.subr.mxu0 0.0
  %2631 = vmatpush1.msra.mxu0 %v2608
  %2632 = vmatprep.subr.mxu0 0.0
  %2633 = vmatpush1.msra.mxu0 %v2609
  %2634 = vmatprep.subr.mxu0 0.0
  %2635 = vmatpush1.msra.mxu0 0.0
  %2636 = vmatprep.subr.mxu0 0.0
  %2637 = vmatpush1.msra.mxu0 0.0
  %2638 = vmatprep.subr.mxu0 0.0
  %2639 = vmatpush1.msra.mxu0 0.0
  %2640 = vmatprep.subr.mxu0 0.0
  %2641 = vmatpush1.msra.mxu0 0.0
  %2642 = vmatprep.subr.mxu0 0.0
  %2643 = vmatpush1.msra.mxu0 0.0
  %2644 = vmatprep.subr.mxu0 0.0
  %2645 = vmatpush1.msra.mxu0 0.0
  %2646 = vmatprep.subr.mxu0 0.0
  %2647 = vmatpush1.msra.mxu0 0.0
  %2648 = vmatprep.subr.mxu0 0.0
  %2649 = vmatpush1.msra.mxu0 0.0
  %2650 = vmatprep.subr.mxu0 0.0
  %2651 = vmatpush1.msra.mxu0 0.0
  %2652 = vmatprep.subr.mxu0 0.0
  %2653 = vmatpush1.msra.mxu0 0.0
  %2654 = vmatprep.subr.mxu0 0.0
  %2655 = vmatpush1.msra.mxu0 0.0
  %2656 = vmatprep.subr.mxu0 0.0
  %2657 = vmatpush1.msra.mxu0 0.0
  %2658 = vmatprep.subr.mxu0 0.0
  %2659 = vmatpush1.msra.mxu0 0.0
  %2660 = vmatprep.subr.mxu0 0.0
  %2661 = vmatpush1.msra.mxu0 0.0
  %2662 = vmatprep.subr.mxu0 0.0
  %2663 = vmatpush1.msra.mxu0 0.0
  %2664 = vmatprep.subr.mxu0 0.0
  %2665 = vmatpush1.msra.mxu0 0.0
  %2666 = vmatprep.subr.mxu0 0.0
  %2667 = vmatpush1.msra.mxu0 0.0
  %2668 = vmatprep.subr.mxu0 0.0
  %2669 = vmatpush1.msra.mxu0 0.0
  %2670 = vmatprep.subr.mxu0 0.0
  %2671 = vmatpush1.msra.mxu0 0.0
  %2672 = vmatprep.subr.mxu0 0.0
  %2673 = vmatpush1.msra.mxu0 0.0
  %2674 = vmatprep.subr.mxu0 0.0
  %2675 = vmatpush1.msra.mxu0 0.0
  %2676 = vmatprep.subr.mxu0 0.0
  %2677 = vmatpush1.msra.mxu0 0.0
  %2678 = vmatprep.subr.mxu0 0.0
  %2679 = vmatpush1.msra.mxu0 0.0
  %2680 = vmatprep.subr.mxu0 0.0
  %2681 = vmatpush1.msra.mxu0 0.0
  %2682 = vmatprep.mubr.f32.mxu0 0.0
  %2683 = vmatmul.mubr.f32.gmra.mrb[0].mxu0 %v2429
  %v2684 = vpop.f32.mrb[0].mxu0
  %v2685 = vadd.f32 %v2616, %v2684
  %v2686 = vpop.f32.mrb[0].mxu0
  %2687 = vmatprep.mubr.f32.mxu0 0.0
  %2688 = vmatmul.mubr.f32.gmra.mrb[0].mxu0 %v2432
  %v2689 = vpop.f32.mrb[0].mxu0
  %v2690 = vadd.f32 %v2616, %v2689
  %v2691 = vpop.f32.mrb[0].mxu0
  %2692 = vdwg.mxu0
  %s2693 = scalar_lea.vmem %s5, 192
  %v2694 = vld [vmem:[%s2693] sm:$0xff]
  %v2695 = vld [vmem:[%s2693 + $0x8] sm:$0xff]
  %v2696 = vld [vmem:[%s2693 + $0x10] sm:$0xff]
  %v2697 = vld [vmem:[%s2693 + $0x18] sm:$0xff]
  %v2698 = vld [vmem:[%s2693 + $0x20] sm:$0xff]
  %v2699 = vld [vmem:[%s2693 + $0x28] sm:$0xff]
  %v2700 = vld [vmem:[%s2693 + $0x30] sm:$0xff]
  %v2701 = vld [vmem:[%s2693 + $0x38] sm:$0xff]
  %s2702 = scalar_lea.vmem %s5, 256
  %v2703 = vld [vmem:[%s2702] sm:$0xff]
  %v2704 = vld [vmem:[%s2702 + $0x8] sm:$0xff]
  %v2705 = vld [vmem:[%s2702 + $0x10] sm:$0xff]
  %v2706 = vld [vmem:[%s2702 + $0x18] sm:$0xff]
  %v2707 = vld [vmem:[%s2702 + $0x20] sm:$0xff]
  %v2708 = vld [vmem:[%s2702 + $0x28] sm:$0xff]
  %v2709 = vld [vmem:[%s2702 + $0x30] sm:$0xff]
  %v2710 = vld [vmem:[%s2702 + $0x38] sm:$0xff]
  %s2711 = scalar_lea.vmem %s5, 320
  %v2712 = vld [vmem:[%s2711] sm:$0xff]
  %v2713 = vld [vmem:[%s2711 + $0x8] sm:$0xff]
  %v2714 = vld [vmem:[%s2711 + $0x10] sm:$0xff]
  %v2715 = vld [vmem:[%s2711 + $0x18] sm:$0xff]
  %v2716 = vld [vmem:[%s2711 + $0x20] sm:$0xff]
  %v2717 = vld [vmem:[%s2711 + $0x28] sm:$0xff]
  %v2718 = vld [vmem:[%s2711 + $0x30] sm:$0xff]
  %v2719 = vld [vmem:[%s2711 + $0x38] sm:$0xff]
  %s2720 = scalar_lea.vmem %s6, 3
  %v2721 = vld [vmem:[%s2720] sm:$0x1]
  %s2722 = scalar_lea.vmem %s6, 4
  %v2723 = vld [vmem:[%s2722] sm:$0x1]
  %s2724 = scalar_lea.vmem %s6, 5
  %v2725 = vld [vmem:[%s2724] sm:$0x1]
  %v2727 = vlaneseq
  %v2728 = vshrl.u32 %v2727, 7
  %v2729 = vsub.s32 0, %v2728
  %v2730 = vrot.slane %v2721, %v2729
  %2732 = vmatprep.subr.mxu0 0.0
  %2733 = vmatpush1.msra.mxu0 %v2694
  %2734 = vmatprep.subr.mxu0 0.0
  %2735 = vmatpush1.msra.mxu0 %v2695
  %2736 = vmatprep.subr.mxu0 0.0
  %2737 = vmatpush1.msra.mxu0 %v2696
  %2738 = vmatprep.subr.mxu0 0.0
  %2739 = vmatpush1.msra.mxu0 %v2697
  %2740 = vmatprep.subr.mxu0 0.0
  %2741 = vmatpush1.msra.mxu0 %v2698
  %2742 = vmatprep.subr.mxu0 0.0
  %2743 = vmatpush1.msra.mxu0 %v2699
  %2744 = vmatprep.subr.mxu0 0.0
  %2745 = vmatpush1.msra.mxu0 %v2700
  %2746 = vmatprep.subr.mxu0 0.0
  %2747 = vmatpush1.msra.mxu0 %v2701
  %2748 = vmatprep.subr.mxu0 0.0
  %2749 = vmatpush1.msra.mxu0 0.0
  %2750 = vmatprep.subr.mxu0 0.0
  %2751 = vmatpush1.msra.mxu0 0.0
  %2752 = vmatprep.subr.mxu0 0.0
  %2753 = vmatpush1.msra.mxu0 0.0
  %2754 = vmatprep.subr.mxu0 0.0
  %2755 = vmatpush1.msra.mxu0 0.0
  %2756 = vmatprep.subr.mxu0 0.0
  %2757 = vmatpush1.msra.mxu0 0.0
  %2758 = vmatprep.subr.mxu0 0.0
  %2759 = vmatpush1.msra.mxu0 0.0
  %2760 = vmatprep.subr.mxu0 0.0
  %2761 = vmatpush1.msra.mxu0 0.0
  %2762 = vmatprep.subr.mxu0 0.0
  %2763 = vmatpush1.msra.mxu0 0.0
  %2764 = vmatprep.subr.mxu0 0.0
  %2765 = vmatpush1.msra.mxu0 0.0
  %2766 = vmatprep.subr.mxu0 0.0
  %2767 = vmatpush1.msra.mxu0 0.0
  %2768 = vmatprep.subr.mxu0 0.0
  %2769 = vmatpush1.msra.mxu0 0.0
  %2770 = vmatprep.subr.mxu0 0.0
  %2771 = vmatpush1.msra.mxu0 0.0
  %2772 = vmatprep.subr.mxu0 0.0
  %2773 = vmatpush1.msra.mxu0 0.0
  %2774 = vmatprep.subr.mxu0 0.0
  %2775 = vmatpush1.msra.mxu0 0.0
  %2776 = vmatprep.subr.mxu0 0.0
  %2777 = vmatpush1.msra.mxu0 0.0
  %2778 = vmatprep.subr.mxu0 0.0
  %2779 = vmatpush1.msra.mxu0 0.0
  %2780 = vmatprep.subr.mxu0 0.0
  %2781 = vmatpush1.msra.mxu0 0.0
  %2782 = vmatprep.subr.mxu0 0.0
  %2783 = vmatpush1.msra.mxu0 0.0
  %2784 = vmatprep.subr.mxu0 0.0
  %2785 = vmatpush1.msra.mxu0 0.0
  %2786 = vmatprep.subr.mxu0 0.0
  %2787 = vmatpush1.msra.mxu0 0.0
  %2788 = vmatprep.subr.mxu0 0.0
  %2789 = vmatpush1.msra.mxu0 0.0
  %2790 = vmatprep.subr.mxu0 0.0
  %2791 = vmatpush1.msra.mxu0 0.0
  %2792 = vmatprep.subr.mxu0 0.0
  %2793 = vmatpush1.msra.mxu0 0.0
  %2794 = vmatprep.subr.mxu0 0.0
  %2795 = vmatpush1.msra.mxu0 0.0
  %2796 = vmatprep.mubr.f32.mxu0 0.0
  %2797 = vmatmul.mubr.f32.gmra.mrb[0].mxu0 %v447
  %v2798 = vpop.f32.mrb[0].mxu0
  %v2799 = vadd.f32 %v2730, %v2798
  %v2800 = vpop.f32.mrb[0].mxu0
  %2801 = vdwg.mxu0
  %v2803 = vlaneseq
  %v2804 = vshrl.u32 %v2803, 7
  %v2805 = vsub.s32 0, %v2804
  %v2806 = vrot.slane %v2723, %v2805
  %2808 = vmatprep.subr.mxu0 0.0
  %2809 = vmatpush1.msra.mxu0 %v2703
  %2810 = vmatprep.subr.mxu0 0.0
  %2811 = vmatpush1.msra.mxu0 %v2704
  %2812 = vmatprep.subr.mxu0 0.0
  %2813 = vmatpush1.msra.mxu0 %v2705
  %2814 = vmatprep.subr.mxu0 0.0
  %2815 = vmatpush1.msra.mxu0 %v2706
  %2816 = vmatprep.subr.mxu0 0.0
  %2817 = vmatpush1.msra.mxu0 %v2707
  %2818 = vmatprep.subr.mxu0 0.0
  %2819 = vmatpush1.msra.mxu0 %v2708
  %2820 = vmatprep.subr.mxu0 0.0
  %2821 = vmatpush1.msra.mxu0 %v2709
  %2822 = vmatprep.subr.mxu0 0.0
  %2823 = vmatpush1.msra.mxu0 %v2710
  %2824 = vmatprep.subr.mxu0 0.0
  %2825 = vmatpush1.msra.mxu0 0.0
  %2826 = vmatprep.subr.mxu0 0.0
  %2827 = vmatpush1.msra.mxu0 0.0
  %2828 = vmatprep.subr.mxu0 0.0
  %2829 = vmatpush1.msra.mxu0 0.0
  %2830 = vmatprep.subr.mxu0 0.0
  %2831 = vmatpush1.msra.mxu0 0.0
  %2832 = vmatprep.subr.mxu0 0.0
  %2833 = vmatpush1.msra.mxu0 0.0
  %2834 = vmatprep.subr.mxu0 0.0
  %2835 = vmatpush1.msra.mxu0 0.0
  %2836 = vmatprep.subr.mxu0 0.0
  %2837 = vmatpush1.msra.mxu0 0.0
  %2838 = vmatprep.subr.mxu0 0.0
  %2839 = vmatpush1.msra.mxu0 0.0
  %2840 = vmatprep.subr.mxu0 0.0
  %2841 = vmatpush1.msra.mxu0 0.0
  %2842 = vmatprep.subr.mxu0 0.0
  %2843 = vmatpush1.msra.mxu0 0.0
  %2844 = vmatprep.subr.mxu0 0.0
  %2845 = vmatpush1.msra.mxu0 0.0
  %2846 = vmatprep.subr.mxu0 0.0
  %2847 = vmatpush1.msra.mxu0 0.0
  %2848 = vmatprep.subr.mxu0 0.0
  %2849 = vmatpush1.msra.mxu0 0.0
  %2850 = vmatprep.subr.mxu0 0.0
  %2851 = vmatpush1.msra.mxu0 0.0
  %2852 = vmatprep.subr.mxu0 0.0
  %2853 = vmatpush1.msra.mxu0 0.0
  %2854 = vmatprep.subr.mxu0 0.0
  %2855 = vmatpush1.msra.mxu0 0.0
  %2856 = vmatprep.subr.mxu0 0.0
  %2857 = vmatpush1.msra.mxu0 0.0
  %2858 = vmatprep.subr.mxu0 0.0
  %2859 = vmatpush1.msra.mxu0 0.0
  %2860 = vmatprep.subr.mxu0 0.0
  %2861 = vmatpush1.msra.mxu0 0.0
  %2862 = vmatprep.subr.mxu0 0.0
  %2863 = vmatpush1.msra.mxu0 0.0
  %2864 = vmatprep.subr.mxu0 0.0
  %2865 = vmatpush1.msra.mxu0 0.0
  %2866 = vmatprep.subr.mxu0 0.0
  %2867 = vmatpush1.msra.mxu0 0.0
  %2868 = vmatprep.subr.mxu0 0.0
  %2869 = vmatpush1.msra.mxu0 0.0
  %2870 = vmatprep.subr.mxu0 0.0
  %2871 = vmatpush1.msra.mxu0 0.0
  %2872 = vmatprep.mubr.f32.mxu0 0.0
  %2873 = vmatmul.mubr.f32.gmra.mrb[0].mxu0 %v447
  %v2874 = vpop.f32.mrb[0].mxu0
  %v2875 = vadd.f32 %v2806, %v2874
  %v2876 = vpop.f32.mrb[0].mxu0
  %2877 = vdwg.mxu0
  %v2879 = vlaneseq
  %v2880 = vshrl.u32 %v2879, 7
  %v2881 = vsub.s32 0, %v2880
  %v2882 = vrot.slane %v2725, %v2881
  %2884 = vmatprep.subr.mxu0 0.0
  %2885 = vmatpush1.msra.mxu0 %v2712
  %2886 = vmatprep.subr.mxu0 0.0
  %2887 = vmatpush1.msra.mxu0 %v2713
  %2888 = vmatprep.subr.mxu0 0.0
  %2889 = vmatpush1.msra.mxu0 %v2714
  %2890 = vmatprep.subr.mxu0 0.0
  %2891 = vmatpush1.msra.mxu0 %v2715
  %2892 = vmatprep.subr.mxu0 0.0
  %2893 = vmatpush1.msra.mxu0 %v2716
  %2894 = vmatprep.subr.mxu0 0.0
  %2895 = vmatpush1.msra.mxu0 %v2717
  %2896 = vmatprep.subr.mxu0 0.0
  %2897 = vmatpush1.msra.mxu0 %v2718
  %2898 = vmatprep.subr.mxu0 0.0
  %2899 = vmatpush1.msra.mxu0 %v2719
  %2900 = vmatprep.subr.mxu0 0.0
  %2901 = vmatpush1.msra.mxu0 0.0
  %2902 = vmatprep.subr.mxu0 0.0
  %2903 = vmatpush1.msra.mxu0 0.0
  %2904 = vmatprep.subr.mxu0 0.0
  %2905 = vmatpush1.msra.mxu0 0.0
  %2906 = vmatprep.subr.mxu0 0.0
  %2907 = vmatpush1.msra.mxu0 0.0
  %2908 = vmatprep.subr.mxu0 0.0
  %2909 = vmatpush1.msra.mxu0 0.0
  %2910 = vmatprep.subr.mxu0 0.0
  %2911 = vmatpush1.msra.mxu0 0.0
  %2912 = vmatprep.subr.mxu0 0.0
  %2913 = vmatpush1.msra.mxu0 0.0
  %2914 = vmatprep.subr.mxu0 0.0
  %2915 = vmatpush1.msra.mxu0 0.0
  %2916 = vmatprep.subr.mxu0 0.0
  %2917 = vmatpush1.msra.mxu0 0.0
  %2918 = vmatprep.subr.mxu0 0.0
  %2919 = vmatpush1.msra.mxu0 0.0
  %2920 = vmatprep.subr.mxu0 0.0
  %2921 = vmatpush1.msra.mxu0 0.0
  %2922 = vmatprep.subr.mxu0 0.0
  %2923 = vmatpush1.msra.mxu0 0.0
  %2924 = vmatprep.subr.mxu0 0.0
  %2925 = vmatpush1.msra.mxu0 0.0
  %2926 = vmatprep.subr.mxu0 0.0
  %2927 = vmatpush1.msra.mxu0 0.0
  %2928 = vmatprep.subr.mxu0 0.0
  %2929 = vmatpush1.msra.mxu0 0.0
  %2930 = vmatprep.subr.mxu0 0.0
  %2931 = vmatpush1.msra.mxu0 0.0
  %2932 = vmatprep.subr.mxu0 0.0
  %2933 = vmatpush1.msra.mxu0 0.0
  %2934 = vmatprep.subr.mxu0 0.0
  %2935 = vmatpush1.msra.mxu0 0.0
  %2936 = vmatprep.subr.mxu0 0.0
  %2937 = vmatpush1.msra.mxu0 0.0
  %2938 = vmatprep.subr.mxu0 0.0
  %2939 = vmatpush1.msra.mxu0 0.0
  %2940 = vmatprep.subr.mxu0 0.0
  %2941 = vmatpush1.msra.mxu0 0.0
  %2942 = vmatprep.subr.mxu0 0.0
  %2943 = vmatpush1.msra.mxu0 0.0
  %2944 = vmatprep.subr.mxu0 0.0
  %2945 = vmatpush1.msra.mxu0 0.0
  %2946 = vmatprep.subr.mxu0 0.0
  %2947 = vmatpush1.msra.mxu0 0.0
  %2948 = vmatprep.mubr.f32.mxu0 0.0
  %2949 = vmatmul.mubr.f32.gmra.mrb[0].mxu0 %v447
  %v2950 = vpop.f32.mrb[0].mxu0
  %v2951 = vadd.f32 %v2882, %v2950
  %v2952 = vpop.f32.mrb[0].mxu0
  %2953 = vdwg.mxu0
  %v2954 = vadd.f32 %v2501, %v2799
  %v2955 = vxor.u32 %v2954, 2147483648
  %v2956 = vmul.f32 %v2955, 1.442695
  %v2957 = vpow.pop %v2956
  %v2958 = vadd.f32 %v2957, 1.0
  %v2959 = vrcp.pop %v2958
  %v2960 = vmul.f32 1.0, %v2959
  %v2961 = vadd.f32 %v2593, %v2875
  %v2962 = vxor.u32 %v2961, 2147483648
  %v2963 = vmul.f32 %v2962, 1.442695
  %v2964 = vpow.pop %v2963
  %v2965 = vadd.f32 %v2964, 1.0
  %v2966 = vrcp.pop %v2965
  %v2967 = vmul.f32 1.0, %v2966
  %v2968 = vmul.f32 %v2960, %v2951
  %v2969 = vadd.f32 %v2685, %v2968
  %v2970 = vtanh.pop %v2969
  %v2971 = vsub.f32 1.0, %v2967
  %v2972 = vmul.f32 %v2971, %v2970
  %v2973 = vmul.f32 %v2967, 0.0
  %v2974 = vadd.f32 %v2972, %v2973
  %v2976 = vsel %vm45, %v2974, 0
  %2978 = vmatprep.subr.mxu0 0.0
  %2979 = vmatpush1.msra.mxu0 %v2694
  %2980 = vmatprep.subr.mxu0 0.0
  %2981 = vmatpush1.msra.mxu0 %v2695
  %2982 = vmatprep.subr.mxu0 0.0
  %2983 = vmatpush1.msra.mxu0 %v2696
  %2984 = vmatprep.subr.mxu0 0.0
  %2985 = vmatpush1.msra.mxu0 %v2697
  %2986 = vmatprep.subr.mxu0 0.0
  %2987 = vmatpush1.msra.mxu0 %v2698
  %2988 = vmatprep.subr.mxu0 0.0
  %2989 = vmatpush1.msra.mxu0 %v2699
  %2990 = vmatprep.subr.mxu0 0.0
  %2991 = vmatpush1.msra.mxu0 %v2700
  %2992 = vmatprep.subr.mxu0 0.0
  %2993 = vmatpush1.msra.mxu0 %v2701
  %2994 = vmatprep.subr.mxu0 0.0
  %2995 = vmatpush1.msra.mxu0 0.0
  %2996 = vmatprep.subr.mxu0 0.0
  %2997 = vmatpush1.msra.mxu0 0.0
  %2998 = vmatprep.subr.mxu0 0.0
  %2999 = vmatpush1.msra.mxu0 0.0
  %3000 = vmatprep.subr.mxu0 0.0
  %3001 = vmatpush1.msra.mxu0 0.0
  %3002 = vmatprep.subr.mxu0 0.0
  %3003 = vmatpush1.msra.mxu0 0.0
  %3004 = vmatprep.subr.mxu0 0.0
  %3005 = vmatpush1.msra.mxu0 0.0
  %3006 = vmatprep.subr.mxu0 0.0
  %3007 = vmatpush1.msra.mxu0 0.0
  %3008 = vmatprep.subr.mxu0 0.0
  %3009 = vmatpush1.msra.mxu0 0.0
  %3010 = vmatprep.subr.mxu0 0.0
  %3011 = vmatpush1.msra.mxu0 0.0
  %3012 = vmatprep.subr.mxu0 0.0
  %3013 = vmatpush1.msra.mxu0 0.0
  %3014 = vmatprep.subr.mxu0 0.0
  %3015 = vmatpush1.msra.mxu0 0.0
  %3016 = vmatprep.subr.mxu0 0.0
  %3017 = vmatpush1.msra.mxu0 0.0
  %3018 = vmatprep.subr.mxu0 0.0
  %3019 = vmatpush1.msra.mxu0 0.0
  %3020 = vmatprep.subr.mxu0 0.0
  %3021 = vmatpush1.msra.mxu0 0.0
  %3022 = vmatprep.subr.mxu0 0.0
  %3023 = vmatpush1.msra.mxu0 0.0
  %3024 = vmatprep.subr.mxu0 0.0
  %3025 = vmatpush1.msra.mxu0 0.0
  %3026 = vmatprep.subr.mxu0 0.0
  %3027 = vmatpush1.msra.mxu0 0.0
  %3028 = vmatprep.subr.mxu0 0.0
  %3029 = vmatpush1.msra.mxu0 0.0
  %3030 = vmatprep.subr.mxu0 0.0
  %3031 = vmatpush1.msra.mxu0 0.0
  %3032 = vmatprep.subr.mxu0 0.0
  %3033 = vmatpush1.msra.mxu0 0.0
  %3034 = vmatprep.subr.mxu0 0.0
  %3035 = vmatpush1.msra.mxu0 0.0
  %3036 = vmatprep.subr.mxu0 0.0
  %3037 = vmatpush1.msra.mxu0 0.0
  %3038 = vmatprep.subr.mxu0 0.0
  %3039 = vmatpush1.msra.mxu0 0.0
  %3040 = vmatprep.subr.mxu0 0.0
  %3041 = vmatpush1.msra.mxu0 0.0
  %3042 = vmatprep.mubr.f32.mxu0 0.0
  %3043 = vmatmul.mubr.f32.gmra.mrb[0].mxu0 %v2976
  %v3044 = vpop.f32.mrb[0].mxu0
  %v3045 = vadd.f32 %v2730, %v3044
  %v3046 = vpop.f32.mrb[0].mxu0
  %3047 = vdwg.mxu0
  %3048 = vmatprep.subr.mxu0 0.0
  %3049 = vmatpush1.msra.mxu0 %v2703
  %3050 = vmatprep.subr.mxu0 0.0
  %3051 = vmatpush1.msra.mxu0 %v2704
  %3052 = vmatprep.subr.mxu0 0.0
  %3053 = vmatpush1.msra.mxu0 %v2705
  %3054 = vmatprep.subr.mxu0 0.0
  %3055 = vmatpush1.msra.mxu0 %v2706
  %3056 = vmatprep.subr.mxu0 0.0
  %3057 = vmatpush1.msra.mxu0 %v2707
  %3058 = vmatprep.subr.mxu0 0.0
  %3059 = vmatpush1.msra.mxu0 %v2708
  %3060 = vmatprep.subr.mxu0 0.0
  %3061 = vmatpush1.msra.mxu0 %v2709
  %3062 = vmatprep.subr.mxu0 0.0
  %3063 = vmatpush1.msra.mxu0 %v2710
  %3064 = vmatprep.subr.mxu0 0.0
  %3065 = vmatpush1.msra.mxu0 0.0
  %3066 = vmatprep.subr.mxu0 0.0
  %3067 = vmatpush1.msra.mxu0 0.0
  %3068 = vmatprep.subr.mxu0 0.0
  %3069 = vmatpush1.msra.mxu0 0.0
  %3070 = vmatprep.subr.mxu0 0.0
  %3071 = vmatpush1.msra.mxu0 0.0
  %3072 = vmatprep.subr.mxu0 0.0
  %3073 = vmatpush1.msra.mxu0 0.0
  %3074 = vmatprep.subr.mxu0 0.0
  %3075 = vmatpush1.msra.mxu0 0.0
  %3076 = vmatprep.subr.mxu0 0.0
  %3077 = vmatpush1.msra.mxu0 0.0
  %3078 = vmatprep.subr.mxu0 0.0
  %3079 = vmatpush1.msra.mxu0 0.0
  %3080 = vmatprep.subr.mxu0 0.0
  %3081 = vmatpush1.msra.mxu0 0.0
  %3082 = vmatprep.subr.mxu0 0.0
  %3083 = vmatpush1.msra.mxu0 0.0
  %3084 = vmatprep.subr.mxu0 0.0
  %3085 = vmatpush1.msra.mxu0 0.0
  %3086 = vmatprep.subr.mxu0 0.0
  %3087 = vmatpush1.msra.mxu0 0.0
  %3088 = vmatprep.subr.mxu0 0.0
  %3089 = vmatpush1.msra.mxu0 0.0
  %3090 = vmatprep.subr.mxu0 0.0
  %3091 = vmatpush1.msra.mxu0 0.0
  %3092 = vmatprep.subr.mxu0 0.0
  %3093 = vmatpush1.msra.mxu0 0.0
  %3094 = vmatprep.subr.mxu0 0.0
  %3095 = vmatpush1.msra.mxu0 0.0
  %3096 = vmatprep.subr.mxu0 0.0
  %3097 = vmatpush1.msra.mxu0 0.0
  %3098 = vmatprep.subr.mxu0 0.0
  %3099 = vmatpush1.msra.mxu0 0.0
  %3100 = vmatprep.subr.mxu0 0.0
  %3101 = vmatpush1.msra.mxu0 0.0
  %3102 = vmatprep.subr.mxu0 0.0
  %3103 = vmatpush1.msra.mxu0 0.0
  %3104 = vmatprep.subr.mxu0 0.0
  %3105 = vmatpush1.msra.mxu0 0.0
  %3106 = vmatprep.subr.mxu0 0.0
  %3107 = vmatpush1.msra.mxu0 0.0
  %3108 = vmatprep.subr.mxu0 0.0
  %3109 = vmatpush1.msra.mxu0 0.0
  %3110 = vmatprep.subr.mxu0 0.0
  %3111 = vmatpush1.msra.mxu0 0.0
  %3112 = vmatprep.mubr.f32.mxu0 0.0
  %3113 = vmatmul.mubr.f32.gmra.mrb[0].mxu0 %v2976
  %v3114 = vpop.f32.mrb[0].mxu0
  %v3115 = vadd.f32 %v2806, %v3114
  %v3116 = vpop.f32.mrb[0].mxu0
  %3117 = vdwg.mxu0
  %3118 = vmatprep.subr.mxu0 0.0
  %3119 = vmatpush1.msra.mxu0 %v2712
  %3120 = vmatprep.subr.mxu0 0.0
  %3121 = vmatpush1.msra.mxu0 %v2713
  %3122 = vmatprep.subr.mxu0 0.0
  %3123 = vmatpush1.msra.mxu0 %v2714
  %3124 = vmatprep.subr.mxu0 0.0
  %3125 = vmatpush1.msra.mxu0 %v2715
  %3126 = vmatprep.subr.mxu0 0.0
  %3127 = vmatpush1.msra.mxu0 %v2716
  %3128 = vmatprep.subr.mxu0 0.0
  %3129 = vmatpush1.msra.mxu0 %v2717
  %3130 = vmatprep.subr.mxu0 0.0
  %3131 = vmatpush1.msra.mxu0 %v2718
  %3132 = vmatprep.subr.mxu0 0.0
  %3133 = vmatpush1.msra.mxu0 %v2719
  %3134 = vmatprep.subr.mxu0 0.0
  %3135 = vmatpush1.msra.mxu0 0.0
  %3136 = vmatprep.subr.mxu0 0.0
  %3137 = vmatpush1.msra.mxu0 0.0
  %3138 = vmatprep.subr.mxu0 0.0
  %3139 = vmatpush1.msra.mxu0 0.0
  %3140 = vmatprep.subr.mxu0 0.0
  %3141 = vmatpush1.msra.mxu0 0.0
  %3142 = vmatprep.subr.mxu0 0.0
  %3143 = vmatpush1.msra.mxu0 0.0
  %3144 = vmatprep.subr.mxu0 0.0
  %3145 = vmatpush1.msra.mxu0 0.0
  %3146 = vmatprep.subr.mxu0 0.0
  %3147 = vmatpush1.msra.mxu0 0.0
  %3148 = vmatprep.subr.mxu0 0.0
  %3149 = vmatpush1.msra.mxu0 0.0
  %3150 = vmatprep.subr.mxu0 0.0
  %3151 = vmatpush1.msra.mxu0 0.0
  %3152 = vmatprep.subr.mxu0 0.0
  %3153 = vmatpush1.msra.mxu0 0.0
  %3154 = vmatprep.subr.mxu0 0.0
  %3155 = vmatpush1.msra.mxu0 0.0
  %3156 = vmatprep.subr.mxu0 0.0
  %3157 = vmatpush1.msra.mxu0 0.0
  %3158 = vmatprep.subr.mxu0 0.0
  %3159 = vmatpush1.msra.mxu0 0.0
  %3160 = vmatprep.subr.mxu0 0.0
  %3161 = vmatpush1.msra.mxu0 0.0
  %3162 = vmatprep.subr.mxu0 0.0
  %3163 = vmatpush1.msra.mxu0 0.0
  %3164 = vmatprep.subr.mxu0 0.0
  %3165 = vmatpush1.msra.mxu0 0.0
  %3166 = vmatprep.subr.mxu0 0.0
  %3167 = vmatpush1.msra.mxu0 0.0
  %3168 = vmatprep.subr.mxu0 0.0
  %3169 = vmatpush1.msra.mxu0 0.0
  %3170 = vmatprep.subr.mxu0 0.0
  %3171 = vmatpush1.msra.mxu0 0.0
  %3172 = vmatprep.subr.mxu0 0.0
  %3173 = vmatpush1.msra.mxu0 0.0
  %3174 = vmatprep.subr.mxu0 0.0
  %3175 = vmatpush1.msra.mxu0 0.0
  %3176 = vmatprep.subr.mxu0 0.0
  %3177 = vmatpush1.msra.mxu0 0.0
  %3178 = vmatprep.subr.mxu0 0.0
  %3179 = vmatpush1.msra.mxu0 0.0
  %3180 = vmatprep.subr.mxu0 0.0
  %3181 = vmatpush1.msra.mxu0 0.0
  %3182 = vmatprep.mubr.f32.mxu0 0.0
  %3183 = vmatmul.mubr.f32.gmra.mrb[0].mxu0 %v2976
  %v3184 = vpop.f32.mrb[0].mxu0
  %v3185 = vadd.f32 %v2882, %v3184
  %v3186 = vpop.f32.mrb[0].mxu0
  %3187 = vdwg.mxu0
  %v3189 = vrot.slane %v3045, 6
  %v3191 = vadd.f32 %v2501, %v3189
  %v3192 = vxor.u32 %v3191, 2147483648
  %v3193 = vmul.f32 %v3192, 1.442695
  %v3194 = vpow.pop %v3193
  %v3195 = vadd.f32 %v3194, 1.0
  %v3196 = vrcp.pop %v3195
  %v3197 = vmul.f32 1.0, %v3196
  %v3199 = vrot.slane %v3115, 6
  %v3201 = vadd.f32 %v2593, %v3199
  %v3202 = vxor.u32 %v3201, 2147483648
  %v3203 = vmul.f32 %v3202, 1.442695
  %v3204 = vpow.pop %v3203
  %v3205 = vadd.f32 %v3204, 1.0
  %v3206 = vrcp.pop %v3205
  %v3207 = vmul.f32 1.0, %v3206
  %v3209 = vrot.slane %v3185, 6
  %v3211 = vmul.f32 %v3197, %v3209
  %v3212 = vadd.f32 %v2685, %v3211
  %v3213 = vtanh.pop %v3212
  %v3214 = vsub.f32 1.0, %v3207
  %v3215 = vmul.f32 %v3214, %v3213
  %v3216 = vrot.slane %v2974, 6
  %v3218 = vmul.f32 %v3207, %v3216
  %v3219 = vadd.f32 %v3215, %v3218
  %v3221 = vrot.slane %v3219, 2
  %v3222 = vsel %vm45, %v3221, 0
  %3224 = vmatprep.subr.mxu0 0.0
  %3225 = vmatpush1.msra.mxu0 %v2694
  %3226 = vmatprep.subr.mxu0 0.0
  %3227 = vmatpush1.msra.mxu0 %v2695
  %3228 = vmatprep.subr.mxu0 0.0
  %3229 = vmatpush1.msra.mxu0 %v2696
  %3230 = vmatprep.subr.mxu0 0.0
  %3231 = vmatpush1.msra.mxu0 %v2697
  %3232 = vmatprep.subr.mxu0 0.0
  %3233 = vmatpush1.msra.mxu0 %v2698
  %3234 = vmatprep.subr.mxu0 0.0
  %3235 = vmatpush1.msra.mxu0 %v2699
  %3236 = vmatprep.subr.mxu0 0.0
  %3237 = vmatpush1.msra.mxu0 %v2700
  %3238 = vmatprep.subr.mxu0 0.0
  %3239 = vmatpush1.msra.mxu0 %v2701
  %3240 = vmatprep.subr.mxu0 0.0
  %3241 = vmatpush1.msra.mxu0 0.0
  %3242 = vmatprep.subr.mxu0 0.0
  %3243 = vmatpush1.msra.mxu0 0.0
  %3244 = vmatprep.subr.mxu0 0.0
  %3245 = vmatpush1.msra.mxu0 0.0
  %3246 = vmatprep.subr.mxu0 0.0
  %3247 = vmatpush1.msra.mxu0 0.0
  %3248 = vmatprep.subr.mxu0 0.0
  %3249 = vmatpush1.msra.mxu0 0.0
  %3250 = vmatprep.subr.mxu0 0.0
  %3251 = vmatpush1.msra.mxu0 0.0
  %3252 = vmatprep.subr.mxu0 0.0
  %3253 = vmatpush1.msra.mxu0 0.0
  %3254 = vmatprep.subr.mxu0 0.0
  %3255 = vmatpush1.msra.mxu0 0.0
  %3256 = vmatprep.subr.mxu0 0.0
  %3257 = vmatpush1.msra.mxu0 0.0
  %3258 = vmatprep.subr.mxu0 0.0
  %3259 = vmatpush1.msra.mxu0 0.0
  %3260 = vmatprep.subr.mxu0 0.0
  %3261 = vmatpush1.msra.mxu0 0.0
  %3262 = vmatprep.subr.mxu0 0.0
  %3263 = vmatpush1.msra.mxu0 0.0
  %3264 = vmatprep.subr.mxu0 0.0
  %3265 = vmatpush1.msra.mxu0 0.0
  %3266 = vmatprep.subr.mxu0 0.0
  %3267 = vmatpush1.msra.mxu0 0.0
  %3268 = vmatprep.subr.mxu0 0.0
  %3269 = vmatpush1.msra.mxu0 0.0
  %3270 = vmatprep.subr.mxu0 0.0
  %3271 = vmatpush1.msra.mxu0 0.0
  %3272 = vmatprep.subr.mxu0 0.0
  %3273 = vmatpush1.msra.mxu0 0.0
  %3274 = vmatprep.subr.mxu0 0.0
  %3275 = vmatpush1.msra.mxu0 0.0
  %3276 = vmatprep.subr.mxu0 0.0
  %3277 = vmatpush1.msra.mxu0 0.0
  %3278 = vmatprep.subr.mxu0 0.0
  %3279 = vmatpush1.msra.mxu0 0.0
  %3280 = vmatprep.subr.mxu0 0.0
  %3281 = vmatpush1.msra.mxu0 0.0
  %3282 = vmatprep.subr.mxu0 0.0
  %3283 = vmatpush1.msra.mxu0 0.0
  %3284 = vmatprep.subr.mxu0 0.0
  %3285 = vmatpush1.msra.mxu0 0.0
  %3286 = vmatprep.subr.mxu0 0.0
  %3287 = vmatpush1.msra.mxu0 0.0
  %3288 = vmatprep.mubr.f32.mxu0 0.0
  %3289 = vmatmul.mubr.f32.gmra.mrb[0].mxu0 %v3222
  %v3290 = vpop.f32.mrb[0].mxu0
  %v3291 = vadd.f32 %v2730, %v3290
  %v3292 = vpop.f32.mrb[0].mxu0
  %3293 = vdwg.mxu0
  %3294 = vmatprep.subr.mxu0 0.0
  %3295 = vmatpush1.msra.mxu0 %v2703
  %3296 = vmatprep.subr.mxu0 0.0
  %3297 = vmatpush1.msra.mxu0 %v2704
  %3298 = vmatprep.subr.mxu0 0.0
  %3299 = vmatpush1.msra.mxu0 %v2705
  %3300 = vmatprep.subr.mxu0 0.0
  %3301 = vmatpush1.msra.mxu0 %v2706
  %3302 = vmatprep.subr.mxu0 0.0
  %3303 = vmatpush1.msra.mxu0 %v2707
  %3304 = vmatprep.subr.mxu0 0.0
  %3305 = vmatpush1.msra.mxu0 %v2708
  %3306 = vmatprep.subr.mxu0 0.0
  %3307 = vmatpush1.msra.mxu0 %v2709
  %3308 = vmatprep.subr.mxu0 0.0
  %3309 = vmatpush1.msra.mxu0 %v2710
  %3310 = vmatprep.subr.mxu0 0.0
  %3311 = vmatpush1.msra.mxu0 0.0
  %3312 = vmatprep.subr.mxu0 0.0
  %3313 = vmatpush1.msra.mxu0 0.0
  %3314 = vmatprep.subr.mxu0 0.0
  %3315 = vmatpush1.msra.mxu0 0.0
  %3316 = vmatprep.subr.mxu0 0.0
  %3317 = vmatpush1.msra.mxu0 0.0
  %3318 = vmatprep.subr.mxu0 0.0
  %3319 = vmatpush1.msra.mxu0 0.0
  %3320 = vmatprep.subr.mxu0 0.0
  %3321 = vmatpush1.msra.mxu0 0.0
  %3322 = vmatprep.subr.mxu0 0.0
  %3323 = vmatpush1.msra.mxu0 0.0
  %3324 = vmatprep.subr.mxu0 0.0
  %3325 = vmatpush1.msra.mxu0 0.0
  %3326 = vmatprep.subr.mxu0 0.0
  %3327 = vmatpush1.msra.mxu0 0.0
  %3328 = vmatprep.subr.mxu0 0.0
  %3329 = vmatpush1.msra.mxu0 0.0
  %3330 = vmatprep.subr.mxu0 0.0
  %3331 = vmatpush1.msra.mxu0 0.0
  %3332 = vmatprep.subr.mxu0 0.0
  %3333 = vmatpush1.msra.mxu0 0.0
  %3334 = vmatprep.subr.mxu0 0.0
  %3335 = vmatpush1.msra.mxu0 0.0
  %3336 = vmatprep.subr.mxu0 0.0
  %3337 = vmatpush1.msra.mxu0 0.0
  %3338 = vmatprep.subr.mxu0 0.0
  %3339 = vmatpush1.msra.mxu0 0.0
  %3340 = vmatprep.subr.mxu0 0.0
  %3341 = vmatpush1.msra.mxu0 0.0
  %3342 = vmatprep.subr.mxu0 0.0
  %3343 = vmatpush1.msra.mxu0 0.0
  %3344 = vmatprep.subr.mxu0 0.0
  %3345 = vmatpush1.msra.mxu0 0.0
  %3346 = vmatprep.subr.mxu0 0.0
  %3347 = vmatpush1.msra.mxu0 0.0
  %3348 = vmatprep.subr.mxu0 0.0
  %3349 = vmatpush1.msra.mxu0 0.0
  %3350 = vmatprep.subr.mxu0 0.0
  %3351 = vmatpush1.msra.mxu0 0.0
  %3352 = vmatprep.subr.mxu0 0.0
  %3353 = vmatpush1.msra.mxu0 0.0
  %3354 = vmatprep.subr.mxu0 0.0
  %3355 = vmatpush1.msra.mxu0 0.0
  %3356 = vmatprep.subr.mxu0 0.0
  %3357 = vmatpush1.msra.mxu0 0.0
  %3358 = vmatprep.mubr.f32.mxu0 0.0
  %3359 = vmatmul.mubr.f32.gmra.mrb[0].mxu0 %v3222
  %v3360 = vpop.f32.mrb[0].mxu0
  %v3361 = vadd.f32 %v2806, %v3360
  %v3362 = vpop.f32.mrb[0].mxu0
  %3363 = vdwg.mxu0
  %3364 = vmatprep.subr.mxu0 0.0
  %3365 = vmatpush1.msra.mxu0 %v2712
  %3366 = vmatprep.subr.mxu0 0.0
  %3367 = vmatpush1.msra.mxu0 %v2713
  %3368 = vmatprep.subr.mxu0 0.0
  %3369 = vmatpush1.msra.mxu0 %v2714
  %3370 = vmatprep.subr.mxu0 0.0
  %3371 = vmatpush1.msra.mxu0 %v2715
  %3372 = vmatprep.subr.mxu0 0.0
  %3373 = vmatpush1.msra.mxu0 %v2716
  %3374 = vmatprep.subr.mxu0 0.0
  %3375 = vmatpush1.msra.mxu0 %v2717
  %3376 = vmatprep.subr.mxu0 0.0
  %3377 = vmatpush1.msra.mxu0 %v2718
  %3378 = vmatprep.subr.mxu0 0.0
  %3379 = vmatpush1.msra.mxu0 %v2719
  %3380 = vmatprep.subr.mxu0 0.0
  %3381 = vmatpush1.msra.mxu0 0.0
  %3382 = vmatprep.subr.mxu0 0.0
  %3383 = vmatpush1.msra.mxu0 0.0
  %3384 = vmatprep.subr.mxu0 0.0
  %3385 = vmatpush1.msra.mxu0 0.0
  %3386 = vmatprep.subr.mxu0 0.0
  %3387 = vmatpush1.msra.mxu0 0.0
  %3388 = vmatprep.subr.mxu0 0.0
  %3389 = vmatpush1.msra.mxu0 0.0
  %3390 = vmatprep.subr.mxu0 0.0
  %3391 = vmatpush1.msra.mxu0 0.0
  %3392 = vmatprep.subr.mxu0 0.0
  %3393 = vmatpush1.msra.mxu0 0.0
  %3394 = vmatprep.subr.mxu0 0.0
  %3395 = vmatpush1.msra.mxu0 0.0
  %3396 = vmatprep.subr.mxu0 0.0
  %3397 = vmatpush1.msra.mxu0 0.0
  %3398 = vmatprep.subr.mxu0 0.0
  %3399 = vmatpush1.msra.mxu0 0.0
  %3400 = vmatprep.subr.mxu0 0.0
  %3401 = vmatpush1.msra.mxu0 0.0
  %3402 = vmatprep.subr.mxu0 0.0
  %3403 = vmatpush1.msra.mxu0 0.0
  %3404 = vmatprep.subr.mxu0 0.0
  %3405 = vmatpush1.msra.mxu0 0.0
  %3406 = vmatprep.subr.mxu0 0.0
  %3407 = vmatpush1.msra.mxu0 0.0
  %3408 = vmatprep.subr.mxu0 0.0
  %3409 = vmatpush1.msra.mxu0 0.0
  %3410 = vmatprep.subr.mxu0 0.0
  %3411 = vmatpush1.msra.mxu0 0.0
  %3412 = vmatprep.subr.mxu0 0.0
  %3413 = vmatpush1.msra.mxu0 0.0
  %3414 = vmatprep.subr.mxu0 0.0
  %3415 = vmatpush1.msra.mxu0 0.0
  %3416 = vmatprep.subr.mxu0 0.0
  %3417 = vmatpush1.msra.mxu0 0.0
  %3418 = vmatprep.subr.mxu0 0.0
  %3419 = vmatpush1.msra.mxu0 0.0
  %3420 = vmatprep.subr.mxu0 0.0
  %3421 = vmatpush1.msra.mxu0 0.0
  %3422 = vmatprep.subr.mxu0 0.0
  %3423 = vmatpush1.msra.mxu0 0.0
  %3424 = vmatprep.subr.mxu0 0.0
  %3425 = vmatpush1.msra.mxu0 0.0
  %3426 = vmatprep.subr.mxu0 0.0
  %3427 = vmatpush1.msra.mxu0 0.0
  %3428 = vmatprep.mubr.f32.mxu0 0.0
  %3429 = vmatmul.mubr.f32.gmra.mrb[0].mxu0 %v3222
  %v3430 = vpop.f32.mrb[0].mxu0
  %v3431 = vadd.f32 %v2882, %v3430
  %v3432 = vpop.f32.mrb[0].mxu0
  %3433 = vdwg.mxu0
  %v3435 = vrot.slane %v3291, 4
  %v3437 = vadd.f32 %v2501, %v3435
  %v3438 = vxor.u32 %v3437, 2147483648
  %v3439 = vmul.f32 %v3438, 1.442695
  %v3440 = vpow.pop %v3439
  %v3441 = vadd.f32 %v3440, 1.0
  %v3442 = vrcp.pop %v3441
  %v3443 = vmul.f32 1.0, %v3442
  %v3445 = vrot.slane %v3361, 4
  %v3447 = vadd.f32 %v2593, %v3445
  %v3448 = vxor.u32 %v3447, 2147483648
  %v3449 = vmul.f32 %v3448, 1.442695
  %v3450 = vpow.pop %v3449
  %v3451 = vadd.f32 %v3450, 1.0
  %v3452 = vrcp.pop %v3451
  %v3453 = vmul.f32 1.0, %v3452
  %v3455 = vrot.slane %v3431, 4
  %v3457 = vmul.f32 %v3443, %v3455
  %v3458 = vadd.f32 %v2685, %v3457
  %v3459 = vtanh.pop %v3458
  %v3460 = vsub.f32 1.0, %v3453
  %v3461 = vmul.f32 %v3460, %v3459
  %v3462 = vrot.slane %v3219, 6
  %v3464 = vmul.f32 %v3453, %v3462
  %v3465 = vadd.f32 %v3461, %v3464
  %v3467 = vrot.slane %v3465, 4
  %v3468 = vsel %vm45, %v3467, 0
  %3470 = vmatprep.subr.mxu0 0.0
  %3471 = vmatpush1.msra.mxu0 %v2694
  %3472 = vmatprep.subr.mxu0 0.0
  %3473 = vmatpush1.msra.mxu0 %v2695
  %3474 = vmatprep.subr.mxu0 0.0
  %3475 = vmatpush1.msra.mxu0 %v2696
  %3476 = vmatprep.subr.mxu0 0.0
  %3477 = vmatpush1.msra.mxu0 %v2697
  %3478 = vmatprep.subr.mxu0 0.0
  %3479 = vmatpush1.msra.mxu0 %v2698
  %3480 = vmatprep.subr.mxu0 0.0
  %3481 = vmatpush1.msra.mxu0 %v2699
  %3482 = vmatprep.subr.mxu0 0.0
  %3483 = vmatpush1.msra.mxu0 %v2700
  %3484 = vmatprep.subr.mxu0 0.0
  %3485 = vmatpush1.msra.mxu0 %v2701
  %3486 = vmatprep.subr.mxu0 0.0
  %3487 = vmatpush1.msra.mxu0 0.0
  %3488 = vmatprep.subr.mxu0 0.0
  %3489 = vmatpush1.msra.mxu0 0.0
  %3490 = vmatprep.subr.mxu0 0.0
  %3491 = vmatpush1.msra.mxu0 0.0
  %3492 = vmatprep.subr.mxu0 0.0
  %3493 = vmatpush1.msra.mxu0 0.0
  %3494 = vmatprep.subr.mxu0 0.0
  %3495 = vmatpush1.msra.mxu0 0.0
  %3496 = vmatprep.subr.mxu0 0.0
  %3497 = vmatpush1.msra.mxu0 0.0
  %3498 = vmatprep.subr.mxu0 0.0
  %3499 = vmatpush1.msra.mxu0 0.0
  %3500 = vmatprep.subr.mxu0 0.0
  %3501 = vmatpush1.msra.mxu0 0.0
  %3502 = vmatprep.subr.mxu0 0.0
  %3503 = vmatpush1.msra.mxu0 0.0
  %3504 = vmatprep.subr.mxu0 0.0
  %3505 = vmatpush1.msra.mxu0 0.0
  %3506 = vmatprep.subr.mxu0 0.0
  %3507 = vmatpush1.msra.mxu0 0.0
  %3508 = vmatprep.subr.mxu0 0.0
  %3509 = vmatpush1.msra.mxu0 0.0
  %3510 = vmatprep.subr.mxu0 0.0
  %3511 = vmatpush1.msra.mxu0 0.0
  %3512 = vmatprep.subr.mxu0 0.0
  %3513 = vmatpush1.msra.mxu0 0.0
  %3514 = vmatprep.subr.mxu0 0.0
  %3515 = vmatpush1.msra.mxu0 0.0
  %3516 = vmatprep.subr.mxu0 0.0
  %3517 = vmatpush1.msra.mxu0 0.0
  %3518 = vmatprep.subr.mxu0 0.0
  %3519 = vmatpush1.msra.mxu0 0.0
  %3520 = vmatprep.subr.mxu0 0.0
  %3521 = vmatpush1.msra.mxu0 0.0
  %3522 = vmatprep.subr.mxu0 0.0
  %3523 = vmatpush1.msra.mxu0 0.0
  %3524 = vmatprep.subr.mxu0 0.0
  %3525 = vmatpush1.msra.mxu0 0.0
  %3526 = vmatprep.subr.mxu0 0.0
  %3527 = vmatpush1.msra.mxu0 0.0
  %3528 = vmatprep.subr.mxu0 0.0
  %3529 = vmatpush1.msra.mxu0 0.0
  %3530 = vmatprep.subr.mxu0 0.0
  %3531 = vmatpush1.msra.mxu0 0.0
  %3532 = vmatprep.subr.mxu0 0.0
  %3533 = vmatpush1.msra.mxu0 0.0
  %3534 = vmatprep.mubr.f32.mxu0 0.0
  %3535 = vmatmul.mubr.f32.gmra.mrb[0].mxu0 %v3468
  %v3536 = vpop.f32.mrb[0].mxu0
  %v3537 = vadd.f32 %v2730, %v3536
  %v3538 = vpop.f32.mrb[0].mxu0
  %3539 = vdwg.mxu0
  %3540 = vmatprep.subr.mxu0 0.0
  %3541 = vmatpush1.msra.mxu0 %v2703
  %3542 = vmatprep.subr.mxu0 0.0
  %3543 = vmatpush1.msra.mxu0 %v2704
  %3544 = vmatprep.subr.mxu0 0.0
  %3545 = vmatpush1.msra.mxu0 %v2705
  %3546 = vmatprep.subr.mxu0 0.0
  %3547 = vmatpush1.msra.mxu0 %v2706
  %3548 = vmatprep.subr.mxu0 0.0
  %3549 = vmatpush1.msra.mxu0 %v2707
  %3550 = vmatprep.subr.mxu0 0.0
  %3551 = vmatpush1.msra.mxu0 %v2708
  %3552 = vmatprep.subr.mxu0 0.0
  %3553 = vmatpush1.msra.mxu0 %v2709
  %3554 = vmatprep.subr.mxu0 0.0
  %3555 = vmatpush1.msra.mxu0 %v2710
  %3556 = vmatprep.subr.mxu0 0.0
  %3557 = vmatpush1.msra.mxu0 0.0
  %3558 = vmatprep.subr.mxu0 0.0
  %3559 = vmatpush1.msra.mxu0 0.0
  %3560 = vmatprep.subr.mxu0 0.0
  %3561 = vmatpush1.msra.mxu0 0.0
  %3562 = vmatprep.subr.mxu0 0.0
  %3563 = vmatpush1.msra.mxu0 0.0
  %3564 = vmatprep.subr.mxu0 0.0
  %3565 = vmatpush1.msra.mxu0 0.0
  %3566 = vmatprep.subr.mxu0 0.0
  %3567 = vmatpush1.msra.mxu0 0.0
  %3568 = vmatprep.subr.mxu0 0.0
  %3569 = vmatpush1.msra.mxu0 0.0
  %3570 = vmatprep.subr.mxu0 0.0
  %3571 = vmatpush1.msra.mxu0 0.0
  %3572 = vmatprep.subr.mxu0 0.0
  %3573 = vmatpush1.msra.mxu0 0.0
  %3574 = vmatprep.subr.mxu0 0.0
  %3575 = vmatpush1.msra.mxu0 0.0
  %3576 = vmatprep.subr.mxu0 0.0
  %3577 = vmatpush1.msra.mxu0 0.0
  %3578 = vmatprep.subr.mxu0 0.0
  %3579 = vmatpush1.msra.mxu0 0.0
  %3580 = vmatprep.subr.mxu0 0.0
  %3581 = vmatpush1.msra.mxu0 0.0
  %3582 = vmatprep.subr.mxu0 0.0
  %3583 = vmatpush1.msra.mxu0 0.0
  %3584 = vmatprep.subr.mxu0 0.0
  %3585 = vmatpush1.msra.mxu0 0.0
  %3586 = vmatprep.subr.mxu0 0.0
  %3587 = vmatpush1.msra.mxu0 0.0
  %3588 = vmatprep.subr.mxu0 0.0
  %3589 = vmatpush1.msra.mxu0 0.0
  %3590 = vmatprep.subr.mxu0 0.0
  %3591 = vmatpush1.msra.mxu0 0.0
  %3592 = vmatprep.subr.mxu0 0.0
  %3593 = vmatpush1.msra.mxu0 0.0
  %3594 = vmatprep.subr.mxu0 0.0
  %3595 = vmatpush1.msra.mxu0 0.0
  %3596 = vmatprep.subr.mxu0 0.0
  %3597 = vmatpush1.msra.mxu0 0.0
  %3598 = vmatprep.subr.mxu0 0.0
  %3599 = vmatpush1.msra.mxu0 0.0
  %3600 = vmatprep.subr.mxu0 0.0
  %3601 = vmatpush1.msra.mxu0 0.0
  %3602 = vmatprep.subr.mxu0 0.0
  %3603 = vmatpush1.msra.mxu0 0.0
  %3604 = vmatprep.mubr.f32.mxu0 0.0
  %3605 = vmatmul.mubr.f32.gmra.mrb[0].mxu0 %v3468
  %v3606 = vpop.f32.mrb[0].mxu0
  %v3607 = vadd.f32 %v2806, %v3606
  %v3608 = vpop.f32.mrb[0].mxu0
  %3609 = vdwg.mxu0
  %3610 = vmatprep.subr.mxu0 0.0
  %3611 = vmatpush1.msra.mxu0 %v2712
  %3612 = vmatprep.subr.mxu0 0.0
  %3613 = vmatpush1.msra.mxu0 %v2713
  %3614 = vmatprep.subr.mxu0 0.0
  %3615 = vmatpush1.msra.mxu0 %v2714
  %3616 = vmatprep.subr.mxu0 0.0
  %3617 = vmatpush1.msra.mxu0 %v2715
  %3618 = vmatprep.subr.mxu0 0.0
  %3619 = vmatpush1.msra.mxu0 %v2716
  %3620 = vmatprep.subr.mxu0 0.0
  %3621 = vmatpush1.msra.mxu0 %v2717
  %3622 = vmatprep.subr.mxu0 0.0
  %3623 = vmatpush1.msra.mxu0 %v2718
  %3624 = vmatprep.subr.mxu0 0.0
  %3625 = vmatpush1.msra.mxu0 %v2719
  %3626 = vmatprep.subr.mxu0 0.0
  %3627 = vmatpush1.msra.mxu0 0.0
  %3628 = vmatprep.subr.mxu0 0.0
  %3629 = vmatpush1.msra.mxu0 0.0
  %3630 = vmatprep.subr.mxu0 0.0
  %3631 = vmatpush1.msra.mxu0 0.0
  %3632 = vmatprep.subr.mxu0 0.0
  %3633 = vmatpush1.msra.mxu0 0.0
  %3634 = vmatprep.subr.mxu0 0.0
  %3635 = vmatpush1.msra.mxu0 0.0
  %3636 = vmatprep.subr.mxu0 0.0
  %3637 = vmatpush1.msra.mxu0 0.0
  %3638 = vmatprep.subr.mxu0 0.0
  %3639 = vmatpush1.msra.mxu0 0.0
  %3640 = vmatprep.subr.mxu0 0.0
  %3641 = vmatpush1.msra.mxu0 0.0
  %3642 = vmatprep.subr.mxu0 0.0
  %3643 = vmatpush1.msra.mxu0 0.0
  %3644 = vmatprep.subr.mxu0 0.0
  %3645 = vmatpush1.msra.mxu0 0.0
  %3646 = vmatprep.subr.mxu0 0.0
  %3647 = vmatpush1.msra.mxu0 0.0
  %3648 = vmatprep.subr.mxu0 0.0
  %3649 = vmatpush1.msra.mxu0 0.0
  %3650 = vmatprep.subr.mxu0 0.0
  %3651 = vmatpush1.msra.mxu0 0.0
  %3652 = vmatprep.subr.mxu0 0.0
  %3653 = vmatpush1.msra.mxu0 0.0
  %3654 = vmatprep.subr.mxu0 0.0
  %3655 = vmatpush1.msra.mxu0 0.0
  %3656 = vmatprep.subr.mxu0 0.0
  %3657 = vmatpush1.msra.mxu0 0.0
  %3658 = vmatprep.subr.mxu0 0.0
  %3659 = vmatpush1.msra.mxu0 0.0
  %3660 = vmatprep.subr.mxu0 0.0
  %3661 = vmatpush1.msra.mxu0 0.0
  %3662 = vmatprep.subr.mxu0 0.0
  %3663 = vmatpush1.msra.mxu0 0.0
  %3664 = vmatprep.subr.mxu0 0.0
  %3665 = vmatpush1.msra.mxu0 0.0
  %3666 = vmatprep.subr.mxu0 0.0
  %3667 = vmatpush1.msra.mxu0 0.0
  %3668 = vmatprep.subr.mxu0 0.0
  %3669 = vmatpush1.msra.mxu0 0.0
  %3670 = vmatprep.subr.mxu0 0.0
  %3671 = vmatpush1.msra.mxu0 0.0
  %3672 = vmatprep.subr.mxu0 0.0
  %3673 = vmatpush1.msra.mxu0 0.0
  %3674 = vmatprep.mubr.f32.mxu0 0.0
  %3675 = vmatmul.mubr.f32.gmra.mrb[0].mxu0 %v3468
  %v3676 = vpop.f32.mrb[0].mxu0
  %v3677 = vadd.f32 %v2882, %v3676
  %v3678 = vpop.f32.mrb[0].mxu0
  %3679 = vdwg.mxu0
  %v3681 = vrot.slane %v3537, 2
  %v3683 = vadd.f32 %v2501, %v3681
  %v3684 = vxor.u32 %v3683, 2147483648
  %v3685 = vmul.f32 %v3684, 1.442695
  %v3686 = vpow.pop %v3685
  %v3687 = vadd.f32 %v3686, 1.0
  %v3688 = vrcp.pop %v3687
  %v3689 = vmul.f32 1.0, %v3688
  %v3691 = vrot.slane %v3607, 2
  %v3693 = vadd.f32 %v2593, %v3691
  %v3694 = vxor.u32 %v3693, 2147483648
  %v3695 = vmul.f32 %v3694, 1.442695
  %v3696 = vpow.pop %v3695
  %v3697 = vadd.f32 %v3696, 1.0
  %v3698 = vrcp.pop %v3697
  %v3699 = vmul.f32 1.0, %v3698
  %v3701 = vrot.slane %v3677, 2
  %v3703 = vmul.f32 %v3689, %v3701
  %v3704 = vadd.f32 %v2685, %v3703
  %v3705 = vtanh.pop %v3704
  %v3706 = vsub.f32 1.0, %v3699
  %v3707 = vmul.f32 %v3706, %v3705
  %v3708 = vrot.slane %v3465, 6
  %v3710 = vmul.f32 %v3699, %v3708
  %v3711 = vadd.f32 %v3707, %v3710
  %v3713 = vrot.slane %v3711, 6
  %v3714 = vsel %vm45, %v3713, 0
  %3716 = vmatprep.subr.mxu0 0.0
  %3717 = vmatpush1.msra.mxu0 %v2694
  %3718 = vmatprep.subr.mxu0 0.0
  %3719 = vmatpush1.msra.mxu0 %v2695
  %3720 = vmatprep.subr.mxu0 0.0
  %3721 = vmatpush1.msra.mxu0 %v2696
  %3722 = vmatprep.subr.mxu0 0.0
  %3723 = vmatpush1.msra.mxu0 %v2697
  %3724 = vmatprep.subr.mxu0 0.0
  %3725 = vmatpush1.msra.mxu0 %v2698
  %3726 = vmatprep.subr.mxu0 0.0
  %3727 = vmatpush1.msra.mxu0 %v2699
  %3728 = vmatprep.subr.mxu0 0.0
  %3729 = vmatpush1.msra.mxu0 %v2700
  %3730 = vmatprep.subr.mxu0 0.0
  %3731 = vmatpush1.msra.mxu0 %v2701
  %3732 = vmatprep.subr.mxu0 0.0
  %3733 = vmatpush1.msra.mxu0 0.0
  %3734 = vmatprep.subr.mxu0 0.0
  %3735 = vmatpush1.msra.mxu0 0.0
  %3736 = vmatprep.subr.mxu0 0.0
  %3737 = vmatpush1.msra.mxu0 0.0
  %3738 = vmatprep.subr.mxu0 0.0
  %3739 = vmatpush1.msra.mxu0 0.0
  %3740 = vmatprep.subr.mxu0 0.0
  %3741 = vmatpush1.msra.mxu0 0.0
  %3742 = vmatprep.subr.mxu0 0.0
  %3743 = vmatpush1.msra.mxu0 0.0
  %3744 = vmatprep.subr.mxu0 0.0
  %3745 = vmatpush1.msra.mxu0 0.0
  %3746 = vmatprep.subr.mxu0 0.0
  %3747 = vmatpush1.msra.mxu0 0.0
  %3748 = vmatprep.subr.mxu0 0.0
  %3749 = vmatpush1.msra.mxu0 0.0
  %3750 = vmatprep.subr.mxu0 0.0
  %3751 = vmatpush1.msra.mxu0 0.0
  %3752 = vmatprep.subr.mxu0 0.0
  %3753 = vmatpush1.msra.mxu0 0.0
  %3754 = vmatprep.subr.mxu0 0.0
  %3755 = vmatpush1.msra.mxu0 0.0
  %3756 = vmatprep.subr.mxu0 0.0
  %3757 = vmatpush1.msra.mxu0 0.0
  %3758 = vmatprep.subr.mxu0 0.0
  %3759 = vmatpush1.msra.mxu0 0.0
  %3760 = vmatprep.subr.mxu0 0.0
  %3761 = vmatpush1.msra.mxu0 0.0
  %3762 = vmatprep.subr.mxu0 0.0
  %3763 = vmatpush1.msra.mxu0 0.0
  %3764 = vmatprep.subr.mxu0 0.0
  %3765 = vmatpush1.msra.mxu0 0.0
  %3766 = vmatprep.subr.mxu0 0.0
  %3767 = vmatpush1.msra.mxu0 0.0
  %3768 = vmatprep.subr.mxu0 0.0
  %3769 = vmatpush1.msra.mxu0 0.0
  %3770 = vmatprep.subr.mxu0 0.0
  %3771 = vmatpush1.msra.mxu0 0.0
  %3772 = vmatprep.subr.mxu0 0.0
  %3773 = vmatpush1.msra.mxu0 0.0
  %3774 = vmatprep.subr.mxu0 0.0
  %3775 = vmatpush1.msra.mxu0 0.0
  %3776 = vmatprep.subr.mxu0 0.0
  %3777 = vmatpush1.msra.mxu0 0.0
  %3778 = vmatprep.subr.mxu0 0.0
  %3779 = vmatpush1.msra.mxu0 0.0
  %3780 = vmatprep.mubr.f32.mxu0 0.0
  %3781 = vmatmul.mubr.f32.gmra.mrb[0].mxu0 %v3714
  %v3782 = vpop.f32.mrb[0].mxu0
  %v3783 = vadd.f32 %v2730, %v3782
  %v3784 = vpop.f32.mrb[0].mxu0
  %3785 = vdwg.mxu0
  %3786 = vmatprep.subr.mxu0 0.0
  %3787 = vmatpush1.msra.mxu0 %v2703
  %3788 = vmatprep.subr.mxu0 0.0
  %3789 = vmatpush1.msra.mxu0 %v2704
  %3790 = vmatprep.subr.mxu0 0.0
  %3791 = vmatpush1.msra.mxu0 %v2705
  %3792 = vmatprep.subr.mxu0 0.0
  %3793 = vmatpush1.msra.mxu0 %v2706
  %3794 = vmatprep.subr.mxu0 0.0
  %3795 = vmatpush1.msra.mxu0 %v2707
  %3796 = vmatprep.subr.mxu0 0.0
  %3797 = vmatpush1.msra.mxu0 %v2708
  %3798 = vmatprep.subr.mxu0 0.0
  %3799 = vmatpush1.msra.mxu0 %v2709
  %3800 = vmatprep.subr.mxu0 0.0
  %3801 = vmatpush1.msra.mxu0 %v2710
  %3802 = vmatprep.subr.mxu0 0.0
  %3803 = vmatpush1.msra.mxu0 0.0
  %3804 = vmatprep.subr.mxu0 0.0
  %3805 = vmatpush1.msra.mxu0 0.0
  %3806 = vmatprep.subr.mxu0 0.0
  %3807 = vmatpush1.msra.mxu0 0.0
  %3808 = vmatprep.subr.mxu0 0.0
  %3809 = vmatpush1.msra.mxu0 0.0
  %3810 = vmatprep.subr.mxu0 0.0
  %3811 = vmatpush1.msra.mxu0 0.0
  %3812 = vmatprep.subr.mxu0 0.0
  %3813 = vmatpush1.msra.mxu0 0.0
  %3814 = vmatprep.subr.mxu0 0.0
  %3815 = vmatpush1.msra.mxu0 0.0
  %3816 = vmatprep.subr.mxu0 0.0
  %3817 = vmatpush1.msra.mxu0 0.0
  %3818 = vmatprep.subr.mxu0 0.0
  %3819 = vmatpush1.msra.mxu0 0.0
  %3820 = vmatprep.subr.mxu0 0.0
  %3821 = vmatpush1.msra.mxu0 0.0
  %3822 = vmatprep.subr.mxu0 0.0
  %3823 = vmatpush1.msra.mxu0 0.0
  %3824 = vmatprep.subr.mxu0 0.0
  %3825 = vmatpush1.msra.mxu0 0.0
  %3826 = vmatprep.subr.mxu0 0.0
  %3827 = vmatpush1.msra.mxu0 0.0
  %3828 = vmatprep.subr.mxu0 0.0
  %3829 = vmatpush1.msra.mxu0 0.0
  %3830 = vmatprep.subr.mxu0 0.0
  %3831 = vmatpush1.msra.mxu0 0.0
  %3832 = vmatprep.subr.mxu0 0.0
  %3833 = vmatpush1.msra.mxu0 0.0
  %3834 = vmatprep.subr.mxu0 0.0
  %3835 = vmatpush1.msra.mxu0 0.0
  %3836 = vmatprep.subr.mxu0 0.0
  %3837 = vmatpush1.msra.mxu0 0.0
  %3838 = vmatprep.subr.mxu0 0.0
  %3839 = vmatpush1.msra.mxu0 0.0
  %3840 = vmatprep.subr.mxu0 0.0
  %3841 = vmatpush1.msra.mxu0 0.0
  %3842 = vmatprep.subr.mxu0 0.0
  %3843 = vmatpush1.msra.mxu0 0.0
  %3844 = vmatprep.subr.mxu0 0.0
  %3845 = vmatpush1.msra.mxu0 0.0
  %3846 = vmatprep.subr.mxu0 0.0
  %3847 = vmatpush1.msra.mxu0 0.0
  %3848 = vmatprep.subr.mxu0 0.0
  %3849 = vmatpush1.msra.mxu0 0.0
  %3850 = vmatprep.mubr.f32.mxu0 0.0
  %3851 = vmatmul.mubr.f32.gmra.mrb[0].mxu0 %v3714
  %v3852 = vpop.f32.mrb[0].mxu0
  %v3853 = vadd.f32 %v2806, %v3852
  %v3854 = vpop.f32.mrb[0].mxu0
  %3855 = vdwg.mxu0
  %3856 = vmatprep.subr.mxu0 0.0
  %3857 = vmatpush1.msra.mxu0 %v2712
  %3858 = vmatprep.subr.mxu0 0.0
  %3859 = vmatpush1.msra.mxu0 %v2713
  %3860 = vmatprep.subr.mxu0 0.0
  %3861 = vmatpush1.msra.mxu0 %v2714
  %3862 = vmatprep.subr.mxu0 0.0
  %3863 = vmatpush1.msra.mxu0 %v2715
  %3864 = vmatprep.subr.mxu0 0.0
  %3865 = vmatpush1.msra.mxu0 %v2716
  %3866 = vmatprep.subr.mxu0 0.0
  %3867 = vmatpush1.msra.mxu0 %v2717
  %3868 = vmatprep.subr.mxu0 0.0
  %3869 = vmatpush1.msra.mxu0 %v2718
  %3870 = vmatprep.subr.mxu0 0.0
  %3871 = vmatpush1.msra.mxu0 %v2719
  %3872 = vmatprep.subr.mxu0 0.0
  %3873 = vmatpush1.msra.mxu0 0.0
  %3874 = vmatprep.subr.mxu0 0.0
  %3875 = vmatpush1.msra.mxu0 0.0
  %3876 = vmatprep.subr.mxu0 0.0
  %3877 = vmatpush1.msra.mxu0 0.0
  %3878 = vmatprep.subr.mxu0 0.0
  %3879 = vmatpush1.msra.mxu0 0.0
  %3880 = vmatprep.subr.mxu0 0.0
  %3881 = vmatpush1.msra.mxu0 0.0
  %3882 = vmatprep.subr.mxu0 0.0
  %3883 = vmatpush1.msra.mxu0 0.0
  %3884 = vmatprep.subr.mxu0 0.0
  %3885 = vmatpush1.msra.mxu0 0.0
  %3886 = vmatprep.subr.mxu0 0.0
  %3887 = vmatpush1.msra.mxu0 0.0
  %3888 = vmatprep.subr.mxu0 0.0
  %3889 = vmatpush1.msra.mxu0 0.0
  %3890 = vmatprep.subr.mxu0 0.0
  %3891 = vmatpush1.msra.mxu0 0.0
  %3892 = vmatprep.subr.mxu0 0.0
  %3893 = vmatpush1.msra.mxu0 0.0
  %3894 = vmatprep.subr.mxu0 0.0
  %3895 = vmatpush1.msra.mxu0 0.0
  %3896 = vmatprep.subr.mxu0 0.0
  %3897 = vmatpush1.msra.mxu0 0.0
  %3898 = vmatprep.subr.mxu0 0.0
  %3899 = vmatpush1.msra.mxu0 0.0
  %3900 = vmatprep.subr.mxu0 0.0
  %3901 = vmatpush1.msra.mxu0 0.0
  %3902 = vmatprep.subr.mxu0 0.0
  %3903 = vmatpush1.msra.mxu0 0.0
  %3904 = vmatprep.subr.mxu0 0.0
  %3905 = vmatpush1.msra.mxu0 0.0
  %3906 = vmatprep.subr.mxu0 0.0
  %3907 = vmatpush1.msra.mxu0 0.0
  %3908 = vmatprep.subr.mxu0 0.0
  %3909 = vmatpush1.msra.mxu0 0.0
  %3910 = vmatprep.subr.mxu0 0.0
  %3911 = vmatpush1.msra.mxu0 0.0
  %3912 = vmatprep.subr.mxu0 0.0
  %3913 = vmatpush1.msra.mxu0 0.0
  %3914 = vmatprep.subr.mxu0 0.0
  %3915 = vmatpush1.msra.mxu0 0.0
  %3916 = vmatprep.subr.mxu0 0.0
  %3917 = vmatpush1.msra.mxu0 0.0
  %3918 = vmatprep.subr.mxu0 0.0
  %3919 = vmatpush1.msra.mxu0 0.0
  %3920 = vmatprep.mubr.f32.mxu0 0.0
  %3921 = vmatmul.mubr.f32.gmra.mrb[0].mxu0 %v3714
  %v3922 = vpop.f32.mrb[0].mxu0
  %v3923 = vadd.f32 %v2882, %v3922
  %v3924 = vpop.f32.mrb[0].mxu0
  %3925 = vdwg.mxu0
  %v3926 = vadd.f32 %v2506, %v3783
  %v3927 = vxor.u32 %v3926, 2147483648
  %v3928 = vmul.f32 %v3927, 1.442695
  %v3929 = vpow.pop %v3928
  %v3930 = vadd.f32 %v3929, 1.0
  %v3931 = vrcp.pop %v3930
  %v3932 = vmul.f32 1.0, %v3931
  %v3933 = vadd.f32 %v2598, %v3853
  %v3934 = vxor.u32 %v3933, 2147483648
  %v3935 = vmul.f32 %v3934, 1.442695
  %v3936 = vpow.pop %v3935
  %v3937 = vadd.f32 %v3936, 1.0
  %v3938 = vrcp.pop %v3937
  %v3939 = vmul.f32 1.0, %v3938
  %v3940 = vmul.f32 %v3932, %v3923
  %v3941 = vadd.f32 %v2690, %v3940
  %v3942 = vtanh.pop %v3941
  %v3943 = vsub.f32 1.0, %v3939
  %v3944 = vmul.f32 %v3943, %v3942
  %v3946 = vmul.f32 %v3939, %v3713
  %v3947 = vadd.f32 %v3944, %v3946
  %v3949 = vsel %vm45, %v3947, 0
  %3951 = vmatprep.subr.mxu0 0.0
  %3952 = vmatpush1.msra.mxu0 %v2694
  %3953 = vmatprep.subr.mxu0 0.0
  %3954 = vmatpush1.msra.mxu0 %v2695
  %3955 = vmatprep.subr.mxu0 0.0
  %3956 = vmatpush1.msra.mxu0 %v2696
  %3957 = vmatprep.subr.mxu0 0.0
  %3958 = vmatpush1.msra.mxu0 %v2697
  %3959 = vmatprep.subr.mxu0 0.0
  %3960 = vmatpush1.msra.mxu0 %v2698
  %3961 = vmatprep.subr.mxu0 0.0
  %3962 = vmatpush1.msra.mxu0 %v2699
  %3963 = vmatprep.subr.mxu0 0.0
  %3964 = vmatpush1.msra.mxu0 %v2700
  %3965 = vmatprep.subr.mxu0 0.0
  %3966 = vmatpush1.msra.mxu0 %v2701
  %3967 = vmatprep.subr.mxu0 0.0
  %3968 = vmatpush1.msra.mxu0 0.0
  %3969 = vmatprep.subr.mxu0 0.0
  %3970 = vmatpush1.msra.mxu0 0.0
  %3971 = vmatprep.subr.mxu0 0.0
  %3972 = vmatpush1.msra.mxu0 0.0
  %3973 = vmatprep.subr.mxu0 0.0
  %3974 = vmatpush1.msra.mxu0 0.0
  %3975 = vmatprep.subr.mxu0 0.0
  %3976 = vmatpush1.msra.mxu0 0.0
  %3977 = vmatprep.subr.mxu0 0.0
  %3978 = vmatpush1.msra.mxu0 0.0
  %3979 = vmatprep.subr.mxu0 0.0
  %3980 = vmatpush1.msra.mxu0 0.0
  %3981 = vmatprep.subr.mxu0 0.0
  %3982 = vmatpush1.msra.mxu0 0.0
  %3983 = vmatprep.subr.mxu0 0.0
  %3984 = vmatpush1.msra.mxu0 0.0
  %3985 = vmatprep.subr.mxu0 0.0
  %3986 = vmatpush1.msra.mxu0 0.0
  %3987 = vmatprep.subr.mxu0 0.0
  %3988 = vmatpush1.msra.mxu0 0.0
  %3989 = vmatprep.subr.mxu0 0.0
  %3990 = vmatpush1.msra.mxu0 0.0
  %3991 = vmatprep.subr.mxu0 0.0
  %3992 = vmatpush1.msra.mxu0 0.0
  %3993 = vmatprep.subr.mxu0 0.0
  %3994 = vmatpush1.msra.mxu0 0.0
  %3995 = vmatprep.subr.mxu0 0.0
  %3996 = vmatpush1.msra.mxu0 0.0
  %3997 = vmatprep.subr.mxu0 0.0
  %3998 = vmatpush1.msra.mxu0 0.0
  %3999 = vmatprep.subr.mxu0 0.0
  %4000 = vmatpush1.msra.mxu0 0.0
  %4001 = vmatprep.subr.mxu0 0.0
  %4002 = vmatpush1.msra.mxu0 0.0
  %4003 = vmatprep.subr.mxu0 0.0
  %4004 = vmatpush1.msra.mxu0 0.0
  %4005 = vmatprep.subr.mxu0 0.0
  %4006 = vmatpush1.msra.mxu0 0.0
  %4007 = vmatprep.subr.mxu0 0.0
  %4008 = vmatpush1.msra.mxu0 0.0
  %4009 = vmatprep.subr.mxu0 0.0
  %4010 = vmatpush1.msra.mxu0 0.0
  %4011 = vmatprep.subr.mxu0 0.0
  %4012 = vmatpush1.msra.mxu0 0.0
  %4013 = vmatprep.subr.mxu0 0.0
  %4014 = vmatpush1.msra.mxu0 0.0
  %4015 = vmatprep.mubr.f32.mxu0 0.0
  %4016 = vmatmul.mubr.f32.gmra.mrb[0].mxu0 %v3949
  %v4017 = vpop.f32.mrb[0].mxu0
  %v4018 = vadd.f32 %v2730, %v4017
  %v4019 = vpop.f32.mrb[0].mxu0
  %4020 = vdwg.mxu0
  %4021 = vmatprep.subr.mxu0 0.0
  %4022 = vmatpush1.msra.mxu0 %v2703
  %4023 = vmatprep.subr.mxu0 0.0
  %4024 = vmatpush1.msra.mxu0 %v2704
  %4025 = vmatprep.subr.mxu0 0.0
  %4026 = vmatpush1.msra.mxu0 %v2705
  %4027 = vmatprep.subr.mxu0 0.0
  %4028 = vmatpush1.msra.mxu0 %v2706
  %4029 = vmatprep.subr.mxu0 0.0
  %4030 = vmatpush1.msra.mxu0 %v2707
  %4031 = vmatprep.subr.mxu0 0.0
  %4032 = vmatpush1.msra.mxu0 %v2708
  %4033 = vmatprep.subr.mxu0 0.0
  %4034 = vmatpush1.msra.mxu0 %v2709
  %4035 = vmatprep.subr.mxu0 0.0
  %4036 = vmatpush1.msra.mxu0 %v2710
  %4037 = vmatprep.subr.mxu0 0.0
  %4038 = vmatpush1.msra.mxu0 0.0
  %4039 = vmatprep.subr.mxu0 0.0
  %4040 = vmatpush1.msra.mxu0 0.0
  %4041 = vmatprep.subr.mxu0 0.0
  %4042 = vmatpush1.msra.mxu0 0.0
  %4043 = vmatprep.subr.mxu0 0.0
  %4044 = vmatpush1.msra.mxu0 0.0
  %4045 = vmatprep.subr.mxu0 0.0
  %4046 = vmatpush1.msra.mxu0 0.0
  %4047 = vmatprep.subr.mxu0 0.0
  %4048 = vmatpush1.msra.mxu0 0.0
  %4049 = vmatprep.subr.mxu0 0.0
  %4050 = vmatpush1.msra.mxu0 0.0
  %4051 = vmatprep.subr.mxu0 0.0
  %4052 = vmatpush1.msra.mxu0 0.0
  %4053 = vmatprep.subr.mxu0 0.0
  %4054 = vmatpush1.msra.mxu0 0.0
  %4055 = vmatprep.subr.mxu0 0.0
  %4056 = vmatpush1.msra.mxu0 0.0
  %4057 = vmatprep.subr.mxu0 0.0
  %4058 = vmatpush1.msra.mxu0 0.0
  %4059 = vmatprep.subr.mxu0 0.0
  %4060 = vmatpush1.msra.mxu0 0.0
  %4061 = vmatprep.subr.mxu0 0.0
  %4062 = vmatpush1.msra.mxu0 0.0
  %4063 = vmatprep.subr.mxu0 0.0
  %4064 = vmatpush1.msra.mxu0 0.0
  %4065 = vmatprep.subr.mxu0 0.0
  %4066 = vmatpush1.msra.mxu0 0.0
  %4067 = vmatprep.subr.mxu0 0.0
  %4068 = vmatpush1.msra.mxu0 0.0
  %4069 = vmatprep.subr.mxu0 0.0
  %4070 = vmatpush1.msra.mxu0 0.0
  %4071 = vmatprep.subr.mxu0 0.0
  %4072 = vmatpush1.msra.mxu0 0.0
  %4073 = vmatprep.subr.mxu0 0.0
  %4074 = vmatpush1.msra.mxu0 0.0
  %4075 = vmatprep.subr.mxu0 0.0
  %4076 = vmatpush1.msra.mxu0 0.0
  %4077 = vmatprep.subr.mxu0 0.0
  %4078 = vmatpush1.msra.mxu0 0.0
  %4079 = vmatprep.subr.mxu0 0.0
  %4080 = vmatpush1.msra.mxu0 0.0
  %4081 = vmatprep.subr.mxu0 0.0
  %4082 = vmatpush1.msra.mxu0 0.0
  %4083 = vmatprep.subr.mxu0 0.0
  %4084 = vmatpush1.msra.mxu0 0.0
  %4085 = vmatprep.mubr.f32.mxu0 0.0
  %4086 = vmatmul.mubr.f32.gmra.mrb[0].mxu0 %v3949
  %v4087 = vpop.f32.mrb[0].mxu0
  %v4088 = vadd.f32 %v2806, %v4087
  %v4089 = vpop.f32.mrb[0].mxu0
  %4090 = vdwg.mxu0
  %4091 = vmatprep.subr.mxu0 0.0
  %4092 = vmatpush1.msra.mxu0 %v2712
  %4093 = vmatprep.subr.mxu0 0.0
  %4094 = vmatpush1.msra.mxu0 %v2713
  %4095 = vmatprep.subr.mxu0 0.0
  %4096 = vmatpush1.msra.mxu0 %v2714
  %4097 = vmatprep.subr.mxu0 0.0
  %4098 = vmatpush1.msra.mxu0 %v2715
  %4099 = vmatprep.subr.mxu0 0.0
  %4100 = vmatpush1.msra.mxu0 %v2716
  %4101 = vmatprep.subr.mxu0 0.0
  %4102 = vmatpush1.msra.mxu0 %v2717
  %4103 = vmatprep.subr.mxu0 0.0
  %4104 = vmatpush1.msra.mxu0 %v2718
  %4105 = vmatprep.subr.mxu0 0.0
  %4106 = vmatpush1.msra.mxu0 %v2719
  %4107 = vmatprep.subr.mxu0 0.0
  %4108 = vmatpush1.msra.mxu0 0.0
  %4109 = vmatprep.subr.mxu0 0.0
  %4110 = vmatpush1.msra.mxu0 0.0
  %4111 = vmatprep.subr.mxu0 0.0
  %4112 = vmatpush1.msra.mxu0 0.0
  %4113 = vmatprep.subr.mxu0 0.0
  %4114 = vmatpush1.msra.mxu0 0.0
  %4115 = vmatprep.subr.mxu0 0.0
  %4116 = vmatpush1.msra.mxu0 0.0
  %4117 = vmatprep.subr.mxu0 0.0
  %4118 = vmatpush1.msra.mxu0 0.0
  %4119 = vmatprep.subr.mxu0 0.0
  %4120 = vmatpush1.msra.mxu0 0.0
  %4121 = vmatprep.subr.mxu0 0.0
  %4122 = vmatpush1.msra.mxu0 0.0
  %4123 = vmatprep.subr.mxu0 0.0
  %4124 = vmatpush1.msra.mxu0 0.0
  %4125 = vmatprep.subr.mxu0 0.0
  %4126 = vmatpush1.msra.mxu0 0.0
  %4127 = vmatprep.subr.mxu0 0.0
  %4128 = vmatpush1.msra.mxu0 0.0
  %4129 = vmatprep.subr.mxu0 0.0
  %4130 = vmatpush1.msra.mxu0 0.0
  %4131 = vmatprep.subr.mxu0 0.0
  %4132 = vmatpush1.msra.mxu0 0.0
  %4133 = vmatprep.subr.mxu0 0.0
  %4134 = vmatpush1.msra.mxu0 0.0
  %4135 = vmatprep.subr.mxu0 0.0
  %4136 = vmatpush1.msra.mxu0 0.0
  %4137 = vmatprep.subr.mxu0 0.0
  %4138 = vmatpush1.msra.mxu0 0.0
  %4139 = vmatprep.subr.mxu0 0.0
  %4140 = vmatpush1.msra.mxu0 0.0
  %4141 = vmatprep.subr.mxu0 0.0
  %4142 = vmatpush1.msra.mxu0 0.0
  %4143 = vmatprep.subr.mxu0 0.0
  %4144 = vmatpush1.msra.mxu0 0.0
  %4145 = vmatprep.subr.mxu0 0.0
  %4146 = vmatpush1.msra.mxu0 0.0
  %4147 = vmatprep.subr.mxu0 0.0
  %4148 = vmatpush1.msra.mxu0 0.0
  %4149 = vmatprep.subr.mxu0 0.0
  %4150 = vmatpush1.msra.mxu0 0.0
  %4151 = vmatprep.subr.mxu0 0.0
  %4152 = vmatpush1.msra.mxu0 0.0
  %4153 = vmatprep.subr.mxu0 0.0
  %4154 = vmatpush1.msra.mxu0 0.0
  %4155 = vmatprep.mubr.f32.mxu0 0.0
  %4156 = vmatmul.mubr.f32.gmra.mrb[0].mxu0 %v3949
  %v4157 = vpop.f32.mrb[0].mxu0
  %v4158 = vadd.f32 %v2882, %v4157
  %v4159 = vpop.f32.mrb[0].mxu0
  %4160 = vdwg.mxu0
  %v4162 = vrot.slane %v4018, 6
  %v4164 = vadd.f32 %v2506, %v4162
  %v4165 = vxor.u32 %v4164, 2147483648
  %v4166 = vmul.f32 %v4165, 1.442695
  %v4167 = vpow.pop %v4166
  %v4168 = vadd.f32 %v4167, 1.0
  %v4169 = vrcp.pop %v4168
  %v4170 = vmul.f32 1.0, %v4169
  %v4172 = vrot.slane %v4088, 6
  %v4174 = vadd.f32 %v2598, %v4172
  %v4175 = vxor.u32 %v4174, 2147483648
  %v4176 = vmul.f32 %v4175, 1.442695
  %v4177 = vpow.pop %v4176
  %v4178 = vadd.f32 %v4177, 1.0
  %v4179 = vrcp.pop %v4178
  %v4180 = vmul.f32 1.0, %v4179
  %v4182 = vrot.slane %v4158, 6
  %v4184 = vmul.f32 %v4170, %v4182
  %v4185 = vadd.f32 %v2690, %v4184
  %v4186 = vtanh.pop %v4185
  %v4187 = vsub.f32 1.0, %v4180
  %v4188 = vmul.f32 %v4187, %v4186
  %v4189 = vrot.slane %v3947, 6
  %v4191 = vmul.f32 %v4180, %v4189
  %v4192 = vadd.f32 %v4188, %v4191
  %v4194 = vrot.slane %v4192, 2
  %v4195 = vsel %vm45, %v4194, 0
  %4197 = vmatprep.subr.mxu0 0.0
  %4198 = vmatpush1.msra.mxu0 %v2694
  %4199 = vmatprep.subr.mxu0 0.0
  %4200 = vmatpush1.msra.mxu0 %v2695
  %4201 = vmatprep.subr.mxu0 0.0
  %4202 = vmatpush1.msra.mxu0 %v2696
  %4203 = vmatprep.subr.mxu0 0.0
  %4204 = vmatpush1.msra.mxu0 %v2697
  %4205 = vmatprep.subr.mxu0 0.0
  %4206 = vmatpush1.msra.mxu0 %v2698
  %4207 = vmatprep.subr.mxu0 0.0
  %4208 = vmatpush1.msra.mxu0 %v2699
  %4209 = vmatprep.subr.mxu0 0.0
  %4210 = vmatpush1.msra.mxu0 %v2700
  %4211 = vmatprep.subr.mxu0 0.0
  %4212 = vmatpush1.msra.mxu0 %v2701
  %4213 = vmatprep.subr.mxu0 0.0
  %4214 = vmatpush1.msra.mxu0 0.0
  %4215 = vmatprep.subr.mxu0 0.0
  %4216 = vmatpush1.msra.mxu0 0.0
  %4217 = vmatprep.subr.mxu0 0.0
  %4218 = vmatpush1.msra.mxu0 0.0
  %4219 = vmatprep.subr.mxu0 0.0
  %4220 = vmatpush1.msra.mxu0 0.0
  %4221 = vmatprep.subr.mxu0 0.0
  %4222 = vmatpush1.msra.mxu0 0.0
  %4223 = vmatprep.subr.mxu0 0.0
  %4224 = vmatpush1.msra.mxu0 0.0
  %4225 = vmatprep.subr.mxu0 0.0
  %4226 = vmatpush1.msra.mxu0 0.0
  %4227 = vmatprep.subr.mxu0 0.0
  %4228 = vmatpush1.msra.mxu0 0.0
  %4229 = vmatprep.subr.mxu0 0.0
  %4230 = vmatpush1.msra.mxu0 0.0
  %4231 = vmatprep.subr.mxu0 0.0
  %4232 = vmatpush1.msra.mxu0 0.0
  %4233 = vmatprep.subr.mxu0 0.0
  %4234 = vmatpush1.msra.mxu0 0.0
  %4235 = vmatprep.subr.mxu0 0.0
  %4236 = vmatpush1.msra.mxu0 0.0
  %4237 = vmatprep.subr.mxu0 0.0
  %4238 = vmatpush1.msra.mxu0 0.0
  %4239 = vmatprep.subr.mxu0 0.0
  %4240 = vmatpush1.msra.mxu0 0.0
  %4241 = vmatprep.subr.mxu0 0.0
  %4242 = vmatpush1.msra.mxu0 0.0
  %4243 = vmatprep.subr.mxu0 0.0
  %4244 = vmatpush1.msra.mxu0 0.0
  %4245 = vmatprep.subr.mxu0 0.0
  %4246 = vmatpush1.msra.mxu0 0.0
  %4247 = vmatprep.subr.mxu0 0.0
  %4248 = vmatpush1.msra.mxu0 0.0
  %4249 = vmatprep.subr.mxu0 0.0
  %4250 = vmatpush1.msra.mxu0 0.0
  %4251 = vmatprep.subr.mxu0 0.0
  %4252 = vmatpush1.msra.mxu0 0.0
  %4253 = vmatprep.subr.mxu0 0.0
  %4254 = vmatpush1.msra.mxu0 0.0
  %4255 = vmatprep.subr.mxu0 0.0
  %4256 = vmatpush1.msra.mxu0 0.0
  %4257 = vmatprep.subr.mxu0 0.0
  %4258 = vmatpush1.msra.mxu0 0.0
  %4259 = vmatprep.subr.mxu0 0.0
  %4260 = vmatpush1.msra.mxu0 0.0
  %4261 = vmatprep.mubr.f32.mxu0 0.0
  %4262 = vmatmul.mubr.f32.gmra.mrb[0].mxu0 %v4195
  %v4263 = vpop.f32.mrb[0].mxu0
  %v4264 = vadd.f32 %v2730, %v4263
  %v4265 = vpop.f32.mrb[0].mxu0
  %4266 = vdwg.mxu0
  %4267 = vmatprep.subr.mxu0 0.0
  %4268 = vmatpush1.msra.mxu0 %v2703
  %4269 = vmatprep.subr.mxu0 0.0
  %4270 = vmatpush1.msra.mxu0 %v2704
  %4271 = vmatprep.subr.mxu0 0.0
  %4272 = vmatpush1.msra.mxu0 %v2705
  %4273 = vmatprep.subr.mxu0 0.0
  %4274 = vmatpush1.msra.mxu0 %v2706
  %4275 = vmatprep.subr.mxu0 0.0
  %4276 = vmatpush1.msra.mxu0 %v2707
  %4277 = vmatprep.subr.mxu0 0.0
  %4278 = vmatpush1.msra.mxu0 %v2708
  %4279 = vmatprep.subr.mxu0 0.0
  %4280 = vmatpush1.msra.mxu0 %v2709
  %4281 = vmatprep.subr.mxu0 0.0
  %4282 = vmatpush1.msra.mxu0 %v2710
  %4283 = vmatprep.subr.mxu0 0.0
  %4284 = vmatpush1.msra.mxu0 0.0
  %4285 = vmatprep.subr.mxu0 0.0
  %4286 = vmatpush1.msra.mxu0 0.0
  %4287 = vmatprep.subr.mxu0 0.0
  %4288 = vmatpush1.msra.mxu0 0.0
  %4289 = vmatprep.subr.mxu0 0.0
  %4290 = vmatpush1.msra.mxu0 0.0
  %4291 = vmatprep.subr.mxu0 0.0
  %4292 = vmatpush1.msra.mxu0 0.0
  %4293 = vmatprep.subr.mxu0 0.0
  %4294 = vmatpush1.msra.mxu0 0.0
  %4295 = vmatprep.subr.mxu0 0.0
  %4296 = vmatpush1.msra.mxu0 0.0
  %4297 = vmatprep.subr.mxu0 0.0
  %4298 = vmatpush1.msra.mxu0 0.0
  %4299 = vmatprep.subr.mxu0 0.0
  %4300 = vmatpush1.msra.mxu0 0.0
  %4301 = vmatprep.subr.mxu0 0.0
  %4302 = vmatpush1.msra.mxu0 0.0
  %4303 = vmatprep.subr.mxu0 0.0
  %4304 = vmatpush1.msra.mxu0 0.0
  %4305 = vmatprep.subr.mxu0 0.0
  %4306 = vmatpush1.msra.mxu0 0.0
  %4307 = vmatprep.subr.mxu0 0.0
  %4308 = vmatpush1.msra.mxu0 0.0
  %4309 = vmatprep.subr.mxu0 0.0
  %4310 = vmatpush1.msra.mxu0 0.0
  %4311 = vmatprep.subr.mxu0 0.0
  %4312 = vmatpush1.msra.mxu0 0.0
  %4313 = vmatprep.subr.mxu0 0.0
  %4314 = vmatpush1.msra.mxu0 0.0
  %4315 = vmatprep.subr.mxu0 0.0
  %4316 = vmatpush1.msra.mxu0 0.0
  %4317 = vmatprep.subr.mxu0 0.0
  %4318 = vmatpush1.msra.mxu0 0.0
  %4319 = vmatprep.subr.mxu0 0.0
  %4320 = vmatpush1.msra.mxu0 0.0
  %4321 = vmatprep.subr.mxu0 0.0
  %4322 = vmatpush1.msra.mxu0 0.0
  %4323 = vmatprep.subr.mxu0 0.0
  %4324 = vmatpush1.msra.mxu0 0.0
  %4325 = vmatprep.subr.mxu0 0.0
  %4326 = vmatpush1.msra.mxu0 0.0
  %4327 = vmatprep.subr.mxu0 0.0
  %4328 = vmatpush1.msra.mxu0 0.0
  %4329 = vmatprep.subr.mxu0 0.0
  %4330 = vmatpush1.msra.mxu0 0.0
  %4331 = vmatprep.mubr.f32.mxu0 0.0
  %4332 = vmatmul.mubr.f32.gmra.mrb[0].mxu0 %v4195
  %v4333 = vpop.f32.mrb[0].mxu0
  %v4334 = vadd.f32 %v2806, %v4333
  %v4335 = vpop.f32.mrb[0].mxu0
  %4336 = vdwg.mxu0
  %4337 = vmatprep.subr.mxu0 0.0
  %4338 = vmatpush1.msra.mxu0 %v2712
  %4339 = vmatprep.subr.mxu0 0.0
  %4340 = vmatpush1.msra.mxu0 %v2713
  %4341 = vmatprep.subr.mxu0 0.0
  %4342 = vmatpush1.msra.mxu0 %v2714
  %4343 = vmatprep.subr.mxu0 0.0
  %4344 = vmatpush1.msra.mxu0 %v2715
  %4345 = vmatprep.subr.mxu0 0.0
  %4346 = vmatpush1.msra.mxu0 %v2716
  %4347 = vmatprep.subr.mxu0 0.0
  %4348 = vmatpush1.msra.mxu0 %v2717
  %4349 = vmatprep.subr.mxu0 0.0
  %4350 = vmatpush1.msra.mxu0 %v2718
  %4351 = vmatprep.subr.mxu0 0.0
  %4352 = vmatpush1.msra.mxu0 %v2719
  %4353 = vmatprep.subr.mxu0 0.0
  %4354 = vmatpush1.msra.mxu0 0.0
  %4355 = vmatprep.subr.mxu0 0.0
  %4356 = vmatpush1.msra.mxu0 0.0
  %4357 = vmatprep.subr.mxu0 0.0
  %4358 = vmatpush1.msra.mxu0 0.0
  %4359 = vmatprep.subr.mxu0 0.0
  %4360 = vmatpush1.msra.mxu0 0.0
  %4361 = vmatprep.subr.mxu0 0.0
  %4362 = vmatpush1.msra.mxu0 0.0
  %4363 = vmatprep.subr.mxu0 0.0
  %4364 = vmatpush1.msra.mxu0 0.0
  %4365 = vmatprep.subr.mxu0 0.0
  %4366 = vmatpush1.msra.mxu0 0.0
  %4367 = vmatprep.subr.mxu0 0.0
  %4368 = vmatpush1.msra.mxu0 0.0
  %4369 = vmatprep.subr.mxu0 0.0
  %4370 = vmatpush1.msra.mxu0 0.0
  %4371 = vmatprep.subr.mxu0 0.0
  %4372 = vmatpush1.msra.mxu0 0.0
  %4373 = vmatprep.subr.mxu0 0.0
  %4374 = vmatpush1.msra.mxu0 0.0
  %4375 = vmatprep.subr.mxu0 0.0
  %4376 = vmatpush1.msra.mxu0 0.0
  %4377 = vmatprep.subr.mxu0 0.0
  %4378 = vmatpush1.msra.mxu0 0.0
  %4379 = vmatprep.subr.mxu0 0.0
  %4380 = vmatpush1.msra.mxu0 0.0
  %4381 = vmatprep.subr.mxu0 0.0
  %4382 = vmatpush1.msra.mxu0 0.0
  %4383 = vmatprep.subr.mxu0 0.0
  %4384 = vmatpush1.msra.mxu0 0.0
  %4385 = vmatprep.subr.mxu0 0.0
  %4386 = vmatpush1.msra.mxu0 0.0
  %4387 = vmatprep.subr.mxu0 0.0
  %4388 = vmatpush1.msra.mxu0 0.0
  %4389 = vmatprep.subr.mxu0 0.0
  %4390 = vmatpush1.msra.mxu0 0.0
  %4391 = vmatprep.subr.mxu0 0.0
  %4392 = vmatpush1.msra.mxu0 0.0
  %4393 = vmatprep.subr.mxu0 0.0
  %4394 = vmatpush1.msra.mxu0 0.0
  %4395 = vmatprep.subr.mxu0 0.0
  %4396 = vmatpush1.msra.mxu0 0.0
  %4397 = vmatprep.subr.mxu0 0.0
  %4398 = vmatpush1.msra.mxu0 0.0
  %4399 = vmatprep.subr.mxu0 0.0
  %4400 = vmatpush1.msra.mxu0 0.0
  %4401 = vmatprep.mubr.f32.mxu0 0.0
  %4402 = vmatmul.mubr.f32.gmra.mrb[0].mxu0 %v4195
  %v4403 = vpop.f32.mrb[0].mxu0
  %v4404 = vadd.f32 %v2882, %v4403
  %v4405 = vpop.f32.mrb[0].mxu0
  %4406 = vdwg.mxu0
  %v4408 = vrot.slane %v4264, 4
  %v4410 = vadd.f32 %v2506, %v4408
  %v4411 = vxor.u32 %v4410, 2147483648
  %v4412 = vmul.f32 %v4411, 1.442695
  %v4413 = vpow.pop %v4412
  %v4414 = vadd.f32 %v4413, 1.0
  %v4415 = vrcp.pop %v4414
  %v4416 = vmul.f32 1.0, %v4415
  %v4418 = vrot.slane %v4334, 4
  %v4420 = vadd.f32 %v2598, %v4418
  %v4421 = vxor.u32 %v4420, 2147483648
  %v4422 = vmul.f32 %v4421, 1.442695
  %v4423 = vpow.pop %v4422
  %v4424 = vadd.f32 %v4423, 1.0
  %v4425 = vrcp.pop %v4424
  %v4426 = vmul.f32 1.0, %v4425
  %v4428 = vrot.slane %v4404, 4
  %v4430 = vmul.f32 %v4416, %v4428
  %v4431 = vadd.f32 %v2690, %v4430
  %v4432 = vtanh.pop %v4431
  %v4433 = vsub.f32 1.0, %v4426
  %v4434 = vmul.f32 %v4433, %v4432
  %v4435 = vrot.slane %v4192, 6
  %v4437 = vmul.f32 %v4426, %v4435
  %v4438 = vadd.f32 %v4434, %v4437
  %v4440 = vrot.slane %v4438, 4
  %v4441 = vsel %vm45, %v4440, 0
  %4443 = vmatprep.subr.mxu0 0.0
  %4444 = vmatpush1.msra.mxu0 %v2694
  %4445 = vmatprep.subr.mxu0 0.0
  %4446 = vmatpush1.msra.mxu0 %v2695
  %4447 = vmatprep.subr.mxu0 0.0
  %4448 = vmatpush1.msra.mxu0 %v2696
  %4449 = vmatprep.subr.mxu0 0.0
  %4450 = vmatpush1.msra.mxu0 %v2697
  %4451 = vmatprep.subr.mxu0 0.0
  %4452 = vmatpush1.msra.mxu0 %v2698
  %4453 = vmatprep.subr.mxu0 0.0
  %4454 = vmatpush1.msra.mxu0 %v2699
  %4455 = vmatprep.subr.mxu0 0.0
  %4456 = vmatpush1.msra.mxu0 %v2700
  %4457 = vmatprep.subr.mxu0 0.0
  %4458 = vmatpush1.msra.mxu0 %v2701
  %4459 = vmatprep.subr.mxu0 0.0
  %4460 = vmatpush1.msra.mxu0 0.0
  %4461 = vmatprep.subr.mxu0 0.0
  %4462 = vmatpush1.msra.mxu0 0.0
  %4463 = vmatprep.subr.mxu0 0.0
  %4464 = vmatpush1.msra.mxu0 0.0
  %4465 = vmatprep.subr.mxu0 0.0
  %4466 = vmatpush1.msra.mxu0 0.0
  %4467 = vmatprep.subr.mxu0 0.0
  %4468 = vmatpush1.msra.mxu0 0.0
  %4469 = vmatprep.subr.mxu0 0.0
  %4470 = vmatpush1.msra.mxu0 0.0
  %4471 = vmatprep.subr.mxu0 0.0
  %4472 = vmatpush1.msra.mxu0 0.0
  %4473 = vmatprep.subr.mxu0 0.0
  %4474 = vmatpush1.msra.mxu0 0.0
  %4475 = vmatprep.subr.mxu0 0.0
  %4476 = vmatpush1.msra.mxu0 0.0
  %4477 = vmatprep.subr.mxu0 0.0
  %4478 = vmatpush1.msra.mxu0 0.0
  %4479 = vmatprep.subr.mxu0 0.0
  %4480 = vmatpush1.msra.mxu0 0.0
  %4481 = vmatprep.subr.mxu0 0.0
  %4482 = vmatpush1.msra.mxu0 0.0
  %4483 = vmatprep.subr.mxu0 0.0
  %4484 = vmatpush1.msra.mxu0 0.0
  %4485 = vmatprep.subr.mxu0 0.0
  %4486 = vmatpush1.msra.mxu0 0.0
  %4487 = vmatprep.subr.mxu0 0.0
  %4488 = vmatpush1.msra.mxu0 0.0
  %4489 = vmatprep.subr.mxu0 0.0
  %4490 = vmatpush1.msra.mxu0 0.0
  %4491 = vmatprep.subr.mxu0 0.0
  %4492 = vmatpush1.msra.mxu0 0.0
  %4493 = vmatprep.subr.mxu0 0.0
  %4494 = vmatpush1.msra.mxu0 0.0
  %4495 = vmatprep.subr.mxu0 0.0
  %4496 = vmatpush1.msra.mxu0 0.0
  %4497 = vmatprep.subr.mxu0 0.0
  %4498 = vmatpush1.msra.mxu0 0.0
  %4499 = vmatprep.subr.mxu0 0.0
  %4500 = vmatpush1.msra.mxu0 0.0
  %4501 = vmatprep.subr.mxu0 0.0
  %4502 = vmatpush1.msra.mxu0 0.0
  %4503 = vmatprep.subr.mxu0 0.0
  %4504 = vmatpush1.msra.mxu0 0.0
  %4505 = vmatprep.subr.mxu0 0.0
  %4506 = vmatpush1.msra.mxu0 0.0
  %4507 = vmatprep.mubr.f32.mxu0 0.0
  %4508 = vmatmul.mubr.f32.gmra.mrb[0].mxu0 %v4441
  %v4509 = vpop.f32.mrb[0].mxu0
  %v4510 = vadd.f32 %v2730, %v4509
  %v4511 = vpop.f32.mrb[0].mxu0
  %4512 = vdwg.mxu0
  %4513 = vmatprep.subr.mxu0 0.0
  %4514 = vmatpush1.msra.mxu0 %v2703
  %4515 = vmatprep.subr.mxu0 0.0
  %4516 = vmatpush1.msra.mxu0 %v2704
  %4517 = vmatprep.subr.mxu0 0.0
  %4518 = vmatpush1.msra.mxu0 %v2705
  %4519 = vmatprep.subr.mxu0 0.0
  %4520 = vmatpush1.msra.mxu0 %v2706
  %4521 = vmatprep.subr.mxu0 0.0
  %4522 = vmatpush1.msra.mxu0 %v2707
  %4523 = vmatprep.subr.mxu0 0.0
  %4524 = vmatpush1.msra.mxu0 %v2708
  %4525 = vmatprep.subr.mxu0 0.0
  %4526 = vmatpush1.msra.mxu0 %v2709
  %4527 = vmatprep.subr.mxu0 0.0
  %4528 = vmatpush1.msra.mxu0 %v2710
  %4529 = vmatprep.subr.mxu0 0.0
  %4530 = vmatpush1.msra.mxu0 0.0
  %4531 = vmatprep.subr.mxu0 0.0
  %4532 = vmatpush1.msra.mxu0 0.0
  %4533 = vmatprep.subr.mxu0 0.0
  %4534 = vmatpush1.msra.mxu0 0.0
  %4535 = vmatprep.subr.mxu0 0.0
  %4536 = vmatpush1.msra.mxu0 0.0
  %4537 = vmatprep.subr.mxu0 0.0
  %4538 = vmatpush1.msra.mxu0 0.0
  %4539 = vmatprep.subr.mxu0 0.0
  %4540 = vmatpush1.msra.mxu0 0.0
  %4541 = vmatprep.subr.mxu0 0.0
  %4542 = vmatpush1.msra.mxu0 0.0
  %4543 = vmatprep.subr.mxu0 0.0
  %4544 = vmatpush1.msra.mxu0 0.0
  %4545 = vmatprep.subr.mxu0 0.0
  %4546 = vmatpush1.msra.mxu0 0.0
  %4547 = vmatprep.subr.mxu0 0.0
  %4548 = vmatpush1.msra.mxu0 0.0
  %4549 = vmatprep.subr.mxu0 0.0
  %4550 = vmatpush1.msra.mxu0 0.0
  %4551 = vmatprep.subr.mxu0 0.0
  %4552 = vmatpush1.msra.mxu0 0.0
  %4553 = vmatprep.subr.mxu0 0.0
  %4554 = vmatpush1.msra.mxu0 0.0
  %4555 = vmatprep.subr.mxu0 0.0
  %4556 = vmatpush1.msra.mxu0 0.0
  %4557 = vmatprep.subr.mxu0 0.0
  %4558 = vmatpush1.msra.mxu0 0.0
  %4559 = vmatprep.subr.mxu0 0.0
  %4560 = vmatpush1.msra.mxu0 0.0
  %4561 = vmatprep.subr.mxu0 0.0
  %4562 = vmatpush1.msra.mxu0 0.0
  %4563 = vmatprep.subr.mxu0 0.0
  %4564 = vmatpush1.msra.mxu0 0.0
  %4565 = vmatprep.subr.mxu0 0.0
  %4566 = vmatpush1.msra.mxu0 0.0
  %4567 = vmatprep.subr.mxu0 0.0
  %4568 = vmatpush1.msra.mxu0 0.0
  %4569 = vmatprep.subr.mxu0 0.0
  %4570 = vmatpush1.msra.mxu0 0.0
  %4571 = vmatprep.subr.mxu0 0.0
  %4572 = vmatpush1.msra.mxu0 0.0
  %4573 = vmatprep.subr.mxu0 0.0
  %4574 = vmatpush1.msra.mxu0 0.0
  %4575 = vmatprep.subr.mxu0 0.0
  %4576 = vmatpush1.msra.mxu0 0.0
  %4577 = vmatprep.mubr.f32.mxu0 0.0
  %4578 = vmatmul.mubr.f32.gmra.mrb[0].mxu0 %v4441
  %v4579 = vpop.f32.mrb[0].mxu0
  %v4580 = vadd.f32 %v2806, %v4579
  %v4581 = vpop.f32.mrb[0].mxu0
  %4582 = vdwg.mxu0
  %4583 = vmatprep.subr.mxu0 0.0
  %4584 = vmatpush1.msra.mxu0 %v2712
  %4585 = vmatprep.subr.mxu0 0.0
  %4586 = vmatpush1.msra.mxu0 %v2713
  %4587 = vmatprep.subr.mxu0 0.0
  %4588 = vmatpush1.msra.mxu0 %v2714
  %4589 = vmatprep.subr.mxu0 0.0
  %4590 = vmatpush1.msra.mxu0 %v2715
  %4591 = vmatprep.subr.mxu0 0.0
  %4592 = vmatpush1.msra.mxu0 %v2716
  %4593 = vmatprep.subr.mxu0 0.0
  %4594 = vmatpush1.msra.mxu0 %v2717
  %4595 = vmatprep.subr.mxu0 0.0
  %4596 = vmatpush1.msra.mxu0 %v2718
  %4597 = vmatprep.subr.mxu0 0.0
  %4598 = vmatpush1.msra.mxu0 %v2719
  %4599 = vmatprep.subr.mxu0 0.0
  %4600 = vmatpush1.msra.mxu0 0.0
  %4601 = vmatprep.subr.mxu0 0.0
  %4602 = vmatpush1.msra.mxu0 0.0
  %4603 = vmatprep.subr.mxu0 0.0
  %4604 = vmatpush1.msra.mxu0 0.0
  %4605 = vmatprep.subr.mxu0 0.0
  %4606 = vmatpush1.msra.mxu0 0.0
  %4607 = vmatprep.subr.mxu0 0.0
  %4608 = vmatpush1.msra.mxu0 0.0
  %4609 = vmatprep.subr.mxu0 0.0
  %4610 = vmatpush1.msra.mxu0 0.0
  %4611 = vmatprep.subr.mxu0 0.0
  %4612 = vmatpush1.msra.mxu0 0.0
  %4613 = vmatprep.subr.mxu0 0.0
  %4614 = vmatpush1.msra.mxu0 0.0
  %4615 = vmatprep.subr.mxu0 0.0
  %4616 = vmatpush1.msra.mxu0 0.0
  %4617 = vmatprep.subr.mxu0 0.0
  %4618 = vmatpush1.msra.mxu0 0.0
  %4619 = vmatprep.subr.mxu0 0.0
  %4620 = vmatpush1.msra.mxu0 0.0
  %4621 = vmatprep.subr.mxu0 0.0
  %4622 = vmatpush1.msra.mxu0 0.0
  %4623 = vmatprep.subr.mxu0 0.0
  %4624 = vmatpush1.msra.mxu0 0.0
  %4625 = vmatprep.subr.mxu0 0.0
  %4626 = vmatpush1.msra.mxu0 0.0
  %4627 = vmatprep.subr.mxu0 0.0
  %4628 = vmatpush1.msra.mxu0 0.0
  %4629 = vmatprep.subr.mxu0 0.0
  %4630 = vmatpush1.msra.mxu0 0.0
  %4631 = vmatprep.subr.mxu0 0.0
  %4632 = vmatpush1.msra.mxu0 0.0
  %4633 = vmatprep.subr.mxu0 0.0
  %4634 = vmatpush1.msra.mxu0 0.0
  %4635 = vmatprep.subr.mxu0 0.0
  %4636 = vmatpush1.msra.mxu0 0.0
  %4637 = vmatprep.subr.mxu0 0.0
  %4638 = vmatpush1.msra.mxu0 0.0
  %4639 = vmatprep.subr.mxu0 0.0
  %4640 = vmatpush1.msra.mxu0 0.0
  %4641 = vmatprep.subr.mxu0 0.0
  %4642 = vmatpush1.msra.mxu0 0.0
  %4643 = vmatprep.subr.mxu0 0.0
  %4644 = vmatpush1.msra.mxu0 0.0
  %4645 = vmatprep.subr.mxu0 0.0
  %4646 = vmatpush1.msra.mxu0 0.0
  %4647 = vmatprep.mubr.f32.mxu0 0.0
  %4648 = vmatmul.mubr.f32.gmra.mrb[0].mxu0 %v4441
  %v4649 = vpop.f32.mrb[0].mxu0
  %v4650 = vadd.f32 %v2882, %v4649
  %v4651 = vpop.f32.mrb[0].mxu0
  %4652 = vdwg.mxu0
  %v4654 = vrot.slane %v4510, 2
  %v4656 = vadd.f32 %v2506, %v4654
  %v4657 = vxor.u32 %v4656, 2147483648
  %v4658 = vmul.f32 %v4657, 1.442695
  %v4659 = vpow.pop %v4658
  %v4660 = vadd.f32 %v4659, 1.0
  %v4661 = vrcp.pop %v4660
  %v4662 = vmul.f32 1.0, %v4661
  %v4664 = vrot.slane %v4580, 2
  %v4666 = vadd.f32 %v2598, %v4664
  %v4667 = vxor.u32 %v4666, 2147483648
  %v4668 = vmul.f32 %v4667, 1.442695
  %v4669 = vpow.pop %v4668
  %v4670 = vadd.f32 %v4669, 1.0
  %v4671 = vrcp.pop %v4670
  %v4672 = vmul.f32 1.0, %v4671
  %v4674 = vrot.slane %v4650, 2
  %v4676 = vmul.f32 %v4662, %v4674
  %v4677 = vadd.f32 %v2690, %v4676
  %v4678 = vtanh.pop %v4677
  %v4679 = vsub.f32 1.0, %v4672
  %v4680 = vmul.f32 %v4679, %v4678
  %v4681 = vrot.slane %v4438, 6
  %v4683 = vmul.f32 %v4672, %v4681
  %v4684 = vadd.f32 %v4680, %v4683
  %v4685 = vsel %vm2402, %v2974, %v3219
  %v4686 = vsel %vm2404, %v4685, %v3465
  %v4687 = vsel %vm2406, %v4686, %v3711
  %v4688 = vsel %vm2402, %v3947, %v4192
  %v4689 = vsel %vm2404, %v4688, %v4438
  %v4690 = vsel %vm2406, %v4689, %v4684
  %v4691 = vld [vmem:[%s9] sm:$0xff]
  %v4692 = vld [vmem:[%s9 + $0x8] sm:$0xff]
  %v4693 = vld [vmem:[%s9 + $0x10] sm:$0xff]
  %v4694 = vld [vmem:[%s9 + $0x18] sm:$0xff]
  %v4695 = vld [vmem:[%s9 + $0x20] sm:$0xff]
  %v4696 = vld [vmem:[%s9 + $0x28] sm:$0xff]
  %v4697 = vld [vmem:[%s9 + $0x30] sm:$0xff]
  %v4698 = vld [vmem:[%s9 + $0x38] sm:$0xff]
  %v4699 = vld [vmem:[%s9 + $0x40] sm:$0xff]
  %v4700 = vld [vmem:[%s9 + $0x48] sm:$0xff]
  %v4701 = vld [vmem:[%s9 + $0x50] sm:$0xff]
  %v4702 = vld [vmem:[%s9 + $0x58] sm:$0xff]
  %v4703 = vld [vmem:[%s9 + $0x60] sm:$0xff]
  %v4704 = vld [vmem:[%s9 + $0x68] sm:$0xff]
  %v4705 = vld [vmem:[%s9 + $0x70] sm:$0xff]
  %v4706 = vld [vmem:[%s9 + $0x78] sm:$0xff]
  %v4707 = vld [vmem:[%s9 + $0x80] sm:$0xff]
  %v4708 = vld [vmem:[%s9 + $0x88] sm:$0xff]
  %v4709 = vld [vmem:[%s9 + $0x90] sm:$0xff]
  %v4710 = vld [vmem:[%s9 + $0x98] sm:$0xff]
  %v4711 = vld [vmem:[%s9 + $0xa0] sm:$0xff]
  %v4712 = vld [vmem:[%s9 + $0xa8] sm:$0xff]
  %v4713 = vld [vmem:[%s9 + $0xb0] sm:$0xff]
  %v4714 = vld [vmem:[%s9 + $0xb8] sm:$0xff]
  %v4716 = vsel %vm45, %v4687, 0
  %v4719 = vsel %vm45, %v4690, 0
  %4721 = vmatprep.subr.mxu0 %v4692
  %4722 = vmatpush1.msra.mxu0 %v4691
  %4723 = vmatprep.subr.mxu0 %v4695
  %4724 = vmatpush1.msra.mxu0 %v4694
  %4725 = vmatprep.subr.mxu0 %v4698
  %4726 = vmatpush1.msra.mxu0 %v4697
  %4727 = vmatprep.subr.mxu0 %v4701
  %4728 = vmatpush1.msra.mxu0 %v4700
  %4729 = vmatprep.subr.mxu0 %v4704
  %4730 = vmatpush1.msra.mxu0 %v4703
  %4731 = vmatprep.subr.mxu0 %v4707
  %4732 = vmatpush1.msra.mxu0 %v4706
  %4733 = vmatprep.subr.mxu0 %v4710
  %4734 = vmatpush1.msra.mxu0 %v4709
  %4735 = vmatprep.subr.mxu0 %v4713
  %4736 = vmatpush1.msra.mxu0 %v4712
  %4737 = vmatprep.subr.mxu0 0.0
  %4738 = vmatpush1.msra.mxu0 0.0
  %4739 = vmatprep.subr.mxu0 0.0
  %4740 = vmatpush1.msra.mxu0 0.0
  %4741 = vmatprep.subr.mxu0 0.0
  %4742 = vmatpush1.msra.mxu0 0.0
  %4743 = vmatprep.subr.mxu0 0.0
  %4744 = vmatpush1.msra.mxu0 0.0
  %4745 = vmatprep.subr.mxu0 0.0
  %4746 = vmatpush1.msra.mxu0 0.0
  %4747 = vmatprep.subr.mxu0 0.0
  %4748 = vmatpush1.msra.mxu0 0.0
  %4749 = vmatprep.subr.mxu0 0.0
  %4750 = vmatpush1.msra.mxu0 0.0
  %4751 = vmatprep.subr.mxu0 0.0
  %4752 = vmatpush1.msra.mxu0 0.0
  %4753 = vmatprep.subr.mxu0 0.0
  %4754 = vmatpush1.msra.mxu0 0.0
  %4755 = vmatprep.subr.mxu0 0.0
  %4756 = vmatpush1.msra.mxu0 0.0
  %4757 = vmatprep.subr.mxu0 0.0
  %4758 = vmatpush1.msra.mxu0 0.0
  %4759 = vmatprep.subr.mxu0 0.0
  %4760 = vmatpush1.msra.mxu0 0.0
  %4761 = vmatprep.subr.mxu0 0.0
  %4762 = vmatpush1.msra.mxu0 0.0
  %4763 = vmatprep.subr.mxu0 0.0
  %4764 = vmatpush1.msra.mxu0 0.0
  %4765 = vmatprep.subr.mxu0 0.0
  %4766 = vmatpush1.msra.mxu0 0.0
  %4767 = vmatprep.subr.mxu0 0.0
  %4768 = vmatpush1.msra.mxu0 0.0
  %4769 = vmatprep.subr.mxu0 0.0
  %4770 = vmatpush1.msra.mxu0 0.0
  %4771 = vmatprep.subr.mxu0 0.0
  %4772 = vmatpush1.msra.mxu0 0.0
  %4773 = vmatprep.subr.mxu0 0.0
  %4774 = vmatpush1.msra.mxu0 0.0
  %4775 = vmatprep.subr.mxu0 0.0
  %4776 = vmatpush1.msra.mxu0 0.0
  %4777 = vmatprep.subr.mxu0 0.0
  %4778 = vmatpush1.msra.mxu0 0.0
  %4779 = vmatprep.subr.mxu0 0.0
  %4780 = vmatpush1.msra.mxu0 0.0
  %4781 = vmatprep.subr.mxu0 0.0
  %4782 = vmatpush1.msra.mxu0 0.0
  %4783 = vmatprep.subr.mxu0 0.0
  %4784 = vmatpush1.msra.mxu0 0.0
  %4785 = vmatprep.mubr.f32.mxu0 0.0
  %4786 = vmatmul.mubr.f32.gmra.mrb[0].mxu0 %v4716
  %v4787 = vpop.f32.mrb[0].mxu0
  %v4788 = vadd.f32 0.0, %v4787
  %v4789 = vpop.f32.mrb[0].mxu0
  %v4790 = vadd.f32 0.0, %v4789
  %4791 = vmatprep.mubr.f32.mxu0 0.0
  %4792 = vmatmul.mubr.f32.gmra.mrb[0].mxu0 %v4719
  %v4793 = vpop.f32.mrb[0].mxu0
  %v4794 = vadd.f32 0.0, %v4793
  %v4795 = vpop.f32.mrb[0].mxu0
  %v4796 = vadd.f32 0.0, %v4795
  %4797 = vdwg.mxu0
  %4798 = vmatprep.subr.mxu0 0.0
  %4799 = vmatpush1.msra.mxu0 %v4693
  %4800 = vmatprep.subr.mxu0 0.0
  %4801 = vmatpush1.msra.mxu0 %v4696
  %4802 = vmatprep.subr.mxu0 0.0
  %4803 = vmatpush1.msra.mxu0 %v4699
  %4804 = vmatprep.subr.mxu0 0.0
  %4805 = vmatpush1.msra.mxu0 %v4702
  %4806 = vmatprep.subr.mxu0 0.0
  %4807 = vmatpush1.msra.mxu0 %v4705
  %4808 = vmatprep.subr.mxu0 0.0
  %4809 = vmatpush1.msra.mxu0 %v4708
  %4810 = vmatprep.subr.mxu0 0.0
  %4811 = vmatpush1.msra.mxu0 %v4711
  %4812 = vmatprep.subr.mxu0 0.0
  %4813 = vmatpush1.msra.mxu0 %v4714
  %4814 = vmatprep.subr.mxu0 0.0
  %4815 = vmatpush1.msra.mxu0 0.0
  %4816 = vmatprep.subr.mxu0 0.0
  %4817 = vmatpush1.msra.mxu0 0.0
  %4818 = vmatprep.subr.mxu0 0.0
  %4819 = vmatpush1.msra.mxu0 0.0
  %4820 = vmatprep.subr.mxu0 0.0
  %4821 = vmatpush1.msra.mxu0 0.0
  %4822 = vmatprep.subr.mxu0 0.0
  %4823 = vmatpush1.msra.mxu0 0.0
  %4824 = vmatprep.subr.mxu0 0.0
  %4825 = vmatpush1.msra.mxu0 0.0
  %4826 = vmatprep.subr.mxu0 0.0
  %4827 = vmatpush1.msra.mxu0 0.0
  %4828 = vmatprep.subr.mxu0 0.0
  %4829 = vmatpush1.msra.mxu0 0.0
  %4830 = vmatprep.subr.mxu0 0.0
  %4831 = vmatpush1.msra.mxu0 0.0
  %4832 = vmatprep.subr.mxu0 0.0
  %4833 = vmatpush1.msra.mxu0 0.0
  %4834 = vmatprep.subr.mxu0 0.0
  %4835 = vmatpush1.msra.mxu0 0.0
  %4836 = vmatprep.subr.mxu0 0.0
  %4837 = vmatpush1.msra.mxu0 0.0
  %4838 = vmatprep.subr.mxu0 0.0
  %4839 = vmatpush1.msra.mxu0 0.0
  %4840 = vmatprep.subr.mxu0 0.0
  %4841 = vmatpush1.msra.mxu0 0.0
  %4842 = vmatprep.subr.mxu0 0.0
  %4843 = vmatpush1.msra.mxu0 0.0
  %4844 = vmatprep.subr.mxu0 0.0
  %4845 = vmatpush1.msra.mxu0 0.0
  %4846 = vmatprep.subr.mxu0 0.0
  %4847 = vmatpush1.msra.mxu0 0.0
  %4848 = vmatprep.subr.mxu0 0.0
  %4849 = vmatpush1.msra.mxu0 0.0
  %4850 = vmatprep.subr.mxu0 0.0
  %4851 = vmatpush1.msra.mxu0 0.0
  %4852 = vmatprep.subr.mxu0 0.0
  %4853 = vmatpush1.msra.mxu0 0.0
  %4854 = vmatprep.subr.mxu0 0.0
  %4855 = vmatpush1.msra.mxu0 0.0
  %4856 = vmatprep.subr.mxu0 0.0
  %4857 = vmatpush1.msra.mxu0 0.0
  %4858 = vmatprep.subr.mxu0 0.0
  %4859 = vmatpush1.msra.mxu0 0.0
  %4860 = vmatprep.subr.mxu0 0.0
  %4861 = vmatpush1.msra.mxu0 0.0
  %4862 = vmatprep.mubr.f32.mxu0 0.0
  %4863 = vmatmul.mubr.f32.gmra.mrb[0].mxu0 %v4716
  %v4864 = vpop.f32.mrb[0].mxu0
  %v4865 = vadd.f32 0.0, %v4864
  %v4866 = vpop.f32.mrb[0].mxu0
  %4867 = vmatprep.mubr.f32.mxu0 0.0
  %4868 = vmatmul.mubr.f32.gmra.mrb[0].mxu0 %v4719
  %v4869 = vpop.f32.mrb[0].mxu0
  %v4870 = vadd.f32 0.0, %v4869
  %v4871 = vpop.f32.mrb[0].mxu0
  %4872 = vdwg.mxu0
  %v4873 = vtanh.pop %v4788
  %v4874 = vtanh.pop %v4790
  %v4875 = vtanh.pop %v4865
  %v4876 = vtanh.pop %v4794
  %v4877 = vtanh.pop %v4796
  %v4878 = vtanh.pop %v4870
  %v4879 = vld [vmem:[%s1] sm:$0xff]
  %v4880 = vld [vmem:[%s1 + $0x8] sm:$0xff]
  %v4881 = vld [vmem:[%s1 + $0x10] sm:$0xff]
  %v4882 = vld [vmem:[%s1 + $0x18] sm:$0xff]
  %v4883 = vld [vmem:[%s1 + $0x20] sm:$0xff]
  %v4884 = vld [vmem:[%s1 + $0x28] sm:$0xff]
  %v4885 = vld [vmem:[%s1 + $0x30] sm:$0xff]
  %v4886 = vld [vmem:[%s1 + $0x38] sm:$0xff]
  %v4887 = vld [vmem:[%s7] sm:$0xff]
  %v4888 = vld [vmem:[%s7 + $0x8] sm:$0xff]
  %v4889 = vld [vmem:[%s7 + $0x10] sm:$0xff]
  %v4890 = vld [vmem:[%s7 + $0x18] sm:$0xff]
  %v4891 = vld [vmem:[%s7 + $0x20] sm:$0xff]
  %v4892 = vld [vmem:[%s7 + $0x28] sm:$0xff]
  %v4893 = vld [vmem:[%s7 + $0x30] sm:$0xff]
  %v4894 = vld [vmem:[%s7 + $0x38] sm:$0xff]
  %v4895 = vld [vmem:[%s7 + $0x40] sm:$0xff]
  %v4896 = vld [vmem:[%s7 + $0x48] sm:$0xff]
  %v4897 = vld [vmem:[%s7 + $0x50] sm:$0xff]
  %v4898 = vld [vmem:[%s7 + $0x58] sm:$0xff]
  %v4899 = vld [vmem:[%s7 + $0x60] sm:$0xff]
  %v4900 = vld [vmem:[%s7 + $0x68] sm:$0xff]
  %v4901 = vld [vmem:[%s7 + $0x70] sm:$0xff]
  %v4902 = vld [vmem:[%s7 + $0x78] sm:$0xff]
  %v4903 = vld [vmem:[%s7 + $0x80] sm:$0xff]
  %v4904 = vld [vmem:[%s7 + $0x88] sm:$0xff]
  %v4905 = vld [vmem:[%s7 + $0x90] sm:$0xff]
  %v4906 = vld [vmem:[%s7 + $0x98] sm:$0xff]
  %v4907 = vld [vmem:[%s7 + $0xa0] sm:$0xff]
  %v4908 = vld [vmem:[%s7 + $0xa8] sm:$0xff]
  %v4909 = vld [vmem:[%s7 + $0xb0] sm:$0xff]
  %v4910 = vld [vmem:[%s7 + $0xb8] sm:$0xff]
  %v4911 = vld [vmem:[%s7 + $0xc0] sm:$0xff]
  %v4912 = vld [vmem:[%s7 + $0xc8] sm:$0xff]
  %v4913 = vld [vmem:[%s7 + $0xd0] sm:$0xff]
  %v4914 = vld [vmem:[%s7 + $0xd8] sm:$0xff]
  %v4915 = vld [vmem:[%s7 + $0xe0] sm:$0xff]
  %v4916 = vld [vmem:[%s7 + $0xe8] sm:$0xff]
  %v4917 = vld [vmem:[%s7 + $0xf0] sm:$0xff]
  %v4918 = vld [vmem:[%s7 + $0xf8] sm:$0xff]
  %v4919 = vld [vmem:[%s7 + $0x100] sm:$0xff]
  %v4920 = vld [vmem:[%s7 + $0x108] sm:$0xff]
  %v4921 = vld [vmem:[%s7 + $0x110] sm:$0xff]
  %v4922 = vld [vmem:[%s7 + $0x118] sm:$0xff]
  %v4923 = vld [vmem:[%s7 + $0x120] sm:$0xff]
  %v4924 = vld [vmem:[%s7 + $0x128] sm:$0xff]
  %v4925 = vld [vmem:[%s7 + $0x130] sm:$0xff]
  %v4926 = vld [vmem:[%s7 + $0x138] sm:$0xff]
  %v4927 = vld [vmem:[%s7 + $0x140] sm:$0xff]
  %v4928 = vld [vmem:[%s7 + $0x148] sm:$0xff]
  %v4929 = vld [vmem:[%s7 + $0x150] sm:$0xff]
  %v4930 = vld [vmem:[%s7 + $0x158] sm:$0xff]
  %v4931 = vld [vmem:[%s7 + $0x160] sm:$0xff]
  %v4932 = vld [vmem:[%s7 + $0x168] sm:$0xff]
  %v4933 = vld [vmem:[%s7 + $0x170] sm:$0xff]
  %v4934 = vld [vmem:[%s7 + $0x178] sm:$0xff]
  %v4935 = vld [vmem:[%s7 + $0x180] sm:$0xff]
  %v4936 = vld [vmem:[%s7 + $0x188] sm:$0xff]
  %v4937 = vld [vmem:[%s7 + $0x190] sm:$0xff]
  %v4938 = vld [vmem:[%s7 + $0x198] sm:$0xff]
  %v4939 = vld [vmem:[%s7 + $0x1a0] sm:$0xff]
  %v4940 = vld [vmem:[%s7 + $0x1a8] sm:$0xff]
  %v4941 = vld [vmem:[%s7 + $0x1b0] sm:$0xff]
  %v4942 = vld [vmem:[%s7 + $0x1b8] sm:$0xff]
  %v4943 = vld [vmem:[%s7 + $0x1c0] sm:$0xff]
  %v4944 = vld [vmem:[%s7 + $0x1c8] sm:$0xff]
  %v4945 = vld [vmem:[%s7 + $0x1d0] sm:$0xff]
  %v4946 = vld [vmem:[%s7 + $0x1d8] sm:$0xff]
  %v4947 = vld [vmem:[%s7 + $0x1e0] sm:$0xff]
  %v4948 = vld [vmem:[%s7 + $0x1e8] sm:$0xff]
  %v4949 = vld [vmem:[%s7 + $0x1f0] sm:$0xff]
  %v4950 = vld [vmem:[%s7 + $0x1f8] sm:$0xff]
  %v4951 = vld [vmem:[%s7 + $0x200] sm:$0xff]
  %v4952 = vld [vmem:[%s7 + $0x208] sm:$0xff]
  %v4953 = vld [vmem:[%s7 + $0x210] sm:$0xff]
  %v4954 = vld [vmem:[%s7 + $0x218] sm:$0xff]
  %v4955 = vld [vmem:[%s7 + $0x220] sm:$0xff]
  %v4956 = vld [vmem:[%s7 + $0x228] sm:$0xff]
  %v4957 = vld [vmem:[%s7 + $0x230] sm:$0xff]
  %v4958 = vld [vmem:[%s7 + $0x238] sm:$0xff]
  %v4959 = vld [vmem:[%s7 + $0x240] sm:$0xff]
  %v4960 = vld [vmem:[%s7 + $0x248] sm:$0xff]
  %v4961 = vld [vmem:[%s7 + $0x250] sm:$0xff]
  %v4962 = vld [vmem:[%s7 + $0x258] sm:$0xff]
  %v4963 = vld [vmem:[%s7 + $0x260] sm:$0xff]
  %v4964 = vld [vmem:[%s7 + $0x268] sm:$0xff]
  %v4965 = vld [vmem:[%s7 + $0x270] sm:$0xff]
  %v4966 = vld [vmem:[%s7 + $0x278] sm:$0xff]
  %v4967 = vld [vmem:[%s7 + $0x280] sm:$0xff]
  %v4968 = vld [vmem:[%s7 + $0x288] sm:$0xff]
  %v4969 = vld [vmem:[%s7 + $0x290] sm:$0xff]
  %v4970 = vld [vmem:[%s7 + $0x298] sm:$0xff]
  %v4971 = vld [vmem:[%s7 + $0x2a0] sm:$0xff]
  %v4972 = vld [vmem:[%s7 + $0x2a8] sm:$0xff]
  %v4973 = vld [vmem:[%s7 + $0x2b0] sm:$0xff]
  %v4974 = vld [vmem:[%s7 + $0x2b8] sm:$0xff]
  %v4975 = vld [vmem:[%s7 + $0x2c0] sm:$0xff]
  %v4976 = vld [vmem:[%s7 + $0x2c8] sm:$0xff]
  %v4977 = vld [vmem:[%s7 + $0x2d0] sm:$0xff]
  %v4978 = vld [vmem:[%s7 + $0x2d8] sm:$0xff]
  %v4979 = vld [vmem:[%s7 + $0x2e0] sm:$0xff]
  %v4980 = vld [vmem:[%s7 + $0x2e8] sm:$0xff]
  %v4981 = vld [vmem:[%s7 + $0x2f0] sm:$0xff]
  %v4982 = vld [vmem:[%s7 + $0x2f8] sm:$0xff]
  %v4983 = vld [vmem:[%s7 + $0x300] sm:$0xff]
  %v4984 = vld [vmem:[%s7 + $0x308] sm:$0xff]
  %v4985 = vld [vmem:[%s7 + $0x310] sm:$0xff]
  %v4986 = vld [vmem:[%s7 + $0x318] sm:$0xff]
  %v4987 = vld [vmem:[%s7 + $0x320] sm:$0xff]
  %v4988 = vld [vmem:[%s7 + $0x328] sm:$0xff]
  %v4989 = vld [vmem:[%s7 + $0x330] sm:$0xff]
  %v4990 = vld [vmem:[%s7 + $0x338] sm:$0xff]
  %v4991 = vld [vmem:[%s7 + $0x340] sm:$0xff]
  %v4992 = vld [vmem:[%s7 + $0x348] sm:$0xff]
  %v4993 = vld [vmem:[%s7 + $0x350] sm:$0xff]
  %v4994 = vld [vmem:[%s7 + $0x358] sm:$0xff]
  %v4995 = vld [vmem:[%s7 + $0x360] sm:$0xff]
  %v4996 = vld [vmem:[%s7 + $0x368] sm:$0xff]
  %v4997 = vld [vmem:[%s7 + $0x370] sm:$0xff]
  %v4998 = vld [vmem:[%s7 + $0x378] sm:$0xff]
  %v4999 = vld [vmem:[%s7 + $0x380] sm:$0xff]
  %v5000 = vld [vmem:[%s7 + $0x388] sm:$0xff]
  %v5001 = vld [vmem:[%s7 + $0x390] sm:$0xff]
  %v5002 = vld [vmem:[%s7 + $0x398] sm:$0xff]
  %v5003 = vld [vmem:[%s7 + $0x3a0] sm:$0xff]
  %v5004 = vld [vmem:[%s7 + $0x3a8] sm:$0xff]
  %v5005 = vld [vmem:[%s7 + $0x3b0] sm:$0xff]
  %v5006 = vld [vmem:[%s7 + $0x3b8] sm:$0xff]
  %v5007 = vld [vmem:[%s7 + $0x3c0] sm:$0xff]
  %v5008 = vld [vmem:[%s7 + $0x3c8] sm:$0xff]
  %v5009 = vld [vmem:[%s7 + $0x3d0] sm:$0xff]
  %v5010 = vld [vmem:[%s7 + $0x3d8] sm:$0xff]
  %v5011 = vld [vmem:[%s7 + $0x3e0] sm:$0xff]
  %v5012 = vld [vmem:[%s7 + $0x3e8] sm:$0xff]
  %v5013 = vld [vmem:[%s7 + $0x3f0] sm:$0xff]
  %v5014 = vld [vmem:[%s7 + $0x3f8] sm:$0xff]
  %v5015 = vld [vmem:[%s7 + $0x400] sm:$0xff]
  %v5016 = vld [vmem:[%s7 + $0x408] sm:$0xff]
  %v5017 = vld [vmem:[%s7 + $0x410] sm:$0xff]
  %v5018 = vld [vmem:[%s7 + $0x418] sm:$0xff]
  %v5019 = vld [vmem:[%s7 + $0x420] sm:$0xff]
  %v5020 = vld [vmem:[%s7 + $0x428] sm:$0xff]
  %v5021 = vld [vmem:[%s7 + $0x430] sm:$0xff]
  %v5022 = vld [vmem:[%s7 + $0x438] sm:$0xff]
  %v5023 = vld [vmem:[%s7 + $0x440] sm:$0xff]
  %v5024 = vld [vmem:[%s7 + $0x448] sm:$0xff]
  %v5025 = vld [vmem:[%s7 + $0x450] sm:$0xff]
  %v5026 = vld [vmem:[%s7 + $0x458] sm:$0xff]
  %v5027 = vld [vmem:[%s7 + $0x460] sm:$0xff]
  %v5028 = vld [vmem:[%s7 + $0x468] sm:$0xff]
  %v5029 = vld [vmem:[%s7 + $0x470] sm:$0xff]
  %v5030 = vld [vmem:[%s7 + $0x478] sm:$0xff]
  %v5031 = vld [vmem:[%s7 + $0x480] sm:$0xff]
  %v5032 = vld [vmem:[%s7 + $0x488] sm:$0xff]
  %v5033 = vld [vmem:[%s7 + $0x490] sm:$0xff]
  %v5034 = vld [vmem:[%s7 + $0x498] sm:$0xff]
  %v5035 = vld [vmem:[%s7 + $0x4a0] sm:$0xff]
  %v5036 = vld [vmem:[%s7 + $0x4a8] sm:$0xff]
  %v5037 = vld [vmem:[%s7 + $0x4b0] sm:$0xff]
  %v5038 = vld [vmem:[%s7 + $0x4b8] sm:$0xff]
  %v5039 = vld [vmem:[%s7 + $0x4c0] sm:$0xff]
  %v5040 = vld [vmem:[%s7 + $0x4c8] sm:$0xff]
  %v5041 = vld [vmem:[%s7 + $0x4d0] sm:$0xff]
  %v5042 = vld [vmem:[%s7 + $0x4d8] sm:$0xff]
  %v5043 = vld [vmem:[%s7 + $0x4e0] sm:$0xff]
  %v5044 = vld [vmem:[%s7 + $0x4e8] sm:$0xff]
  %v5045 = vld [vmem:[%s7 + $0x4f0] sm:$0xff]
  %v5046 = vld [vmem:[%s7 + $0x4f8] sm:$0xff]
  %v5047 = vld [vmem:[%s7 + $0x500] sm:$0xff]
  %v5048 = vld [vmem:[%s7 + $0x508] sm:$0xff]
  %v5049 = vld [vmem:[%s7 + $0x510] sm:$0xff]
  %v5050 = vld [vmem:[%s7 + $0x518] sm:$0xff]
  %v5051 = vld [vmem:[%s7 + $0x520] sm:$0xff]
  %v5052 = vld [vmem:[%s7 + $0x528] sm:$0xff]
  %v5053 = vld [vmem:[%s7 + $0x530] sm:$0xff]
  %v5054 = vld [vmem:[%s7 + $0x538] sm:$0xff]
  %v5055 = vld [vmem:[%s7 + $0x540] sm:$0xff]
  %v5056 = vld [vmem:[%s7 + $0x548] sm:$0xff]
  %v5057 = vld [vmem:[%s7 + $0x550] sm:$0xff]
  %v5058 = vld [vmem:[%s7 + $0x558] sm:$0xff]
  %v5059 = vld [vmem:[%s7 + $0x560] sm:$0xff]
  %v5060 = vld [vmem:[%s7 + $0x568] sm:$0xff]
  %v5061 = vld [vmem:[%s7 + $0x570] sm:$0xff]
  %v5062 = vld [vmem:[%s7 + $0x578] sm:$0xff]
  %v5063 = vld [vmem:[%s7 + $0x580] sm:$0xff]
  %v5064 = vld [vmem:[%s7 + $0x588] sm:$0xff]
  %v5065 = vld [vmem:[%s7 + $0x590] sm:$0xff]
  %v5066 = vld [vmem:[%s7 + $0x598] sm:$0xff]
  %v5067 = vld [vmem:[%s7 + $0x5a0] sm:$0xff]
  %v5068 = vld [vmem:[%s7 + $0x5a8] sm:$0xff]
  %v5069 = vld [vmem:[%s7 + $0x5b0] sm:$0xff]
  %v5070 = vld [vmem:[%s7 + $0x5b8] sm:$0xff]
  %v5071 = vld [vmem:[%s7 + $0x5c0] sm:$0xff]
  %v5072 = vld [vmem:[%s7 + $0x5c8] sm:$0xff]
  %v5073 = vld [vmem:[%s7 + $0x5d0] sm:$0xff]
  %v5074 = vld [vmem:[%s7 + $0x5d8] sm:$0xff]
  %v5075 = vld [vmem:[%s7 + $0x5e0] sm:$0xff]
  %v5076 = vld [vmem:[%s7 + $0x5e8] sm:$0xff]
  %v5077 = vld [vmem:[%s7 + $0x5f0] sm:$0xff]
  %v5078 = vld [vmem:[%s7 + $0x5f8] sm:$0xff]
  %v5079 = vld [vmem:[%s8] sm:$0x7]
  %v5081 = vlaneseq
  %v5082 = vshrl.u32 %v5081, 7
  %v5083 = vsub.s32 0, %v5082
  %v5084 = vrot.slane %v5079, %v5083
  %v5085 = vlaneseq
  %v5086 = vshrl.u32 %v5085, 7
  %v5087 = vsub.s32 1, %v5086
  %v5088 = vrot.slane %v5079, %v5087
  %v5089 = vlaneseq
  %v5090 = vshrl.u32 %v5089, 7
  %v5091 = vsub.s32 2, %v5090
  %v5092 = vrot.slane %v5079, %v5091
  %5096 = vmatprep.subr.mxu0 %v4888
  %5097 = vmatpush1.msra.mxu0 %v4887
  %5098 = vmatprep.subr.mxu0 %v4891
  %5099 = vmatpush1.msra.mxu0 %v4890
  %5100 = vmatprep.subr.mxu0 %v4894
  %5101 = vmatpush1.msra.mxu0 %v4893
  %5102 = vmatprep.subr.mxu0 %v4897
  %5103 = vmatpush1.msra.mxu0 %v4896
  %5104 = vmatprep.subr.mxu0 %v4900
  %5105 = vmatpush1.msra.mxu0 %v4899
  %5106 = vmatprep.subr.mxu0 %v4903
  %5107 = vmatpush1.msra.mxu0 %v4902
  %5108 = vmatprep.subr.mxu0 %v4906
  %5109 = vmatpush1.msra.mxu0 %v4905
  %5110 = vmatprep.subr.mxu0 %v4909
  %5111 = vmatpush1.msra.mxu0 %v4908
  %5112 = vmatprep.subr.mxu0 %v4912
  %5113 = vmatpush1.msra.mxu0 %v4911
  %5114 = vmatprep.subr.mxu0 %v4915
  %5115 = vmatpush1.msra.mxu0 %v4914
  %5116 = vmatprep.subr.mxu0 %v4918
  %5117 = vmatpush1.msra.mxu0 %v4917
  %5118 = vmatprep.subr.mxu0 %v4921
  %5119 = vmatpush1.msra.mxu0 %v4920
  %5120 = vmatprep.subr.mxu0 %v4924
  %5121 = vmatpush1.msra.mxu0 %v4923
  %5122 = vmatprep.subr.mxu0 %v4927
  %5123 = vmatpush1.msra.mxu0 %v4926
  %5124 = vmatprep.subr.mxu0 %v4930
  %5125 = vmatpush1.msra.mxu0 %v4929
  %5126 = vmatprep.subr.mxu0 %v4933
  %5127 = vmatpush1.msra.mxu0 %v4932
  %5128 = vmatprep.subr.mxu0 %v4936
  %5129 = vmatpush1.msra.mxu0 %v4935
  %5130 = vmatprep.subr.mxu0 %v4939
  %5131 = vmatpush1.msra.mxu0 %v4938
  %5132 = vmatprep.subr.mxu0 %v4942
  %5133 = vmatpush1.msra.mxu0 %v4941
  %5134 = vmatprep.subr.mxu0 %v4945
  %5135 = vmatpush1.msra.mxu0 %v4944
  %5136 = vmatprep.subr.mxu0 %v4948
  %5137 = vmatpush1.msra.mxu0 %v4947
  %5138 = vmatprep.subr.mxu0 %v4951
  %5139 = vmatpush1.msra.mxu0 %v4950
  %5140 = vmatprep.subr.mxu0 %v4954
  %5141 = vmatpush1.msra.mxu0 %v4953
  %5142 = vmatprep.subr.mxu0 %v4957
  %5143 = vmatpush1.msra.mxu0 %v4956
  %5144 = vmatprep.subr.mxu0 %v4960
  %5145 = vmatpush1.msra.mxu0 %v4959
  %5146 = vmatprep.subr.mxu0 %v4963
  %5147 = vmatpush1.msra.mxu0 %v4962
  %5148 = vmatprep.subr.mxu0 %v4966
  %5149 = vmatpush1.msra.mxu0 %v4965
  %5150 = vmatprep.subr.mxu0 %v4969
  %5151 = vmatpush1.msra.mxu0 %v4968
  %5152 = vmatprep.subr.mxu0 %v4972
  %5153 = vmatpush1.msra.mxu0 %v4971
  %5154 = vmatprep.subr.mxu0 %v4975
  %5155 = vmatpush1.msra.mxu0 %v4974
  %5156 = vmatprep.subr.mxu0 %v4978
  %5157 = vmatpush1.msra.mxu0 %v4977
  %5158 = vmatprep.subr.mxu0 %v4981
  %5159 = vmatpush1.msra.mxu0 %v4980
  %5160 = vmatprep.mubr.f32.mxu0 %v4880
  %5161 = vmatmul.mubr.f32.gmra.mrb[0].mxu0 %v4879
  %v5162 = vpop.f32.mrb[0].mxu0
  %v5163 = vadd.f32 %v5084, %v5162
  %v5164 = vpop.f32.mrb[0].mxu0
  %v5165 = vadd.f32 %v5088, %v5164
  %5166 = vmatprep.mubr.f32.mxu0 %v4884
  %5167 = vmatmul.mubr.f32.gmra.mrb[0].mxu0 %v4883
  %v5168 = vpop.f32.mrb[0].mxu0
  %v5169 = vadd.f32 %v5084, %v5168
  %v5170 = vpop.f32.mrb[0].mxu0
  %v5171 = vadd.f32 %v5088, %v5170
  %5172 = vdwg.mxu0
  %5173 = vmatprep.subr.mxu0 %v4984
  %5174 = vmatpush1.msra.mxu0 %v4983
  %5175 = vmatprep.subr.mxu0 %v4987
  %5176 = vmatpush1.msra.mxu0 %v4986
  %5177 = vmatprep.subr.mxu0 %v4990
  %5178 = vmatpush1.msra.mxu0 %v4989
  %5179 = vmatprep.subr.mxu0 %v4993
  %5180 = vmatpush1.msra.mxu0 %v4992
  %5181 = vmatprep.subr.mxu0 %v4996
  %5182 = vmatpush1.msra.mxu0 %v4995
  %5183 = vmatprep.subr.mxu0 %v4999
  %5184 = vmatpush1.msra.mxu0 %v4998
  %5185 = vmatprep.subr.mxu0 %v5002
  %5186 = vmatpush1.msra.mxu0 %v5001
  %5187 = vmatprep.subr.mxu0 %v5005
  %5188 = vmatpush1.msra.mxu0 %v5004
  %5189 = vmatprep.subr.mxu0 %v5008
  %5190 = vmatpush1.msra.mxu0 %v5007
  %5191 = vmatprep.subr.mxu0 %v5011
  %5192 = vmatpush1.msra.mxu0 %v5010
  %5193 = vmatprep.subr.mxu0 %v5014
  %5194 = vmatpush1.msra.mxu0 %v5013
  %5195 = vmatprep.subr.mxu0 %v5017
  %5196 = vmatpush1.msra.mxu0 %v5016
  %5197 = vmatprep.subr.mxu0 %v5020
  %5198 = vmatpush1.msra.mxu0 %v5019
  %5199 = vmatprep.subr.mxu0 %v5023
  %5200 = vmatpush1.msra.mxu0 %v5022
  %5201 = vmatprep.subr.mxu0 %v5026
  %5202 = vmatpush1.msra.mxu0 %v5025
  %5203 = vmatprep.subr.mxu0 %v5029
  %5204 = vmatpush1.msra.mxu0 %v5028
  %5205 = vmatprep.subr.mxu0 %v5032
  %5206 = vmatpush1.msra.mxu0 %v5031
  %5207 = vmatprep.subr.mxu0 %v5035
  %5208 = vmatpush1.msra.mxu0 %v5034
  %5209 = vmatprep.subr.mxu0 %v5038
  %5210 = vmatpush1.msra.mxu0 %v5037
  %5211 = vmatprep.subr.mxu0 %v5041
  %5212 = vmatpush1.msra.mxu0 %v5040
  %5213 = vmatprep.subr.mxu0 %v5044
  %5214 = vmatpush1.msra.mxu0 %v5043
  %5215 = vmatprep.subr.mxu0 %v5047
  %5216 = vmatpush1.msra.mxu0 %v5046
  %5217 = vmatprep.subr.mxu0 %v5050
  %5218 = vmatpush1.msra.mxu0 %v5049
  %5219 = vmatprep.subr.mxu0 %v5053
  %5220 = vmatpush1.msra.mxu0 %v5052
  %5221 = vmatprep.subr.mxu0 %v5056
  %5222 = vmatpush1.msra.mxu0 %v5055
  %5223 = vmatprep.subr.mxu0 %v5059
  %5224 = vmatpush1.msra.mxu0 %v5058
  %5225 = vmatprep.subr.mxu0 %v5062
  %5226 = vmatpush1.msra.mxu0 %v5061
  %5227 = vmatprep.subr.mxu0 %v5065
  %5228 = vmatpush1.msra.mxu0 %v5064
  %5229 = vmatprep.subr.mxu0 %v5068
  %5230 = vmatpush1.msra.mxu0 %v5067
  %5231 = vmatprep.subr.mxu0 %v5071
  %5232 = vmatpush1.msra.mxu0 %v5070
  %5233 = vmatprep.subr.mxu0 %v5074
  %5234 = vmatpush1.msra.mxu0 %v5073
  %5235 = vmatprep.subr.mxu0 %v5077
  %5236 = vmatpush1.msra.mxu0 %v5076
  %5237 = vmatprep.mubr.f32.mxu0 %v4882
  %5238 = vmatmul.mubr.f32.gmra.mrb[0].mxu0 %v4881
  %v5239 = vpop.f32.mrb[0].mxu0
  %v5240 = vadd.f32 %v5163, %v5239
  %v5241 = vpop.f32.mrb[0].mxu0
  %v5242 = vadd.f32 %v5165, %v5241
  %5243 = vmatprep.mubr.f32.mxu0 %v4886
  %5244 = vmatmul.mubr.f32.gmra.mrb[0].mxu0 %v4885
  %v5245 = vpop.f32.mrb[0].mxu0
  %v5246 = vadd.f32 %v5169, %v5245
  %v5247 = vpop.f32.mrb[0].mxu0
  %v5248 = vadd.f32 %v5171, %v5247
  %5249 = vdwg.mxu0
  %5250 = vmatprep.subr.mxu0 0.0
  %5251 = vmatpush1.msra.mxu0 %v4889
  %5252 = vmatprep.subr.mxu0 0.0
  %5253 = vmatpush1.msra.mxu0 %v4892
  %5254 = vmatprep.subr.mxu0 0.0
  %5255 = vmatpush1.msra.mxu0 %v4895
  %5256 = vmatprep.subr.mxu0 0.0
  %5257 = vmatpush1.msra.mxu0 %v4898
  %5258 = vmatprep.subr.mxu0 0.0
  %5259 = vmatpush1.msra.mxu0 %v4901
  %5260 = vmatprep.subr.mxu0 0.0
  %5261 = vmatpush1.msra.mxu0 %v4904
  %5262 = vmatprep.subr.mxu0 0.0
  %5263 = vmatpush1.msra.mxu0 %v4907
  %5264 = vmatprep.subr.mxu0 0.0
  %5265 = vmatpush1.msra.mxu0 %v4910
  %5266 = vmatprep.subr.mxu0 0.0
  %5267 = vmatpush1.msra.mxu0 %v4913
  %5268 = vmatprep.subr.mxu0 0.0
  %5269 = vmatpush1.msra.mxu0 %v4916
  %5270 = vmatprep.subr.mxu0 0.0
  %5271 = vmatpush1.msra.mxu0 %v4919
  %5272 = vmatprep.subr.mxu0 0.0
  %5273 = vmatpush1.msra.mxu0 %v4922
  %5274 = vmatprep.subr.mxu0 0.0
  %5275 = vmatpush1.msra.mxu0 %v4925
  %5276 = vmatprep.subr.mxu0 0.0
  %5277 = vmatpush1.msra.mxu0 %v4928
  %5278 = vmatprep.subr.mxu0 0.0
  %5279 = vmatpush1.msra.mxu0 %v4931
  %5280 = vmatprep.subr.mxu0 0.0
  %5281 = vmatpush1.msra.mxu0 %v4934
  %5282 = vmatprep.subr.mxu0 0.0
  %5283 = vmatpush1.msra.mxu0 %v4937
  %5284 = vmatprep.subr.mxu0 0.0
  %5285 = vmatpush1.msra.mxu0 %v4940
  %5286 = vmatprep.subr.mxu0 0.0
  %5287 = vmatpush1.msra.mxu0 %v4943
  %5288 = vmatprep.subr.mxu0 0.0
  %5289 = vmatpush1.msra.mxu0 %v4946
  %5290 = vmatprep.subr.mxu0 0.0
  %5291 = vmatpush1.msra.mxu0 %v4949
  %5292 = vmatprep.subr.mxu0 0.0
  %5293 = vmatpush1.msra.mxu0 %v4952
  %5294 = vmatprep.subr.mxu0 0.0
  %5295 = vmatpush1.msra.mxu0 %v4955
  %5296 = vmatprep.subr.mxu0 0.0
  %5297 = vmatpush1.msra.mxu0 %v4958
  %5298 = vmatprep.subr.mxu0 0.0
  %5299 = vmatpush1.msra.mxu0 %v4961
  %5300 = vmatprep.subr.mxu0 0.0
  %5301 = vmatpush1.msra.mxu0 %v4964
  %5302 = vmatprep.subr.mxu0 0.0
  %5303 = vmatpush1.msra.mxu0 %v4967
  %5304 = vmatprep.subr.mxu0 0.0
  %5305 = vmatpush1.msra.mxu0 %v4970
  %5306 = vmatprep.subr.mxu0 0.0
  %5307 = vmatpush1.msra.mxu0 %v4973
  %5308 = vmatprep.subr.mxu0 0.0
  %5309 = vmatpush1.msra.mxu0 %v4976
  %5310 = vmatprep.subr.mxu0 0.0
  %5311 = vmatpush1.msra.mxu0 %v4979
  %5312 = vmatprep.subr.mxu0 0.0
  %5313 = vmatpush1.msra.mxu0 %v4982
  %5314 = vmatprep.mubr.f32.mxu0 %v4880
  %5315 = vmatmul.mubr.f32.gmra.mrb[0].mxu0 %v4879
  %v5316 = vpop.f32.mrb[0].mxu0
  %v5317 = vadd.f32 %v5092, %v5316
  %v5318 = vpop.f32.mrb[0].mxu0
  %5319 = vmatprep.mubr.f32.mxu0 %v4884
  %5320 = vmatmul.mubr.f32.gmra.mrb[0].mxu0 %v4883
  %v5321 = vpop.f32.mrb[0].mxu0
  %v5322 = vadd.f32 %v5092, %v5321
  %v5323 = vpop.f32.mrb[0].mxu0
  %5324 = vdwg.mxu0
  %5325 = vmatprep.subr.mxu0 0.0
  %5326 = vmatpush1.msra.mxu0 %v4985
  %5327 = vmatprep.subr.mxu0 0.0
  %5328 = vmatpush1.msra.mxu0 %v4988
  %5329 = vmatprep.subr.mxu0 0.0
  %5330 = vmatpush1.msra.mxu0 %v4991
  %5331 = vmatprep.subr.mxu0 0.0
  %5332 = vmatpush1.msra.mxu0 %v4994
  %5333 = vmatprep.subr.mxu0 0.0
  %5334 = vmatpush1.msra.mxu0 %v4997
  %5335 = vmatprep.subr.mxu0 0.0
  %5336 = vmatpush1.msra.mxu0 %v5000
  %5337 = vmatprep.subr.mxu0 0.0
  %5338 = vmatpush1.msra.mxu0 %v5003
  %5339 = vmatprep.subr.mxu0 0.0
  %5340 = vmatpush1.msra.mxu0 %v5006
  %5341 = vmatprep.subr.mxu0 0.0
  %5342 = vmatpush1.msra.mxu0 %v5009
  %5343 = vmatprep.subr.mxu0 0.0
  %5344 = vmatpush1.msra.mxu0 %v5012
  %5345 = vmatprep.subr.mxu0 0.0
  %5346 = vmatpush1.msra.mxu0 %v5015
  %5347 = vmatprep.subr.mxu0 0.0
  %5348 = vmatpush1.msra.mxu0 %v5018
  %5349 = vmatprep.subr.mxu0 0.0
  %5350 = vmatpush1.msra.mxu0 %v5021
  %5351 = vmatprep.subr.mxu0 0.0
  %5352 = vmatpush1.msra.mxu0 %v5024
  %5353 = vmatprep.subr.mxu0 0.0
  %5354 = vmatpush1.msra.mxu0 %v5027
  %5355 = vmatprep.subr.mxu0 0.0
  %5356 = vmatpush1.msra.mxu0 %v5030
  %5357 = vmatprep.subr.mxu0 0.0
  %5358 = vmatpush1.msra.mxu0 %v5033
  %5359 = vmatprep.subr.mxu0 0.0
  %5360 = vmatpush1.msra.mxu0 %v5036
  %5361 = vmatprep.subr.mxu0 0.0
  %5362 = vmatpush1.msra.mxu0 %v5039
  %5363 = vmatprep.subr.mxu0 0.0
  %5364 = vmatpush1.msra.mxu0 %v5042
  %5365 = vmatprep.subr.mxu0 0.0
  %5366 = vmatpush1.msra.mxu0 %v5045
  %5367 = vmatprep.subr.mxu0 0.0
  %5368 = vmatpush1.msra.mxu0 %v5048
  %5369 = vmatprep.subr.mxu0 0.0
  %5370 = vmatpush1.msra.mxu0 %v5051
  %5371 = vmatprep.subr.mxu0 0.0
  %5372 = vmatpush1.msra.mxu0 %v5054
  %5373 = vmatprep.subr.mxu0 0.0
  %5374 = vmatpush1.msra.mxu0 %v5057
  %5375 = vmatprep.subr.mxu0 0.0
  %5376 = vmatpush1.msra.mxu0 %v5060
  %5377 = vmatprep.subr.mxu0 0.0
  %5378 = vmatpush1.msra.mxu0 %v5063
  %5379 = vmatprep.subr.mxu0 0.0
  %5380 = vmatpush1.msra.mxu0 %v5066
  %5381 = vmatprep.subr.mxu0 0.0
  %5382 = vmatpush1.msra.mxu0 %v5069
  %5383 = vmatprep.subr.mxu0 0.0
  %5384 = vmatpush1.msra.mxu0 %v5072
  %5385 = vmatprep.subr.mxu0 0.0
  %5386 = vmatpush1.msra.mxu0 %v5075
  %5387 = vmatprep.subr.mxu0 0.0
  %5388 = vmatpush1.msra.mxu0 %v5078
  %5389 = vmatprep.mubr.f32.mxu0 %v4882
  %5390 = vmatmul.mubr.f32.gmra.mrb[0].mxu0 %v4881
  %v5391 = vpop.f32.mrb[0].mxu0
  %v5392 = vadd.f32 %v5317, %v5391
  %v5393 = vpop.f32.mrb[0].mxu0
  %5394 = vmatprep.mubr.f32.mxu0 %v4886
  %5395 = vmatmul.mubr.f32.gmra.mrb[0].mxu0 %v4885
  %v5396 = vpop.f32.mrb[0].mxu0
  %v5397 = vadd.f32 %v5322, %v5396
  %v5398 = vpop.f32.mrb[0].mxu0
  %5399 = vdwg.mxu0
  %v5400 = vmax.f32 %v5240, 0.0
  %v5401 = vmax.f32 %v5242, 0.0
  %v5402 = vmax.f32 %v5392, 0.0
  %v5403 = vmax.f32 %v5246, 0.0
  %v5404 = vmax.f32 %v5248, 0.0
  %v5405 = vmax.f32 %v5397, 0.0
  %v5406 = vadd.f32 %v4873, %v5400
  %v5407 = vadd.f32 %v4874, %v5401
  %v5408 = vadd.f32 %v4875, %v5402
  %v5409 = vadd.f32 %v4876, %v5403
  %v5410 = vadd.f32 %v4877, %v5404
  %v5411 = vadd.f32 %v4878, %v5405
  %5412 = vst [vmem:[%s10] sm:$0xff] %v5406
  %5413 = vst [vmem:[%s10 + $0x8] sm:$0xff] %v5407
  %5414 = vst.msk [vmem:[%s10 + $0x10] sm:$0xff] %vm45, %v5408
  %5415 = vst [vmem:[%s10 + $0x18] sm:$0xff] %v5409
  %5416 = vst [vmem:[%s10 + $0x20] sm:$0xff] %v5410
  %5417 = vst.msk [vmem:[%s10 + $0x28] sm:$0xff] %vm45, %v5411
  // Predicated region
  $region42: #{df_decoder_forward.1} parent=0 // pred_check
    _
  $region43: #{df_decoder_forward.1} parent=0 // pred_check_branch
    %5419 = sbr.rel (0) target = $region45
  $region44: #{df_decoder_forward.1} parent=0 // pred_region
    _
  $region45: #{df_decoder_forward.1} parent=0 // pred_fallthru
    _
  // Predicated region
  $region46: #{df_decoder_forward.1} parent=0 // pred_check
    _
  $region47: #{df_decoder_forward.1} parent=0 // pred_check_branch
    %5421 = sbr.rel (0) target = $region49
  $region48: #{df_decoder_forward.1} parent=0 // pred_region
    _
  $region49: #{df_decoder_forward.1} parent=0 // pred_fallthru
    _

</llo_original>
